<compile_context>
chip_gen: v6e
topology: v6e:2x2x1
jax: 0.10.0
libtpu: 0.0.40
codegen_flags: <defaults>
</compile_context>

<pallas_src>
import jax
import jax.numpy as jnp
from jax.experimental import pallas as pl
from jax.experimental.pallas import tpu as pltpu

_BN_EPS = 1e-5
_FILTERS = 32
_NUM_CLASSES = 1
_K0 = 32  # first-conv im2col K: 9*3=27 padded to 32 (sublane multiple)

# MobileNetV2 features[1:7] (truncated backbone, output stride 8, 32 channels):
#   (expand_ratio, cin, cout, stride)
_ARCH = (
    (1, 32, 16, 1),
    (6, 16, 24, 2),
    (6, 24, 24, 1),
    (6, 24, 32, 2),
    (6, 32, 32, 1),
    (6, 32, 32, 1),
)


# ----------------------------------------------------------------------------
# In-kernel building blocks (operate on 2D (M, C) activation values + VMEM refs)
# ----------------------------------------------------------------------------
def _pw(h, w_ref, s_ref, b_ref, act):
    """1x1 conv as an MXU matmul (bf16 inputs, f32 accum) + folded BN + activation."""
    y = jnp.dot(h.astype(jnp.bfloat16), w_ref[...],
                preferred_element_type=jnp.float32)
    y = y * s_ref[...] + b_ref[...]
    if act == "relu6":
        y = jnp.clip(y, 0.0, 6.0)
    elif act == "relu":
        y = jnp.maximum(y, 0.0)
    return y


def _fill_pad(pad_ref, h2, N, H, W):
    """Scatter the (N*H*W, C) activation into a zeroed (N, H+2, W+2, C) VMEM scratch."""
    pad_ref[...] = jnp.zeros(pad_ref.shape, jnp.float32)
    for n in range(N):
        for hh in range(H):
            r = (n * H + hh) * W
            pad_ref[n, hh + 1, 1:W + 1, :] = h2[r:r + W, :]


def _dw_s1(h2, w_ref, s_ref, b_ref, pad_ref, out_ref, N, H, W, C):
    """3x3 depthwise conv, stride 1, + folded BN + ReLU6. Returns a (N*H*W, C) value."""
    _fill_pad(pad_ref, h2, N, H, W)
    acc = jnp.zeros((N, H, W, C), jnp.float32)
    for kh in range(3):
        for kw in range(3):
            t = 3 * kh + kw
            acc = acc + pad_ref[:, kh:kh + H, kw:kw + W, :] * w_ref[t:t + 1, :]
    y = jnp.clip(acc * s_ref[...] + b_ref[...], 0.0, 6.0)
    for n in range(N):
        for hh in range(H):
            r = (n * H + hh) * W
            out_ref[r:r + W, :] = y[n, hh]
    return out_ref[...]


def _dw_s2(h2, w_ref, s_ref, b_ref, pad_ref, out_ref, N, H, W, C):
    """3x3 depthwise conv, stride 2: only even output rows/cols are computed."""
    Ho, Wo = H // 2, W // 2
    _fill_pad(pad_ref, h2, N, H, W)
    s = s_ref[...]
    b = b_ref[...]
    for oh in range(Ho):
        for ow in range(Wo):
            acc = jnp.zeros((N, C), jnp.float32)
            for kh in range(3):
                patch = pad_ref[:, 2 * oh + kh, 2 * ow:2 * ow + 3, :]   # (N, 3, C)
                acc = acc + jnp.sum(patch * w_ref[3 * kh:3 * kh + 3, :], axis=1)
            pos = jnp.clip(acc * s + b, 0.0, 6.0)
            for n in range(N):
                r = (n * Ho + oh) * Wo + ow
                out_ref[r:r + 1, :] = pos[n:n + 1, :]
    return out_ref[...]


def _make_kernel(N, blocks, n_inputs):
    """Fused backbone+head kernel. refs = (inputs..., out, scratch...)."""
    def kernel(*refs):
        in_refs = refs[:n_inputs]
        out_ref = refs[n_inputs]
        scratch = refs[n_inputs + 1:]
        it = iter(in_refs)
        sit = iter(scratch)

        # features[0]: Conv2d(3,32,3,s=2,p=1)+BN+ReLU6 (im2col matmul, K padded to 32)
        x_ref = next(it)
        h = _pw(x_ref[...], next(it), next(it), next(it), "relu6")

        # features[1:7]: inverted residual blocks, activations stay in VMEM
        for blk in blocks:
            res = h if blk["use_res"] else None
            if blk["expand"]:
                h = _pw(h, next(it), next(it), next(it), "relu6")
            wd, sd, bd = next(it), next(it), next(it)
            pad_ref, o2_ref = next(sit), next(sit)
            dw = _dw_s1 if blk["stride"] == 1 else _dw_s2
            h = dw(h, wd, sd, bd, pad_ref, o2_ref,
                   N, blk["H"], blk["W"], blk["hid"])
            h = _pw(h, next(it), next(it), next(it), None)   # project: BN, no act
            if res is not None:
                h = h + res

        # FOMO head: 1x1(32->32)+bias+ReLU, then 1x1(32->1)+bias as a lane reduction
        w1, b1 = next(it), next(it)
        y = jnp.dot(h.astype(jnp.bfloat16), w1[...],
                    preferred_element_type=jnp.float32) + b1[...]
        y = jnp.maximum(y, 0.0)
        w2, b2 = next(it), next(it)
        out_ref[...] = jnp.sum(y * w2[...], axis=1, keepdims=True) + b2[...]

    return kernel


# ----------------------------------------------------------------------------
# Parameters (deterministic, synthetic) and forward pass
# ----------------------------------------------------------------------------
def _fold_bn(key, c):
    k1, k2, k3, k4 = jax.random.split(key, 4)
    gamma = 1.0 + 0.05 * jax.random.normal(k1, (c,), jnp.float32)
    beta = 0.05 * jax.random.normal(k2, (c,), jnp.float32)
    mean = 0.05 * jax.random.normal(k3, (c,), jnp.float32)
    var = 1.0 + 0.1 * jnp.abs(jax.random.normal(k4, (c,), jnp.float32))
    scale = gamma / jnp.sqrt(var + _BN_EPS)
    bias = beta - mean * scale
    return scale.reshape(1, c), bias.reshape(1, c)


def build_params(key):
    """Flat tuple of arrays, in the exact order the fused kernel consumes them."""
    ki = iter(jax.random.split(key, 80))
    nxt = lambda: next(ki)
    flat = []

    # features[0] weight: rows ordered (kh, kw, cin) like the wrapper im2col; pad 27->32
    w0 = 0.1 * jax.random.normal(nxt(), (27, 32), jnp.float32)
    w0 = jnp.pad(w0, ((0, _K0 - 27), (0, 0))).astype(jnp.bfloat16)
    s0, b0 = _fold_bn(nxt(), 32)
    flat += [w0, s0, b0]

    for t, cin, cout, stride in _ARCH:
        hid = cin * t
        if t != 1:
            we = (0.1 * jax.random.normal(nxt(), (cin, hid), jnp.float32)
                  ).astype(jnp.bfloat16)
            se, be = _fold_bn(nxt(), hid)
            flat += [we, se, be]
        wd = 0.1 * jax.random.normal(nxt(), (9, hid), jnp.float32)
        sd, bd = _fold_bn(nxt(), hid)
        flat += [wd, sd, bd]
        wp = (0.1 * jax.random.normal(nxt(), (hid, cout), jnp.float32)
              ).astype(jnp.bfloat16)
        sp, bp = _fold_bn(nxt(), cout)
        flat += [wp, sp, bp]

    # FOMO head: Conv2d(32,32,1,bias=True) + ReLU + Conv2d(32,num_classes=1,1,bias=True)
    w1 = (0.1 * jax.random.normal(nxt(), (_FILTERS, _FILTERS), jnp.float32)
          ).astype(jnp.bfloat16)
    b1 = 0.05 * jax.random.normal(nxt(), (1, _FILTERS), jnp.float32)
    w2 = 0.1 * jax.random.normal(nxt(), (1, _FILTERS), jnp.float32)  # lane-reduce form
    b2 = 0.05 * jax.random.normal(nxt(), (1, 1), jnp.float32)
    flat += [w1, b1, w2, b2]
    return tuple(flat)


def fomo_forward(x_nchw, flat_params):
    N, Cin, Hin, Win = x_nchw.shape
    assert Cin == 3 and Hin % 8 == 0 and Win % 8 == 0

    # NCHW -> NHWC and im2col for the stride-2 first conv (thin plain-JAX glue on the
    # raw input only; everything else runs inside the single fused Pallas kernel).
    x = jnp.transpose(x_nchw, (0, 2, 3, 1)).astype(jnp.float32)
    xp = jnp.pad(x, ((0, 0), (1, 1), (1, 1), (0, 0)))
    H1, W1 = Hin // 2, Win // 2
    cols = jnp.concatenate(
        [xp[:, kh:kh + Hin:2, kw:kw + Win:2, :] for kh in range(3) for kw in range(3)],
        axis=-1)                                               # (N, H1, W1, 27)
    cols = jnp.pad(cols, ((0, 0), (0, 0), (0, 0), (0, _K0 - 9 * Cin)))
    x2 = cols.reshape(N * H1 * W1, _K0)

    # Static per-block plan + VMEM scratch (padded dw input + 2D dw output per block).
    blocks, scratch = [], []
    H, W = H1, W1
    for t, cin, cout, stride in _ARCH:
        hid = cin * t
        blocks.append(dict(expand=(t != 1), stride=stride, hid=hid, H=H, W=W,
                           use_res=(stride == 1 and cin == cout)))
        scratch.append(pltpu.VMEM((N, H + 2, W + 2, hid), jnp.float32))
        H, W = H // stride, W // stride
        scratch.append(pltpu.VMEM((N * H * W, hid), jnp.float32))

    m_out = N * H * W   # H == Hin // 8 after the two stride-2 blocks
    kernel = _make_kernel(N, blocks, 1 + len(flat_params))

    out2 = pl.pallas_call(
        kernel,
        out_shape=jax.ShapeDtypeStruct((m_out, _NUM_CLASSES), jnp.float32),
        scratch_shapes=scratch,
    )(x2, *flat_params)

    out = out2.reshape(N, H, W, _NUM_CLASSES)
    return jnp.transpose(out, (0, 3, 1, 2))   # NHWC -> NCHW (PyTorch convention)


if __name__ == "__main__":
    x = jax.random.normal(jax.random.PRNGKey(0), (2, 3, 16, 16), jnp.float32)  # NCHW
    params = build_params(jax.random.PRNGKey(1))

    out = jax.jit(lambda a: fomo_forward(a, params))(x)
    out = jax.block_until_ready(out)

    assert out.shape == (2, _NUM_CLASSES, 2, 2), out.shape  # stride-8 FOMO grid
    assert bool(jnp.all(jnp.isfinite(out)))
    print("KERNEL_OK")
</pallas_src>

<mosaic_0001>
module attributes {stable_mosaic.version = 11 : i64} {
  func.func @kernel(%arg0: memref<128x32xf32, #tpu.memory_space<vmem>>, %arg1: memref<32x32xbf16, #tpu.memory_space<vmem>>, %arg2: memref<1x32xf32, #tpu.memory_space<vmem>>, %arg3: memref<1x32xf32, #tpu.memory_space<vmem>>, %arg4: memref<9x32xf32, #tpu.memory_space<vmem>>, %arg5: memref<1x32xf32, #tpu.memory_space<vmem>>, %arg6: memref<1x32xf32, #tpu.memory_space<vmem>>, %arg7: memref<32x16xbf16, #tpu.memory_space<vmem>>, %arg8: memref<1x16xf32, #tpu.memory_space<vmem>>, %arg9: memref<1x16xf32, #tpu.memory_space<vmem>>, %arg10: memref<16x96xbf16, #tpu.memory_space<vmem>>, %arg11: memref<1x96xf32, #tpu.memory_space<vmem>>, %arg12: memref<1x96xf32, #tpu.memory_space<vmem>>, %arg13: memref<9x96xf32, #tpu.memory_space<vmem>>, %arg14: memref<1x96xf32, #tpu.memory_space<vmem>>, %arg15: memref<1x96xf32, #tpu.memory_space<vmem>>, %arg16: memref<96x24xbf16, #tpu.memory_space<vmem>>, %arg17: memref<1x24xf32, #tpu.memory_space<vmem>>, %arg18: memref<1x24xf32, #tpu.memory_space<vmem>>, %arg19: memref<24x144xbf16, #tpu.memory_space<vmem>>, %arg20: memref<1x144xf32, #tpu.memory_space<vmem>>, %arg21: memref<1x144xf32, #tpu.memory_space<vmem>>, %arg22: memref<9x144xf32, #tpu.memory_space<vmem>>, %arg23: memref<1x144xf32, #tpu.memory_space<vmem>>, %arg24: memref<1x144xf32, #tpu.memory_space<vmem>>, %arg25: memref<144x24xbf16, #tpu.memory_space<vmem>>, %arg26: memref<1x24xf32, #tpu.memory_space<vmem>>, %arg27: memref<1x24xf32, #tpu.memory_space<vmem>>, %arg28: memref<24x144xbf16, #tpu.memory_space<vmem>>, %arg29: memref<1x144xf32, #tpu.memory_space<vmem>>, %arg30: memref<1x144xf32, #tpu.memory_space<vmem>>, %arg31: memref<9x144xf32, #tpu.memory_space<vmem>>, %arg32: memref<1x144xf32, #tpu.memory_space<vmem>>, %arg33: memref<1x144xf32, #tpu.memory_space<vmem>>, %arg34: memref<144x32xbf16, #tpu.memory_space<vmem>>, %arg35: memref<1x32xf32, #tpu.memory_space<vmem>>, %arg36: memref<1x32xf32, #tpu.memory_space<vmem>>, %arg37: memref<32x192xbf16, #tpu.memory_space<vmem>>, %arg38: memref<1x192xf32, #tpu.memory_space<vmem>>, %arg39: memref<1x192xf32, #tpu.memory_space<vmem>>, %arg40: memref<9x192xf32, #tpu.memory_space<vmem>>, %arg41: memref<1x192xf32, #tpu.memory_space<vmem>>, %arg42: memref<1x192xf32, #tpu.memory_space<vmem>>, %arg43: memref<192x32xbf16, #tpu.memory_space<vmem>>, %arg44: memref<1x32xf32, #tpu.memory_space<vmem>>, %arg45: memref<1x32xf32, #tpu.memory_space<vmem>>, %arg46: memref<32x192xbf16, #tpu.memory_space<vmem>>, %arg47: memref<1x192xf32, #tpu.memory_space<vmem>>, %arg48: memref<1x192xf32, #tpu.memory_space<vmem>>, %arg49: memref<9x192xf32, #tpu.memory_space<vmem>>, %arg50: memref<1x192xf32, #tpu.memory_space<vmem>>, %arg51: memref<1x192xf32, #tpu.memory_space<vmem>>, %arg52: memref<192x32xbf16, #tpu.memory_space<vmem>>, %arg53: memref<1x32xf32, #tpu.memory_space<vmem>>, %arg54: memref<1x32xf32, #tpu.memory_space<vmem>>, %arg55: memref<32x32xbf16, #tpu.memory_space<vmem>>, %arg56: memref<1x32xf32, #tpu.memory_space<vmem>>, %arg57: memref<1x32xf32, #tpu.memory_space<vmem>>, %arg58: memref<1x1xf32, #tpu.memory_space<vmem>>, %arg59: memref<8x1xf32, #tpu.memory_space<vmem>>, %arg60: memref<2x10x10x32xf32, #tpu.memory_space<vmem>>, %arg61: memref<128x32xf32, #tpu.memory_space<vmem>>, %arg62: memref<2x10x10x96xf32, #tpu.memory_space<vmem>>, %arg63: memref<32x96xf32, #tpu.memory_space<vmem>>, %arg64: memref<2x6x6x144xf32, #tpu.memory_space<vmem>>, %arg65: memref<32x144xf32, #tpu.memory_space<vmem>>, %arg66: memref<2x6x6x144xf32, #tpu.memory_space<vmem>>, %arg67: memref<8x144xf32, #tpu.memory_space<vmem>>, %arg68: memref<2x4x4x192xf32, #tpu.memory_space<vmem>>, %arg69: memref<8x192xf32, #tpu.memory_space<vmem>>, %arg70: memref<2x4x4x192xf32, #tpu.memory_space<vmem>>, %arg71: memref<8x192xf32, #tpu.memory_space<vmem>>) attributes {dimension_semantics = [], scalar_prefetch = 0 : i64, scratch_operands = 12 : i64, tpu.core_type = #tpu.core_type<tc>} {
    %c0 = arith.constant 0 : index
    %c0_0 = arith.constant 0 : index
    %0 = vector.load %arg0[%c0, %c0_0] : memref<128x32xf32, #tpu.memory_space<vmem>>, vector<128x32xf32>
    %1 = arith.truncf %0 : vector<128x32xf32> to vector<128x32xbf16>
    %c0_1 = arith.constant 0 : index
    %c0_2 = arith.constant 0 : index
    %2 = vector.load %arg1[%c0_1, %c0_2] : memref<32x32xbf16, #tpu.memory_space<vmem>>, vector<32x32xbf16>
    %cst = arith.constant dense<0.000000e+00> : vector<128x32xf32>
    %3 = tpu.matmul %1, %2, %cst {dimension_numbers = #tpu.dot_dimension_numbers<[1], [0], [0], [1], [0, 0, 1, 1], [], []>} : vector<128x32xbf16>, vector<32x32xbf16>, vector<128x32xf32> -> vector<128x32xf32>
    %c0_3 = arith.constant 0 : index
    %c0_4 = arith.constant 0 : index
    %4 = vector.load %arg2[%c0_3, %c0_4] : memref<1x32xf32, #tpu.memory_space<vmem>>, vector<1x32xf32>
    %5 = vector.broadcast %4 : vector<1x32xf32> to vector<128x32xf32>
    %6 = arith.mulf %3, %5 : vector<128x32xf32>
    %c0_5 = arith.constant 0 : index
    %c0_6 = arith.constant 0 : index
    %7 = vector.load %arg3[%c0_5, %c0_6] : memref<1x32xf32, #tpu.memory_space<vmem>>, vector<1x32xf32>
    %8 = vector.broadcast %7 : vector<1x32xf32> to vector<128x32xf32>
    %9 = arith.addf %6, %8 : vector<128x32xf32>
    %cst_7 = arith.constant 0.000000e+00 : f32
    %cst_8 = arith.constant 6.000000e+00 : f32
    %10 = vector.broadcast %cst_7 : f32 to vector<128x32xf32>
    %11 = arith.maximumf %10, %9 : vector<128x32xf32>
    %12 = vector.broadcast %cst_8 : f32 to vector<128x32xf32>
    %13 = arith.minimumf %12, %11 : vector<128x32xf32>
    %cst_9 = arith.constant 0.000000e+00 : f32
    %14 = vector.broadcast %cst_9 : f32 to vector<2x10x10x32xf32>
    %c0_10 = arith.constant 0 : index
    %c0_11 = arith.constant 0 : index
    %c0_12 = arith.constant 0 : index
    %c0_13 = arith.constant 0 : index
    %15 = vector.load %arg60[%c0_10, %c0_11, %c0_12, %c0_13] : memref<2x10x10x32xf32, #tpu.memory_space<vmem>>, vector<2x10x10x32xf32>
    tpu.vector_store %arg60[%c0_10, %c0_11, %c0_12, %c0_13], %14 {strides = array<i32>} : memref<2x10x10x32xf32, #tpu.memory_space<vmem>>, vector<2x10x10x32xf32>,
    %16 = vector.extract_strided_slice %13 {offsets = [0, 0], sizes = [8, 32], strides = [1, 1]} : vector<128x32xf32> to vector<8x32xf32>
    %c0_14 = arith.constant 0 : index
    %c1 = arith.constant 1 : index
    %c1_15 = arith.constant 1 : index
    %c0_16 = arith.constant 0 : index
    %17 = vector.load %arg60[%c0_14, %c1, %c1_15, %c0_16] : memref<2x10x10x32xf32, #tpu.memory_space<vmem>>, vector<1x1x8x32xf32>
    %18 = vector.shape_cast %17 : vector<1x1x8x32xf32> to vector<8x32xf32>
    %19 = vector.shape_cast %16 : vector<8x32xf32> to vector<1x1x8x32xf32>
    tpu.vector_store %arg60[%c0_14, %c1, %c1_15, %c0_16], %19 {strides = array<i32>} : memref<2x10x10x32xf32, #tpu.memory_space<vmem>>, vector<1x1x8x32xf32>,
    %20 = vector.extract_strided_slice %13 {offsets = [8, 0], sizes = [8, 32], strides = [1, 1]} : vector<128x32xf32> to vector<8x32xf32>
    %c0_17 = arith.constant 0 : index
    %c2 = arith.constant 2 : index
    %c1_18 = arith.constant 1 : index
    %c0_19 = arith.constant 0 : index
    %21 = vector.load %arg60[%c0_17, %c2, %c1_18, %c0_19] : memref<2x10x10x32xf32, #tpu.memory_space<vmem>>, vector<1x1x8x32xf32>
    %22 = vector.shape_cast %21 : vector<1x1x8x32xf32> to vector<8x32xf32>
    %23 = vector.shape_cast %20 : vector<8x32xf32> to vector<1x1x8x32xf32>
    tpu.vector_store %arg60[%c0_17, %c2, %c1_18, %c0_19], %23 {strides = array<i32>} : memref<2x10x10x32xf32, #tpu.memory_space<vmem>>, vector<1x1x8x32xf32>,
    %24 = vector.extract_strided_slice %13 {offsets = [16, 0], sizes = [8, 32], strides = [1, 1]} : vector<128x32xf32> to vector<8x32xf32>
    %c0_20 = arith.constant 0 : index
    %c3 = arith.constant 3 : index
    %c1_21 = arith.constant 1 : index
    %c0_22 = arith.constant 0 : index
    %25 = vector.load %arg60[%c0_20, %c3, %c1_21, %c0_22] : memref<2x10x10x32xf32, #tpu.memory_space<vmem>>, vector<1x1x8x32xf32>
    %26 = vector.shape_cast %25 : vector<1x1x8x32xf32> to vector<8x32xf32>
    %27 = vector.shape_cast %24 : vector<8x32xf32> to vector<1x1x8x32xf32>
    tpu.vector_store %arg60[%c0_20, %c3, %c1_21, %c0_22], %27 {strides = array<i32>} : memref<2x10x10x32xf32, #tpu.memory_space<vmem>>, vector<1x1x8x32xf32>,
    %28 = vector.extract_strided_slice %13 {offsets = [24, 0], sizes = [8, 32], strides = [1, 1]} : vector<128x32xf32> to vector<8x32xf32>
    %c0_23 = arith.constant 0 : index
    %c4 = arith.constant 4 : index
    %c1_24 = arith.constant 1 : index
    %c0_25 = arith.constant 0 : index
    %29 = vector.load %arg60[%c0_23, %c4, %c1_24, %c0_25] : memref<2x10x10x32xf32, #tpu.memory_space<vmem>>, vector<1x1x8x32xf32>
    %30 = vector.shape_cast %29 : vector<1x1x8x32xf32> to vector<8x32xf32>
    %31 = vector.shape_cast %28 : vector<8x32xf32> to vector<1x1x8x32xf32>
    tpu.vector_store %arg60[%c0_23, %c4, %c1_24, %c0_25], %31 {strides = array<i32>} : memref<2x10x10x32xf32, #tpu.memory_space<vmem>>, vector<1x1x8x32xf32>,
    %32 = vector.extract_strided_slice %13 {offsets = [32, 0], sizes = [8, 32], strides = [1, 1]} : vector<128x32xf32> to vector<8x32xf32>
    %c0_26 = arith.constant 0 : index
    %c5 = arith.constant 5 : index
    %c1_27 = arith.constant 1 : index
    %c0_28 = arith.constant 0 : index
    %33 = vector.load %arg60[%c0_26, %c5, %c1_27, %c0_28] : memref<2x10x10x32xf32, #tpu.memory_space<vmem>>, vector<1x1x8x32xf32>
    %34 = vector.shape_cast %33 : vector<1x1x8x32xf32> to vector<8x32xf32>
    %35 = vector.shape_cast %32 : vector<8x32xf32> to vector<1x1x8x32xf32>
    tpu.vector_store %arg60[%c0_26, %c5, %c1_27, %c0_28], %35 {strides = array<i32>} : memref<2x10x10x32xf32, #tpu.memory_space<vmem>>, vector<1x1x8x32xf32>,
    %36 = vector.extract_strided_slice %13 {offsets = [40, 0], sizes = [8, 32], strides = [1, 1]} : vector<128x32xf32> to vector<8x32xf32>
    %c0_29 = arith.constant 0 : index
    %c6 = arith.constant 6 : index
    %c1_30 = arith.constant 1 : index
    %c0_31 = arith.constant 0 : index
    %37 = vector.load %arg60[%c0_29, %c6, %c1_30, %c0_31] : memref<2x10x10x32xf32, #tpu.memory_space<vmem>>, vector<1x1x8x32xf32>
    %38 = vector.shape_cast %37 : vector<1x1x8x32xf32> to vector<8x32xf32>
    %39 = vector.shape_cast %36 : vector<8x32xf32> to vector<1x1x8x32xf32>
    tpu.vector_store %arg60[%c0_29, %c6, %c1_30, %c0_31], %39 {strides = array<i32>} : memref<2x10x10x32xf32, #tpu.memory_space<vmem>>, vector<1x1x8x32xf32>,
    %40 = vector.extract_strided_slice %13 {offsets = [48, 0], sizes = [8, 32], strides = [1, 1]} : vector<128x32xf32> to vector<8x32xf32>
    %c0_32 = arith.constant 0 : index
    %c7 = arith.constant 7 : index
    %c1_33 = arith.constant 1 : index
    %c0_34 = arith.constant 0 : index
    %41 = vector.load %arg60[%c0_32, %c7, %c1_33, %c0_34] : memref<2x10x10x32xf32, #tpu.memory_space<vmem>>, vector<1x1x8x32xf32>
    %42 = vector.shape_cast %41 : vector<1x1x8x32xf32> to vector<8x32xf32>
    %43 = vector.shape_cast %40 : vector<8x32xf32> to vector<1x1x8x32xf32>
    tpu.vector_store %arg60[%c0_32, %c7, %c1_33, %c0_34], %43 {strides = array<i32>} : memref<2x10x10x32xf32, #tpu.memory_space<vmem>>, vector<1x1x8x32xf32>,
    %44 = vector.extract_strided_slice %13 {offsets = [56, 0], sizes = [8, 32], strides = [1, 1]} : vector<128x32xf32> to vector<8x32xf32>
    %c0_35 = arith.constant 0 : index
    %c8 = arith.constant 8 : index
    %c1_36 = arith.constant 1 : index
    %c0_37 = arith.constant 0 : index
    %45 = vector.load %arg60[%c0_35, %c8, %c1_36, %c0_37] : memref<2x10x10x32xf32, #tpu.memory_space<vmem>>, vector<1x1x8x32xf32>
    %46 = vector.shape_cast %45 : vector<1x1x8x32xf32> to vector<8x32xf32>
    %47 = vector.shape_cast %44 : vector<8x32xf32> to vector<1x1x8x32xf32>
    tpu.vector_store %arg60[%c0_35, %c8, %c1_36, %c0_37], %47 {strides = array<i32>} : memref<2x10x10x32xf32, #tpu.memory_space<vmem>>, vector<1x1x8x32xf32>,
    %48 = vector.extract_strided_slice %13 {offsets = [64, 0], sizes = [8, 32], strides = [1, 1]} : vector<128x32xf32> to vector<8x32xf32>
    %c1_38 = arith.constant 1 : index
    %c1_39 = arith.constant 1 : index
    %c1_40 = arith.constant 1 : index
    %c0_41 = arith.constant 0 : index
    %49 = vector.load %arg60[%c1_38, %c1_39, %c1_40, %c0_41] : memref<2x10x10x32xf32, #tpu.memory_space<vmem>>, vector<1x1x8x32xf32>
    %50 = vector.shape_cast %49 : vector<1x1x8x32xf32> to vector<8x32xf32>
    %51 = vector.shape_cast %48 : vector<8x32xf32> to vector<1x1x8x32xf32>
    tpu.vector_store %arg60[%c1_38, %c1_39, %c1_40, %c0_41], %51 {strides = array<i32>} : memref<2x10x10x32xf32, #tpu.memory_space<vmem>>, vector<1x1x8x32xf32>,
    %52 = vector.extract_strided_slice %13 {offsets = [72, 0], sizes = [8, 32], strides = [1, 1]} : vector<128x32xf32> to vector<8x32xf32>
    %c1_42 = arith.constant 1 : index
    %c2_43 = arith.constant 2 : index
    %c1_44 = arith.constant 1 : index
    %c0_45 = arith.constant 0 : index
    %53 = vector.load %arg60[%c1_42, %c2_43, %c1_44, %c0_45] : memref<2x10x10x32xf32, #tpu.memory_space<vmem>>, vector<1x1x8x32xf32>
    %54 = vector.shape_cast %53 : vector<1x1x8x32xf32> to vector<8x32xf32>
    %55 = vector.shape_cast %52 : vector<8x32xf32> to vector<1x1x8x32xf32>
    tpu.vector_store %arg60[%c1_42, %c2_43, %c1_44, %c0_45], %55 {strides = array<i32>} : memref<2x10x10x32xf32, #tpu.memory_space<vmem>>, vector<1x1x8x32xf32>,
    %56 = vector.extract_strided_slice %13 {offsets = [80, 0], sizes = [8, 32], strides = [1, 1]} : vector<128x32xf32> to vector<8x32xf32>
    %c1_46 = arith.constant 1 : index
    %c3_47 = arith.constant 3 : index
    %c1_48 = arith.constant 1 : index
    %c0_49 = arith.constant 0 : index
    %57 = vector.load %arg60[%c1_46, %c3_47, %c1_48, %c0_49] : memref<2x10x10x32xf32, #tpu.memory_space<vmem>>, vector<1x1x8x32xf32>
    %58 = vector.shape_cast %57 : vector<1x1x8x32xf32> to vector<8x32xf32>
    %59 = vector.shape_cast %56 : vector<8x32xf32> to vector<1x1x8x32xf32>
    tpu.vector_store %arg60[%c1_46, %c3_47, %c1_48, %c0_49], %59 {strides = array<i32>} : memref<2x10x10x32xf32, #tpu.memory_space<vmem>>, vector<1x1x8x32xf32>,
    %60 = vector.extract_strided_slice %13 {offsets = [88, 0], sizes = [8, 32], strides = [1, 1]} : vector<128x32xf32> to vector<8x32xf32>
    %c1_50 = arith.constant 1 : index
    %c4_51 = arith.constant 4 : index
    %c1_52 = arith.constant 1 : index
    %c0_53 = arith.constant 0 : index
    %61 = vector.load %arg60[%c1_50, %c4_51, %c1_52, %c0_53] : memref<2x10x10x32xf32, #tpu.memory_space<vmem>>, vector<1x1x8x32xf32>
    %62 = vector.shape_cast %61 : vector<1x1x8x32xf32> to vector<8x32xf32>
    %63 = vector.shape_cast %60 : vector<8x32xf32> to vector<1x1x8x32xf32>
    tpu.vector_store %arg60[%c1_50, %c4_51, %c1_52, %c0_53], %63 {strides = array<i32>} : memref<2x10x10x32xf32, #tpu.memory_space<vmem>>, vector<1x1x8x32xf32>,
    %64 = vector.extract_strided_slice %13 {offsets = [96, 0], sizes = [8, 32], strides = [1, 1]} : vector<128x32xf32> to vector<8x32xf32>
    %c1_54 = arith.constant 1 : index
    %c5_55 = arith.constant 5 : index
    %c1_56 = arith.constant 1 : index
    %c0_57 = arith.constant 0 : index
    %65 = vector.load %arg60[%c1_54, %c5_55, %c1_56, %c0_57] : memref<2x10x10x32xf32, #tpu.memory_space<vmem>>, vector<1x1x8x32xf32>
    %66 = vector.shape_cast %65 : vector<1x1x8x32xf32> to vector<8x32xf32>
    %67 = vector.shape_cast %64 : vector<8x32xf32> to vector<1x1x8x32xf32>
    tpu.vector_store %arg60[%c1_54, %c5_55, %c1_56, %c0_57], %67 {strides = array<i32>} : memref<2x10x10x32xf32, #tpu.memory_space<vmem>>, vector<1x1x8x32xf32>,
    %68 = vector.extract_strided_slice %13 {offsets = [104, 0], sizes = [8, 32], strides = [1, 1]} : vector<128x32xf32> to vector<8x32xf32>
    %c1_58 = arith.constant 1 : index
    %c6_59 = arith.constant 6 : index
    %c1_60 = arith.constant 1 : index
    %c0_61 = arith.constant 0 : index
    %69 = vector.load %arg60[%c1_58, %c6_59, %c1_60, %c0_61] : memref<2x10x10x32xf32, #tpu.memory_space<vmem>>, vector<1x1x8x32xf32>
    %70 = vector.shape_cast %69 : vector<1x1x8x32xf32> to vector<8x32xf32>
    %71 = vector.shape_cast %68 : vector<8x32xf32> to vector<1x1x8x32xf32>
    tpu.vector_store %arg60[%c1_58, %c6_59, %c1_60, %c0_61], %71 {strides = array<i32>} : memref<2x10x10x32xf32, #tpu.memory_space<vmem>>, vector<1x1x8x32xf32>,
    %72 = vector.extract_strided_slice %13 {offsets = [112, 0], sizes = [8, 32], strides = [1, 1]} : vector<128x32xf32> to vector<8x32xf32>
    %c1_62 = arith.constant 1 : index
    %c7_63 = arith.constant 7 : index
    %c1_64 = arith.constant 1 : index
    %c0_65 = arith.constant 0 : index
    %73 = vector.load %arg60[%c1_62, %c7_63, %c1_64, %c0_65] : memref<2x10x10x32xf32, #tpu.memory_space<vmem>>, vector<1x1x8x32xf32>
    %74 = vector.shape_cast %73 : vector<1x1x8x32xf32> to vector<8x32xf32>
    %75 = vector.shape_cast %72 : vector<8x32xf32> to vector<1x1x8x32xf32>
    tpu.vector_store %arg60[%c1_62, %c7_63, %c1_64, %c0_65], %75 {strides = array<i32>} : memref<2x10x10x32xf32, #tpu.memory_space<vmem>>, vector<1x1x8x32xf32>,
    %76 = vector.extract_strided_slice %13 {offsets = [120, 0], sizes = [8, 32], strides = [1, 1]} : vector<128x32xf32> to vector<8x32xf32>
    %c1_66 = arith.constant 1 : index
    %c8_67 = arith.constant 8 : index
    %c1_68 = arith.constant 1 : index
    %c0_69 = arith.constant 0 : index
    %77 = vector.load %arg60[%c1_66, %c8_67, %c1_68, %c0_69] : memref<2x10x10x32xf32, #tpu.memory_space<vmem>>, vector<1x1x8x32xf32>
    %78 = vector.shape_cast %77 : vector<1x1x8x32xf32> to vector<8x32xf32>
    %79 = vector.shape_cast %76 : vector<8x32xf32> to vector<1x1x8x32xf32>
    tpu.vector_store %arg60[%c1_66, %c8_67, %c1_68, %c0_69], %79 {strides = array<i32>} : memref<2x10x10x32xf32, #tpu.memory_space<vmem>>, vector<1x1x8x32xf32>,
    %cst_70 = arith.constant 0.000000e+00 : f32
    %80 = vector.broadcast %cst_70 : f32 to vector<2x8x8x32xf32>
    %c0_71 = arith.constant 0 : index
    %c0_72 = arith.constant 0 : index
    %c0_73 = arith.constant 0 : index
    %c0_74 = arith.constant 0 : index
    %81 = vector.load %arg60[%c0_71, %c0_72, %c0_73, %c0_74] : memref<2x10x10x32xf32, #tpu.memory_space<vmem>>, vector<2x8x8x32xf32>
    %c0_75 = arith.constant 0 : index
    %c0_76 = arith.constant 0 : index
    %82 = vector.load %arg4[%c0_75, %c0_76] : memref<9x32xf32, #tpu.memory_space<vmem>>, vector<1x32xf32>
    %83 = vector.shape_cast %82 : vector<1x32xf32> to vector<1x1x1x32xf32>
    %84 = vector.broadcast %83 : vector<1x1x1x32xf32> to vector<2x8x8x32xf32>
    %85 = arith.mulf %81, %84 : vector<2x8x8x32xf32>
    %86 = arith.addf %80, %85 : vector<2x8x8x32xf32>
    %c0_77 = arith.constant 0 : index
    %c0_78 = arith.constant 0 : index
    %c1_79 = arith.constant 1 : index
    %c0_80 = arith.constant 0 : index
    %87 = vector.load %arg60[%c0_77, %c0_78, %c1_79, %c0_80] : memref<2x10x10x32xf32, #tpu.memory_space<vmem>>, vector<2x8x8x32xf32>
    %c1_81 = arith.constant 1 : index
    %c0_82 = arith.constant 0 : index
    %88 = vector.load %arg4[%c1_81, %c0_82] : memref<9x32xf32, #tpu.memory_space<vmem>>, vector<1x32xf32>
    %89 = vector.shape_cast %88 : vector<1x32xf32> to vector<1x1x1x32xf32>
    %90 = vector.broadcast %89 : vector<1x1x1x32xf32> to vector<2x8x8x32xf32>
    %91 = arith.mulf %87, %90 : vector<2x8x8x32xf32>
    %92 = arith.addf %86, %91 : vector<2x8x8x32xf32>
    %c0_83 = arith.constant 0 : index
    %c0_84 = arith.constant 0 : index
    %c2_85 = arith.constant 2 : index
    %c0_86 = arith.constant 0 : index
    %93 = vector.load %arg60[%c0_83, %c0_84, %c2_85, %c0_86] : memref<2x10x10x32xf32, #tpu.memory_space<vmem>>, vector<2x8x8x32xf32>
    %c2_87 = arith.constant 2 : index
    %c0_88 = arith.constant 0 : index
    %94 = vector.load %arg4[%c2_87, %c0_88] : memref<9x32xf32, #tpu.memory_space<vmem>>, vector<1x32xf32>
    %95 = vector.shape_cast %94 : vector<1x32xf32> to vector<1x1x1x32xf32>
    %96 = vector.broadcast %95 : vector<1x1x1x32xf32> to vector<2x8x8x32xf32>
    %97 = arith.mulf %93, %96 : vector<2x8x8x32xf32>
    %98 = arith.addf %92, %97 : vector<2x8x8x32xf32>
    %c0_89 = arith.constant 0 : index
    %c1_90 = arith.constant 1 : index
    %c0_91 = arith.constant 0 : index
    %c0_92 = arith.constant 0 : index
    %99 = vector.load %arg60[%c0_89, %c1_90, %c0_91, %c0_92] : memref<2x10x10x32xf32, #tpu.memory_space<vmem>>, vector<2x8x8x32xf32>
    %c3_93 = arith.constant 3 : index
    %c0_94 = arith.constant 0 : index
    %100 = vector.load %arg4[%c3_93, %c0_94] : memref<9x32xf32, #tpu.memory_space<vmem>>, vector<1x32xf32>
    %101 = vector.shape_cast %100 : vector<1x32xf32> to vector<1x1x1x32xf32>
    %102 = vector.broadcast %101 : vector<1x1x1x32xf32> to vector<2x8x8x32xf32>
    %103 = arith.mulf %99, %102 : vector<2x8x8x32xf32>
    %104 = arith.addf %98, %103 : vector<2x8x8x32xf32>
    %c0_95 = arith.constant 0 : index
    %c1_96 = arith.constant 1 : index
    %c1_97 = arith.constant 1 : index
    %c0_98 = arith.constant 0 : index
    %105 = vector.load %arg60[%c0_95, %c1_96, %c1_97, %c0_98] : memref<2x10x10x32xf32, #tpu.memory_space<vmem>>, vector<2x8x8x32xf32>
    %c4_99 = arith.constant 4 : index
    %c0_100 = arith.constant 0 : index
    %106 = vector.load %arg4[%c4_99, %c0_100] : memref<9x32xf32, #tpu.memory_space<vmem>>, vector<1x32xf32>
    %107 = vector.shape_cast %106 : vector<1x32xf32> to vector<1x1x1x32xf32>
    %108 = vector.broadcast %107 : vector<1x1x1x32xf32> to vector<2x8x8x32xf32>
    %109 = arith.mulf %105, %108 : vector<2x8x8x32xf32>
    %110 = arith.addf %104, %109 : vector<2x8x8x32xf32>
    %c0_101 = arith.constant 0 : index
    %c1_102 = arith.constant 1 : index
    %c2_103 = arith.constant 2 : index
    %c0_104 = arith.constant 0 : index
    %111 = vector.load %arg60[%c0_101, %c1_102, %c2_103, %c0_104] : memref<2x10x10x32xf32, #tpu.memory_space<vmem>>, vector<2x8x8x32xf32>
    %c5_105 = arith.constant 5 : index
    %c0_106 = arith.constant 0 : index
    %112 = vector.load %arg4[%c5_105, %c0_106] : memref<9x32xf32, #tpu.memory_space<vmem>>, vector<1x32xf32>
    %113 = vector.shape_cast %112 : vector<1x32xf32> to vector<1x1x1x32xf32>
    %114 = vector.broadcast %113 : vector<1x1x1x32xf32> to vector<2x8x8x32xf32>
    %115 = arith.mulf %111, %114 : vector<2x8x8x32xf32>
    %116 = arith.addf %110, %115 : vector<2x8x8x32xf32>
    %c0_107 = arith.constant 0 : index
    %c2_108 = arith.constant 2 : index
    %c0_109 = arith.constant 0 : index
    %c0_110 = arith.constant 0 : index
    %117 = vector.load %arg60[%c0_107, %c2_108, %c0_109, %c0_110] : memref<2x10x10x32xf32, #tpu.memory_space<vmem>>, vector<2x8x8x32xf32>
    %c6_111 = arith.constant 6 : index
    %c0_112 = arith.constant 0 : index
    %118 = vector.load %arg4[%c6_111, %c0_112] : memref<9x32xf32, #tpu.memory_space<vmem>>, vector<1x32xf32>
    %119 = vector.shape_cast %118 : vector<1x32xf32> to vector<1x1x1x32xf32>
    %120 = vector.broadcast %119 : vector<1x1x1x32xf32> to vector<2x8x8x32xf32>
    %121 = arith.mulf %117, %120 : vector<2x8x8x32xf32>
    %122 = arith.addf %116, %121 : vector<2x8x8x32xf32>
    %c0_113 = arith.constant 0 : index
    %c2_114 = arith.constant 2 : index
    %c1_115 = arith.constant 1 : index
    %c0_116 = arith.constant 0 : index
    %123 = vector.load %arg60[%c0_113, %c2_114, %c1_115, %c0_116] : memref<2x10x10x32xf32, #tpu.memory_space<vmem>>, vector<2x8x8x32xf32>
    %c7_117 = arith.constant 7 : index
    %c0_118 = arith.constant 0 : index
    %124 = vector.load %arg4[%c7_117, %c0_118] : memref<9x32xf32, #tpu.memory_space<vmem>>, vector<1x32xf32>
    %125 = vector.shape_cast %124 : vector<1x32xf32> to vector<1x1x1x32xf32>
    %126 = vector.broadcast %125 : vector<1x1x1x32xf32> to vector<2x8x8x32xf32>
    %127 = arith.mulf %123, %126 : vector<2x8x8x32xf32>
    %128 = arith.addf %122, %127 : vector<2x8x8x32xf32>
    %c0_119 = arith.constant 0 : index
    %c2_120 = arith.constant 2 : index
    %c2_121 = arith.constant 2 : index
    %c0_122 = arith.constant 0 : index
    %129 = vector.load %arg60[%c0_119, %c2_120, %c2_121, %c0_122] : memref<2x10x10x32xf32, #tpu.memory_space<vmem>>, vector<2x8x8x32xf32>
    %c8_123 = arith.constant 8 : index
    %c0_124 = arith.constant 0 : index
    %130 = vector.load %arg4[%c8_123, %c0_124] : memref<9x32xf32, #tpu.memory_space<vmem>>, vector<1x32xf32>
    %131 = vector.shape_cast %130 : vector<1x32xf32> to vector<1x1x1x32xf32>
    %132 = vector.broadcast %131 : vector<1x1x1x32xf32> to vector<2x8x8x32xf32>
    %133 = arith.mulf %129, %132 : vector<2x8x8x32xf32>
    %134 = arith.addf %128, %133 : vector<2x8x8x32xf32>
    %c0_125 = arith.constant 0 : index
    %c0_126 = arith.constant 0 : index
    %135 = vector.load %arg5[%c0_125, %c0_126] : memref<1x32xf32, #tpu.memory_space<vmem>>, vector<1x32xf32>
    %136 = vector.shape_cast %135 : vector<1x32xf32> to vector<1x1x1x32xf32>
    %137 = vector.broadcast %136 : vector<1x1x1x32xf32> to vector<2x8x8x32xf32>
    %138 = arith.mulf %134, %137 : vector<2x8x8x32xf32>
    %c0_127 = arith.constant 0 : index
    %c0_128 = arith.constant 0 : index
    %139 = vector.load %arg6[%c0_127, %c0_128] : memref<1x32xf32, #tpu.memory_space<vmem>>, vector<1x32xf32>
    %140 = vector.shape_cast %139 : vector<1x32xf32> to vector<1x1x1x32xf32>
    %141 = vector.broadcast %140 : vector<1x1x1x32xf32> to vector<2x8x8x32xf32>
    %142 = arith.addf %138, %141 : vector<2x8x8x32xf32>
    %cst_129 = arith.constant 0.000000e+00 : f32
    %cst_130 = arith.constant 6.000000e+00 : f32
    %143 = vector.broadcast %cst_129 : f32 to vector<2x8x8x32xf32>
    %144 = arith.maximumf %143, %142 : vector<2x8x8x32xf32>
    %145 = vector.broadcast %cst_130 : f32 to vector<2x8x8x32xf32>
    %146 = arith.minimumf %145, %144 : vector<2x8x8x32xf32>
    %147 = vector.extract_strided_slice %146 {offsets = [0, 0, 0, 0], sizes = [1, 1, 8, 32], strides = [1, 1, 1, 1]} : vector<2x8x8x32xf32> to vector<1x1x8x32xf32>
    %148 = vector.shape_cast %147 : vector<1x1x8x32xf32> to vector<8x32xf32>
    %c0_131 = arith.constant 0 : index
    %c0_132 = arith.constant 0 : index
    %149 = vector.load %arg61[%c0_131, %c0_132] : memref<128x32xf32, #tpu.memory_space<vmem>>, vector<8x32xf32>
    tpu.vector_store %arg61[%c0_131, %c0_132], %148 {strides = array<i32>} : memref<128x32xf32, #tpu.memory_space<vmem>>, vector<8x32xf32>,
    %150 = vector.extract_strided_slice %146 {offsets = [0, 1, 0, 0], sizes = [1, 1, 8, 32], strides = [1, 1, 1, 1]} : vector<2x8x8x32xf32> to vector<1x1x8x32xf32>
    %151 = vector.shape_cast %150 : vector<1x1x8x32xf32> to vector<8x32xf32>
    %c8_133 = arith.constant 8 : index
    %c0_134 = arith.constant 0 : index
    %152 = vector.load %arg61[%c8_133, %c0_134] : memref<128x32xf32, #tpu.memory_space<vmem>>, vector<8x32xf32>
    tpu.vector_store %arg61[%c8_133, %c0_134], %151 {strides = array<i32>} : memref<128x32xf32, #tpu.memory_space<vmem>>, vector<8x32xf32>,
    %153 = vector.extract_strided_slice %146 {offsets = [0, 2, 0, 0], sizes = [1, 1, 8, 32], strides = [1, 1, 1, 1]} : vector<2x8x8x32xf32> to vector<1x1x8x32xf32>
    %154 = vector.shape_cast %153 : vector<1x1x8x32xf32> to vector<8x32xf32>
    %c16 = arith.constant 16 : index
    %c0_135 = arith.constant 0 : index
    %155 = vector.load %arg61[%c16, %c0_135] : memref<128x32xf32, #tpu.memory_space<vmem>>, vector<8x32xf32>
    tpu.vector_store %arg61[%c16, %c0_135], %154 {strides = array<i32>} : memref<128x32xf32, #tpu.memory_space<vmem>>, vector<8x32xf32>,
    %156 = vector.extract_strided_slice %146 {offsets = [0, 3, 0, 0], sizes = [1, 1, 8, 32], strides = [1, 1, 1, 1]} : vector<2x8x8x32xf32> to vector<1x1x8x32xf32>
    %157 = vector.shape_cast %156 : vector<1x1x8x32xf32> to vector<8x32xf32>
    %c24 = arith.constant 24 : index
    %c0_136 = arith.constant 0 : index
    %158 = vector.load %arg61[%c24, %c0_136] : memref<128x32xf32, #tpu.memory_space<vmem>>, vector<8x32xf32>
    tpu.vector_store %arg61[%c24, %c0_136], %157 {strides = array<i32>} : memref<128x32xf32, #tpu.memory_space<vmem>>, vector<8x32xf32>,
    %159 = vector.extract_strided_slice %146 {offsets = [0, 4, 0, 0], sizes = [1, 1, 8, 32], strides = [1, 1, 1, 1]} : vector<2x8x8x32xf32> to vector<1x1x8x32xf32>
    %160 = vector.shape_cast %159 : vector<1x1x8x32xf32> to vector<8x32xf32>
    %c32 = arith.constant 32 : index
    %c0_137 = arith.constant 0 : index
    %161 = vector.load %arg61[%c32, %c0_137] : memref<128x32xf32, #tpu.memory_space<vmem>>, vector<8x32xf32>
    tpu.vector_store %arg61[%c32, %c0_137], %160 {strides = array<i32>} : memref<128x32xf32, #tpu.memory_space<vmem>>, vector<8x32xf32>,
    %162 = vector.extract_strided_slice %146 {offsets = [0, 5, 0, 0], sizes = [1, 1, 8, 32], strides = [1, 1, 1, 1]} : vector<2x8x8x32xf32> to vector<1x1x8x32xf32>
    %163 = vector.shape_cast %162 : vector<1x1x8x32xf32> to vector<8x32xf32>
    %c40 = arith.constant 40 : index
    %c0_138 = arith.constant 0 : index
    %164 = vector.load %arg61[%c40, %c0_138] : memref<128x32xf32, #tpu.memory_space<vmem>>, vector<8x32xf32>
    tpu.vector_store %arg61[%c40, %c0_138], %163 {strides = array<i32>} : memref<128x32xf32, #tpu.memory_space<vmem>>, vector<8x32xf32>,
    %165 = vector.extract_strided_slice %146 {offsets = [0, 6, 0, 0], sizes = [1, 1, 8, 32], strides = [1, 1, 1, 1]} : vector<2x8x8x32xf32> to vector<1x1x8x32xf32>
    %166 = vector.shape_cast %165 : vector<1x1x8x32xf32> to vector<8x32xf32>
    %c48 = arith.constant 48 : index
    %c0_139 = arith.constant 0 : index
    %167 = vector.load %arg61[%c48, %c0_139] : memref<128x32xf32, #tpu.memory_space<vmem>>, vector<8x32xf32>
    tpu.vector_store %arg61[%c48, %c0_139], %166 {strides = array<i32>} : memref<128x32xf32, #tpu.memory_space<vmem>>, vector<8x32xf32>,
    %168 = vector.extract_strided_slice %146 {offsets = [0, 7, 0, 0], sizes = [1, 1, 8, 32], strides = [1, 1, 1, 1]} : vector<2x8x8x32xf32> to vector<1x1x8x32xf32>
    %169 = vector.shape_cast %168 : vector<1x1x8x32xf32> to vector<8x32xf32>
    %c56 = arith.constant 56 : index
    %c0_140 = arith.constant 0 : index
    %170 = vector.load %arg61[%c56, %c0_140] : memref<128x32xf32, #tpu.memory_space<vmem>>, vector<8x32xf32>
    tpu.vector_store %arg61[%c56, %c0_140], %169 {strides = array<i32>} : memref<128x32xf32, #tpu.memory_space<vmem>>, vector<8x32xf32>,
    %171 = vector.extract_strided_slice %146 {offsets = [1, 0, 0, 0], sizes = [1, 1, 8, 32], strides = [1, 1, 1, 1]} : vector<2x8x8x32xf32> to vector<1x1x8x32xf32>
    %172 = vector.shape_cast %171 : vector<1x1x8x32xf32> to vector<8x32xf32>
    %c64 = arith.constant 64 : index
    %c0_141 = arith.constant 0 : index
    %173 = vector.load %arg61[%c64, %c0_141] : memref<128x32xf32, #tpu.memory_space<vmem>>, vector<8x32xf32>
    tpu.vector_store %arg61[%c64, %c0_141], %172 {strides = array<i32>} : memref<128x32xf32, #tpu.memory_space<vmem>>, vector<8x32xf32>,
    %174 = vector.extract_strided_slice %146 {offsets = [1, 1, 0, 0], sizes = [1, 1, 8, 32], strides = [1, 1, 1, 1]} : vector<2x8x8x32xf32> to vector<1x1x8x32xf32>
    %175 = vector.shape_cast %174 : vector<1x1x8x32xf32> to vector<8x32xf32>
    %c72 = arith.constant 72 : index
    %c0_142 = arith.constant 0 : index
    %176 = vector.load %arg61[%c72, %c0_142] : memref<128x32xf32, #tpu.memory_space<vmem>>, vector<8x32xf32>
    tpu.vector_store %arg61[%c72, %c0_142], %175 {strides = array<i32>} : memref<128x32xf32, #tpu.memory_space<vmem>>, vector<8x32xf32>,
    %177 = vector.extract_strided_slice %146 {offsets = [1, 2, 0, 0], sizes = [1, 1, 8, 32], strides = [1, 1, 1, 1]} : vector<2x8x8x32xf32> to vector<1x1x8x32xf32>
    %178 = vector.shape_cast %177 : vector<1x1x8x32xf32> to vector<8x32xf32>
    %c80 = arith.constant 80 : index
    %c0_143 = arith.constant 0 : index
    %179 = vector.load %arg61[%c80, %c0_143] : memref<128x32xf32, #tpu.memory_space<vmem>>, vector<8x32xf32>
    tpu.vector_store %arg61[%c80, %c0_143], %178 {strides = array<i32>} : memref<128x32xf32, #tpu.memory_space<vmem>>, vector<8x32xf32>,
    %180 = vector.extract_strided_slice %146 {offsets = [1, 3, 0, 0], sizes = [1, 1, 8, 32], strides = [1, 1, 1, 1]} : vector<2x8x8x32xf32> to vector<1x1x8x32xf32>
    %181 = vector.shape_cast %180 : vector<1x1x8x32xf32> to vector<8x32xf32>
    %c88 = arith.constant 88 : index
    %c0_144 = arith.constant 0 : index
    %182 = vector.load %arg61[%c88, %c0_144] : memref<128x32xf32, #tpu.memory_space<vmem>>, vector<8x32xf32>
    tpu.vector_store %arg61[%c88, %c0_144], %181 {strides = array<i32>} : memref<128x32xf32, #tpu.memory_space<vmem>>, vector<8x32xf32>,
    %183 = vector.extract_strided_slice %146 {offsets = [1, 4, 0, 0], sizes = [1, 1, 8, 32], strides = [1, 1, 1, 1]} : vector<2x8x8x32xf32> to vector<1x1x8x32xf32>
    %184 = vector.shape_cast %183 : vector<1x1x8x32xf32> to vector<8x32xf32>
    %c96 = arith.constant 96 : index
    %c0_145 = arith.constant 0 : index
    %185 = vector.load %arg61[%c96, %c0_145] : memref<128x32xf32, #tpu.memory_space<vmem>>, vector<8x32xf32>
    tpu.vector_store %arg61[%c96, %c0_145], %184 {strides = array<i32>} : memref<128x32xf32, #tpu.memory_space<vmem>>, vector<8x32xf32>,
    %186 = vector.extract_strided_slice %146 {offsets = [1, 5, 0, 0], sizes = [1, 1, 8, 32], strides = [1, 1, 1, 1]} : vector<2x8x8x32xf32> to vector<1x1x8x32xf32>
    %187 = vector.shape_cast %186 : vector<1x1x8x32xf32> to vector<8x32xf32>
    %c104 = arith.constant 104 : index
    %c0_146 = arith.constant 0 : index
    %188 = vector.load %arg61[%c104, %c0_146] : memref<128x32xf32, #tpu.memory_space<vmem>>, vector<8x32xf32>
    tpu.vector_store %arg61[%c104, %c0_146], %187 {strides = array<i32>} : memref<128x32xf32, #tpu.memory_space<vmem>>, vector<8x32xf32>,
    %189 = vector.extract_strided_slice %146 {offsets = [1, 6, 0, 0], sizes = [1, 1, 8, 32], strides = [1, 1, 1, 1]} : vector<2x8x8x32xf32> to vector<1x1x8x32xf32>
    %190 = vector.shape_cast %189 : vector<1x1x8x32xf32> to vector<8x32xf32>
    %c112 = arith.constant 112 : index
    %c0_147 = arith.constant 0 : index
    %191 = vector.load %arg61[%c112, %c0_147] : memref<128x32xf32, #tpu.memory_space<vmem>>, vector<8x32xf32>
    tpu.vector_store %arg61[%c112, %c0_147], %190 {strides = array<i32>} : memref<128x32xf32, #tpu.memory_space<vmem>>, vector<8x32xf32>,
    %192 = vector.extract_strided_slice %146 {offsets = [1, 7, 0, 0], sizes = [1, 1, 8, 32], strides = [1, 1, 1, 1]} : vector<2x8x8x32xf32> to vector<1x1x8x32xf32>
    %193 = vector.shape_cast %192 : vector<1x1x8x32xf32> to vector<8x32xf32>
    %c120 = arith.constant 120 : index
    %c0_148 = arith.constant 0 : index
    %194 = vector.load %arg61[%c120, %c0_148] : memref<128x32xf32, #tpu.memory_space<vmem>>, vector<8x32xf32>
    tpu.vector_store %arg61[%c120, %c0_148], %193 {strides = array<i32>} : memref<128x32xf32, #tpu.memory_space<vmem>>, vector<8x32xf32>,
    %c0_149 = arith.constant 0 : index
    %c0_150 = arith.constant 0 : index
    %195 = vector.load %arg61[%c0_149, %c0_150] : memref<128x32xf32, #tpu.memory_space<vmem>>, vector<128x32xf32>
    %196 = arith.truncf %195 : vector<128x32xf32> to vector<128x32xbf16>
    %c0_151 = arith.constant 0 : index
    %c0_152 = arith.constant 0 : index
    %197 = vector.load %arg7[%c0_151, %c0_152] : memref<32x16xbf16, #tpu.memory_space<vmem>>, vector<32x16xbf16>
    %cst_153 = arith.constant dense<0.000000e+00> : vector<128x16xf32>
    %198 = tpu.matmul %196, %197, %cst_153 {dimension_numbers = #tpu.dot_dimension_numbers<[1], [0], [0], [1], [0, 0, 1, 1], [], []>} : vector<128x32xbf16>, vector<32x16xbf16>, vector<128x16xf32> -> vector<128x16xf32>
    %c0_154 = arith.constant 0 : index
    %c0_155 = arith.constant 0 : index
    %199 = vector.load %arg8[%c0_154, %c0_155] : memref<1x16xf32, #tpu.memory_space<vmem>>, vector<1x16xf32>
    %200 = vector.broadcast %199 : vector<1x16xf32> to vector<128x16xf32>
    %201 = arith.mulf %198, %200 : vector<128x16xf32>
    %c0_156 = arith.constant 0 : index
    %c0_157 = arith.constant 0 : index
    %202 = vector.load %arg9[%c0_156, %c0_157] : memref<1x16xf32, #tpu.memory_space<vmem>>, vector<1x16xf32>
    %203 = vector.broadcast %202 : vector<1x16xf32> to vector<128x16xf32>
    %204 = arith.addf %201, %203 : vector<128x16xf32>
    %205 = arith.truncf %204 : vector<128x16xf32> to vector<128x16xbf16>
    %c0_158 = arith.constant 0 : index
    %c0_159 = arith.constant 0 : index
    %206 = vector.load %arg10[%c0_158, %c0_159] : memref<16x96xbf16, #tpu.memory_space<vmem>>, vector<16x96xbf16>
    %cst_160 = arith.constant dense<0.000000e+00> : vector<128x96xf32>
    %207 = tpu.matmul %205, %206, %cst_160 {dimension_numbers = #tpu.dot_dimension_numbers<[1], [0], [0], [1], [0, 0, 1, 1], [], []>} : vector<128x16xbf16>, vector<16x96xbf16>, vector<128x96xf32> -> vector<128x96xf32>
    %c0_161 = arith.constant 0 : index
    %c0_162 = arith.constant 0 : index
    %208 = vector.load %arg11[%c0_161, %c0_162] : memref<1x96xf32, #tpu.memory_space<vmem>>, vector<1x96xf32>
    %209 = vector.broadcast %208 : vector<1x96xf32> to vector<128x96xf32>
    %210 = arith.mulf %207, %209 : vector<128x96xf32>
    %c0_163 = arith.constant 0 : index
    %c0_164 = arith.constant 0 : index
    %211 = vector.load %arg12[%c0_163, %c0_164] : memref<1x96xf32, #tpu.memory_space<vmem>>, vector<1x96xf32>
    %212 = vector.broadcast %211 : vector<1x96xf32> to vector<128x96xf32>
    %213 = arith.addf %210, %212 : vector<128x96xf32>
    %cst_165 = arith.constant 0.000000e+00 : f32
    %cst_166 = arith.constant 6.000000e+00 : f32
    %214 = vector.broadcast %cst_165 : f32 to vector<128x96xf32>
    %215 = arith.maximumf %214, %213 : vector<128x96xf32>
    %216 = vector.broadcast %cst_166 : f32 to vector<128x96xf32>
    %217 = arith.minimumf %216, %215 : vector<128x96xf32>
    %cst_167 = arith.constant 0.000000e+00 : f32
    %218 = vector.broadcast %cst_167 : f32 to vector<2x10x10x96xf32>
    %c0_168 = arith.constant 0 : index
    %c0_169 = arith.constant 0 : index
    %c0_170 = arith.constant 0 : index
    %c0_171 = arith.constant 0 : index
    %219 = vector.load %arg62[%c0_168, %c0_169, %c0_170, %c0_171] : memref<2x10x10x96xf32, #tpu.memory_space<vmem>>, vector<2x10x10x96xf32>
    tpu.vector_store %arg62[%c0_168, %c0_169, %c0_170, %c0_171], %218 {strides = array<i32>} : memref<2x10x10x96xf32, #tpu.memory_space<vmem>>, vector<2x10x10x96xf32>,
    %220 = vector.extract_strided_slice %217 {offsets = [0, 0], sizes = [8, 96], strides = [1, 1]} : vector<128x96xf32> to vector<8x96xf32>
    %c0_172 = arith.constant 0 : index
    %c1_173 = arith.constant 1 : index
    %c1_174 = arith.constant 1 : index
    %c0_175 = arith.constant 0 : index
    %221 = vector.load %arg62[%c0_172, %c1_173, %c1_174, %c0_175] : memref<2x10x10x96xf32, #tpu.memory_space<vmem>>, vector<1x1x8x96xf32>
    %222 = vector.shape_cast %221 : vector<1x1x8x96xf32> to vector<8x96xf32>
    %223 = vector.shape_cast %220 : vector<8x96xf32> to vector<1x1x8x96xf32>
    tpu.vector_store %arg62[%c0_172, %c1_173, %c1_174, %c0_175], %223 {strides = array<i32>} : memref<2x10x10x96xf32, #tpu.memory_space<vmem>>, vector<1x1x8x96xf32>,
    %224 = vector.extract_strided_slice %217 {offsets = [8, 0], sizes = [8, 96], strides = [1, 1]} : vector<128x96xf32> to vector<8x96xf32>
    %c0_176 = arith.constant 0 : index
    %c2_177 = arith.constant 2 : index
    %c1_178 = arith.constant 1 : index
    %c0_179 = arith.constant 0 : index
    %225 = vector.load %arg62[%c0_176, %c2_177, %c1_178, %c0_179] : memref<2x10x10x96xf32, #tpu.memory_space<vmem>>, vector<1x1x8x96xf32>
    %226 = vector.shape_cast %225 : vector<1x1x8x96xf32> to vector<8x96xf32>
    %227 = vector.shape_cast %224 : vector<8x96xf32> to vector<1x1x8x96xf32>
    tpu.vector_store %arg62[%c0_176, %c2_177, %c1_178, %c0_179], %227 {strides = array<i32>} : memref<2x10x10x96xf32, #tpu.memory_space<vmem>>, vector<1x1x8x96xf32>,
    %228 = vector.extract_strided_slice %217 {offsets = [16, 0], sizes = [8, 96], strides = [1, 1]} : vector<128x96xf32> to vector<8x96xf32>
    %c0_180 = arith.constant 0 : index
    %c3_181 = arith.constant 3 : index
    %c1_182 = arith.constant 1 : index
    %c0_183 = arith.constant 0 : index
    %229 = vector.load %arg62[%c0_180, %c3_181, %c1_182, %c0_183] : memref<2x10x10x96xf32, #tpu.memory_space<vmem>>, vector<1x1x8x96xf32>
    %230 = vector.shape_cast %229 : vector<1x1x8x96xf32> to vector<8x96xf32>
    %231 = vector.shape_cast %228 : vector<8x96xf32> to vector<1x1x8x96xf32>
    tpu.vector_store %arg62[%c0_180, %c3_181, %c1_182, %c0_183], %231 {strides = array<i32>} : memref<2x10x10x96xf32, #tpu.memory_space<vmem>>, vector<1x1x8x96xf32>,
    %232 = vector.extract_strided_slice %217 {offsets = [24, 0], sizes = [8, 96], strides = [1, 1]} : vector<128x96xf32> to vector<8x96xf32>
    %c0_184 = arith.constant 0 : index
    %c4_185 = arith.constant 4 : index
    %c1_186 = arith.constant 1 : index
    %c0_187 = arith.constant 0 : index
    %233 = vector.load %arg62[%c0_184, %c4_185, %c1_186, %c0_187] : memref<2x10x10x96xf32, #tpu.memory_space<vmem>>, vector<1x1x8x96xf32>
    %234 = vector.shape_cast %233 : vector<1x1x8x96xf32> to vector<8x96xf32>
    %235 = vector.shape_cast %232 : vector<8x96xf32> to vector<1x1x8x96xf32>
    tpu.vector_store %arg62[%c0_184, %c4_185, %c1_186, %c0_187], %235 {strides = array<i32>} : memref<2x10x10x96xf32, #tpu.memory_space<vmem>>, vector<1x1x8x96xf32>,
    %236 = vector.extract_strided_slice %217 {offsets = [32, 0], sizes = [8, 96], strides = [1, 1]} : vector<128x96xf32> to vector<8x96xf32>
    %c0_188 = arith.constant 0 : index
    %c5_189 = arith.constant 5 : index
    %c1_190 = arith.constant 1 : index
    %c0_191 = arith.constant 0 : index
    %237 = vector.load %arg62[%c0_188, %c5_189, %c1_190, %c0_191] : memref<2x10x10x96xf32, #tpu.memory_space<vmem>>, vector<1x1x8x96xf32>
    %238 = vector.shape_cast %237 : vector<1x1x8x96xf32> to vector<8x96xf32>
    %239 = vector.shape_cast %236 : vector<8x96xf32> to vector<1x1x8x96xf32>
    tpu.vector_store %arg62[%c0_188, %c5_189, %c1_190, %c0_191], %239 {strides = array<i32>} : memref<2x10x10x96xf32, #tpu.memory_space<vmem>>, vector<1x1x8x96xf32>,
    %240 = vector.extract_strided_slice %217 {offsets = [40, 0], sizes = [8, 96], strides = [1, 1]} : vector<128x96xf32> to vector<8x96xf32>
    %c0_192 = arith.constant 0 : index
    %c6_193 = arith.constant 6 : index
    %c1_194 = arith.constant 1 : index
    %c0_195 = arith.constant 0 : index
    %241 = vector.load %arg62[%c0_192, %c6_193, %c1_194, %c0_195] : memref<2x10x10x96xf32, #tpu.memory_space<vmem>>, vector<1x1x8x96xf32>
    %242 = vector.shape_cast %241 : vector<1x1x8x96xf32> to vector<8x96xf32>
    %243 = vector.shape_cast %240 : vector<8x96xf32> to vector<1x1x8x96xf32>
    tpu.vector_store %arg62[%c0_192, %c6_193, %c1_194, %c0_195], %243 {strides = array<i32>} : memref<2x10x10x96xf32, #tpu.memory_space<vmem>>, vector<1x1x8x96xf32>,
    %244 = vector.extract_strided_slice %217 {offsets = [48, 0], sizes = [8, 96], strides = [1, 1]} : vector<128x96xf32> to vector<8x96xf32>
    %c0_196 = arith.constant 0 : index
    %c7_197 = arith.constant 7 : index
    %c1_198 = arith.constant 1 : index
    %c0_199 = arith.constant 0 : index
    %245 = vector.load %arg62[%c0_196, %c7_197, %c1_198, %c0_199] : memref<2x10x10x96xf32, #tpu.memory_space<vmem>>, vector<1x1x8x96xf32>
    %246 = vector.shape_cast %245 : vector<1x1x8x96xf32> to vector<8x96xf32>
    %247 = vector.shape_cast %244 : vector<8x96xf32> to vector<1x1x8x96xf32>
    tpu.vector_store %arg62[%c0_196, %c7_197, %c1_198, %c0_199], %247 {strides = array<i32>} : memref<2x10x10x96xf32, #tpu.memory_space<vmem>>, vector<1x1x8x96xf32>,
    %248 = vector.extract_strided_slice %217 {offsets = [56, 0], sizes = [8, 96], strides = [1, 1]} : vector<128x96xf32> to vector<8x96xf32>
    %c0_200 = arith.constant 0 : index
    %c8_201 = arith.constant 8 : index
    %c1_202 = arith.constant 1 : index
    %c0_203 = arith.constant 0 : index
    %249 = vector.load %arg62[%c0_200, %c8_201, %c1_202, %c0_203] : memref<2x10x10x96xf32, #tpu.memory_space<vmem>>, vector<1x1x8x96xf32>
    %250 = vector.shape_cast %249 : vector<1x1x8x96xf32> to vector<8x96xf32>
    %251 = vector.shape_cast %248 : vector<8x96xf32> to vector<1x1x8x96xf32>
    tpu.vector_store %arg62[%c0_200, %c8_201, %c1_202, %c0_203], %251 {strides = array<i32>} : memref<2x10x10x96xf32, #tpu.memory_space<vmem>>, vector<1x1x8x96xf32>,
    %252 = vector.extract_strided_slice %217 {offsets = [64, 0], sizes = [8, 96], strides = [1, 1]} : vector<128x96xf32> to vector<8x96xf32>
    %c1_204 = arith.constant 1 : index
    %c1_205 = arith.constant 1 : index
    %c1_206 = arith.constant 1 : index
    %c0_207 = arith.constant 0 : index
    %253 = vector.load %arg62[%c1_204, %c1_205, %c1_206, %c0_207] : memref<2x10x10x96xf32, #tpu.memory_space<vmem>>, vector<1x1x8x96xf32>
    %254 = vector.shape_cast %253 : vector<1x1x8x96xf32> to vector<8x96xf32>
    %255 = vector.shape_cast %252 : vector<8x96xf32> to vector<1x1x8x96xf32>
    tpu.vector_store %arg62[%c1_204, %c1_205, %c1_206, %c0_207], %255 {strides = array<i32>} : memref<2x10x10x96xf32, #tpu.memory_space<vmem>>, vector<1x1x8x96xf32>,
    %256 = vector.extract_strided_slice %217 {offsets = [72, 0], sizes = [8, 96], strides = [1, 1]} : vector<128x96xf32> to vector<8x96xf32>
    %c1_208 = arith.constant 1 : index
    %c2_209 = arith.constant 2 : index
    %c1_210 = arith.constant 1 : index
    %c0_211 = arith.constant 0 : index
    %257 = vector.load %arg62[%c1_208, %c2_209, %c1_210, %c0_211] : memref<2x10x10x96xf32, #tpu.memory_space<vmem>>, vector<1x1x8x96xf32>
    %258 = vector.shape_cast %257 : vector<1x1x8x96xf32> to vector<8x96xf32>
    %259 = vector.shape_cast %256 : vector<8x96xf32> to vector<1x1x8x96xf32>
    tpu.vector_store %arg62[%c1_208, %c2_209, %c1_210, %c0_211], %259 {strides = array<i32>} : memref<2x10x10x96xf32, #tpu.memory_space<vmem>>, vector<1x1x8x96xf32>,
    %260 = vector.extract_strided_slice %217 {offsets = [80, 0], sizes = [8, 96], strides = [1, 1]} : vector<128x96xf32> to vector<8x96xf32>
    %c1_212 = arith.constant 1 : index
    %c3_213 = arith.constant 3 : index
    %c1_214 = arith.constant 1 : index
    %c0_215 = arith.constant 0 : index
    %261 = vector.load %arg62[%c1_212, %c3_213, %c1_214, %c0_215] : memref<2x10x10x96xf32, #tpu.memory_space<vmem>>, vector<1x1x8x96xf32>
    %262 = vector.shape_cast %261 : vector<1x1x8x96xf32> to vector<8x96xf32>
    %263 = vector.shape_cast %260 : vector<8x96xf32> to vector<1x1x8x96xf32>
    tpu.vector_store %arg62[%c1_212, %c3_213, %c1_214, %c0_215], %263 {strides = array<i32>} : memref<2x10x10x96xf32, #tpu.memory_space<vmem>>, vector<1x1x8x96xf32>,
    %264 = vector.extract_strided_slice %217 {offsets = [88, 0], sizes = [8, 96], strides = [1, 1]} : vector<128x96xf32> to vector<8x96xf32>
    %c1_216 = arith.constant 1 : index
    %c4_217 = arith.constant 4 : index
    %c1_218 = arith.constant 1 : index
    %c0_219 = arith.constant 0 : index
    %265 = vector.load %arg62[%c1_216, %c4_217, %c1_218, %c0_219] : memref<2x10x10x96xf32, #tpu.memory_space<vmem>>, vector<1x1x8x96xf32>
    %266 = vector.shape_cast %265 : vector<1x1x8x96xf32> to vector<8x96xf32>
    %267 = vector.shape_cast %264 : vector<8x96xf32> to vector<1x1x8x96xf32>
    tpu.vector_store %arg62[%c1_216, %c4_217, %c1_218, %c0_219], %267 {strides = array<i32>} : memref<2x10x10x96xf32, #tpu.memory_space<vmem>>, vector<1x1x8x96xf32>,
    %268 = vector.extract_strided_slice %217 {offsets = [96, 0], sizes = [8, 96], strides = [1, 1]} : vector<128x96xf32> to vector<8x96xf32>
    %c1_220 = arith.constant 1 : index
    %c5_221 = arith.constant 5 : index
    %c1_222 = arith.constant 1 : index
    %c0_223 = arith.constant 0 : index
    %269 = vector.load %arg62[%c1_220, %c5_221, %c1_222, %c0_223] : memref<2x10x10x96xf32, #tpu.memory_space<vmem>>, vector<1x1x8x96xf32>
    %270 = vector.shape_cast %269 : vector<1x1x8x96xf32> to vector<8x96xf32>
    %271 = vector.shape_cast %268 : vector<8x96xf32> to vector<1x1x8x96xf32>
    tpu.vector_store %arg62[%c1_220, %c5_221, %c1_222, %c0_223], %271 {strides = array<i32>} : memref<2x10x10x96xf32, #tpu.memory_space<vmem>>, vector<1x1x8x96xf32>,
    %272 = vector.extract_strided_slice %217 {offsets = [104, 0], sizes = [8, 96], strides = [1, 1]} : vector<128x96xf32> to vector<8x96xf32>
    %c1_224 = arith.constant 1 : index
    %c6_225 = arith.constant 6 : index
    %c1_226 = arith.constant 1 : index
    %c0_227 = arith.constant 0 : index
    %273 = vector.load %arg62[%c1_224, %c6_225, %c1_226, %c0_227] : memref<2x10x10x96xf32, #tpu.memory_space<vmem>>, vector<1x1x8x96xf32>
    %274 = vector.shape_cast %273 : vector<1x1x8x96xf32> to vector<8x96xf32>
    %275 = vector.shape_cast %272 : vector<8x96xf32> to vector<1x1x8x96xf32>
    tpu.vector_store %arg62[%c1_224, %c6_225, %c1_226, %c0_227], %275 {strides = array<i32>} : memref<2x10x10x96xf32, #tpu.memory_space<vmem>>, vector<1x1x8x96xf32>,
    %276 = vector.extract_strided_slice %217 {offsets = [112, 0], sizes = [8, 96], strides = [1, 1]} : vector<128x96xf32> to vector<8x96xf32>
    %c1_228 = arith.constant 1 : index
    %c7_229 = arith.constant 7 : index
    %c1_230 = arith.constant 1 : index
    %c0_231 = arith.constant 0 : index
    %277 = vector.load %arg62[%c1_228, %c7_229, %c1_230, %c0_231] : memref<2x10x10x96xf32, #tpu.memory_space<vmem>>, vector<1x1x8x96xf32>
    %278 = vector.shape_cast %277 : vector<1x1x8x96xf32> to vector<8x96xf32>
    %279 = vector.shape_cast %276 : vector<8x96xf32> to vector<1x1x8x96xf32>
    tpu.vector_store %arg62[%c1_228, %c7_229, %c1_230, %c0_231], %279 {strides = array<i32>} : memref<2x10x10x96xf32, #tpu.memory_space<vmem>>, vector<1x1x8x96xf32>,
    %280 = vector.extract_strided_slice %217 {offsets = [120, 0], sizes = [8, 96], strides = [1, 1]} : vector<128x96xf32> to vector<8x96xf32>
    %c1_232 = arith.constant 1 : index
    %c8_233 = arith.constant 8 : index
    %c1_234 = arith.constant 1 : index
    %c0_235 = arith.constant 0 : index
    %281 = vector.load %arg62[%c1_232, %c8_233, %c1_234, %c0_235] : memref<2x10x10x96xf32, #tpu.memory_space<vmem>>, vector<1x1x8x96xf32>
    %282 = vector.shape_cast %281 : vector<1x1x8x96xf32> to vector<8x96xf32>
    %283 = vector.shape_cast %280 : vector<8x96xf32> to vector<1x1x8x96xf32>
    tpu.vector_store %arg62[%c1_232, %c8_233, %c1_234, %c0_235], %283 {strides = array<i32>} : memref<2x10x10x96xf32, #tpu.memory_space<vmem>>, vector<1x1x8x96xf32>,
    %c0_236 = arith.constant 0 : index
    %c0_237 = arith.constant 0 : index
    %284 = vector.load %arg14[%c0_236, %c0_237] : memref<1x96xf32, #tpu.memory_space<vmem>>, vector<1x96xf32>
    %c0_238 = arith.constant 0 : index
    %c0_239 = arith.constant 0 : index
    %285 = vector.load %arg15[%c0_238, %c0_239] : memref<1x96xf32, #tpu.memory_space<vmem>>, vector<1x96xf32>
    %cst_240 = arith.constant 0.000000e+00 : f32
    %286 = vector.broadcast %cst_240 : f32 to vector<2x96xf32>
    %c0_241 = arith.constant 0 : index
    %c0_242 = arith.constant 0 : index
    %c0_243 = arith.constant 0 : index
    %c0_244 = arith.constant 0 : index
    %287 = vector.load %arg62[%c0_241, %c0_242, %c0_243, %c0_244] : memref<2x10x10x96xf32, #tpu.memory_space<vmem>>, vector<2x1x3x96xf32>
    %288 = vector.shape_cast %287 : vector<2x1x3x96xf32> to vector<2x3x96xf32>
    %c0_245 = arith.constant 0 : index
    %c0_246 = arith.constant 0 : index
    %289 = vector.load %arg13[%c0_245, %c0_246] : memref<9x96xf32, #tpu.memory_space<vmem>>, vector<3x96xf32>
    %290 = vector.shape_cast %289 : vector<3x96xf32> to vector<1x3x96xf32>
    %291 = vector.broadcast %290 : vector<1x3x96xf32> to vector<2x3x96xf32>
    %292 = arith.mulf %288, %291 : vector<2x3x96xf32>
    %cst_247 = arith.constant dense<0.000000e+00> : vector<2x96xf32>
    %293 = vector.multi_reduction <add>, %292, %cst_247 [1] : vector<2x3x96xf32> to vector<2x96xf32>
    %294 = arith.addf %286, %293 : vector<2x96xf32>
    %c0_248 = arith.constant 0 : index
    %c1_249 = arith.constant 1 : index
    %c0_250 = arith.constant 0 : index
    %c0_251 = arith.constant 0 : index
    %295 = vector.load %arg62[%c0_248, %c1_249, %c0_250, %c0_251] : memref<2x10x10x96xf32, #tpu.memory_space<vmem>>, vector<2x1x3x96xf32>
    %296 = vector.shape_cast %295 : vector<2x1x3x96xf32> to vector<2x3x96xf32>
    %c3_252 = arith.constant 3 : index
    %c0_253 = arith.constant 0 : index
    %297 = vector.load %arg13[%c3_252, %c0_253] : memref<9x96xf32, #tpu.memory_space<vmem>>, vector<3x96xf32>
    %298 = vector.shape_cast %297 : vector<3x96xf32> to vector<1x3x96xf32>
    %299 = vector.broadcast %298 : vector<1x3x96xf32> to vector<2x3x96xf32>
    %300 = arith.mulf %296, %299 : vector<2x3x96xf32>
    %cst_254 = arith.constant dense<0.000000e+00> : vector<2x96xf32>
    %301 = vector.multi_reduction <add>, %300, %cst_254 [1] : vector<2x3x96xf32> to vector<2x96xf32>
    %302 = arith.addf %294, %301 : vector<2x96xf32>
    %c0_255 = arith.constant 0 : index
    %c2_256 = arith.constant 2 : index
    %c0_257 = arith.constant 0 : index
    %c0_258 = arith.constant 0 : index
    %303 = vector.load %arg62[%c0_255, %c2_256, %c0_257, %c0_258] : memref<2x10x10x96xf32, #tpu.memory_space<vmem>>, vector<2x1x3x96xf32>
    %304 = vector.shape_cast %303 : vector<2x1x3x96xf32> to vector<2x3x96xf32>
    %c6_259 = arith.constant 6 : index
    %c0_260 = arith.constant 0 : index
    %305 = vector.load %arg13[%c6_259, %c0_260] : memref<9x96xf32, #tpu.memory_space<vmem>>, vector<3x96xf32>
    %306 = vector.shape_cast %305 : vector<3x96xf32> to vector<1x3x96xf32>
    %307 = vector.broadcast %306 : vector<1x3x96xf32> to vector<2x3x96xf32>
    %308 = arith.mulf %304, %307 : vector<2x3x96xf32>
    %cst_261 = arith.constant dense<0.000000e+00> : vector<2x96xf32>
    %309 = vector.multi_reduction <add>, %308, %cst_261 [1] : vector<2x3x96xf32> to vector<2x96xf32>
    %310 = arith.addf %302, %309 : vector<2x96xf32>
    %311 = vector.broadcast %284 : vector<1x96xf32> to vector<2x96xf32>
    %312 = arith.mulf %310, %311 : vector<2x96xf32>
    %313 = vector.broadcast %285 : vector<1x96xf32> to vector<2x96xf32>
    %314 = arith.addf %312, %313 : vector<2x96xf32>
    %cst_262 = arith.constant 0.000000e+00 : f32
    %cst_263 = arith.constant 6.000000e+00 : f32
    %315 = vector.broadcast %cst_262 : f32 to vector<2x96xf32>
    %316 = arith.maximumf %315, %314 : vector<2x96xf32>
    %317 = vector.broadcast %cst_263 : f32 to vector<2x96xf32>
    %318 = arith.minimumf %317, %316 : vector<2x96xf32>
    %319 = vector.extract_strided_slice %318 {offsets = [0, 0], sizes = [1, 96], strides = [1, 1]} : vector<2x96xf32> to vector<1x96xf32>
    %c0_264 = arith.constant 0 : index
    %c0_265 = arith.constant 0 : index
    %320 = vector.load %arg63[%c0_264, %c0_265] : memref<32x96xf32, #tpu.memory_space<vmem>>, vector<1x96xf32>
    tpu.vector_store %arg63[%c0_264, %c0_265], %319 {strides = array<i32>} : memref<32x96xf32, #tpu.memory_space<vmem>>, vector<1x96xf32>,
    %321 = vector.extract_strided_slice %318 {offsets = [1, 0], sizes = [1, 96], strides = [1, 1]} : vector<2x96xf32> to vector<1x96xf32>
    %c16_266 = arith.constant 16 : index
    %c0_267 = arith.constant 0 : index
    %322 = vector.load %arg63[%c16_266, %c0_267] : memref<32x96xf32, #tpu.memory_space<vmem>>, vector<1x96xf32>
    tpu.vector_store %arg63[%c16_266, %c0_267], %321 {strides = array<i32>} : memref<32x96xf32, #tpu.memory_space<vmem>>, vector<1x96xf32>,
    %cst_268 = arith.constant 0.000000e+00 : f32
    %323 = vector.broadcast %cst_268 : f32 to vector<2x96xf32>
    %c0_269 = arith.constant 0 : index
    %c0_270 = arith.constant 0 : index
    %c2_271 = arith.constant 2 : index
    %c0_272 = arith.constant 0 : index
    %324 = vector.load %arg62[%c0_269, %c0_270, %c2_271, %c0_272] : memref<2x10x10x96xf32, #tpu.memory_space<vmem>>, vector<2x1x3x96xf32>
    %325 = vector.shape_cast %324 : vector<2x1x3x96xf32> to vector<2x3x96xf32>
    %c0_273 = arith.constant 0 : index
    %c0_274 = arith.constant 0 : index
    %326 = vector.load %arg13[%c0_273, %c0_274] : memref<9x96xf32, #tpu.memory_space<vmem>>, vector<3x96xf32>
    %327 = vector.shape_cast %326 : vector<3x96xf32> to vector<1x3x96xf32>
    %328 = vector.broadcast %327 : vector<1x3x96xf32> to vector<2x3x96xf32>
    %329 = arith.mulf %325, %328 : vector<2x3x96xf32>
    %cst_275 = arith.constant dense<0.000000e+00> : vector<2x96xf32>
    %330 = vector.multi_reduction <add>, %329, %cst_275 [1] : vector<2x3x96xf32> to vector<2x96xf32>
    %331 = arith.addf %323, %330 : vector<2x96xf32>
    %c0_276 = arith.constant 0 : index
    %c1_277 = arith.constant 1 : index
    %c2_278 = arith.constant 2 : index
    %c0_279 = arith.constant 0 : index
    %332 = vector.load %arg62[%c0_276, %c1_277, %c2_278, %c0_279] : memref<2x10x10x96xf32, #tpu.memory_space<vmem>>, vector<2x1x3x96xf32>
    %333 = vector.shape_cast %332 : vector<2x1x3x96xf32> to vector<2x3x96xf32>
    %c3_280 = arith.constant 3 : index
    %c0_281 = arith.constant 0 : index
    %334 = vector.load %arg13[%c3_280, %c0_281] : memref<9x96xf32, #tpu.memory_space<vmem>>, vector<3x96xf32>
    %335 = vector.shape_cast %334 : vector<3x96xf32> to vector<1x3x96xf32>
    %336 = vector.broadcast %335 : vector<1x3x96xf32> to vector<2x3x96xf32>
    %337 = arith.mulf %333, %336 : vector<2x3x96xf32>
    %cst_282 = arith.constant dense<0.000000e+00> : vector<2x96xf32>
    %338 = vector.multi_reduction <add>, %337, %cst_282 [1] : vector<2x3x96xf32> to vector<2x96xf32>
    %339 = arith.addf %331, %338 : vector<2x96xf32>
    %c0_283 = arith.constant 0 : index
    %c2_284 = arith.constant 2 : index
    %c2_285 = arith.constant 2 : index
    %c0_286 = arith.constant 0 : index
    %340 = vector.load %arg62[%c0_283, %c2_284, %c2_285, %c0_286] : memref<2x10x10x96xf32, #tpu.memory_space<vmem>>, vector<2x1x3x96xf32>
    %341 = vector.shape_cast %340 : vector<2x1x3x96xf32> to vector<2x3x96xf32>
    %c6_287 = arith.constant 6 : index
    %c0_288 = arith.constant 0 : index
    %342 = vector.load %arg13[%c6_287, %c0_288] : memref<9x96xf32, #tpu.memory_space<vmem>>, vector<3x96xf32>
    %343 = vector.shape_cast %342 : vector<3x96xf32> to vector<1x3x96xf32>
    %344 = vector.broadcast %343 : vector<1x3x96xf32> to vector<2x3x96xf32>
    %345 = arith.mulf %341, %344 : vector<2x3x96xf32>
    %cst_289 = arith.constant dense<0.000000e+00> : vector<2x96xf32>
    %346 = vector.multi_reduction <add>, %345, %cst_289 [1] : vector<2x3x96xf32> to vector<2x96xf32>
    %347 = arith.addf %339, %346 : vector<2x96xf32>
    %348 = vector.broadcast %284 : vector<1x96xf32> to vector<2x96xf32>
    %349 = arith.mulf %347, %348 : vector<2x96xf32>
    %350 = vector.broadcast %285 : vector<1x96xf32> to vector<2x96xf32>
    %351 = arith.addf %349, %350 : vector<2x96xf32>
    %cst_290 = arith.constant 0.000000e+00 : f32
    %cst_291 = arith.constant 6.000000e+00 : f32
    %352 = vector.broadcast %cst_290 : f32 to vector<2x96xf32>
    %353 = arith.maximumf %352, %351 : vector<2x96xf32>
    %354 = vector.broadcast %cst_291 : f32 to vector<2x96xf32>
    %355 = arith.minimumf %354, %353 : vector<2x96xf32>
    %356 = vector.extract_strided_slice %355 {offsets = [0, 0], sizes = [1, 96], strides = [1, 1]} : vector<2x96xf32> to vector<1x96xf32>
    %c1_292 = arith.constant 1 : index
    %c0_293 = arith.constant 0 : index
    %357 = vector.load %arg63[%c1_292, %c0_293] : memref<32x96xf32, #tpu.memory_space<vmem>>, vector<1x96xf32>
    tpu.vector_store %arg63[%c1_292, %c0_293], %356 {strides = array<i32>} : memref<32x96xf32, #tpu.memory_space<vmem>>, vector<1x96xf32>,
    %358 = vector.extract_strided_slice %355 {offsets = [1, 0], sizes = [1, 96], strides = [1, 1]} : vector<2x96xf32> to vector<1x96xf32>
    %c17 = arith.constant 17 : index
    %c0_294 = arith.constant 0 : index
    %359 = vector.load %arg63[%c17, %c0_294] : memref<32x96xf32, #tpu.memory_space<vmem>>, vector<1x96xf32>
    tpu.vector_store %arg63[%c17, %c0_294], %358 {strides = array<i32>} : memref<32x96xf32, #tpu.memory_space<vmem>>, vector<1x96xf32>,
    %cst_295 = arith.constant 0.000000e+00 : f32
    %360 = vector.broadcast %cst_295 : f32 to vector<2x96xf32>
    %c0_296 = arith.constant 0 : index
    %c0_297 = arith.constant 0 : index
    %c4_298 = arith.constant 4 : index
    %c0_299 = arith.constant 0 : index
    %361 = vector.load %arg62[%c0_296, %c0_297, %c4_298, %c0_299] : memref<2x10x10x96xf32, #tpu.memory_space<vmem>>, vector<2x1x3x96xf32>
    %362 = vector.shape_cast %361 : vector<2x1x3x96xf32> to vector<2x3x96xf32>
    %c0_300 = arith.constant 0 : index
    %c0_301 = arith.constant 0 : index
    %363 = vector.load %arg13[%c0_300, %c0_301] : memref<9x96xf32, #tpu.memory_space<vmem>>, vector<3x96xf32>
    %364 = vector.shape_cast %363 : vector<3x96xf32> to vector<1x3x96xf32>
    %365 = vector.broadcast %364 : vector<1x3x96xf32> to vector<2x3x96xf32>
    %366 = arith.mulf %362, %365 : vector<2x3x96xf32>
    %cst_302 = arith.constant dense<0.000000e+00> : vector<2x96xf32>
    %367 = vector.multi_reduction <add>, %366, %cst_302 [1] : vector<2x3x96xf32> to vector<2x96xf32>
    %368 = arith.addf %360, %367 : vector<2x96xf32>
    %c0_303 = arith.constant 0 : index
    %c1_304 = arith.constant 1 : index
    %c4_305 = arith.constant 4 : index
    %c0_306 = arith.constant 0 : index
    %369 = vector.load %arg62[%c0_303, %c1_304, %c4_305, %c0_306] : memref<2x10x10x96xf32, #tpu.memory_space<vmem>>, vector<2x1x3x96xf32>
    %370 = vector.shape_cast %369 : vector<2x1x3x96xf32> to vector<2x3x96xf32>
    %c3_307 = arith.constant 3 : index
    %c0_308 = arith.constant 0 : index
    %371 = vector.load %arg13[%c3_307, %c0_308] : memref<9x96xf32, #tpu.memory_space<vmem>>, vector<3x96xf32>
    %372 = vector.shape_cast %371 : vector<3x96xf32> to vector<1x3x96xf32>
    %373 = vector.broadcast %372 : vector<1x3x96xf32> to vector<2x3x96xf32>
    %374 = arith.mulf %370, %373 : vector<2x3x96xf32>
    %cst_309 = arith.constant dense<0.000000e+00> : vector<2x96xf32>
    %375 = vector.multi_reduction <add>, %374, %cst_309 [1] : vector<2x3x96xf32> to vector<2x96xf32>
    %376 = arith.addf %368, %375 : vector<2x96xf32>
    %c0_310 = arith.constant 0 : index
    %c2_311 = arith.constant 2 : index
    %c4_312 = arith.constant 4 : index
    %c0_313 = arith.constant 0 : index
    %377 = vector.load %arg62[%c0_310, %c2_311, %c4_312, %c0_313] : memref<2x10x10x96xf32, #tpu.memory_space<vmem>>, vector<2x1x3x96xf32>
    %378 = vector.shape_cast %377 : vector<2x1x3x96xf32> to vector<2x3x96xf32>
    %c6_314 = arith.constant 6 : index
    %c0_315 = arith.constant 0 : index
    %379 = vector.load %arg13[%c6_314, %c0_315] : memref<9x96xf32, #tpu.memory_space<vmem>>, vector<3x96xf32>
    %380 = vector.shape_cast %379 : vector<3x96xf32> to vector<1x3x96xf32>
    %381 = vector.broadcast %380 : vector<1x3x96xf32> to vector<2x3x96xf32>
    %382 = arith.mulf %378, %381 : vector<2x3x96xf32>
    %cst_316 = arith.constant dense<0.000000e+00> : vector<2x96xf32>
    %383 = vector.multi_reduction <add>, %382, %cst_316 [1] : vector<2x3x96xf32> to vector<2x96xf32>
    %384 = arith.addf %376, %383 : vector<2x96xf32>
    %385 = vector.broadcast %284 : vector<1x96xf32> to vector<2x96xf32>
    %386 = arith.mulf %384, %385 : vector<2x96xf32>
    %387 = vector.broadcast %285 : vector<1x96xf32> to vector<2x96xf32>
    %388 = arith.addf %386, %387 : vector<2x96xf32>
    %cst_317 = arith.constant 0.000000e+00 : f32
    %cst_318 = arith.constant 6.000000e+00 : f32
    %389 = vector.broadcast %cst_317 : f32 to vector<2x96xf32>
    %390 = arith.maximumf %389, %388 : vector<2x96xf32>
    %391 = vector.broadcast %cst_318 : f32 to vector<2x96xf32>
    %392 = arith.minimumf %391, %390 : vector<2x96xf32>
    %393 = vector.extract_strided_slice %392 {offsets = [0, 0], sizes = [1, 96], strides = [1, 1]} : vector<2x96xf32> to vector<1x96xf32>
    %c2_319 = arith.constant 2 : index
    %c0_320 = arith.constant 0 : index
    %394 = vector.load %arg63[%c2_319, %c0_320] : memref<32x96xf32, #tpu.memory_space<vmem>>, vector<1x96xf32>
    tpu.vector_store %arg63[%c2_319, %c0_320], %393 {strides = array<i32>} : memref<32x96xf32, #tpu.memory_space<vmem>>, vector<1x96xf32>,
    %395 = vector.extract_strided_slice %392 {offsets = [1, 0], sizes = [1, 96], strides = [1, 1]} : vector<2x96xf32> to vector<1x96xf32>
    %c18 = arith.constant 18 : index
    %c0_321 = arith.constant 0 : index
    %396 = vector.load %arg63[%c18, %c0_321] : memref<32x96xf32, #tpu.memory_space<vmem>>, vector<1x96xf32>
    tpu.vector_store %arg63[%c18, %c0_321], %395 {strides = array<i32>} : memref<32x96xf32, #tpu.memory_space<vmem>>, vector<1x96xf32>,
    %cst_322 = arith.constant 0.000000e+00 : f32
    %397 = vector.broadcast %cst_322 : f32 to vector<2x96xf32>
    %c0_323 = arith.constant 0 : index
    %c0_324 = arith.constant 0 : index
    %c6_325 = arith.constant 6 : index
    %c0_326 = arith.constant 0 : index
    %398 = vector.load %arg62[%c0_323, %c0_324, %c6_325, %c0_326] : memref<2x10x10x96xf32, #tpu.memory_space<vmem>>, vector<2x1x3x96xf32>
    %399 = vector.shape_cast %398 : vector<2x1x3x96xf32> to vector<2x3x96xf32>
    %c0_327 = arith.constant 0 : index
    %c0_328 = arith.constant 0 : index
    %400 = vector.load %arg13[%c0_327, %c0_328] : memref<9x96xf32, #tpu.memory_space<vmem>>, vector<3x96xf32>
    %401 = vector.shape_cast %400 : vector<3x96xf32> to vector<1x3x96xf32>
    %402 = vector.broadcast %401 : vector<1x3x96xf32> to vector<2x3x96xf32>
    %403 = arith.mulf %399, %402 : vector<2x3x96xf32>
    %cst_329 = arith.constant dense<0.000000e+00> : vector<2x96xf32>
    %404 = vector.multi_reduction <add>, %403, %cst_329 [1] : vector<2x3x96xf32> to vector<2x96xf32>
    %405 = arith.addf %397, %404 : vector<2x96xf32>
    %c0_330 = arith.constant 0 : index
    %c1_331 = arith.constant 1 : index
    %c6_332 = arith.constant 6 : index
    %c0_333 = arith.constant 0 : index
    %406 = vector.load %arg62[%c0_330, %c1_331, %c6_332, %c0_333] : memref<2x10x10x96xf32, #tpu.memory_space<vmem>>, vector<2x1x3x96xf32>
    %407 = vector.shape_cast %406 : vector<2x1x3x96xf32> to vector<2x3x96xf32>
    %c3_334 = arith.constant 3 : index
    %c0_335 = arith.constant 0 : index
    %408 = vector.load %arg13[%c3_334, %c0_335] : memref<9x96xf32, #tpu.memory_space<vmem>>, vector<3x96xf32>
    %409 = vector.shape_cast %408 : vector<3x96xf32> to vector<1x3x96xf32>
    %410 = vector.broadcast %409 : vector<1x3x96xf32> to vector<2x3x96xf32>
    %411 = arith.mulf %407, %410 : vector<2x3x96xf32>
    %cst_336 = arith.constant dense<0.000000e+00> : vector<2x96xf32>
    %412 = vector.multi_reduction <add>, %411, %cst_336 [1] : vector<2x3x96xf32> to vector<2x96xf32>
    %413 = arith.addf %405, %412 : vector<2x96xf32>
    %c0_337 = arith.constant 0 : index
    %c2_338 = arith.constant 2 : index
    %c6_339 = arith.constant 6 : index
    %c0_340 = arith.constant 0 : index
    %414 = vector.load %arg62[%c0_337, %c2_338, %c6_339, %c0_340] : memref<2x10x10x96xf32, #tpu.memory_space<vmem>>, vector<2x1x3x96xf32>
    %415 = vector.shape_cast %414 : vector<2x1x3x96xf32> to vector<2x3x96xf32>
    %c6_341 = arith.constant 6 : index
    %c0_342 = arith.constant 0 : index
    %416 = vector.load %arg13[%c6_341, %c0_342] : memref<9x96xf32, #tpu.memory_space<vmem>>, vector<3x96xf32>
    %417 = vector.shape_cast %416 : vector<3x96xf32> to vector<1x3x96xf32>
    %418 = vector.broadcast %417 : vector<1x3x96xf32> to vector<2x3x96xf32>
    %419 = arith.mulf %415, %418 : vector<2x3x96xf32>
    %cst_343 = arith.constant dense<0.000000e+00> : vector<2x96xf32>
    %420 = vector.multi_reduction <add>, %419, %cst_343 [1] : vector<2x3x96xf32> to vector<2x96xf32>
    %421 = arith.addf %413, %420 : vector<2x96xf32>
    %422 = vector.broadcast %284 : vector<1x96xf32> to vector<2x96xf32>
    %423 = arith.mulf %421, %422 : vector<2x96xf32>
    %424 = vector.broadcast %285 : vector<1x96xf32> to vector<2x96xf32>
    %425 = arith.addf %423, %424 : vector<2x96xf32>
    %cst_344 = arith.constant 0.000000e+00 : f32
    %cst_345 = arith.constant 6.000000e+00 : f32
    %426 = vector.broadcast %cst_344 : f32 to vector<2x96xf32>
    %427 = arith.maximumf %426, %425 : vector<2x96xf32>
    %428 = vector.broadcast %cst_345 : f32 to vector<2x96xf32>
    %429 = arith.minimumf %428, %427 : vector<2x96xf32>
    %430 = vector.extract_strided_slice %429 {offsets = [0, 0], sizes = [1, 96], strides = [1, 1]} : vector<2x96xf32> to vector<1x96xf32>
    %c3_346 = arith.constant 3 : index
    %c0_347 = arith.constant 0 : index
    %431 = vector.load %arg63[%c3_346, %c0_347] : memref<32x96xf32, #tpu.memory_space<vmem>>, vector<1x96xf32>
    tpu.vector_store %arg63[%c3_346, %c0_347], %430 {strides = array<i32>} : memref<32x96xf32, #tpu.memory_space<vmem>>, vector<1x96xf32>,
    %432 = vector.extract_strided_slice %429 {offsets = [1, 0], sizes = [1, 96], strides = [1, 1]} : vector<2x96xf32> to vector<1x96xf32>
    %c19 = arith.constant 19 : index
    %c0_348 = arith.constant 0 : index
    %433 = vector.load %arg63[%c19, %c0_348] : memref<32x96xf32, #tpu.memory_space<vmem>>, vector<1x96xf32>
    tpu.vector_store %arg63[%c19, %c0_348], %432 {strides = array<i32>} : memref<32x96xf32, #tpu.memory_space<vmem>>, vector<1x96xf32>,
    %cst_349 = arith.constant 0.000000e+00 : f32
    %434 = vector.broadcast %cst_349 : f32 to vector<2x96xf32>
    %c0_350 = arith.constant 0 : index
    %c2_351 = arith.constant 2 : index
    %c0_352 = arith.constant 0 : index
    %c0_353 = arith.constant 0 : index
    %435 = vector.load %arg62[%c0_350, %c2_351, %c0_352, %c0_353] : memref<2x10x10x96xf32, #tpu.memory_space<vmem>>, vector<2x1x3x96xf32>
    %436 = vector.shape_cast %435 : vector<2x1x3x96xf32> to vector<2x3x96xf32>
    %c0_354 = arith.constant 0 : index
    %c0_355 = arith.constant 0 : index
    %437 = vector.load %arg13[%c0_354, %c0_355] : memref<9x96xf32, #tpu.memory_space<vmem>>, vector<3x96xf32>
    %438 = vector.shape_cast %437 : vector<3x96xf32> to vector<1x3x96xf32>
    %439 = vector.broadcast %438 : vector<1x3x96xf32> to vector<2x3x96xf32>
    %440 = arith.mulf %436, %439 : vector<2x3x96xf32>
    %cst_356 = arith.constant dense<0.000000e+00> : vector<2x96xf32>
    %441 = vector.multi_reduction <add>, %440, %cst_356 [1] : vector<2x3x96xf32> to vector<2x96xf32>
    %442 = arith.addf %434, %441 : vector<2x96xf32>
    %c0_357 = arith.constant 0 : index
    %c3_358 = arith.constant 3 : index
    %c0_359 = arith.constant 0 : index
    %c0_360 = arith.constant 0 : index
    %443 = vector.load %arg62[%c0_357, %c3_358, %c0_359, %c0_360] : memref<2x10x10x96xf32, #tpu.memory_space<vmem>>, vector<2x1x3x96xf32>
    %444 = vector.shape_cast %443 : vector<2x1x3x96xf32> to vector<2x3x96xf32>
    %c3_361 = arith.constant 3 : index
    %c0_362 = arith.constant 0 : index
    %445 = vector.load %arg13[%c3_361, %c0_362] : memref<9x96xf32, #tpu.memory_space<vmem>>, vector<3x96xf32>
    %446 = vector.shape_cast %445 : vector<3x96xf32> to vector<1x3x96xf32>
    %447 = vector.broadcast %446 : vector<1x3x96xf32> to vector<2x3x96xf32>
    %448 = arith.mulf %444, %447 : vector<2x3x96xf32>
    %cst_363 = arith.constant dense<0.000000e+00> : vector<2x96xf32>
    %449 = vector.multi_reduction <add>, %448, %cst_363 [1] : vector<2x3x96xf32> to vector<2x96xf32>
    %450 = arith.addf %442, %449 : vector<2x96xf32>
    %c0_364 = arith.constant 0 : index
    %c4_365 = arith.constant 4 : index
    %c0_366 = arith.constant 0 : index
    %c0_367 = arith.constant 0 : index
    %451 = vector.load %arg62[%c0_364, %c4_365, %c0_366, %c0_367] : memref<2x10x10x96xf32, #tpu.memory_space<vmem>>, vector<2x1x3x96xf32>
    %452 = vector.shape_cast %451 : vector<2x1x3x96xf32> to vector<2x3x96xf32>
    %c6_368 = arith.constant 6 : index
    %c0_369 = arith.constant 0 : index
    %453 = vector.load %arg13[%c6_368, %c0_369] : memref<9x96xf32, #tpu.memory_space<vmem>>, vector<3x96xf32>
    %454 = vector.shape_cast %453 : vector<3x96xf32> to vector<1x3x96xf32>
    %455 = vector.broadcast %454 : vector<1x3x96xf32> to vector<2x3x96xf32>
    %456 = arith.mulf %452, %455 : vector<2x3x96xf32>
    %cst_370 = arith.constant dense<0.000000e+00> : vector<2x96xf32>
    %457 = vector.multi_reduction <add>, %456, %cst_370 [1] : vector<2x3x96xf32> to vector<2x96xf32>
    %458 = arith.addf %450, %457 : vector<2x96xf32>
    %459 = vector.broadcast %284 : vector<1x96xf32> to vector<2x96xf32>
    %460 = arith.mulf %458, %459 : vector<2x96xf32>
    %461 = vector.broadcast %285 : vector<1x96xf32> to vector<2x96xf32>
    %462 = arith.addf %460, %461 : vector<2x96xf32>
    %cst_371 = arith.constant 0.000000e+00 : f32
    %cst_372 = arith.constant 6.000000e+00 : f32
    %463 = vector.broadcast %cst_371 : f32 to vector<2x96xf32>
    %464 = arith.maximumf %463, %462 : vector<2x96xf32>
    %465 = vector.broadcast %cst_372 : f32 to vector<2x96xf32>
    %466 = arith.minimumf %465, %464 : vector<2x96xf32>
    %467 = vector.extract_strided_slice %466 {offsets = [0, 0], sizes = [1, 96], strides = [1, 1]} : vector<2x96xf32> to vector<1x96xf32>
    %c4_373 = arith.constant 4 : index
    %c0_374 = arith.constant 0 : index
    %468 = vector.load %arg63[%c4_373, %c0_374] : memref<32x96xf32, #tpu.memory_space<vmem>>, vector<1x96xf32>
    tpu.vector_store %arg63[%c4_373, %c0_374], %467 {strides = array<i32>} : memref<32x96xf32, #tpu.memory_space<vmem>>, vector<1x96xf32>,
    %469 = vector.extract_strided_slice %466 {offsets = [1, 0], sizes = [1, 96], strides = [1, 1]} : vector<2x96xf32> to vector<1x96xf32>
    %c20 = arith.constant 20 : index
    %c0_375 = arith.constant 0 : index
    %470 = vector.load %arg63[%c20, %c0_375] : memref<32x96xf32, #tpu.memory_space<vmem>>, vector<1x96xf32>
    tpu.vector_store %arg63[%c20, %c0_375], %469 {strides = array<i32>} : memref<32x96xf32, #tpu.memory_space<vmem>>, vector<1x96xf32>,
    %cst_376 = arith.constant 0.000000e+00 : f32
    %471 = vector.broadcast %cst_376 : f32 to vector<2x96xf32>
    %c0_377 = arith.constant 0 : index
    %c2_378 = arith.constant 2 : index
    %c2_379 = arith.constant 2 : index
    %c0_380 = arith.constant 0 : index
    %472 = vector.load %arg62[%c0_377, %c2_378, %c2_379, %c0_380] : memref<2x10x10x96xf32, #tpu.memory_space<vmem>>, vector<2x1x3x96xf32>
    %473 = vector.shape_cast %472 : vector<2x1x3x96xf32> to vector<2x3x96xf32>
    %c0_381 = arith.constant 0 : index
    %c0_382 = arith.constant 0 : index
    %474 = vector.load %arg13[%c0_381, %c0_382] : memref<9x96xf32, #tpu.memory_space<vmem>>, vector<3x96xf32>
    %475 = vector.shape_cast %474 : vector<3x96xf32> to vector<1x3x96xf32>
    %476 = vector.broadcast %475 : vector<1x3x96xf32> to vector<2x3x96xf32>
    %477 = arith.mulf %473, %476 : vector<2x3x96xf32>
    %cst_383 = arith.constant dense<0.000000e+00> : vector<2x96xf32>
    %478 = vector.multi_reduction <add>, %477, %cst_383 [1] : vector<2x3x96xf32> to vector<2x96xf32>
    %479 = arith.addf %471, %478 : vector<2x96xf32>
    %c0_384 = arith.constant 0 : index
    %c3_385 = arith.constant 3 : index
    %c2_386 = arith.constant 2 : index
    %c0_387 = arith.constant 0 : index
    %480 = vector.load %arg62[%c0_384, %c3_385, %c2_386, %c0_387] : memref<2x10x10x96xf32, #tpu.memory_space<vmem>>, vector<2x1x3x96xf32>
    %481 = vector.shape_cast %480 : vector<2x1x3x96xf32> to vector<2x3x96xf32>
    %c3_388 = arith.constant 3 : index
    %c0_389 = arith.constant 0 : index
    %482 = vector.load %arg13[%c3_388, %c0_389] : memref<9x96xf32, #tpu.memory_space<vmem>>, vector<3x96xf32>
    %483 = vector.shape_cast %482 : vector<3x96xf32> to vector<1x3x96xf32>
    %484 = vector.broadcast %483 : vector<1x3x96xf32> to vector<2x3x96xf32>
    %485 = arith.mulf %481, %484 : vector<2x3x96xf32>
    %cst_390 = arith.constant dense<0.000000e+00> : vector<2x96xf32>
    %486 = vector.multi_reduction <add>, %485, %cst_390 [1] : vector<2x3x96xf32> to vector<2x96xf32>
    %487 = arith.addf %479, %486 : vector<2x96xf32>
    %c0_391 = arith.constant 0 : index
    %c4_392 = arith.constant 4 : index
    %c2_393 = arith.constant 2 : index
    %c0_394 = arith.constant 0 : index
    %488 = vector.load %arg62[%c0_391, %c4_392, %c2_393, %c0_394] : memref<2x10x10x96xf32, #tpu.memory_space<vmem>>, vector<2x1x3x96xf32>
    %489 = vector.shape_cast %488 : vector<2x1x3x96xf32> to vector<2x3x96xf32>
    %c6_395 = arith.constant 6 : index
    %c0_396 = arith.constant 0 : index
    %490 = vector.load %arg13[%c6_395, %c0_396] : memref<9x96xf32, #tpu.memory_space<vmem>>, vector<3x96xf32>
    %491 = vector.shape_cast %490 : vector<3x96xf32> to vector<1x3x96xf32>
    %492 = vector.broadcast %491 : vector<1x3x96xf32> to vector<2x3x96xf32>
    %493 = arith.mulf %489, %492 : vector<2x3x96xf32>
    %cst_397 = arith.constant dense<0.000000e+00> : vector<2x96xf32>
    %494 = vector.multi_reduction <add>, %493, %cst_397 [1] : vector<2x3x96xf32> to vector<2x96xf32>
    %495 = arith.addf %487, %494 : vector<2x96xf32>
    %496 = vector.broadcast %284 : vector<1x96xf32> to vector<2x96xf32>
    %497 = arith.mulf %495, %496 : vector<2x96xf32>
    %498 = vector.broadcast %285 : vector<1x96xf32> to vector<2x96xf32>
    %499 = arith.addf %497, %498 : vector<2x96xf32>
    %cst_398 = arith.constant 0.000000e+00 : f32
    %cst_399 = arith.constant 6.000000e+00 : f32
    %500 = vector.broadcast %cst_398 : f32 to vector<2x96xf32>
    %501 = arith.maximumf %500, %499 : vector<2x96xf32>
    %502 = vector.broadcast %cst_399 : f32 to vector<2x96xf32>
    %503 = arith.minimumf %502, %501 : vector<2x96xf32>
    %504 = vector.extract_strided_slice %503 {offsets = [0, 0], sizes = [1, 96], strides = [1, 1]} : vector<2x96xf32> to vector<1x96xf32>
    %c5_400 = arith.constant 5 : index
    %c0_401 = arith.constant 0 : index
    %505 = vector.load %arg63[%c5_400, %c0_401] : memref<32x96xf32, #tpu.memory_space<vmem>>, vector<1x96xf32>
    tpu.vector_store %arg63[%c5_400, %c0_401], %504 {strides = array<i32>} : memref<32x96xf32, #tpu.memory_space<vmem>>, vector<1x96xf32>,
    %506 = vector.extract_strided_slice %503 {offsets = [1, 0], sizes = [1, 96], strides = [1, 1]} : vector<2x96xf32> to vector<1x96xf32>
    %c21 = arith.constant 21 : index
    %c0_402 = arith.constant 0 : index
    %507 = vector.load %arg63[%c21, %c0_402] : memref<32x96xf32, #tpu.memory_space<vmem>>, vector<1x96xf32>
    tpu.vector_store %arg63[%c21, %c0_402], %506 {strides = array<i32>} : memref<32x96xf32, #tpu.memory_space<vmem>>, vector<1x96xf32>,
    %cst_403 = arith.constant 0.000000e+00 : f32
    %508 = vector.broadcast %cst_403 : f32 to vector<2x96xf32>
    %c0_404 = arith.constant 0 : index
    %c2_405 = arith.constant 2 : index
    %c4_406 = arith.constant 4 : index
    %c0_407 = arith.constant 0 : index
    %509 = vector.load %arg62[%c0_404, %c2_405, %c4_406, %c0_407] : memref<2x10x10x96xf32, #tpu.memory_space<vmem>>, vector<2x1x3x96xf32>
    %510 = vector.shape_cast %509 : vector<2x1x3x96xf32> to vector<2x3x96xf32>
    %c0_408 = arith.constant 0 : index
    %c0_409 = arith.constant 0 : index
    %511 = vector.load %arg13[%c0_408, %c0_409] : memref<9x96xf32, #tpu.memory_space<vmem>>, vector<3x96xf32>
    %512 = vector.shape_cast %511 : vector<3x96xf32> to vector<1x3x96xf32>
    %513 = vector.broadcast %512 : vector<1x3x96xf32> to vector<2x3x96xf32>
    %514 = arith.mulf %510, %513 : vector<2x3x96xf32>
    %cst_410 = arith.constant dense<0.000000e+00> : vector<2x96xf32>
    %515 = vector.multi_reduction <add>, %514, %cst_410 [1] : vector<2x3x96xf32> to vector<2x96xf32>
    %516 = arith.addf %508, %515 : vector<2x96xf32>
    %c0_411 = arith.constant 0 : index
    %c3_412 = arith.constant 3 : index
    %c4_413 = arith.constant 4 : index
    %c0_414 = arith.constant 0 : index
    %517 = vector.load %arg62[%c0_411, %c3_412, %c4_413, %c0_414] : memref<2x10x10x96xf32, #tpu.memory_space<vmem>>, vector<2x1x3x96xf32>
    %518 = vector.shape_cast %517 : vector<2x1x3x96xf32> to vector<2x3x96xf32>
    %c3_415 = arith.constant 3 : index
    %c0_416 = arith.constant 0 : index
    %519 = vector.load %arg13[%c3_415, %c0_416] : memref<9x96xf32, #tpu.memory_space<vmem>>, vector<3x96xf32>
    %520 = vector.shape_cast %519 : vector<3x96xf32> to vector<1x3x96xf32>
    %521 = vector.broadcast %520 : vector<1x3x96xf32> to vector<2x3x96xf32>
    %522 = arith.mulf %518, %521 : vector<2x3x96xf32>
    %cst_417 = arith.constant dense<0.000000e+00> : vector<2x96xf32>
    %523 = vector.multi_reduction <add>, %522, %cst_417 [1] : vector<2x3x96xf32> to vector<2x96xf32>
    %524 = arith.addf %516, %523 : vector<2x96xf32>
    %c0_418 = arith.constant 0 : index
    %c4_419 = arith.constant 4 : index
    %c4_420 = arith.constant 4 : index
    %c0_421 = arith.constant 0 : index
    %525 = vector.load %arg62[%c0_418, %c4_419, %c4_420, %c0_421] : memref<2x10x10x96xf32, #tpu.memory_space<vmem>>, vector<2x1x3x96xf32>
    %526 = vector.shape_cast %525 : vector<2x1x3x96xf32> to vector<2x3x96xf32>
    %c6_422 = arith.constant 6 : index
    %c0_423 = arith.constant 0 : index
    %527 = vector.load %arg13[%c6_422, %c0_423] : memref<9x96xf32, #tpu.memory_space<vmem>>, vector<3x96xf32>
    %528 = vector.shape_cast %527 : vector<3x96xf32> to vector<1x3x96xf32>
    %529 = vector.broadcast %528 : vector<1x3x96xf32> to vector<2x3x96xf32>
    %530 = arith.mulf %526, %529 : vector<2x3x96xf32>
    %cst_424 = arith.constant dense<0.000000e+00> : vector<2x96xf32>
    %531 = vector.multi_reduction <add>, %530, %cst_424 [1] : vector<2x3x96xf32> to vector<2x96xf32>
    %532 = arith.addf %524, %531 : vector<2x96xf32>
    %533 = vector.broadcast %284 : vector<1x96xf32> to vector<2x96xf32>
    %534 = arith.mulf %532, %533 : vector<2x96xf32>
    %535 = vector.broadcast %285 : vector<1x96xf32> to vector<2x96xf32>
    %536 = arith.addf %534, %535 : vector<2x96xf32>
    %cst_425 = arith.constant 0.000000e+00 : f32
    %cst_426 = arith.constant 6.000000e+00 : f32
    %537 = vector.broadcast %cst_425 : f32 to vector<2x96xf32>
    %538 = arith.maximumf %537, %536 : vector<2x96xf32>
    %539 = vector.broadcast %cst_426 : f32 to vector<2x96xf32>
    %540 = arith.minimumf %539, %538 : vector<2x96xf32>
    %541 = vector.extract_strided_slice %540 {offsets = [0, 0], sizes = [1, 96], strides = [1, 1]} : vector<2x96xf32> to vector<1x96xf32>
    %c6_427 = arith.constant 6 : index
    %c0_428 = arith.constant 0 : index
    %542 = vector.load %arg63[%c6_427, %c0_428] : memref<32x96xf32, #tpu.memory_space<vmem>>, vector<1x96xf32>
    tpu.vector_store %arg63[%c6_427, %c0_428], %541 {strides = array<i32>} : memref<32x96xf32, #tpu.memory_space<vmem>>, vector<1x96xf32>,
    %543 = vector.extract_strided_slice %540 {offsets = [1, 0], sizes = [1, 96], strides = [1, 1]} : vector<2x96xf32> to vector<1x96xf32>
    %c22 = arith.constant 22 : index
    %c0_429 = arith.constant 0 : index
    %544 = vector.load %arg63[%c22, %c0_429] : memref<32x96xf32, #tpu.memory_space<vmem>>, vector<1x96xf32>
    tpu.vector_store %arg63[%c22, %c0_429], %543 {strides = array<i32>} : memref<32x96xf32, #tpu.memory_space<vmem>>, vector<1x96xf32>,
    %cst_430 = arith.constant 0.000000e+00 : f32
    %545 = vector.broadcast %cst_430 : f32 to vector<2x96xf32>
    %c0_431 = arith.constant 0 : index
    %c2_432 = arith.constant 2 : index
    %c6_433 = arith.constant 6 : index
    %c0_434 = arith.constant 0 : index
    %546 = vector.load %arg62[%c0_431, %c2_432, %c6_433, %c0_434] : memref<2x10x10x96xf32, #tpu.memory_space<vmem>>, vector<2x1x3x96xf32>
    %547 = vector.shape_cast %546 : vector<2x1x3x96xf32> to vector<2x3x96xf32>
    %c0_435 = arith.constant 0 : index
    %c0_436 = arith.constant 0 : index
    %548 = vector.load %arg13[%c0_435, %c0_436] : memref<9x96xf32, #tpu.memory_space<vmem>>, vector<3x96xf32>
    %549 = vector.shape_cast %548 : vector<3x96xf32> to vector<1x3x96xf32>
    %550 = vector.broadcast %549 : vector<1x3x96xf32> to vector<2x3x96xf32>
    %551 = arith.mulf %547, %550 : vector<2x3x96xf32>
    %cst_437 = arith.constant dense<0.000000e+00> : vector<2x96xf32>
    %552 = vector.multi_reduction <add>, %551, %cst_437 [1] : vector<2x3x96xf32> to vector<2x96xf32>
    %553 = arith.addf %545, %552 : vector<2x96xf32>
    %c0_438 = arith.constant 0 : index
    %c3_439 = arith.constant 3 : index
    %c6_440 = arith.constant 6 : index
    %c0_441 = arith.constant 0 : index
    %554 = vector.load %arg62[%c0_438, %c3_439, %c6_440, %c0_441] : memref<2x10x10x96xf32, #tpu.memory_space<vmem>>, vector<2x1x3x96xf32>
    %555 = vector.shape_cast %554 : vector<2x1x3x96xf32> to vector<2x3x96xf32>
    %c3_442 = arith.constant 3 : index
    %c0_443 = arith.constant 0 : index
    %556 = vector.load %arg13[%c3_442, %c0_443] : memref<9x96xf32, #tpu.memory_space<vmem>>, vector<3x96xf32>
    %557 = vector.shape_cast %556 : vector<3x96xf32> to vector<1x3x96xf32>
    %558 = vector.broadcast %557 : vector<1x3x96xf32> to vector<2x3x96xf32>
    %559 = arith.mulf %555, %558 : vector<2x3x96xf32>
    %cst_444 = arith.constant dense<0.000000e+00> : vector<2x96xf32>
    %560 = vector.multi_reduction <add>, %559, %cst_444 [1] : vector<2x3x96xf32> to vector<2x96xf32>
    %561 = arith.addf %553, %560 : vector<2x96xf32>
    %c0_445 = arith.constant 0 : index
    %c4_446 = arith.constant 4 : index
    %c6_447 = arith.constant 6 : index
    %c0_448 = arith.constant 0 : index
    %562 = vector.load %arg62[%c0_445, %c4_446, %c6_447, %c0_448] : memref<2x10x10x96xf32, #tpu.memory_space<vmem>>, vector<2x1x3x96xf32>
    %563 = vector.shape_cast %562 : vector<2x1x3x96xf32> to vector<2x3x96xf32>
    %c6_449 = arith.constant 6 : index
    %c0_450 = arith.constant 0 : index
    %564 = vector.load %arg13[%c6_449, %c0_450] : memref<9x96xf32, #tpu.memory_space<vmem>>, vector<3x96xf32>
    %565 = vector.shape_cast %564 : vector<3x96xf32> to vector<1x3x96xf32>
    %566 = vector.broadcast %565 : vector<1x3x96xf32> to vector<2x3x96xf32>
    %567 = arith.mulf %563, %566 : vector<2x3x96xf32>
    %cst_451 = arith.constant dense<0.000000e+00> : vector<2x96xf32>
    %568 = vector.multi_reduction <add>, %567, %cst_451 [1] : vector<2x3x96xf32> to vector<2x96xf32>
    %569 = arith.addf %561, %568 : vector<2x96xf32>
    %570 = vector.broadcast %284 : vector<1x96xf32> to vector<2x96xf32>
    %571 = arith.mulf %569, %570 : vector<2x96xf32>
    %572 = vector.broadcast %285 : vector<1x96xf32> to vector<2x96xf32>
    %573 = arith.addf %571, %572 : vector<2x96xf32>
    %cst_452 = arith.constant 0.000000e+00 : f32
    %cst_453 = arith.constant 6.000000e+00 : f32
    %574 = vector.broadcast %cst_452 : f32 to vector<2x96xf32>
    %575 = arith.maximumf %574, %573 : vector<2x96xf32>
    %576 = vector.broadcast %cst_453 : f32 to vector<2x96xf32>
    %577 = arith.minimumf %576, %575 : vector<2x96xf32>
    %578 = vector.extract_strided_slice %577 {offsets = [0, 0], sizes = [1, 96], strides = [1, 1]} : vector<2x96xf32> to vector<1x96xf32>
    %c7_454 = arith.constant 7 : index
    %c0_455 = arith.constant 0 : index
    %579 = vector.load %arg63[%c7_454, %c0_455] : memref<32x96xf32, #tpu.memory_space<vmem>>, vector<1x96xf32>
    tpu.vector_store %arg63[%c7_454, %c0_455], %578 {strides = array<i32>} : memref<32x96xf32, #tpu.memory_space<vmem>>, vector<1x96xf32>,
    %580 = vector.extract_strided_slice %577 {offsets = [1, 0], sizes = [1, 96], strides = [1, 1]} : vector<2x96xf32> to vector<1x96xf32>
    %c23 = arith.constant 23 : index
    %c0_456 = arith.constant 0 : index
    %581 = vector.load %arg63[%c23, %c0_456] : memref<32x96xf32, #tpu.memory_space<vmem>>, vector<1x96xf32>
    tpu.vector_store %arg63[%c23, %c0_456], %580 {strides = array<i32>} : memref<32x96xf32, #tpu.memory_space<vmem>>, vector<1x96xf32>,
    %cst_457 = arith.constant 0.000000e+00 : f32
    %582 = vector.broadcast %cst_457 : f32 to vector<2x96xf32>
    %c0_458 = arith.constant 0 : index
    %c4_459 = arith.constant 4 : index
    %c0_460 = arith.constant 0 : index
    %c0_461 = arith.constant 0 : index
    %583 = vector.load %arg62[%c0_458, %c4_459, %c0_460, %c0_461] : memref<2x10x10x96xf32, #tpu.memory_space<vmem>>, vector<2x1x3x96xf32>
    %584 = vector.shape_cast %583 : vector<2x1x3x96xf32> to vector<2x3x96xf32>
    %c0_462 = arith.constant 0 : index
    %c0_463 = arith.constant 0 : index
    %585 = vector.load %arg13[%c0_462, %c0_463] : memref<9x96xf32, #tpu.memory_space<vmem>>, vector<3x96xf32>
    %586 = vector.shape_cast %585 : vector<3x96xf32> to vector<1x3x96xf32>
    %587 = vector.broadcast %586 : vector<1x3x96xf32> to vector<2x3x96xf32>
    %588 = arith.mulf %584, %587 : vector<2x3x96xf32>
    %cst_464 = arith.constant dense<0.000000e+00> : vector<2x96xf32>
    %589 = vector.multi_reduction <add>, %588, %cst_464 [1] : vector<2x3x96xf32> to vector<2x96xf32>
    %590 = arith.addf %582, %589 : vector<2x96xf32>
    %c0_465 = arith.constant 0 : index
    %c5_466 = arith.constant 5 : index
    %c0_467 = arith.constant 0 : index
    %c0_468 = arith.constant 0 : index
    %591 = vector.load %arg62[%c0_465, %c5_466, %c0_467, %c0_468] : memref<2x10x10x96xf32, #tpu.memory_space<vmem>>, vector<2x1x3x96xf32>
    %592 = vector.shape_cast %591 : vector<2x1x3x96xf32> to vector<2x3x96xf32>
    %c3_469 = arith.constant 3 : index
    %c0_470 = arith.constant 0 : index
    %593 = vector.load %arg13[%c3_469, %c0_470] : memref<9x96xf32, #tpu.memory_space<vmem>>, vector<3x96xf32>
    %594 = vector.shape_cast %593 : vector<3x96xf32> to vector<1x3x96xf32>
    %595 = vector.broadcast %594 : vector<1x3x96xf32> to vector<2x3x96xf32>
    %596 = arith.mulf %592, %595 : vector<2x3x96xf32>
    %cst_471 = arith.constant dense<0.000000e+00> : vector<2x96xf32>
    %597 = vector.multi_reduction <add>, %596, %cst_471 [1] : vector<2x3x96xf32> to vector<2x96xf32>
    %598 = arith.addf %590, %597 : vector<2x96xf32>
    %c0_472 = arith.constant 0 : index
    %c6_473 = arith.constant 6 : index
    %c0_474 = arith.constant 0 : index
    %c0_475 = arith.constant 0 : index
    %599 = vector.load %arg62[%c0_472, %c6_473, %c0_474, %c0_475] : memref<2x10x10x96xf32, #tpu.memory_space<vmem>>, vector<2x1x3x96xf32>
    %600 = vector.shape_cast %599 : vector<2x1x3x96xf32> to vector<2x3x96xf32>
    %c6_476 = arith.constant 6 : index
    %c0_477 = arith.constant 0 : index
    %601 = vector.load %arg13[%c6_476, %c0_477] : memref<9x96xf32, #tpu.memory_space<vmem>>, vector<3x96xf32>
    %602 = vector.shape_cast %601 : vector<3x96xf32> to vector<1x3x96xf32>
    %603 = vector.broadcast %602 : vector<1x3x96xf32> to vector<2x3x96xf32>
    %604 = arith.mulf %600, %603 : vector<2x3x96xf32>
    %cst_478 = arith.constant dense<0.000000e+00> : vector<2x96xf32>
    %605 = vector.multi_reduction <add>, %604, %cst_478 [1] : vector<2x3x96xf32> to vector<2x96xf32>
    %606 = arith.addf %598, %605 : vector<2x96xf32>
    %607 = vector.broadcast %284 : vector<1x96xf32> to vector<2x96xf32>
    %608 = arith.mulf %606, %607 : vector<2x96xf32>
    %609 = vector.broadcast %285 : vector<1x96xf32> to vector<2x96xf32>
    %610 = arith.addf %608, %609 : vector<2x96xf32>
    %cst_479 = arith.constant 0.000000e+00 : f32
    %cst_480 = arith.constant 6.000000e+00 : f32
    %611 = vector.broadcast %cst_479 : f32 to vector<2x96xf32>
    %612 = arith.maximumf %611, %610 : vector<2x96xf32>
    %613 = vector.broadcast %cst_480 : f32 to vector<2x96xf32>
    %614 = arith.minimumf %613, %612 : vector<2x96xf32>
    %615 = vector.extract_strided_slice %614 {offsets = [0, 0], sizes = [1, 96], strides = [1, 1]} : vector<2x96xf32> to vector<1x96xf32>
    %c8_481 = arith.constant 8 : index
    %c0_482 = arith.constant 0 : index
    %616 = vector.load %arg63[%c8_481, %c0_482] : memref<32x96xf32, #tpu.memory_space<vmem>>, vector<1x96xf32>
    tpu.vector_store %arg63[%c8_481, %c0_482], %615 {strides = array<i32>} : memref<32x96xf32, #tpu.memory_space<vmem>>, vector<1x96xf32>,
    %617 = vector.extract_strided_slice %614 {offsets = [1, 0], sizes = [1, 96], strides = [1, 1]} : vector<2x96xf32> to vector<1x96xf32>
    %c24_483 = arith.constant 24 : index
    %c0_484 = arith.constant 0 : index
    %618 = vector.load %arg63[%c24_483, %c0_484] : memref<32x96xf32, #tpu.memory_space<vmem>>, vector<1x96xf32>
    tpu.vector_store %arg63[%c24_483, %c0_484], %617 {strides = array<i32>} : memref<32x96xf32, #tpu.memory_space<vmem>>, vector<1x96xf32>,
    %cst_485 = arith.constant 0.000000e+00 : f32
    %619 = vector.broadcast %cst_485 : f32 to vector<2x96xf32>
    %c0_486 = arith.constant 0 : index
    %c4_487 = arith.constant 4 : index
    %c2_488 = arith.constant 2 : index
    %c0_489 = arith.constant 0 : index
    %620 = vector.load %arg62[%c0_486, %c4_487, %c2_488, %c0_489] : memref<2x10x10x96xf32, #tpu.memory_space<vmem>>, vector<2x1x3x96xf32>
    %621 = vector.shape_cast %620 : vector<2x1x3x96xf32> to vector<2x3x96xf32>
    %c0_490 = arith.constant 0 : index
    %c0_491 = arith.constant 0 : index
    %622 = vector.load %arg13[%c0_490, %c0_491] : memref<9x96xf32, #tpu.memory_space<vmem>>, vector<3x96xf32>
    %623 = vector.shape_cast %622 : vector<3x96xf32> to vector<1x3x96xf32>
    %624 = vector.broadcast %623 : vector<1x3x96xf32> to vector<2x3x96xf32>
    %625 = arith.mulf %621, %624 : vector<2x3x96xf32>
    %cst_492 = arith.constant dense<0.000000e+00> : vector<2x96xf32>
    %626 = vector.multi_reduction <add>, %625, %cst_492 [1] : vector<2x3x96xf32> to vector<2x96xf32>
    %627 = arith.addf %619, %626 : vector<2x96xf32>
    %c0_493 = arith.constant 0 : index
    %c5_494 = arith.constant 5 : index
    %c2_495 = arith.constant 2 : index
    %c0_496 = arith.constant 0 : index
    %628 = vector.load %arg62[%c0_493, %c5_494, %c2_495, %c0_496] : memref<2x10x10x96xf32, #tpu.memory_space<vmem>>, vector<2x1x3x96xf32>
    %629 = vector.shape_cast %628 : vector<2x1x3x96xf32> to vector<2x3x96xf32>
    %c3_497 = arith.constant 3 : index
    %c0_498 = arith.constant 0 : index
    %630 = vector.load %arg13[%c3_497, %c0_498] : memref<9x96xf32, #tpu.memory_space<vmem>>, vector<3x96xf32>
    %631 = vector.shape_cast %630 : vector<3x96xf32> to vector<1x3x96xf32>
    %632 = vector.broadcast %631 : vector<1x3x96xf32> to vector<2x3x96xf32>
    %633 = arith.mulf %629, %632 : vector<2x3x96xf32>
    %cst_499 = arith.constant dense<0.000000e+00> : vector<2x96xf32>
    %634 = vector.multi_reduction <add>, %633, %cst_499 [1] : vector<2x3x96xf32> to vector<2x96xf32>
    %635 = arith.addf %627, %634 : vector<2x96xf32>
    %c0_500 = arith.constant 0 : index
    %c6_501 = arith.constant 6 : index
    %c2_502 = arith.constant 2 : index
    %c0_503 = arith.constant 0 : index
    %636 = vector.load %arg62[%c0_500, %c6_501, %c2_502, %c0_503] : memref<2x10x10x96xf32, #tpu.memory_space<vmem>>, vector<2x1x3x96xf32>
    %637 = vector.shape_cast %636 : vector<2x1x3x96xf32> to vector<2x3x96xf32>
    %c6_504 = arith.constant 6 : index
    %c0_505 = arith.constant 0 : index
    %638 = vector.load %arg13[%c6_504, %c0_505] : memref<9x96xf32, #tpu.memory_space<vmem>>, vector<3x96xf32>
    %639 = vector.shape_cast %638 : vector<3x96xf32> to vector<1x3x96xf32>
    %640 = vector.broadcast %639 : vector<1x3x96xf32> to vector<2x3x96xf32>
    %641 = arith.mulf %637, %640 : vector<2x3x96xf32>
    %cst_506 = arith.constant dense<0.000000e+00> : vector<2x96xf32>
    %642 = vector.multi_reduction <add>, %641, %cst_506 [1] : vector<2x3x96xf32> to vector<2x96xf32>
    %643 = arith.addf %635, %642 : vector<2x96xf32>
    %644 = vector.broadcast %284 : vector<1x96xf32> to vector<2x96xf32>
    %645 = arith.mulf %643, %644 : vector<2x96xf32>
    %646 = vector.broadcast %285 : vector<1x96xf32> to vector<2x96xf32>
    %647 = arith.addf %645, %646 : vector<2x96xf32>
    %cst_507 = arith.constant 0.000000e+00 : f32
    %cst_508 = arith.constant 6.000000e+00 : f32
    %648 = vector.broadcast %cst_507 : f32 to vector<2x96xf32>
    %649 = arith.maximumf %648, %647 : vector<2x96xf32>
    %650 = vector.broadcast %cst_508 : f32 to vector<2x96xf32>
    %651 = arith.minimumf %650, %649 : vector<2x96xf32>
    %652 = vector.extract_strided_slice %651 {offsets = [0, 0], sizes = [1, 96], strides = [1, 1]} : vector<2x96xf32> to vector<1x96xf32>
    %c9 = arith.constant 9 : index
    %c0_509 = arith.constant 0 : index
    %653 = vector.load %arg63[%c9, %c0_509] : memref<32x96xf32, #tpu.memory_space<vmem>>, vector<1x96xf32>
    tpu.vector_store %arg63[%c9, %c0_509], %652 {strides = array<i32>} : memref<32x96xf32, #tpu.memory_space<vmem>>, vector<1x96xf32>,
    %654 = vector.extract_strided_slice %651 {offsets = [1, 0], sizes = [1, 96], strides = [1, 1]} : vector<2x96xf32> to vector<1x96xf32>
    %c25 = arith.constant 25 : index
    %c0_510 = arith.constant 0 : index
    %655 = vector.load %arg63[%c25, %c0_510] : memref<32x96xf32, #tpu.memory_space<vmem>>, vector<1x96xf32>
    tpu.vector_store %arg63[%c25, %c0_510], %654 {strides = array<i32>} : memref<32x96xf32, #tpu.memory_space<vmem>>, vector<1x96xf32>,
    %cst_511 = arith.constant 0.000000e+00 : f32
    %656 = vector.broadcast %cst_511 : f32 to vector<2x96xf32>
    %c0_512 = arith.constant 0 : index
    %c4_513 = arith.constant 4 : index
    %c4_514 = arith.constant 4 : index
    %c0_515 = arith.constant 0 : index
    %657 = vector.load %arg62[%c0_512, %c4_513, %c4_514, %c0_515] : memref<2x10x10x96xf32, #tpu.memory_space<vmem>>, vector<2x1x3x96xf32>
    %658 = vector.shape_cast %657 : vector<2x1x3x96xf32> to vector<2x3x96xf32>
    %c0_516 = arith.constant 0 : index
    %c0_517 = arith.constant 0 : index
    %659 = vector.load %arg13[%c0_516, %c0_517] : memref<9x96xf32, #tpu.memory_space<vmem>>, vector<3x96xf32>
    %660 = vector.shape_cast %659 : vector<3x96xf32> to vector<1x3x96xf32>
    %661 = vector.broadcast %660 : vector<1x3x96xf32> to vector<2x3x96xf32>
    %662 = arith.mulf %658, %661 : vector<2x3x96xf32>
    %cst_518 = arith.constant dense<0.000000e+00> : vector<2x96xf32>
    %663 = vector.multi_reduction <add>, %662, %cst_518 [1] : vector<2x3x96xf32> to vector<2x96xf32>
    %664 = arith.addf %656, %663 : vector<2x96xf32>
    %c0_519 = arith.constant 0 : index
    %c5_520 = arith.constant 5 : index
    %c4_521 = arith.constant 4 : index
    %c0_522 = arith.constant 0 : index
    %665 = vector.load %arg62[%c0_519, %c5_520, %c4_521, %c0_522] : memref<2x10x10x96xf32, #tpu.memory_space<vmem>>, vector<2x1x3x96xf32>
    %666 = vector.shape_cast %665 : vector<2x1x3x96xf32> to vector<2x3x96xf32>
    %c3_523 = arith.constant 3 : index
    %c0_524 = arith.constant 0 : index
    %667 = vector.load %arg13[%c3_523, %c0_524] : memref<9x96xf32, #tpu.memory_space<vmem>>, vector<3x96xf32>
    %668 = vector.shape_cast %667 : vector<3x96xf32> to vector<1x3x96xf32>
    %669 = vector.broadcast %668 : vector<1x3x96xf32> to vector<2x3x96xf32>
    %670 = arith.mulf %666, %669 : vector<2x3x96xf32>
    %cst_525 = arith.constant dense<0.000000e+00> : vector<2x96xf32>
    %671 = vector.multi_reduction <add>, %670, %cst_525 [1] : vector<2x3x96xf32> to vector<2x96xf32>
    %672 = arith.addf %664, %671 : vector<2x96xf32>
    %c0_526 = arith.constant 0 : index
    %c6_527 = arith.constant 6 : index
    %c4_528 = arith.constant 4 : index
    %c0_529 = arith.constant 0 : index
    %673 = vector.load %arg62[%c0_526, %c6_527, %c4_528, %c0_529] : memref<2x10x10x96xf32, #tpu.memory_space<vmem>>, vector<2x1x3x96xf32>
    %674 = vector.shape_cast %673 : vector<2x1x3x96xf32> to vector<2x3x96xf32>
    %c6_530 = arith.constant 6 : index
    %c0_531 = arith.constant 0 : index
    %675 = vector.load %arg13[%c6_530, %c0_531] : memref<9x96xf32, #tpu.memory_space<vmem>>, vector<3x96xf32>
    %676 = vector.shape_cast %675 : vector<3x96xf32> to vector<1x3x96xf32>
    %677 = vector.broadcast %676 : vector<1x3x96xf32> to vector<2x3x96xf32>
    %678 = arith.mulf %674, %677 : vector<2x3x96xf32>
    %cst_532 = arith.constant dense<0.000000e+00> : vector<2x96xf32>
    %679 = vector.multi_reduction <add>, %678, %cst_532 [1] : vector<2x3x96xf32> to vector<2x96xf32>
    %680 = arith.addf %672, %679 : vector<2x96xf32>
    %681 = vector.broadcast %284 : vector<1x96xf32> to vector<2x96xf32>
    %682 = arith.mulf %680, %681 : vector<2x96xf32>
    %683 = vector.broadcast %285 : vector<1x96xf32> to vector<2x96xf32>
    %684 = arith.addf %682, %683 : vector<2x96xf32>
    %cst_533 = arith.constant 0.000000e+00 : f32
    %cst_534 = arith.constant 6.000000e+00 : f32
    %685 = vector.broadcast %cst_533 : f32 to vector<2x96xf32>
    %686 = arith.maximumf %685, %684 : vector<2x96xf32>
    %687 = vector.broadcast %cst_534 : f32 to vector<2x96xf32>
    %688 = arith.minimumf %687, %686 : vector<2x96xf32>
    %689 = vector.extract_strided_slice %688 {offsets = [0, 0], sizes = [1, 96], strides = [1, 1]} : vector<2x96xf32> to vector<1x96xf32>
    %c10 = arith.constant 10 : index
    %c0_535 = arith.constant 0 : index
    %690 = vector.load %arg63[%c10, %c0_535] : memref<32x96xf32, #tpu.memory_space<vmem>>, vector<1x96xf32>
    tpu.vector_store %arg63[%c10, %c0_535], %689 {strides = array<i32>} : memref<32x96xf32, #tpu.memory_space<vmem>>, vector<1x96xf32>,
    %691 = vector.extract_strided_slice %688 {offsets = [1, 0], sizes = [1, 96], strides = [1, 1]} : vector<2x96xf32> to vector<1x96xf32>
    %c26 = arith.constant 26 : index
    %c0_536 = arith.constant 0 : index
    %692 = vector.load %arg63[%c26, %c0_536] : memref<32x96xf32, #tpu.memory_space<vmem>>, vector<1x96xf32>
    tpu.vector_store %arg63[%c26, %c0_536], %691 {strides = array<i32>} : memref<32x96xf32, #tpu.memory_space<vmem>>, vector<1x96xf32>,
    %cst_537 = arith.constant 0.000000e+00 : f32
    %693 = vector.broadcast %cst_537 : f32 to vector<2x96xf32>
    %c0_538 = arith.constant 0 : index
    %c4_539 = arith.constant 4 : index
    %c6_540 = arith.constant 6 : index
    %c0_541 = arith.constant 0 : index
    %694 = vector.load %arg62[%c0_538, %c4_539, %c6_540, %c0_541] : memref<2x10x10x96xf32, #tpu.memory_space<vmem>>, vector<2x1x3x96xf32>
    %695 = vector.shape_cast %694 : vector<2x1x3x96xf32> to vector<2x3x96xf32>
    %c0_542 = arith.constant 0 : index
    %c0_543 = arith.constant 0 : index
    %696 = vector.load %arg13[%c0_542, %c0_543] : memref<9x96xf32, #tpu.memory_space<vmem>>, vector<3x96xf32>
    %697 = vector.shape_cast %696 : vector<3x96xf32> to vector<1x3x96xf32>
    %698 = vector.broadcast %697 : vector<1x3x96xf32> to vector<2x3x96xf32>
    %699 = arith.mulf %695, %698 : vector<2x3x96xf32>
    %cst_544 = arith.constant dense<0.000000e+00> : vector<2x96xf32>
    %700 = vector.multi_reduction <add>, %699, %cst_544 [1] : vector<2x3x96xf32> to vector<2x96xf32>
    %701 = arith.addf %693, %700 : vector<2x96xf32>
    %c0_545 = arith.constant 0 : index
    %c5_546 = arith.constant 5 : index
    %c6_547 = arith.constant 6 : index
    %c0_548 = arith.constant 0 : index
    %702 = vector.load %arg62[%c0_545, %c5_546, %c6_547, %c0_548] : memref<2x10x10x96xf32, #tpu.memory_space<vmem>>, vector<2x1x3x96xf32>
    %703 = vector.shape_cast %702 : vector<2x1x3x96xf32> to vector<2x3x96xf32>
    %c3_549 = arith.constant 3 : index
    %c0_550 = arith.constant 0 : index
    %704 = vector.load %arg13[%c3_549, %c0_550] : memref<9x96xf32, #tpu.memory_space<vmem>>, vector<3x96xf32>
    %705 = vector.shape_cast %704 : vector<3x96xf32> to vector<1x3x96xf32>
    %706 = vector.broadcast %705 : vector<1x3x96xf32> to vector<2x3x96xf32>
    %707 = arith.mulf %703, %706 : vector<2x3x96xf32>
    %cst_551 = arith.constant dense<0.000000e+00> : vector<2x96xf32>
    %708 = vector.multi_reduction <add>, %707, %cst_551 [1] : vector<2x3x96xf32> to vector<2x96xf32>
    %709 = arith.addf %701, %708 : vector<2x96xf32>
    %c0_552 = arith.constant 0 : index
    %c6_553 = arith.constant 6 : index
    %c6_554 = arith.constant 6 : index
    %c0_555 = arith.constant 0 : index
    %710 = vector.load %arg62[%c0_552, %c6_553, %c6_554, %c0_555] : memref<2x10x10x96xf32, #tpu.memory_space<vmem>>, vector<2x1x3x96xf32>
    %711 = vector.shape_cast %710 : vector<2x1x3x96xf32> to vector<2x3x96xf32>
    %c6_556 = arith.constant 6 : index
    %c0_557 = arith.constant 0 : index
    %712 = vector.load %arg13[%c6_556, %c0_557] : memref<9x96xf32, #tpu.memory_space<vmem>>, vector<3x96xf32>
    %713 = vector.shape_cast %712 : vector<3x96xf32> to vector<1x3x96xf32>
    %714 = vector.broadcast %713 : vector<1x3x96xf32> to vector<2x3x96xf32>
    %715 = arith.mulf %711, %714 : vector<2x3x96xf32>
    %cst_558 = arith.constant dense<0.000000e+00> : vector<2x96xf32>
    %716 = vector.multi_reduction <add>, %715, %cst_558 [1] : vector<2x3x96xf32> to vector<2x96xf32>
    %717 = arith.addf %709, %716 : vector<2x96xf32>
    %718 = vector.broadcast %284 : vector<1x96xf32> to vector<2x96xf32>
    %719 = arith.mulf %717, %718 : vector<2x96xf32>
    %720 = vector.broadcast %285 : vector<1x96xf32> to vector<2x96xf32>
    %721 = arith.addf %719, %720 : vector<2x96xf32>
    %cst_559 = arith.constant 0.000000e+00 : f32
    %cst_560 = arith.constant 6.000000e+00 : f32
    %722 = vector.broadcast %cst_559 : f32 to vector<2x96xf32>
    %723 = arith.maximumf %722, %721 : vector<2x96xf32>
    %724 = vector.broadcast %cst_560 : f32 to vector<2x96xf32>
    %725 = arith.minimumf %724, %723 : vector<2x96xf32>
    %726 = vector.extract_strided_slice %725 {offsets = [0, 0], sizes = [1, 96], strides = [1, 1]} : vector<2x96xf32> to vector<1x96xf32>
    %c11 = arith.constant 11 : index
    %c0_561 = arith.constant 0 : index
    %727 = vector.load %arg63[%c11, %c0_561] : memref<32x96xf32, #tpu.memory_space<vmem>>, vector<1x96xf32>
    tpu.vector_store %arg63[%c11, %c0_561], %726 {strides = array<i32>} : memref<32x96xf32, #tpu.memory_space<vmem>>, vector<1x96xf32>,
    %728 = vector.extract_strided_slice %725 {offsets = [1, 0], sizes = [1, 96], strides = [1, 1]} : vector<2x96xf32> to vector<1x96xf32>
    %c27 = arith.constant 27 : index
    %c0_562 = arith.constant 0 : index
    %729 = vector.load %arg63[%c27, %c0_562] : memref<32x96xf32, #tpu.memory_space<vmem>>, vector<1x96xf32>
    tpu.vector_store %arg63[%c27, %c0_562], %728 {strides = array<i32>} : memref<32x96xf32, #tpu.memory_space<vmem>>, vector<1x96xf32>,
    %cst_563 = arith.constant 0.000000e+00 : f32
    %730 = vector.broadcast %cst_563 : f32 to vector<2x96xf32>
    %c0_564 = arith.constant 0 : index
    %c6_565 = arith.constant 6 : index
    %c0_566 = arith.constant 0 : index
    %c0_567 = arith.constant 0 : index
    %731 = vector.load %arg62[%c0_564, %c6_565, %c0_566, %c0_567] : memref<2x10x10x96xf32, #tpu.memory_space<vmem>>, vector<2x1x3x96xf32>
    %732 = vector.shape_cast %731 : vector<2x1x3x96xf32> to vector<2x3x96xf32>
    %c0_568 = arith.constant 0 : index
    %c0_569 = arith.constant 0 : index
    %733 = vector.load %arg13[%c0_568, %c0_569] : memref<9x96xf32, #tpu.memory_space<vmem>>, vector<3x96xf32>
    %734 = vector.shape_cast %733 : vector<3x96xf32> to vector<1x3x96xf32>
    %735 = vector.broadcast %734 : vector<1x3x96xf32> to vector<2x3x96xf32>
    %736 = arith.mulf %732, %735 : vector<2x3x96xf32>
    %cst_570 = arith.constant dense<0.000000e+00> : vector<2x96xf32>
    %737 = vector.multi_reduction <add>, %736, %cst_570 [1] : vector<2x3x96xf32> to vector<2x96xf32>
    %738 = arith.addf %730, %737 : vector<2x96xf32>
    %c0_571 = arith.constant 0 : index
    %c7_572 = arith.constant 7 : index
    %c0_573 = arith.constant 0 : index
    %c0_574 = arith.constant 0 : index
    %739 = vector.load %arg62[%c0_571, %c7_572, %c0_573, %c0_574] : memref<2x10x10x96xf32, #tpu.memory_space<vmem>>, vector<2x1x3x96xf32>
    %740 = vector.shape_cast %739 : vector<2x1x3x96xf32> to vector<2x3x96xf32>
    %c3_575 = arith.constant 3 : index
    %c0_576 = arith.constant 0 : index
    %741 = vector.load %arg13[%c3_575, %c0_576] : memref<9x96xf32, #tpu.memory_space<vmem>>, vector<3x96xf32>
    %742 = vector.shape_cast %741 : vector<3x96xf32> to vector<1x3x96xf32>
    %743 = vector.broadcast %742 : vector<1x3x96xf32> to vector<2x3x96xf32>
    %744 = arith.mulf %740, %743 : vector<2x3x96xf32>
    %cst_577 = arith.constant dense<0.000000e+00> : vector<2x96xf32>
    %745 = vector.multi_reduction <add>, %744, %cst_577 [1] : vector<2x3x96xf32> to vector<2x96xf32>
    %746 = arith.addf %738, %745 : vector<2x96xf32>
    %c0_578 = arith.constant 0 : index
    %c8_579 = arith.constant 8 : index
    %c0_580 = arith.constant 0 : index
    %c0_581 = arith.constant 0 : index
    %747 = vector.load %arg62[%c0_578, %c8_579, %c0_580, %c0_581] : memref<2x10x10x96xf32, #tpu.memory_space<vmem>>, vector<2x1x3x96xf32>
    %748 = vector.shape_cast %747 : vector<2x1x3x96xf32> to vector<2x3x96xf32>
    %c6_582 = arith.constant 6 : index
    %c0_583 = arith.constant 0 : index
    %749 = vector.load %arg13[%c6_582, %c0_583] : memref<9x96xf32, #tpu.memory_space<vmem>>, vector<3x96xf32>
    %750 = vector.shape_cast %749 : vector<3x96xf32> to vector<1x3x96xf32>
    %751 = vector.broadcast %750 : vector<1x3x96xf32> to vector<2x3x96xf32>
    %752 = arith.mulf %748, %751 : vector<2x3x96xf32>
    %cst_584 = arith.constant dense<0.000000e+00> : vector<2x96xf32>
    %753 = vector.multi_reduction <add>, %752, %cst_584 [1] : vector<2x3x96xf32> to vector<2x96xf32>
    %754 = arith.addf %746, %753 : vector<2x96xf32>
    %755 = vector.broadcast %284 : vector<1x96xf32> to vector<2x96xf32>
    %756 = arith.mulf %754, %755 : vector<2x96xf32>
    %757 = vector.broadcast %285 : vector<1x96xf32> to vector<2x96xf32>
    %758 = arith.addf %756, %757 : vector<2x96xf32>
    %cst_585 = arith.constant 0.000000e+00 : f32
    %cst_586 = arith.constant 6.000000e+00 : f32
    %759 = vector.broadcast %cst_585 : f32 to vector<2x96xf32>
    %760 = arith.maximumf %759, %758 : vector<2x96xf32>
    %761 = vector.broadcast %cst_586 : f32 to vector<2x96xf32>
    %762 = arith.minimumf %761, %760 : vector<2x96xf32>
    %763 = vector.extract_strided_slice %762 {offsets = [0, 0], sizes = [1, 96], strides = [1, 1]} : vector<2x96xf32> to vector<1x96xf32>
    %c12 = arith.constant 12 : index
    %c0_587 = arith.constant 0 : index
    %764 = vector.load %arg63[%c12, %c0_587] : memref<32x96xf32, #tpu.memory_space<vmem>>, vector<1x96xf32>
    tpu.vector_store %arg63[%c12, %c0_587], %763 {strides = array<i32>} : memref<32x96xf32, #tpu.memory_space<vmem>>, vector<1x96xf32>,
    %765 = vector.extract_strided_slice %762 {offsets = [1, 0], sizes = [1, 96], strides = [1, 1]} : vector<2x96xf32> to vector<1x96xf32>
    %c28 = arith.constant 28 : index
    %c0_588 = arith.constant 0 : index
    %766 = vector.load %arg63[%c28, %c0_588] : memref<32x96xf32, #tpu.memory_space<vmem>>, vector<1x96xf32>
    tpu.vector_store %arg63[%c28, %c0_588], %765 {strides = array<i32>} : memref<32x96xf32, #tpu.memory_space<vmem>>, vector<1x96xf32>,
    %cst_589 = arith.constant 0.000000e+00 : f32
    %767 = vector.broadcast %cst_589 : f32 to vector<2x96xf32>
    %c0_590 = arith.constant 0 : index
    %c6_591 = arith.constant 6 : index
    %c2_592 = arith.constant 2 : index
    %c0_593 = arith.constant 0 : index
    %768 = vector.load %arg62[%c0_590, %c6_591, %c2_592, %c0_593] : memref<2x10x10x96xf32, #tpu.memory_space<vmem>>, vector<2x1x3x96xf32>
    %769 = vector.shape_cast %768 : vector<2x1x3x96xf32> to vector<2x3x96xf32>
    %c0_594 = arith.constant 0 : index
    %c0_595 = arith.constant 0 : index
    %770 = vector.load %arg13[%c0_594, %c0_595] : memref<9x96xf32, #tpu.memory_space<vmem>>, vector<3x96xf32>
    %771 = vector.shape_cast %770 : vector<3x96xf32> to vector<1x3x96xf32>
    %772 = vector.broadcast %771 : vector<1x3x96xf32> to vector<2x3x96xf32>
    %773 = arith.mulf %769, %772 : vector<2x3x96xf32>
    %cst_596 = arith.constant dense<0.000000e+00> : vector<2x96xf32>
    %774 = vector.multi_reduction <add>, %773, %cst_596 [1] : vector<2x3x96xf32> to vector<2x96xf32>
    %775 = arith.addf %767, %774 : vector<2x96xf32>
    %c0_597 = arith.constant 0 : index
    %c7_598 = arith.constant 7 : index
    %c2_599 = arith.constant 2 : index
    %c0_600 = arith.constant 0 : index
    %776 = vector.load %arg62[%c0_597, %c7_598, %c2_599, %c0_600] : memref<2x10x10x96xf32, #tpu.memory_space<vmem>>, vector<2x1x3x96xf32>
    %777 = vector.shape_cast %776 : vector<2x1x3x96xf32> to vector<2x3x96xf32>
    %c3_601 = arith.constant 3 : index
    %c0_602 = arith.constant 0 : index
    %778 = vector.load %arg13[%c3_601, %c0_602] : memref<9x96xf32, #tpu.memory_space<vmem>>, vector<3x96xf32>
    %779 = vector.shape_cast %778 : vector<3x96xf32> to vector<1x3x96xf32>
    %780 = vector.broadcast %779 : vector<1x3x96xf32> to vector<2x3x96xf32>
    %781 = arith.mulf %777, %780 : vector<2x3x96xf32>
    %cst_603 = arith.constant dense<0.000000e+00> : vector<2x96xf32>
    %782 = vector.multi_reduction <add>, %781, %cst_603 [1] : vector<2x3x96xf32> to vector<2x96xf32>
    %783 = arith.addf %775, %782 : vector<2x96xf32>
    %c0_604 = arith.constant 0 : index
    %c8_605 = arith.constant 8 : index
    %c2_606 = arith.constant 2 : index
    %c0_607 = arith.constant 0 : index
    %784 = vector.load %arg62[%c0_604, %c8_605, %c2_606, %c0_607] : memref<2x10x10x96xf32, #tpu.memory_space<vmem>>, vector<2x1x3x96xf32>
    %785 = vector.shape_cast %784 : vector<2x1x3x96xf32> to vector<2x3x96xf32>
    %c6_608 = arith.constant 6 : index
    %c0_609 = arith.constant 0 : index
    %786 = vector.load %arg13[%c6_608, %c0_609] : memref<9x96xf32, #tpu.memory_space<vmem>>, vector<3x96xf32>
    %787 = vector.shape_cast %786 : vector<3x96xf32> to vector<1x3x96xf32>
    %788 = vector.broadcast %787 : vector<1x3x96xf32> to vector<2x3x96xf32>
    %789 = arith.mulf %785, %788 : vector<2x3x96xf32>
    %cst_610 = arith.constant dense<0.000000e+00> : vector<2x96xf32>
    %790 = vector.multi_reduction <add>, %789, %cst_610 [1] : vector<2x3x96xf32> to vector<2x96xf32>
    %791 = arith.addf %783, %790 : vector<2x96xf32>
    %792 = vector.broadcast %284 : vector<1x96xf32> to vector<2x96xf32>
    %793 = arith.mulf %791, %792 : vector<2x96xf32>
    %794 = vector.broadcast %285 : vector<1x96xf32> to vector<2x96xf32>
    %795 = arith.addf %793, %794 : vector<2x96xf32>
    %cst_611 = arith.constant 0.000000e+00 : f32
    %cst_612 = arith.constant 6.000000e+00 : f32
    %796 = vector.broadcast %cst_611 : f32 to vector<2x96xf32>
    %797 = arith.maximumf %796, %795 : vector<2x96xf32>
    %798 = vector.broadcast %cst_612 : f32 to vector<2x96xf32>
    %799 = arith.minimumf %798, %797 : vector<2x96xf32>
    %800 = vector.extract_strided_slice %799 {offsets = [0, 0], sizes = [1, 96], strides = [1, 1]} : vector<2x96xf32> to vector<1x96xf32>
    %c13 = arith.constant 13 : index
    %c0_613 = arith.constant 0 : index
    %801 = vector.load %arg63[%c13, %c0_613] : memref<32x96xf32, #tpu.memory_space<vmem>>, vector<1x96xf32>
    tpu.vector_store %arg63[%c13, %c0_613], %800 {strides = array<i32>} : memref<32x96xf32, #tpu.memory_space<vmem>>, vector<1x96xf32>,
    %802 = vector.extract_strided_slice %799 {offsets = [1, 0], sizes = [1, 96], strides = [1, 1]} : vector<2x96xf32> to vector<1x96xf32>
    %c29 = arith.constant 29 : index
    %c0_614 = arith.constant 0 : index
    %803 = vector.load %arg63[%c29, %c0_614] : memref<32x96xf32, #tpu.memory_space<vmem>>, vector<1x96xf32>
    tpu.vector_store %arg63[%c29, %c0_614], %802 {strides = array<i32>} : memref<32x96xf32, #tpu.memory_space<vmem>>, vector<1x96xf32>,
    %cst_615 = arith.constant 0.000000e+00 : f32
    %804 = vector.broadcast %cst_615 : f32 to vector<2x96xf32>
    %c0_616 = arith.constant 0 : index
    %c6_617 = arith.constant 6 : index
    %c4_618 = arith.constant 4 : index
    %c0_619 = arith.constant 0 : index
    %805 = vector.load %arg62[%c0_616, %c6_617, %c4_618, %c0_619] : memref<2x10x10x96xf32, #tpu.memory_space<vmem>>, vector<2x1x3x96xf32>
    %806 = vector.shape_cast %805 : vector<2x1x3x96xf32> to vector<2x3x96xf32>
    %c0_620 = arith.constant 0 : index
    %c0_621 = arith.constant 0 : index
    %807 = vector.load %arg13[%c0_620, %c0_621] : memref<9x96xf32, #tpu.memory_space<vmem>>, vector<3x96xf32>
    %808 = vector.shape_cast %807 : vector<3x96xf32> to vector<1x3x96xf32>
    %809 = vector.broadcast %808 : vector<1x3x96xf32> to vector<2x3x96xf32>
    %810 = arith.mulf %806, %809 : vector<2x3x96xf32>
    %cst_622 = arith.constant dense<0.000000e+00> : vector<2x96xf32>
    %811 = vector.multi_reduction <add>, %810, %cst_622 [1] : vector<2x3x96xf32> to vector<2x96xf32>
    %812 = arith.addf %804, %811 : vector<2x96xf32>
    %c0_623 = arith.constant 0 : index
    %c7_624 = arith.constant 7 : index
    %c4_625 = arith.constant 4 : index
    %c0_626 = arith.constant 0 : index
    %813 = vector.load %arg62[%c0_623, %c7_624, %c4_625, %c0_626] : memref<2x10x10x96xf32, #tpu.memory_space<vmem>>, vector<2x1x3x96xf32>
    %814 = vector.shape_cast %813 : vector<2x1x3x96xf32> to vector<2x3x96xf32>
    %c3_627 = arith.constant 3 : index
    %c0_628 = arith.constant 0 : index
    %815 = vector.load %arg13[%c3_627, %c0_628] : memref<9x96xf32, #tpu.memory_space<vmem>>, vector<3x96xf32>
    %816 = vector.shape_cast %815 : vector<3x96xf32> to vector<1x3x96xf32>
    %817 = vector.broadcast %816 : vector<1x3x96xf32> to vector<2x3x96xf32>
    %818 = arith.mulf %814, %817 : vector<2x3x96xf32>
    %cst_629 = arith.constant dense<0.000000e+00> : vector<2x96xf32>
    %819 = vector.multi_reduction <add>, %818, %cst_629 [1] : vector<2x3x96xf32> to vector<2x96xf32>
    %820 = arith.addf %812, %819 : vector<2x96xf32>
    %c0_630 = arith.constant 0 : index
    %c8_631 = arith.constant 8 : index
    %c4_632 = arith.constant 4 : index
    %c0_633 = arith.constant 0 : index
    %821 = vector.load %arg62[%c0_630, %c8_631, %c4_632, %c0_633] : memref<2x10x10x96xf32, #tpu.memory_space<vmem>>, vector<2x1x3x96xf32>
    %822 = vector.shape_cast %821 : vector<2x1x3x96xf32> to vector<2x3x96xf32>
    %c6_634 = arith.constant 6 : index
    %c0_635 = arith.constant 0 : index
    %823 = vector.load %arg13[%c6_634, %c0_635] : memref<9x96xf32, #tpu.memory_space<vmem>>, vector<3x96xf32>
    %824 = vector.shape_cast %823 : vector<3x96xf32> to vector<1x3x96xf32>
    %825 = vector.broadcast %824 : vector<1x3x96xf32> to vector<2x3x96xf32>
    %826 = arith.mulf %822, %825 : vector<2x3x96xf32>
    %cst_636 = arith.constant dense<0.000000e+00> : vector<2x96xf32>
    %827 = vector.multi_reduction <add>, %826, %cst_636 [1] : vector<2x3x96xf32> to vector<2x96xf32>
    %828 = arith.addf %820, %827 : vector<2x96xf32>
    %829 = vector.broadcast %284 : vector<1x96xf32> to vector<2x96xf32>
    %830 = arith.mulf %828, %829 : vector<2x96xf32>
    %831 = vector.broadcast %285 : vector<1x96xf32> to vector<2x96xf32>
    %832 = arith.addf %830, %831 : vector<2x96xf32>
    %cst_637 = arith.constant 0.000000e+00 : f32
    %cst_638 = arith.constant 6.000000e+00 : f32
    %833 = vector.broadcast %cst_637 : f32 to vector<2x96xf32>
    %834 = arith.maximumf %833, %832 : vector<2x96xf32>
    %835 = vector.broadcast %cst_638 : f32 to vector<2x96xf32>
    %836 = arith.minimumf %835, %834 : vector<2x96xf32>
    %837 = vector.extract_strided_slice %836 {offsets = [0, 0], sizes = [1, 96], strides = [1, 1]} : vector<2x96xf32> to vector<1x96xf32>
    %c14 = arith.constant 14 : index
    %c0_639 = arith.constant 0 : index
    %838 = vector.load %arg63[%c14, %c0_639] : memref<32x96xf32, #tpu.memory_space<vmem>>, vector<1x96xf32>
    tpu.vector_store %arg63[%c14, %c0_639], %837 {strides = array<i32>} : memref<32x96xf32, #tpu.memory_space<vmem>>, vector<1x96xf32>,
    %839 = vector.extract_strided_slice %836 {offsets = [1, 0], sizes = [1, 96], strides = [1, 1]} : vector<2x96xf32> to vector<1x96xf32>
    %c30 = arith.constant 30 : index
    %c0_640 = arith.constant 0 : index
    %840 = vector.load %arg63[%c30, %c0_640] : memref<32x96xf32, #tpu.memory_space<vmem>>, vector<1x96xf32>
    tpu.vector_store %arg63[%c30, %c0_640], %839 {strides = array<i32>} : memref<32x96xf32, #tpu.memory_space<vmem>>, vector<1x96xf32>,
    %cst_641 = arith.constant 0.000000e+00 : f32
    %841 = vector.broadcast %cst_641 : f32 to vector<2x96xf32>
    %c0_642 = arith.constant 0 : index
    %c6_643 = arith.constant 6 : index
    %c6_644 = arith.constant 6 : index
    %c0_645 = arith.constant 0 : index
    %842 = vector.load %arg62[%c0_642, %c6_643, %c6_644, %c0_645] : memref<2x10x10x96xf32, #tpu.memory_space<vmem>>, vector<2x1x3x96xf32>
    %843 = vector.shape_cast %842 : vector<2x1x3x96xf32> to vector<2x3x96xf32>
    %c0_646 = arith.constant 0 : index
    %c0_647 = arith.constant 0 : index
    %844 = vector.load %arg13[%c0_646, %c0_647] : memref<9x96xf32, #tpu.memory_space<vmem>>, vector<3x96xf32>
    %845 = vector.shape_cast %844 : vector<3x96xf32> to vector<1x3x96xf32>
    %846 = vector.broadcast %845 : vector<1x3x96xf32> to vector<2x3x96xf32>
    %847 = arith.mulf %843, %846 : vector<2x3x96xf32>
    %cst_648 = arith.constant dense<0.000000e+00> : vector<2x96xf32>
    %848 = vector.multi_reduction <add>, %847, %cst_648 [1] : vector<2x3x96xf32> to vector<2x96xf32>
    %849 = arith.addf %841, %848 : vector<2x96xf32>
    %c0_649 = arith.constant 0 : index
    %c7_650 = arith.constant 7 : index
    %c6_651 = arith.constant 6 : index
    %c0_652 = arith.constant 0 : index
    %850 = vector.load %arg62[%c0_649, %c7_650, %c6_651, %c0_652] : memref<2x10x10x96xf32, #tpu.memory_space<vmem>>, vector<2x1x3x96xf32>
    %851 = vector.shape_cast %850 : vector<2x1x3x96xf32> to vector<2x3x96xf32>
    %c3_653 = arith.constant 3 : index
    %c0_654 = arith.constant 0 : index
    %852 = vector.load %arg13[%c3_653, %c0_654] : memref<9x96xf32, #tpu.memory_space<vmem>>, vector<3x96xf32>
    %853 = vector.shape_cast %852 : vector<3x96xf32> to vector<1x3x96xf32>
    %854 = vector.broadcast %853 : vector<1x3x96xf32> to vector<2x3x96xf32>
    %855 = arith.mulf %851, %854 : vector<2x3x96xf32>
    %cst_655 = arith.constant dense<0.000000e+00> : vector<2x96xf32>
    %856 = vector.multi_reduction <add>, %855, %cst_655 [1] : vector<2x3x96xf32> to vector<2x96xf32>
    %857 = arith.addf %849, %856 : vector<2x96xf32>
    %c0_656 = arith.constant 0 : index
    %c8_657 = arith.constant 8 : index
    %c6_658 = arith.constant 6 : index
    %c0_659 = arith.constant 0 : index
    %858 = vector.load %arg62[%c0_656, %c8_657, %c6_658, %c0_659] : memref<2x10x10x96xf32, #tpu.memory_space<vmem>>, vector<2x1x3x96xf32>
    %859 = vector.shape_cast %858 : vector<2x1x3x96xf32> to vector<2x3x96xf32>
    %c6_660 = arith.constant 6 : index
    %c0_661 = arith.constant 0 : index
    %860 = vector.load %arg13[%c6_660, %c0_661] : memref<9x96xf32, #tpu.memory_space<vmem>>, vector<3x96xf32>
    %861 = vector.shape_cast %860 : vector<3x96xf32> to vector<1x3x96xf32>
    %862 = vector.broadcast %861 : vector<1x3x96xf32> to vector<2x3x96xf32>
    %863 = arith.mulf %859, %862 : vector<2x3x96xf32>
    %cst_662 = arith.constant dense<0.000000e+00> : vector<2x96xf32>
    %864 = vector.multi_reduction <add>, %863, %cst_662 [1] : vector<2x3x96xf32> to vector<2x96xf32>
    %865 = arith.addf %857, %864 : vector<2x96xf32>
    %866 = vector.broadcast %284 : vector<1x96xf32> to vector<2x96xf32>
    %867 = arith.mulf %865, %866 : vector<2x96xf32>
    %868 = vector.broadcast %285 : vector<1x96xf32> to vector<2x96xf32>
    %869 = arith.addf %867, %868 : vector<2x96xf32>
    %cst_663 = arith.constant 0.000000e+00 : f32
    %cst_664 = arith.constant 6.000000e+00 : f32
    %870 = vector.broadcast %cst_663 : f32 to vector<2x96xf32>
    %871 = arith.maximumf %870, %869 : vector<2x96xf32>
    %872 = vector.broadcast %cst_664 : f32 to vector<2x96xf32>
    %873 = arith.minimumf %872, %871 : vector<2x96xf32>
    %874 = vector.extract_strided_slice %873 {offsets = [0, 0], sizes = [1, 96], strides = [1, 1]} : vector<2x96xf32> to vector<1x96xf32>
    %c15 = arith.constant 15 : index
    %c0_665 = arith.constant 0 : index
    %875 = vector.load %arg63[%c15, %c0_665] : memref<32x96xf32, #tpu.memory_space<vmem>>, vector<1x96xf32>
    tpu.vector_store %arg63[%c15, %c0_665], %874 {strides = array<i32>} : memref<32x96xf32, #tpu.memory_space<vmem>>, vector<1x96xf32>,
    %876 = vector.extract_strided_slice %873 {offsets = [1, 0], sizes = [1, 96], strides = [1, 1]} : vector<2x96xf32> to vector<1x96xf32>
    %c31 = arith.constant 31 : index
    %c0_666 = arith.constant 0 : index
    %877 = vector.load %arg63[%c31, %c0_666] : memref<32x96xf32, #tpu.memory_space<vmem>>, vector<1x96xf32>
    tpu.vector_store %arg63[%c31, %c0_666], %876 {strides = array<i32>} : memref<32x96xf32, #tpu.memory_space<vmem>>, vector<1x96xf32>,
    %c0_667 = arith.constant 0 : index
    %c0_668 = arith.constant 0 : index
    %878 = vector.load %arg63[%c0_667, %c0_668] : memref<32x96xf32, #tpu.memory_space<vmem>>, vector<32x96xf32>
    %879 = arith.truncf %878 : vector<32x96xf32> to vector<32x96xbf16>
    %c0_669 = arith.constant 0 : index
    %c0_670 = arith.constant 0 : index
    %880 = vector.load %arg16[%c0_669, %c0_670] : memref<96x24xbf16, #tpu.memory_space<vmem>>, vector<96x24xbf16>
    %cst_671 = arith.constant dense<0.000000e+00> : vector<32x24xf32>
    %881 = tpu.matmul %879, %880, %cst_671 {dimension_numbers = #tpu.dot_dimension_numbers<[1], [0], [0], [1], [0, 0, 1, 1], [], []>} : vector<32x96xbf16>, vector<96x24xbf16>, vector<32x24xf32> -> vector<32x24xf32>
    %c0_672 = arith.constant 0 : index
    %c0_673 = arith.constant 0 : index
    %882 = vector.load %arg17[%c0_672, %c0_673] : memref<1x24xf32, #tpu.memory_space<vmem>>, vector<1x24xf32>
    %883 = vector.broadcast %882 : vector<1x24xf32> to vector<32x24xf32>
    %884 = arith.mulf %881, %883 : vector<32x24xf32>
    %c0_674 = arith.constant 0 : index
    %c0_675 = arith.constant 0 : index
    %885 = vector.load %arg18[%c0_674, %c0_675] : memref<1x24xf32, #tpu.memory_space<vmem>>, vector<1x24xf32>
    %886 = vector.broadcast %885 : vector<1x24xf32> to vector<32x24xf32>
    %887 = arith.addf %884, %886 : vector<32x24xf32>
    %888 = arith.truncf %887 : vector<32x24xf32> to vector<32x24xbf16>
    %c0_676 = arith.constant 0 : index
    %c0_677 = arith.constant 0 : index
    %889 = vector.load %arg19[%c0_676, %c0_677] : memref<24x144xbf16, #tpu.memory_space<vmem>>, vector<24x144xbf16>
    %cst_678 = arith.constant dense<0.000000e+00> : vector<32x144xf32>
    %890 = tpu.matmul %888, %889, %cst_678 {dimension_numbers = #tpu.dot_dimension_numbers<[1], [0], [0], [1], [0, 0, 1, 1], [], []>} : vector<32x24xbf16>, vector<24x144xbf16>, vector<32x144xf32> -> vector<32x144xf32>
    %c0_679 = arith.constant 0 : index
    %c0_680 = arith.constant 0 : index
    %891 = vector.load %arg20[%c0_679, %c0_680] : memref<1x144xf32, #tpu.memory_space<vmem>>, vector<1x144xf32>
    %892 = vector.broadcast %891 : vector<1x144xf32> to vector<32x144xf32>
    %893 = arith.mulf %890, %892 : vector<32x144xf32>
    %c0_681 = arith.constant 0 : index
    %c0_682 = arith.constant 0 : index
    %894 = vector.load %arg21[%c0_681, %c0_682] : memref<1x144xf32, #tpu.memory_space<vmem>>, vector<1x144xf32>
    %895 = vector.broadcast %894 : vector<1x144xf32> to vector<32x144xf32>
    %896 = arith.addf %893, %895 : vector<32x144xf32>
    %cst_683 = arith.constant 0.000000e+00 : f32
    %cst_684 = arith.constant 6.000000e+00 : f32
    %897 = vector.broadcast %cst_683 : f32 to vector<32x144xf32>
    %898 = arith.maximumf %897, %896 : vector<32x144xf32>
    %899 = vector.broadcast %cst_684 : f32 to vector<32x144xf32>
    %900 = arith.minimumf %899, %898 : vector<32x144xf32>
    %cst_685 = arith.constant 0.000000e+00 : f32
    %901 = vector.broadcast %cst_685 : f32 to vector<2x6x6x144xf32>
    %c0_686 = arith.constant 0 : index
    %c0_687 = arith.constant 0 : index
    %c0_688 = arith.constant 0 : index
    %c0_689 = arith.constant 0 : index
    %902 = vector.load %arg64[%c0_686, %c0_687, %c0_688, %c0_689] : memref<2x6x6x144xf32, #tpu.memory_space<vmem>>, vector<2x6x6x144xf32>
    tpu.vector_store %arg64[%c0_686, %c0_687, %c0_688, %c0_689], %901 {strides = array<i32>} : memref<2x6x6x144xf32, #tpu.memory_space<vmem>>, vector<2x6x6x144xf32>,
    %903 = vector.extract_strided_slice %900 {offsets = [0, 0], sizes = [4, 144], strides = [1, 1]} : vector<32x144xf32> to vector<4x144xf32>
    %c0_690 = arith.constant 0 : index
    %c1_691 = arith.constant 1 : index
    %c1_692 = arith.constant 1 : index
    %c0_693 = arith.constant 0 : index
    %904 = vector.load %arg64[%c0_690, %c1_691, %c1_692, %c0_693] : memref<2x6x6x144xf32, #tpu.memory_space<vmem>>, vector<1x1x4x144xf32>
    %905 = vector.shape_cast %904 : vector<1x1x4x144xf32> to vector<4x144xf32>
    %906 = vector.shape_cast %903 : vector<4x144xf32> to vector<1x1x4x144xf32>
    tpu.vector_store %arg64[%c0_690, %c1_691, %c1_692, %c0_693], %906 {strides = array<i32>} : memref<2x6x6x144xf32, #tpu.memory_space<vmem>>, vector<1x1x4x144xf32>,
    %907 = vector.extract_strided_slice %900 {offsets = [4, 0], sizes = [4, 144], strides = [1, 1]} : vector<32x144xf32> to vector<4x144xf32>
    %c0_694 = arith.constant 0 : index
    %c2_695 = arith.constant 2 : index
    %c1_696 = arith.constant 1 : index
    %c0_697 = arith.constant 0 : index
    %908 = vector.load %arg64[%c0_694, %c2_695, %c1_696, %c0_697] : memref<2x6x6x144xf32, #tpu.memory_space<vmem>>, vector<1x1x4x144xf32>
    %909 = vector.shape_cast %908 : vector<1x1x4x144xf32> to vector<4x144xf32>
    %910 = vector.shape_cast %907 : vector<4x144xf32> to vector<1x1x4x144xf32>
    tpu.vector_store %arg64[%c0_694, %c2_695, %c1_696, %c0_697], %910 {strides = array<i32>} : memref<2x6x6x144xf32, #tpu.memory_space<vmem>>, vector<1x1x4x144xf32>,
    %911 = vector.extract_strided_slice %900 {offsets = [8, 0], sizes = [4, 144], strides = [1, 1]} : vector<32x144xf32> to vector<4x144xf32>
    %c0_698 = arith.constant 0 : index
    %c3_699 = arith.constant 3 : index
    %c1_700 = arith.constant 1 : index
    %c0_701 = arith.constant 0 : index
    %912 = vector.load %arg64[%c0_698, %c3_699, %c1_700, %c0_701] : memref<2x6x6x144xf32, #tpu.memory_space<vmem>>, vector<1x1x4x144xf32>
    %913 = vector.shape_cast %912 : vector<1x1x4x144xf32> to vector<4x144xf32>
    %914 = vector.shape_cast %911 : vector<4x144xf32> to vector<1x1x4x144xf32>
    tpu.vector_store %arg64[%c0_698, %c3_699, %c1_700, %c0_701], %914 {strides = array<i32>} : memref<2x6x6x144xf32, #tpu.memory_space<vmem>>, vector<1x1x4x144xf32>,
    %915 = vector.extract_strided_slice %900 {offsets = [12, 0], sizes = [4, 144], strides = [1, 1]} : vector<32x144xf32> to vector<4x144xf32>
    %c0_702 = arith.constant 0 : index
    %c4_703 = arith.constant 4 : index
    %c1_704 = arith.constant 1 : index
    %c0_705 = arith.constant 0 : index
    %916 = vector.load %arg64[%c0_702, %c4_703, %c1_704, %c0_705] : memref<2x6x6x144xf32, #tpu.memory_space<vmem>>, vector<1x1x4x144xf32>
    %917 = vector.shape_cast %916 : vector<1x1x4x144xf32> to vector<4x144xf32>
    %918 = vector.shape_cast %915 : vector<4x144xf32> to vector<1x1x4x144xf32>
    tpu.vector_store %arg64[%c0_702, %c4_703, %c1_704, %c0_705], %918 {strides = array<i32>} : memref<2x6x6x144xf32, #tpu.memory_space<vmem>>, vector<1x1x4x144xf32>,
    %919 = vector.extract_strided_slice %900 {offsets = [16, 0], sizes = [4, 144], strides = [1, 1]} : vector<32x144xf32> to vector<4x144xf32>
    %c1_706 = arith.constant 1 : index
    %c1_707 = arith.constant 1 : index
    %c1_708 = arith.constant 1 : index
    %c0_709 = arith.constant 0 : index
    %920 = vector.load %arg64[%c1_706, %c1_707, %c1_708, %c0_709] : memref<2x6x6x144xf32, #tpu.memory_space<vmem>>, vector<1x1x4x144xf32>
    %921 = vector.shape_cast %920 : vector<1x1x4x144xf32> to vector<4x144xf32>
    %922 = vector.shape_cast %919 : vector<4x144xf32> to vector<1x1x4x144xf32>
    tpu.vector_store %arg64[%c1_706, %c1_707, %c1_708, %c0_709], %922 {strides = array<i32>} : memref<2x6x6x144xf32, #tpu.memory_space<vmem>>, vector<1x1x4x144xf32>,
    %923 = vector.extract_strided_slice %900 {offsets = [20, 0], sizes = [4, 144], strides = [1, 1]} : vector<32x144xf32> to vector<4x144xf32>
    %c1_710 = arith.constant 1 : index
    %c2_711 = arith.constant 2 : index
    %c1_712 = arith.constant 1 : index
    %c0_713 = arith.constant 0 : index
    %924 = vector.load %arg64[%c1_710, %c2_711, %c1_712, %c0_713] : memref<2x6x6x144xf32, #tpu.memory_space<vmem>>, vector<1x1x4x144xf32>
    %925 = vector.shape_cast %924 : vector<1x1x4x144xf32> to vector<4x144xf32>
    %926 = vector.shape_cast %923 : vector<4x144xf32> to vector<1x1x4x144xf32>
    tpu.vector_store %arg64[%c1_710, %c2_711, %c1_712, %c0_713], %926 {strides = array<i32>} : memref<2x6x6x144xf32, #tpu.memory_space<vmem>>, vector<1x1x4x144xf32>,
    %927 = vector.extract_strided_slice %900 {offsets = [24, 0], sizes = [4, 144], strides = [1, 1]} : vector<32x144xf32> to vector<4x144xf32>
    %c1_714 = arith.constant 1 : index
    %c3_715 = arith.constant 3 : index
    %c1_716 = arith.constant 1 : index
    %c0_717 = arith.constant 0 : index
    %928 = vector.load %arg64[%c1_714, %c3_715, %c1_716, %c0_717] : memref<2x6x6x144xf32, #tpu.memory_space<vmem>>, vector<1x1x4x144xf32>
    %929 = vector.shape_cast %928 : vector<1x1x4x144xf32> to vector<4x144xf32>
    %930 = vector.shape_cast %927 : vector<4x144xf32> to vector<1x1x4x144xf32>
    tpu.vector_store %arg64[%c1_714, %c3_715, %c1_716, %c0_717], %930 {strides = array<i32>} : memref<2x6x6x144xf32, #tpu.memory_space<vmem>>, vector<1x1x4x144xf32>,
    %931 = vector.extract_strided_slice %900 {offsets = [28, 0], sizes = [4, 144], strides = [1, 1]} : vector<32x144xf32> to vector<4x144xf32>
    %c1_718 = arith.constant 1 : index
    %c4_719 = arith.constant 4 : index
    %c1_720 = arith.constant 1 : index
    %c0_721 = arith.constant 0 : index
    %932 = vector.load %arg64[%c1_718, %c4_719, %c1_720, %c0_721] : memref<2x6x6x144xf32, #tpu.memory_space<vmem>>, vector<1x1x4x144xf32>
    %933 = vector.shape_cast %932 : vector<1x1x4x144xf32> to vector<4x144xf32>
    %934 = vector.shape_cast %931 : vector<4x144xf32> to vector<1x1x4x144xf32>
    tpu.vector_store %arg64[%c1_718, %c4_719, %c1_720, %c0_721], %934 {strides = array<i32>} : memref<2x6x6x144xf32, #tpu.memory_space<vmem>>, vector<1x1x4x144xf32>,
    %cst_722 = arith.constant 0.000000e+00 : f32
    %935 = vector.broadcast %cst_722 : f32 to vector<2x4x4x144xf32>
    %c0_723 = arith.constant 0 : index
    %c0_724 = arith.constant 0 : index
    %c0_725 = arith.constant 0 : index
    %c0_726 = arith.constant 0 : index
    %936 = vector.load %arg64[%c0_723, %c0_724, %c0_725, %c0_726] : memref<2x6x6x144xf32, #tpu.memory_space<vmem>>, vector<2x4x4x144xf32>
    %c0_727 = arith.constant 0 : index
    %c0_728 = arith.constant 0 : index
    %937 = vector.load %arg22[%c0_727, %c0_728] : memref<9x144xf32, #tpu.memory_space<vmem>>, vector<1x144xf32>
    %938 = vector.shape_cast %937 : vector<1x144xf32> to vector<1x1x1x144xf32>
    %939 = vector.broadcast %938 : vector<1x1x1x144xf32> to vector<2x4x4x144xf32>
    %940 = arith.mulf %936, %939 : vector<2x4x4x144xf32>
    %941 = arith.addf %935, %940 : vector<2x4x4x144xf32>
    %c0_729 = arith.constant 0 : index
    %c0_730 = arith.constant 0 : index
    %c1_731 = arith.constant 1 : index
    %c0_732 = arith.constant 0 : index
    %942 = vector.load %arg64[%c0_729, %c0_730, %c1_731, %c0_732] : memref<2x6x6x144xf32, #tpu.memory_space<vmem>>, vector<2x4x4x144xf32>
    %c1_733 = arith.constant 1 : index
    %c0_734 = arith.constant 0 : index
    %943 = vector.load %arg22[%c1_733, %c0_734] : memref<9x144xf32, #tpu.memory_space<vmem>>, vector<1x144xf32>
    %944 = vector.shape_cast %943 : vector<1x144xf32> to vector<1x1x1x144xf32>
    %945 = vector.broadcast %944 : vector<1x1x1x144xf32> to vector<2x4x4x144xf32>
    %946 = arith.mulf %942, %945 : vector<2x4x4x144xf32>
    %947 = arith.addf %941, %946 : vector<2x4x4x144xf32>
    %c0_735 = arith.constant 0 : index
    %c0_736 = arith.constant 0 : index
    %c2_737 = arith.constant 2 : index
    %c0_738 = arith.constant 0 : index
    %948 = vector.load %arg64[%c0_735, %c0_736, %c2_737, %c0_738] : memref<2x6x6x144xf32, #tpu.memory_space<vmem>>, vector<2x4x4x144xf32>
    %c2_739 = arith.constant 2 : index
    %c0_740 = arith.constant 0 : index
    %949 = vector.load %arg22[%c2_739, %c0_740] : memref<9x144xf32, #tpu.memory_space<vmem>>, vector<1x144xf32>
    %950 = vector.shape_cast %949 : vector<1x144xf32> to vector<1x1x1x144xf32>
    %951 = vector.broadcast %950 : vector<1x1x1x144xf32> to vector<2x4x4x144xf32>
    %952 = arith.mulf %948, %951 : vector<2x4x4x144xf32>
    %953 = arith.addf %947, %952 : vector<2x4x4x144xf32>
    %c0_741 = arith.constant 0 : index
    %c1_742 = arith.constant 1 : index
    %c0_743 = arith.constant 0 : index
    %c0_744 = arith.constant 0 : index
    %954 = vector.load %arg64[%c0_741, %c1_742, %c0_743, %c0_744] : memref<2x6x6x144xf32, #tpu.memory_space<vmem>>, vector<2x4x4x144xf32>
    %c3_745 = arith.constant 3 : index
    %c0_746 = arith.constant 0 : index
    %955 = vector.load %arg22[%c3_745, %c0_746] : memref<9x144xf32, #tpu.memory_space<vmem>>, vector<1x144xf32>
    %956 = vector.shape_cast %955 : vector<1x144xf32> to vector<1x1x1x144xf32>
    %957 = vector.broadcast %956 : vector<1x1x1x144xf32> to vector<2x4x4x144xf32>
    %958 = arith.mulf %954, %957 : vector<2x4x4x144xf32>
    %959 = arith.addf %953, %958 : vector<2x4x4x144xf32>
    %c0_747 = arith.constant 0 : index
    %c1_748 = arith.constant 1 : index
    %c1_749 = arith.constant 1 : index
    %c0_750 = arith.constant 0 : index
    %960 = vector.load %arg64[%c0_747, %c1_748, %c1_749, %c0_750] : memref<2x6x6x144xf32, #tpu.memory_space<vmem>>, vector<2x4x4x144xf32>
    %c4_751 = arith.constant 4 : index
    %c0_752 = arith.constant 0 : index
    %961 = vector.load %arg22[%c4_751, %c0_752] : memref<9x144xf32, #tpu.memory_space<vmem>>, vector<1x144xf32>
    %962 = vector.shape_cast %961 : vector<1x144xf32> to vector<1x1x1x144xf32>
    %963 = vector.broadcast %962 : vector<1x1x1x144xf32> to vector<2x4x4x144xf32>
    %964 = arith.mulf %960, %963 : vector<2x4x4x144xf32>
    %965 = arith.addf %959, %964 : vector<2x4x4x144xf32>
    %c0_753 = arith.constant 0 : index
    %c1_754 = arith.constant 1 : index
    %c2_755 = arith.constant 2 : index
    %c0_756 = arith.constant 0 : index
    %966 = vector.load %arg64[%c0_753, %c1_754, %c2_755, %c0_756] : memref<2x6x6x144xf32, #tpu.memory_space<vmem>>, vector<2x4x4x144xf32>
    %c5_757 = arith.constant 5 : index
    %c0_758 = arith.constant 0 : index
    %967 = vector.load %arg22[%c5_757, %c0_758] : memref<9x144xf32, #tpu.memory_space<vmem>>, vector<1x144xf32>
    %968 = vector.shape_cast %967 : vector<1x144xf32> to vector<1x1x1x144xf32>
    %969 = vector.broadcast %968 : vector<1x1x1x144xf32> to vector<2x4x4x144xf32>
    %970 = arith.mulf %966, %969 : vector<2x4x4x144xf32>
    %971 = arith.addf %965, %970 : vector<2x4x4x144xf32>
    %c0_759 = arith.constant 0 : index
    %c2_760 = arith.constant 2 : index
    %c0_761 = arith.constant 0 : index
    %c0_762 = arith.constant 0 : index
    %972 = vector.load %arg64[%c0_759, %c2_760, %c0_761, %c0_762] : memref<2x6x6x144xf32, #tpu.memory_space<vmem>>, vector<2x4x4x144xf32>
    %c6_763 = arith.constant 6 : index
    %c0_764 = arith.constant 0 : index
    %973 = vector.load %arg22[%c6_763, %c0_764] : memref<9x144xf32, #tpu.memory_space<vmem>>, vector<1x144xf32>
    %974 = vector.shape_cast %973 : vector<1x144xf32> to vector<1x1x1x144xf32>
    %975 = vector.broadcast %974 : vector<1x1x1x144xf32> to vector<2x4x4x144xf32>
    %976 = arith.mulf %972, %975 : vector<2x4x4x144xf32>
    %977 = arith.addf %971, %976 : vector<2x4x4x144xf32>
    %c0_765 = arith.constant 0 : index
    %c2_766 = arith.constant 2 : index
    %c1_767 = arith.constant 1 : index
    %c0_768 = arith.constant 0 : index
    %978 = vector.load %arg64[%c0_765, %c2_766, %c1_767, %c0_768] : memref<2x6x6x144xf32, #tpu.memory_space<vmem>>, vector<2x4x4x144xf32>
    %c7_769 = arith.constant 7 : index
    %c0_770 = arith.constant 0 : index
    %979 = vector.load %arg22[%c7_769, %c0_770] : memref<9x144xf32, #tpu.memory_space<vmem>>, vector<1x144xf32>
    %980 = vector.shape_cast %979 : vector<1x144xf32> to vector<1x1x1x144xf32>
    %981 = vector.broadcast %980 : vector<1x1x1x144xf32> to vector<2x4x4x144xf32>
    %982 = arith.mulf %978, %981 : vector<2x4x4x144xf32>
    %983 = arith.addf %977, %982 : vector<2x4x4x144xf32>
    %c0_771 = arith.constant 0 : index
    %c2_772 = arith.constant 2 : index
    %c2_773 = arith.constant 2 : index
    %c0_774 = arith.constant 0 : index
    %984 = vector.load %arg64[%c0_771, %c2_772, %c2_773, %c0_774] : memref<2x6x6x144xf32, #tpu.memory_space<vmem>>, vector<2x4x4x144xf32>
    %c8_775 = arith.constant 8 : index
    %c0_776 = arith.constant 0 : index
    %985 = vector.load %arg22[%c8_775, %c0_776] : memref<9x144xf32, #tpu.memory_space<vmem>>, vector<1x144xf32>
    %986 = vector.shape_cast %985 : vector<1x144xf32> to vector<1x1x1x144xf32>
    %987 = vector.broadcast %986 : vector<1x1x1x144xf32> to vector<2x4x4x144xf32>
    %988 = arith.mulf %984, %987 : vector<2x4x4x144xf32>
    %989 = arith.addf %983, %988 : vector<2x4x4x144xf32>
    %c0_777 = arith.constant 0 : index
    %c0_778 = arith.constant 0 : index
    %990 = vector.load %arg23[%c0_777, %c0_778] : memref<1x144xf32, #tpu.memory_space<vmem>>, vector<1x144xf32>
    %991 = vector.shape_cast %990 : vector<1x144xf32> to vector<1x1x1x144xf32>
    %992 = vector.broadcast %991 : vector<1x1x1x144xf32> to vector<2x4x4x144xf32>
    %993 = arith.mulf %989, %992 : vector<2x4x4x144xf32>
    %c0_779 = arith.constant 0 : index
    %c0_780 = arith.constant 0 : index
    %994 = vector.load %arg24[%c0_779, %c0_780] : memref<1x144xf32, #tpu.memory_space<vmem>>, vector<1x144xf32>
    %995 = vector.shape_cast %994 : vector<1x144xf32> to vector<1x1x1x144xf32>
    %996 = vector.broadcast %995 : vector<1x1x1x144xf32> to vector<2x4x4x144xf32>
    %997 = arith.addf %993, %996 : vector<2x4x4x144xf32>
    %cst_781 = arith.constant 0.000000e+00 : f32
    %cst_782 = arith.constant 6.000000e+00 : f32
    %998 = vector.broadcast %cst_781 : f32 to vector<2x4x4x144xf32>
    %999 = arith.maximumf %998, %997 : vector<2x4x4x144xf32>
    %1000 = vector.broadcast %cst_782 : f32 to vector<2x4x4x144xf32>
    %1001 = arith.minimumf %1000, %999 : vector<2x4x4x144xf32>
    %1002 = vector.extract_strided_slice %1001 {offsets = [0, 0, 0, 0], sizes = [1, 1, 4, 144], strides = [1, 1, 1, 1]} : vector<2x4x4x144xf32> to vector<1x1x4x144xf32>
    %1003 = vector.shape_cast %1002 : vector<1x1x4x144xf32> to vector<4x144xf32>
    %c0_783 = arith.constant 0 : index
    %c0_784 = arith.constant 0 : index
    %1004 = vector.load %arg65[%c0_783, %c0_784] : memref<32x144xf32, #tpu.memory_space<vmem>>, vector<4x144xf32>
    tpu.vector_store %arg65[%c0_783, %c0_784], %1003 {strides = array<i32>} : memref<32x144xf32, #tpu.memory_space<vmem>>, vector<4x144xf32>,
    %1005 = vector.extract_strided_slice %1001 {offsets = [0, 1, 0, 0], sizes = [1, 1, 4, 144], strides = [1, 1, 1, 1]} : vector<2x4x4x144xf32> to vector<1x1x4x144xf32>
    %1006 = vector.shape_cast %1005 : vector<1x1x4x144xf32> to vector<4x144xf32>
    %c4_785 = arith.constant 4 : index
    %c0_786 = arith.constant 0 : index
    %1007 = vector.load %arg65[%c4_785, %c0_786] : memref<32x144xf32, #tpu.memory_space<vmem>>, vector<4x144xf32>
    tpu.vector_store %arg65[%c4_785, %c0_786], %1006 {strides = array<i32>} : memref<32x144xf32, #tpu.memory_space<vmem>>, vector<4x144xf32>,
    %1008 = vector.extract_strided_slice %1001 {offsets = [0, 2, 0, 0], sizes = [1, 1, 4, 144], strides = [1, 1, 1, 1]} : vector<2x4x4x144xf32> to vector<1x1x4x144xf32>
    %1009 = vector.shape_cast %1008 : vector<1x1x4x144xf32> to vector<4x144xf32>
    %c8_787 = arith.constant 8 : index
    %c0_788 = arith.constant 0 : index
    %1010 = vector.load %arg65[%c8_787, %c0_788] : memref<32x144xf32, #tpu.memory_space<vmem>>, vector<4x144xf32>
    tpu.vector_store %arg65[%c8_787, %c0_788], %1009 {strides = array<i32>} : memref<32x144xf32, #tpu.memory_space<vmem>>, vector<4x144xf32>,
    %1011 = vector.extract_strided_slice %1001 {offsets = [0, 3, 0, 0], sizes = [1, 1, 4, 144], strides = [1, 1, 1, 1]} : vector<2x4x4x144xf32> to vector<1x1x4x144xf32>
    %1012 = vector.shape_cast %1011 : vector<1x1x4x144xf32> to vector<4x144xf32>
    %c12_789 = arith.constant 12 : index
    %c0_790 = arith.constant 0 : index
    %1013 = vector.load %arg65[%c12_789, %c0_790] : memref<32x144xf32, #tpu.memory_space<vmem>>, vector<4x144xf32>
    tpu.vector_store %arg65[%c12_789, %c0_790], %1012 {strides = array<i32>} : memref<32x144xf32, #tpu.memory_space<vmem>>, vector<4x144xf32>,
    %1014 = vector.extract_strided_slice %1001 {offsets = [1, 0, 0, 0], sizes = [1, 1, 4, 144], strides = [1, 1, 1, 1]} : vector<2x4x4x144xf32> to vector<1x1x4x144xf32>
    %1015 = vector.shape_cast %1014 : vector<1x1x4x144xf32> to vector<4x144xf32>
    %c16_791 = arith.constant 16 : index
    %c0_792 = arith.constant 0 : index
    %1016 = vector.load %arg65[%c16_791, %c0_792] : memref<32x144xf32, #tpu.memory_space<vmem>>, vector<4x144xf32>
    tpu.vector_store %arg65[%c16_791, %c0_792], %1015 {strides = array<i32>} : memref<32x144xf32, #tpu.memory_space<vmem>>, vector<4x144xf32>,
    %1017 = vector.extract_strided_slice %1001 {offsets = [1, 1, 0, 0], sizes = [1, 1, 4, 144], strides = [1, 1, 1, 1]} : vector<2x4x4x144xf32> to vector<1x1x4x144xf32>
    %1018 = vector.shape_cast %1017 : vector<1x1x4x144xf32> to vector<4x144xf32>
    %c20_793 = arith.constant 20 : index
    %c0_794 = arith.constant 0 : index
    %1019 = vector.load %arg65[%c20_793, %c0_794] : memref<32x144xf32, #tpu.memory_space<vmem>>, vector<4x144xf32>
    tpu.vector_store %arg65[%c20_793, %c0_794], %1018 {strides = array<i32>} : memref<32x144xf32, #tpu.memory_space<vmem>>, vector<4x144xf32>,
    %1020 = vector.extract_strided_slice %1001 {offsets = [1, 2, 0, 0], sizes = [1, 1, 4, 144], strides = [1, 1, 1, 1]} : vector<2x4x4x144xf32> to vector<1x1x4x144xf32>
    %1021 = vector.shape_cast %1020 : vector<1x1x4x144xf32> to vector<4x144xf32>
    %c24_795 = arith.constant 24 : index
    %c0_796 = arith.constant 0 : index
    %1022 = vector.load %arg65[%c24_795, %c0_796] : memref<32x144xf32, #tpu.memory_space<vmem>>, vector<4x144xf32>
    tpu.vector_store %arg65[%c24_795, %c0_796], %1021 {strides = array<i32>} : memref<32x144xf32, #tpu.memory_space<vmem>>, vector<4x144xf32>,
    %1023 = vector.extract_strided_slice %1001 {offsets = [1, 3, 0, 0], sizes = [1, 1, 4, 144], strides = [1, 1, 1, 1]} : vector<2x4x4x144xf32> to vector<1x1x4x144xf32>
    %1024 = vector.shape_cast %1023 : vector<1x1x4x144xf32> to vector<4x144xf32>
    %c28_797 = arith.constant 28 : index
    %c0_798 = arith.constant 0 : index
    %1025 = vector.load %arg65[%c28_797, %c0_798] : memref<32x144xf32, #tpu.memory_space<vmem>>, vector<4x144xf32>
    tpu.vector_store %arg65[%c28_797, %c0_798], %1024 {strides = array<i32>} : memref<32x144xf32, #tpu.memory_space<vmem>>, vector<4x144xf32>,
    %c0_799 = arith.constant 0 : index
    %c0_800 = arith.constant 0 : index
    %1026 = vector.load %arg65[%c0_799, %c0_800] : memref<32x144xf32, #tpu.memory_space<vmem>>, vector<32x144xf32>
    %1027 = arith.truncf %1026 : vector<32x144xf32> to vector<32x144xbf16>
    %c0_801 = arith.constant 0 : index
    %c0_802 = arith.constant 0 : index
    %1028 = vector.load %arg25[%c0_801, %c0_802] : memref<144x24xbf16, #tpu.memory_space<vmem>>, vector<144x24xbf16>
    %cst_803 = arith.constant dense<0.000000e+00> : vector<32x24xf32>
    %1029 = tpu.matmul %1027, %1028, %cst_803 {dimension_numbers = #tpu.dot_dimension_numbers<[1], [0], [0], [1], [0, 0, 1, 1], [], []>} : vector<32x144xbf16>, vector<144x24xbf16>, vector<32x24xf32> -> vector<32x24xf32>
    %c0_804 = arith.constant 0 : index
    %c0_805 = arith.constant 0 : index
    %1030 = vector.load %arg26[%c0_804, %c0_805] : memref<1x24xf32, #tpu.memory_space<vmem>>, vector<1x24xf32>
    %1031 = vector.broadcast %1030 : vector<1x24xf32> to vector<32x24xf32>
    %1032 = arith.mulf %1029, %1031 : vector<32x24xf32>
    %c0_806 = arith.constant 0 : index
    %c0_807 = arith.constant 0 : index
    %1033 = vector.load %arg27[%c0_806, %c0_807] : memref<1x24xf32, #tpu.memory_space<vmem>>, vector<1x24xf32>
    %1034 = vector.broadcast %1033 : vector<1x24xf32> to vector<32x24xf32>
    %1035 = arith.addf %1032, %1034 : vector<32x24xf32>
    %1036 = arith.addf %1035, %887 : vector<32x24xf32>
    %1037 = arith.truncf %1036 : vector<32x24xf32> to vector<32x24xbf16>
    %c0_808 = arith.constant 0 : index
    %c0_809 = arith.constant 0 : index
    %1038 = vector.load %arg28[%c0_808, %c0_809] : memref<24x144xbf16, #tpu.memory_space<vmem>>, vector<24x144xbf16>
    %cst_810 = arith.constant dense<0.000000e+00> : vector<32x144xf32>
    %1039 = tpu.matmul %1037, %1038, %cst_810 {dimension_numbers = #tpu.dot_dimension_numbers<[1], [0], [0], [1], [0, 0, 1, 1], [], []>} : vector<32x24xbf16>, vector<24x144xbf16>, vector<32x144xf32> -> vector<32x144xf32>
    %c0_811 = arith.constant 0 : index
    %c0_812 = arith.constant 0 : index
    %1040 = vector.load %arg29[%c0_811, %c0_812] : memref<1x144xf32, #tpu.memory_space<vmem>>, vector<1x144xf32>
    %1041 = vector.broadcast %1040 : vector<1x144xf32> to vector<32x144xf32>
    %1042 = arith.mulf %1039, %1041 : vector<32x144xf32>
    %c0_813 = arith.constant 0 : index
    %c0_814 = arith.constant 0 : index
    %1043 = vector.load %arg30[%c0_813, %c0_814] : memref<1x144xf32, #tpu.memory_space<vmem>>, vector<1x144xf32>
    %1044 = vector.broadcast %1043 : vector<1x144xf32> to vector<32x144xf32>
    %1045 = arith.addf %1042, %1044 : vector<32x144xf32>
    %cst_815 = arith.constant 0.000000e+00 : f32
    %cst_816 = arith.constant 6.000000e+00 : f32
    %1046 = vector.broadcast %cst_815 : f32 to vector<32x144xf32>
    %1047 = arith.maximumf %1046, %1045 : vector<32x144xf32>
    %1048 = vector.broadcast %cst_816 : f32 to vector<32x144xf32>
    %1049 = arith.minimumf %1048, %1047 : vector<32x144xf32>
    %cst_817 = arith.constant 0.000000e+00 : f32
    %1050 = vector.broadcast %cst_817 : f32 to vector<2x6x6x144xf32>
    %c0_818 = arith.constant 0 : index
    %c0_819 = arith.constant 0 : index
    %c0_820 = arith.constant 0 : index
    %c0_821 = arith.constant 0 : index
    %1051 = vector.load %arg66[%c0_818, %c0_819, %c0_820, %c0_821] : memref<2x6x6x144xf32, #tpu.memory_space<vmem>>, vector<2x6x6x144xf32>
    tpu.vector_store %arg66[%c0_818, %c0_819, %c0_820, %c0_821], %1050 {strides = array<i32>} : memref<2x6x6x144xf32, #tpu.memory_space<vmem>>, vector<2x6x6x144xf32>,
    %1052 = vector.extract_strided_slice %1049 {offsets = [0, 0], sizes = [4, 144], strides = [1, 1]} : vector<32x144xf32> to vector<4x144xf32>
    %c0_822 = arith.constant 0 : index
    %c1_823 = arith.constant 1 : index
    %c1_824 = arith.constant 1 : index
    %c0_825 = arith.constant 0 : index
    %1053 = vector.load %arg66[%c0_822, %c1_823, %c1_824, %c0_825] : memref<2x6x6x144xf32, #tpu.memory_space<vmem>>, vector<1x1x4x144xf32>
    %1054 = vector.shape_cast %1053 : vector<1x1x4x144xf32> to vector<4x144xf32>
    %1055 = vector.shape_cast %1052 : vector<4x144xf32> to vector<1x1x4x144xf32>
    tpu.vector_store %arg66[%c0_822, %c1_823, %c1_824, %c0_825], %1055 {strides = array<i32>} : memref<2x6x6x144xf32, #tpu.memory_space<vmem>>, vector<1x1x4x144xf32>,
    %1056 = vector.extract_strided_slice %1049 {offsets = [4, 0], sizes = [4, 144], strides = [1, 1]} : vector<32x144xf32> to vector<4x144xf32>
    %c0_826 = arith.constant 0 : index
    %c2_827 = arith.constant 2 : index
    %c1_828 = arith.constant 1 : index
    %c0_829 = arith.constant 0 : index
    %1057 = vector.load %arg66[%c0_826, %c2_827, %c1_828, %c0_829] : memref<2x6x6x144xf32, #tpu.memory_space<vmem>>, vector<1x1x4x144xf32>
    %1058 = vector.shape_cast %1057 : vector<1x1x4x144xf32> to vector<4x144xf32>
    %1059 = vector.shape_cast %1056 : vector<4x144xf32> to vector<1x1x4x144xf32>
    tpu.vector_store %arg66[%c0_826, %c2_827, %c1_828, %c0_829], %1059 {strides = array<i32>} : memref<2x6x6x144xf32, #tpu.memory_space<vmem>>, vector<1x1x4x144xf32>,
    %1060 = vector.extract_strided_slice %1049 {offsets = [8, 0], sizes = [4, 144], strides = [1, 1]} : vector<32x144xf32> to vector<4x144xf32>
    %c0_830 = arith.constant 0 : index
    %c3_831 = arith.constant 3 : index
    %c1_832 = arith.constant 1 : index
    %c0_833 = arith.constant 0 : index
    %1061 = vector.load %arg66[%c0_830, %c3_831, %c1_832, %c0_833] : memref<2x6x6x144xf32, #tpu.memory_space<vmem>>, vector<1x1x4x144xf32>
    %1062 = vector.shape_cast %1061 : vector<1x1x4x144xf32> to vector<4x144xf32>
    %1063 = vector.shape_cast %1060 : vector<4x144xf32> to vector<1x1x4x144xf32>
    tpu.vector_store %arg66[%c0_830, %c3_831, %c1_832, %c0_833], %1063 {strides = array<i32>} : memref<2x6x6x144xf32, #tpu.memory_space<vmem>>, vector<1x1x4x144xf32>,
    %1064 = vector.extract_strided_slice %1049 {offsets = [12, 0], sizes = [4, 144], strides = [1, 1]} : vector<32x144xf32> to vector<4x144xf32>
    %c0_834 = arith.constant 0 : index
    %c4_835 = arith.constant 4 : index
    %c1_836 = arith.constant 1 : index
    %c0_837 = arith.constant 0 : index
    %1065 = vector.load %arg66[%c0_834, %c4_835, %c1_836, %c0_837] : memref<2x6x6x144xf32, #tpu.memory_space<vmem>>, vector<1x1x4x144xf32>
    %1066 = vector.shape_cast %1065 : vector<1x1x4x144xf32> to vector<4x144xf32>
    %1067 = vector.shape_cast %1064 : vector<4x144xf32> to vector<1x1x4x144xf32>
    tpu.vector_store %arg66[%c0_834, %c4_835, %c1_836, %c0_837], %1067 {strides = array<i32>} : memref<2x6x6x144xf32, #tpu.memory_space<vmem>>, vector<1x1x4x144xf32>,
    %1068 = vector.extract_strided_slice %1049 {offsets = [16, 0], sizes = [4, 144], strides = [1, 1]} : vector<32x144xf32> to vector<4x144xf32>
    %c1_838 = arith.constant 1 : index
    %c1_839 = arith.constant 1 : index
    %c1_840 = arith.constant 1 : index
    %c0_841 = arith.constant 0 : index
    %1069 = vector.load %arg66[%c1_838, %c1_839, %c1_840, %c0_841] : memref<2x6x6x144xf32, #tpu.memory_space<vmem>>, vector<1x1x4x144xf32>
    %1070 = vector.shape_cast %1069 : vector<1x1x4x144xf32> to vector<4x144xf32>
    %1071 = vector.shape_cast %1068 : vector<4x144xf32> to vector<1x1x4x144xf32>
    tpu.vector_store %arg66[%c1_838, %c1_839, %c1_840, %c0_841], %1071 {strides = array<i32>} : memref<2x6x6x144xf32, #tpu.memory_space<vmem>>, vector<1x1x4x144xf32>,
    %1072 = vector.extract_strided_slice %1049 {offsets = [20, 0], sizes = [4, 144], strides = [1, 1]} : vector<32x144xf32> to vector<4x144xf32>
    %c1_842 = arith.constant 1 : index
    %c2_843 = arith.constant 2 : index
    %c1_844 = arith.constant 1 : index
    %c0_845 = arith.constant 0 : index
    %1073 = vector.load %arg66[%c1_842, %c2_843, %c1_844, %c0_845] : memref<2x6x6x144xf32, #tpu.memory_space<vmem>>, vector<1x1x4x144xf32>
    %1074 = vector.shape_cast %1073 : vector<1x1x4x144xf32> to vector<4x144xf32>
    %1075 = vector.shape_cast %1072 : vector<4x144xf32> to vector<1x1x4x144xf32>
    tpu.vector_store %arg66[%c1_842, %c2_843, %c1_844, %c0_845], %1075 {strides = array<i32>} : memref<2x6x6x144xf32, #tpu.memory_space<vmem>>, vector<1x1x4x144xf32>,
    %1076 = vector.extract_strided_slice %1049 {offsets = [24, 0], sizes = [4, 144], strides = [1, 1]} : vector<32x144xf32> to vector<4x144xf32>
    %c1_846 = arith.constant 1 : index
    %c3_847 = arith.constant 3 : index
    %c1_848 = arith.constant 1 : index
    %c0_849 = arith.constant 0 : index
    %1077 = vector.load %arg66[%c1_846, %c3_847, %c1_848, %c0_849] : memref<2x6x6x144xf32, #tpu.memory_space<vmem>>, vector<1x1x4x144xf32>
    %1078 = vector.shape_cast %1077 : vector<1x1x4x144xf32> to vector<4x144xf32>
    %1079 = vector.shape_cast %1076 : vector<4x144xf32> to vector<1x1x4x144xf32>
    tpu.vector_store %arg66[%c1_846, %c3_847, %c1_848, %c0_849], %1079 {strides = array<i32>} : memref<2x6x6x144xf32, #tpu.memory_space<vmem>>, vector<1x1x4x144xf32>,
    %1080 = vector.extract_strided_slice %1049 {offsets = [28, 0], sizes = [4, 144], strides = [1, 1]} : vector<32x144xf32> to vector<4x144xf32>
    %c1_850 = arith.constant 1 : index
    %c4_851 = arith.constant 4 : index
    %c1_852 = arith.constant 1 : index
    %c0_853 = arith.constant 0 : index
    %1081 = vector.load %arg66[%c1_850, %c4_851, %c1_852, %c0_853] : memref<2x6x6x144xf32, #tpu.memory_space<vmem>>, vector<1x1x4x144xf32>
    %1082 = vector.shape_cast %1081 : vector<1x1x4x144xf32> to vector<4x144xf32>
    %1083 = vector.shape_cast %1080 : vector<4x144xf32> to vector<1x1x4x144xf32>
    tpu.vector_store %arg66[%c1_850, %c4_851, %c1_852, %c0_853], %1083 {strides = array<i32>} : memref<2x6x6x144xf32, #tpu.memory_space<vmem>>, vector<1x1x4x144xf32>,
    %c0_854 = arith.constant 0 : index
    %c0_855 = arith.constant 0 : index
    %1084 = vector.load %arg32[%c0_854, %c0_855] : memref<1x144xf32, #tpu.memory_space<vmem>>, vector<1x144xf32>
    %c0_856 = arith.constant 0 : index
    %c0_857 = arith.constant 0 : index
    %1085 = vector.load %arg33[%c0_856, %c0_857] : memref<1x144xf32, #tpu.memory_space<vmem>>, vector<1x144xf32>
    %cst_858 = arith.constant 0.000000e+00 : f32
    %1086 = vector.broadcast %cst_858 : f32 to vector<2x144xf32>
    %c0_859 = arith.constant 0 : index
    %c0_860 = arith.constant 0 : index
    %c0_861 = arith.constant 0 : index
    %c0_862 = arith.constant 0 : index
    %1087 = vector.load %arg66[%c0_859, %c0_860, %c0_861, %c0_862] : memref<2x6x6x144xf32, #tpu.memory_space<vmem>>, vector<2x1x3x144xf32>
    %1088 = vector.shape_cast %1087 : vector<2x1x3x144xf32> to vector<2x3x144xf32>
    %c0_863 = arith.constant 0 : index
    %c0_864 = arith.constant 0 : index
    %1089 = vector.load %arg31[%c0_863, %c0_864] : memref<9x144xf32, #tpu.memory_space<vmem>>, vector<3x144xf32>
    %1090 = vector.shape_cast %1089 : vector<3x144xf32> to vector<1x3x144xf32>
    %1091 = vector.broadcast %1090 : vector<1x3x144xf32> to vector<2x3x144xf32>
    %1092 = arith.mulf %1088, %1091 : vector<2x3x144xf32>
    %cst_865 = arith.constant dense<0.000000e+00> : vector<2x144xf32>
    %1093 = vector.multi_reduction <add>, %1092, %cst_865 [1] : vector<2x3x144xf32> to vector<2x144xf32>
    %1094 = arith.addf %1086, %1093 : vector<2x144xf32>
    %c0_866 = arith.constant 0 : index
    %c1_867 = arith.constant 1 : index
    %c0_868 = arith.constant 0 : index
    %c0_869 = arith.constant 0 : index
    %1095 = vector.load %arg66[%c0_866, %c1_867, %c0_868, %c0_869] : memref<2x6x6x144xf32, #tpu.memory_space<vmem>>, vector<2x1x3x144xf32>
    %1096 = vector.shape_cast %1095 : vector<2x1x3x144xf32> to vector<2x3x144xf32>
    %c3_870 = arith.constant 3 : index
    %c0_871 = arith.constant 0 : index
    %1097 = vector.load %arg31[%c3_870, %c0_871] : memref<9x144xf32, #tpu.memory_space<vmem>>, vector<3x144xf32>
    %1098 = vector.shape_cast %1097 : vector<3x144xf32> to vector<1x3x144xf32>
    %1099 = vector.broadcast %1098 : vector<1x3x144xf32> to vector<2x3x144xf32>
    %1100 = arith.mulf %1096, %1099 : vector<2x3x144xf32>
    %cst_872 = arith.constant dense<0.000000e+00> : vector<2x144xf32>
    %1101 = vector.multi_reduction <add>, %1100, %cst_872 [1] : vector<2x3x144xf32> to vector<2x144xf32>
    %1102 = arith.addf %1094, %1101 : vector<2x144xf32>
    %c0_873 = arith.constant 0 : index
    %c2_874 = arith.constant 2 : index
    %c0_875 = arith.constant 0 : index
    %c0_876 = arith.constant 0 : index
    %1103 = vector.load %arg66[%c0_873, %c2_874, %c0_875, %c0_876] : memref<2x6x6x144xf32, #tpu.memory_space<vmem>>, vector<2x1x3x144xf32>
    %1104 = vector.shape_cast %1103 : vector<2x1x3x144xf32> to vector<2x3x144xf32>
    %c6_877 = arith.constant 6 : index
    %c0_878 = arith.constant 0 : index
    %1105 = vector.load %arg31[%c6_877, %c0_878] : memref<9x144xf32, #tpu.memory_space<vmem>>, vector<3x144xf32>
    %1106 = vector.shape_cast %1105 : vector<3x144xf32> to vector<1x3x144xf32>
    %1107 = vector.broadcast %1106 : vector<1x3x144xf32> to vector<2x3x144xf32>
    %1108 = arith.mulf %1104, %1107 : vector<2x3x144xf32>
    %cst_879 = arith.constant dense<0.000000e+00> : vector<2x144xf32>
    %1109 = vector.multi_reduction <add>, %1108, %cst_879 [1] : vector<2x3x144xf32> to vector<2x144xf32>
    %1110 = arith.addf %1102, %1109 : vector<2x144xf32>
    %1111 = vector.broadcast %1084 : vector<1x144xf32> to vector<2x144xf32>
    %1112 = arith.mulf %1110, %1111 : vector<2x144xf32>
    %1113 = vector.broadcast %1085 : vector<1x144xf32> to vector<2x144xf32>
    %1114 = arith.addf %1112, %1113 : vector<2x144xf32>
    %cst_880 = arith.constant 0.000000e+00 : f32
    %cst_881 = arith.constant 6.000000e+00 : f32
    %1115 = vector.broadcast %cst_880 : f32 to vector<2x144xf32>
    %1116 = arith.maximumf %1115, %1114 : vector<2x144xf32>
    %1117 = vector.broadcast %cst_881 : f32 to vector<2x144xf32>
    %1118 = arith.minimumf %1117, %1116 : vector<2x144xf32>
    %1119 = vector.extract_strided_slice %1118 {offsets = [0, 0], sizes = [1, 144], strides = [1, 1]} : vector<2x144xf32> to vector<1x144xf32>
    %c0_882 = arith.constant 0 : index
    %c0_883 = arith.constant 0 : index
    %1120 = vector.load %arg67[%c0_882, %c0_883] : memref<8x144xf32, #tpu.memory_space<vmem>>, vector<1x144xf32>
    tpu.vector_store %arg67[%c0_882, %c0_883], %1119 {strides = array<i32>} : memref<8x144xf32, #tpu.memory_space<vmem>>, vector<1x144xf32>,
    %1121 = vector.extract_strided_slice %1118 {offsets = [1, 0], sizes = [1, 144], strides = [1, 1]} : vector<2x144xf32> to vector<1x144xf32>
    %c4_884 = arith.constant 4 : index
    %c0_885 = arith.constant 0 : index
    %1122 = vector.load %arg67[%c4_884, %c0_885] : memref<8x144xf32, #tpu.memory_space<vmem>>, vector<1x144xf32>
    tpu.vector_store %arg67[%c4_884, %c0_885], %1121 {strides = array<i32>} : memref<8x144xf32, #tpu.memory_space<vmem>>, vector<1x144xf32>,
    %cst_886 = arith.constant 0.000000e+00 : f32
    %1123 = vector.broadcast %cst_886 : f32 to vector<2x144xf32>
    %c0_887 = arith.constant 0 : index
    %c0_888 = arith.constant 0 : index
    %c2_889 = arith.constant 2 : index
    %c0_890 = arith.constant 0 : index
    %1124 = vector.load %arg66[%c0_887, %c0_888, %c2_889, %c0_890] : memref<2x6x6x144xf32, #tpu.memory_space<vmem>>, vector<2x1x3x144xf32>
    %1125 = vector.shape_cast %1124 : vector<2x1x3x144xf32> to vector<2x3x144xf32>
    %c0_891 = arith.constant 0 : index
    %c0_892 = arith.constant 0 : index
    %1126 = vector.load %arg31[%c0_891, %c0_892] : memref<9x144xf32, #tpu.memory_space<vmem>>, vector<3x144xf32>
    %1127 = vector.shape_cast %1126 : vector<3x144xf32> to vector<1x3x144xf32>
    %1128 = vector.broadcast %1127 : vector<1x3x144xf32> to vector<2x3x144xf32>
    %1129 = arith.mulf %1125, %1128 : vector<2x3x144xf32>
    %cst_893 = arith.constant dense<0.000000e+00> : vector<2x144xf32>
    %1130 = vector.multi_reduction <add>, %1129, %cst_893 [1] : vector<2x3x144xf32> to vector<2x144xf32>
    %1131 = arith.addf %1123, %1130 : vector<2x144xf32>
    %c0_894 = arith.constant 0 : index
    %c1_895 = arith.constant 1 : index
    %c2_896 = arith.constant 2 : index
    %c0_897 = arith.constant 0 : index
    %1132 = vector.load %arg66[%c0_894, %c1_895, %c2_896, %c0_897] : memref<2x6x6x144xf32, #tpu.memory_space<vmem>>, vector<2x1x3x144xf32>
    %1133 = vector.shape_cast %1132 : vector<2x1x3x144xf32> to vector<2x3x144xf32>
    %c3_898 = arith.constant 3 : index
    %c0_899 = arith.constant 0 : index
    %1134 = vector.load %arg31[%c3_898, %c0_899] : memref<9x144xf32, #tpu.memory_space<vmem>>, vector<3x144xf32>
    %1135 = vector.shape_cast %1134 : vector<3x144xf32> to vector<1x3x144xf32>
    %1136 = vector.broadcast %1135 : vector<1x3x144xf32> to vector<2x3x144xf32>
    %1137 = arith.mulf %1133, %1136 : vector<2x3x144xf32>
    %cst_900 = arith.constant dense<0.000000e+00> : vector<2x144xf32>
    %1138 = vector.multi_reduction <add>, %1137, %cst_900 [1] : vector<2x3x144xf32> to vector<2x144xf32>
    %1139 = arith.addf %1131, %1138 : vector<2x144xf32>
    %c0_901 = arith.constant 0 : index
    %c2_902 = arith.constant 2 : index
    %c2_903 = arith.constant 2 : index
    %c0_904 = arith.constant 0 : index
    %1140 = vector.load %arg66[%c0_901, %c2_902, %c2_903, %c0_904] : memref<2x6x6x144xf32, #tpu.memory_space<vmem>>, vector<2x1x3x144xf32>
    %1141 = vector.shape_cast %1140 : vector<2x1x3x144xf32> to vector<2x3x144xf32>
    %c6_905 = arith.constant 6 : index
    %c0_906 = arith.constant 0 : index
    %1142 = vector.load %arg31[%c6_905, %c0_906] : memref<9x144xf32, #tpu.memory_space<vmem>>, vector<3x144xf32>
    %1143 = vector.shape_cast %1142 : vector<3x144xf32> to vector<1x3x144xf32>
    %1144 = vector.broadcast %1143 : vector<1x3x144xf32> to vector<2x3x144xf32>
    %1145 = arith.mulf %1141, %1144 : vector<2x3x144xf32>
    %cst_907 = arith.constant dense<0.000000e+00> : vector<2x144xf32>
    %1146 = vector.multi_reduction <add>, %1145, %cst_907 [1] : vector<2x3x144xf32> to vector<2x144xf32>
    %1147 = arith.addf %1139, %1146 : vector<2x144xf32>
    %1148 = vector.broadcast %1084 : vector<1x144xf32> to vector<2x144xf32>
    %1149 = arith.mulf %1147, %1148 : vector<2x144xf32>
    %1150 = vector.broadcast %1085 : vector<1x144xf32> to vector<2x144xf32>
    %1151 = arith.addf %1149, %1150 : vector<2x144xf32>
    %cst_908 = arith.constant 0.000000e+00 : f32
    %cst_909 = arith.constant 6.000000e+00 : f32
    %1152 = vector.broadcast %cst_908 : f32 to vector<2x144xf32>
    %1153 = arith.maximumf %1152, %1151 : vector<2x144xf32>
    %1154 = vector.broadcast %cst_909 : f32 to vector<2x144xf32>
    %1155 = arith.minimumf %1154, %1153 : vector<2x144xf32>
    %1156 = vector.extract_strided_slice %1155 {offsets = [0, 0], sizes = [1, 144], strides = [1, 1]} : vector<2x144xf32> to vector<1x144xf32>
    %c1_910 = arith.constant 1 : index
    %c0_911 = arith.constant 0 : index
    %1157 = vector.load %arg67[%c1_910, %c0_911] : memref<8x144xf32, #tpu.memory_space<vmem>>, vector<1x144xf32>
    tpu.vector_store %arg67[%c1_910, %c0_911], %1156 {strides = array<i32>} : memref<8x144xf32, #tpu.memory_space<vmem>>, vector<1x144xf32>,
    %1158 = vector.extract_strided_slice %1155 {offsets = [1, 0], sizes = [1, 144], strides = [1, 1]} : vector<2x144xf32> to vector<1x144xf32>
    %c5_912 = arith.constant 5 : index
    %c0_913 = arith.constant 0 : index
    %1159 = vector.load %arg67[%c5_912, %c0_913] : memref<8x144xf32, #tpu.memory_space<vmem>>, vector<1x144xf32>
    tpu.vector_store %arg67[%c5_912, %c0_913], %1158 {strides = array<i32>} : memref<8x144xf32, #tpu.memory_space<vmem>>, vector<1x144xf32>,
    %cst_914 = arith.constant 0.000000e+00 : f32
    %1160 = vector.broadcast %cst_914 : f32 to vector<2x144xf32>
    %c0_915 = arith.constant 0 : index
    %c2_916 = arith.constant 2 : index
    %c0_917 = arith.constant 0 : index
    %c0_918 = arith.constant 0 : index
    %1161 = vector.load %arg66[%c0_915, %c2_916, %c0_917, %c0_918] : memref<2x6x6x144xf32, #tpu.memory_space<vmem>>, vector<2x1x3x144xf32>
    %1162 = vector.shape_cast %1161 : vector<2x1x3x144xf32> to vector<2x3x144xf32>
    %c0_919 = arith.constant 0 : index
    %c0_920 = arith.constant 0 : index
    %1163 = vector.load %arg31[%c0_919, %c0_920] : memref<9x144xf32, #tpu.memory_space<vmem>>, vector<3x144xf32>
    %1164 = vector.shape_cast %1163 : vector<3x144xf32> to vector<1x3x144xf32>
    %1165 = vector.broadcast %1164 : vector<1x3x144xf32> to vector<2x3x144xf32>
    %1166 = arith.mulf %1162, %1165 : vector<2x3x144xf32>
    %cst_921 = arith.constant dense<0.000000e+00> : vector<2x144xf32>
    %1167 = vector.multi_reduction <add>, %1166, %cst_921 [1] : vector<2x3x144xf32> to vector<2x144xf32>
    %1168 = arith.addf %1160, %1167 : vector<2x144xf32>
    %c0_922 = arith.constant 0 : index
    %c3_923 = arith.constant 3 : index
    %c0_924 = arith.constant 0 : index
    %c0_925 = arith.constant 0 : index
    %1169 = vector.load %arg66[%c0_922, %c3_923, %c0_924, %c0_925] : memref<2x6x6x144xf32, #tpu.memory_space<vmem>>, vector<2x1x3x144xf32>
    %1170 = vector.shape_cast %1169 : vector<2x1x3x144xf32> to vector<2x3x144xf32>
    %c3_926 = arith.constant 3 : index
    %c0_927 = arith.constant 0 : index
    %1171 = vector.load %arg31[%c3_926, %c0_927] : memref<9x144xf32, #tpu.memory_space<vmem>>, vector<3x144xf32>
    %1172 = vector.shape_cast %1171 : vector<3x144xf32> to vector<1x3x144xf32>
    %1173 = vector.broadcast %1172 : vector<1x3x144xf32> to vector<2x3x144xf32>
    %1174 = arith.mulf %1170, %1173 : vector<2x3x144xf32>
    %cst_928 = arith.constant dense<0.000000e+00> : vector<2x144xf32>
    %1175 = vector.multi_reduction <add>, %1174, %cst_928 [1] : vector<2x3x144xf32> to vector<2x144xf32>
    %1176 = arith.addf %1168, %1175 : vector<2x144xf32>
    %c0_929 = arith.constant 0 : index
    %c4_930 = arith.constant 4 : index
    %c0_931 = arith.constant 0 : index
    %c0_932 = arith.constant 0 : index
    %1177 = vector.load %arg66[%c0_929, %c4_930, %c0_931, %c0_932] : memref<2x6x6x144xf32, #tpu.memory_space<vmem>>, vector<2x1x3x144xf32>
    %1178 = vector.shape_cast %1177 : vector<2x1x3x144xf32> to vector<2x3x144xf32>
    %c6_933 = arith.constant 6 : index
    %c0_934 = arith.constant 0 : index
    %1179 = vector.load %arg31[%c6_933, %c0_934] : memref<9x144xf32, #tpu.memory_space<vmem>>, vector<3x144xf32>
    %1180 = vector.shape_cast %1179 : vector<3x144xf32> to vector<1x3x144xf32>
    %1181 = vector.broadcast %1180 : vector<1x3x144xf32> to vector<2x3x144xf32>
    %1182 = arith.mulf %1178, %1181 : vector<2x3x144xf32>
    %cst_935 = arith.constant dense<0.000000e+00> : vector<2x144xf32>
    %1183 = vector.multi_reduction <add>, %1182, %cst_935 [1] : vector<2x3x144xf32> to vector<2x144xf32>
    %1184 = arith.addf %1176, %1183 : vector<2x144xf32>
    %1185 = vector.broadcast %1084 : vector<1x144xf32> to vector<2x144xf32>
    %1186 = arith.mulf %1184, %1185 : vector<2x144xf32>
    %1187 = vector.broadcast %1085 : vector<1x144xf32> to vector<2x144xf32>
    %1188 = arith.addf %1186, %1187 : vector<2x144xf32>
    %cst_936 = arith.constant 0.000000e+00 : f32
    %cst_937 = arith.constant 6.000000e+00 : f32
    %1189 = vector.broadcast %cst_936 : f32 to vector<2x144xf32>
    %1190 = arith.maximumf %1189, %1188 : vector<2x144xf32>
    %1191 = vector.broadcast %cst_937 : f32 to vector<2x144xf32>
    %1192 = arith.minimumf %1191, %1190 : vector<2x144xf32>
    %1193 = vector.extract_strided_slice %1192 {offsets = [0, 0], sizes = [1, 144], strides = [1, 1]} : vector<2x144xf32> to vector<1x144xf32>
    %c2_938 = arith.constant 2 : index
    %c0_939 = arith.constant 0 : index
    %1194 = vector.load %arg67[%c2_938, %c0_939] : memref<8x144xf32, #tpu.memory_space<vmem>>, vector<1x144xf32>
    tpu.vector_store %arg67[%c2_938, %c0_939], %1193 {strides = array<i32>} : memref<8x144xf32, #tpu.memory_space<vmem>>, vector<1x144xf32>,
    %1195 = vector.extract_strided_slice %1192 {offsets = [1, 0], sizes = [1, 144], strides = [1, 1]} : vector<2x144xf32> to vector<1x144xf32>
    %c6_940 = arith.constant 6 : index
    %c0_941 = arith.constant 0 : index
    %1196 = vector.load %arg67[%c6_940, %c0_941] : memref<8x144xf32, #tpu.memory_space<vmem>>, vector<1x144xf32>
    tpu.vector_store %arg67[%c6_940, %c0_941], %1195 {strides = array<i32>} : memref<8x144xf32, #tpu.memory_space<vmem>>, vector<1x144xf32>,
    %cst_942 = arith.constant 0.000000e+00 : f32
    %1197 = vector.broadcast %cst_942 : f32 to vector<2x144xf32>
    %c0_943 = arith.constant 0 : index
    %c2_944 = arith.constant 2 : index
    %c2_945 = arith.constant 2 : index
    %c0_946 = arith.constant 0 : index
    %1198 = vector.load %arg66[%c0_943, %c2_944, %c2_945, %c0_946] : memref<2x6x6x144xf32, #tpu.memory_space<vmem>>, vector<2x1x3x144xf32>
    %1199 = vector.shape_cast %1198 : vector<2x1x3x144xf32> to vector<2x3x144xf32>
    %c0_947 = arith.constant 0 : index
    %c0_948 = arith.constant 0 : index
    %1200 = vector.load %arg31[%c0_947, %c0_948] : memref<9x144xf32, #tpu.memory_space<vmem>>, vector<3x144xf32>
    %1201 = vector.shape_cast %1200 : vector<3x144xf32> to vector<1x3x144xf32>
    %1202 = vector.broadcast %1201 : vector<1x3x144xf32> to vector<2x3x144xf32>
    %1203 = arith.mulf %1199, %1202 : vector<2x3x144xf32>
    %cst_949 = arith.constant dense<0.000000e+00> : vector<2x144xf32>
    %1204 = vector.multi_reduction <add>, %1203, %cst_949 [1] : vector<2x3x144xf32> to vector<2x144xf32>
    %1205 = arith.addf %1197, %1204 : vector<2x144xf32>
    %c0_950 = arith.constant 0 : index
    %c3_951 = arith.constant 3 : index
    %c2_952 = arith.constant 2 : index
    %c0_953 = arith.constant 0 : index
    %1206 = vector.load %arg66[%c0_950, %c3_951, %c2_952, %c0_953] : memref<2x6x6x144xf32, #tpu.memory_space<vmem>>, vector<2x1x3x144xf32>
    %1207 = vector.shape_cast %1206 : vector<2x1x3x144xf32> to vector<2x3x144xf32>
    %c3_954 = arith.constant 3 : index
    %c0_955 = arith.constant 0 : index
    %1208 = vector.load %arg31[%c3_954, %c0_955] : memref<9x144xf32, #tpu.memory_space<vmem>>, vector<3x144xf32>
    %1209 = vector.shape_cast %1208 : vector<3x144xf32> to vector<1x3x144xf32>
    %1210 = vector.broadcast %1209 : vector<1x3x144xf32> to vector<2x3x144xf32>
    %1211 = arith.mulf %1207, %1210 : vector<2x3x144xf32>
    %cst_956 = arith.constant dense<0.000000e+00> : vector<2x144xf32>
    %1212 = vector.multi_reduction <add>, %1211, %cst_956 [1] : vector<2x3x144xf32> to vector<2x144xf32>
    %1213 = arith.addf %1205, %1212 : vector<2x144xf32>
    %c0_957 = arith.constant 0 : index
    %c4_958 = arith.constant 4 : index
    %c2_959 = arith.constant 2 : index
    %c0_960 = arith.constant 0 : index
    %1214 = vector.load %arg66[%c0_957, %c4_958, %c2_959, %c0_960] : memref<2x6x6x144xf32, #tpu.memory_space<vmem>>, vector<2x1x3x144xf32>
    %1215 = vector.shape_cast %1214 : vector<2x1x3x144xf32> to vector<2x3x144xf32>
    %c6_961 = arith.constant 6 : index
    %c0_962 = arith.constant 0 : index
    %1216 = vector.load %arg31[%c6_961, %c0_962] : memref<9x144xf32, #tpu.memory_space<vmem>>, vector<3x144xf32>
    %1217 = vector.shape_cast %1216 : vector<3x144xf32> to vector<1x3x144xf32>
    %1218 = vector.broadcast %1217 : vector<1x3x144xf32> to vector<2x3x144xf32>
    %1219 = arith.mulf %1215, %1218 : vector<2x3x144xf32>
    %cst_963 = arith.constant dense<0.000000e+00> : vector<2x144xf32>
    %1220 = vector.multi_reduction <add>, %1219, %cst_963 [1] : vector<2x3x144xf32> to vector<2x144xf32>
    %1221 = arith.addf %1213, %1220 : vector<2x144xf32>
    %1222 = vector.broadcast %1084 : vector<1x144xf32> to vector<2x144xf32>
    %1223 = arith.mulf %1221, %1222 : vector<2x144xf32>
    %1224 = vector.broadcast %1085 : vector<1x144xf32> to vector<2x144xf32>
    %1225 = arith.addf %1223, %1224 : vector<2x144xf32>
    %cst_964 = arith.constant 0.000000e+00 : f32
    %cst_965 = arith.constant 6.000000e+00 : f32
    %1226 = vector.broadcast %cst_964 : f32 to vector<2x144xf32>
    %1227 = arith.maximumf %1226, %1225 : vector<2x144xf32>
    %1228 = vector.broadcast %cst_965 : f32 to vector<2x144xf32>
    %1229 = arith.minimumf %1228, %1227 : vector<2x144xf32>
    %1230 = vector.extract_strided_slice %1229 {offsets = [0, 0], sizes = [1, 144], strides = [1, 1]} : vector<2x144xf32> to vector<1x144xf32>
    %c3_966 = arith.constant 3 : index
    %c0_967 = arith.constant 0 : index
    %1231 = vector.load %arg67[%c3_966, %c0_967] : memref<8x144xf32, #tpu.memory_space<vmem>>, vector<1x144xf32>
    tpu.vector_store %arg67[%c3_966, %c0_967], %1230 {strides = array<i32>} : memref<8x144xf32, #tpu.memory_space<vmem>>, vector<1x144xf32>,
    %1232 = vector.extract_strided_slice %1229 {offsets = [1, 0], sizes = [1, 144], strides = [1, 1]} : vector<2x144xf32> to vector<1x144xf32>
    %c7_968 = arith.constant 7 : index
    %c0_969 = arith.constant 0 : index
    %1233 = vector.load %arg67[%c7_968, %c0_969] : memref<8x144xf32, #tpu.memory_space<vmem>>, vector<1x144xf32>
    tpu.vector_store %arg67[%c7_968, %c0_969], %1232 {strides = array<i32>} : memref<8x144xf32, #tpu.memory_space<vmem>>, vector<1x144xf32>,
    %c0_970 = arith.constant 0 : index
    %c0_971 = arith.constant 0 : index
    %1234 = vector.load %arg67[%c0_970, %c0_971] : memref<8x144xf32, #tpu.memory_space<vmem>>, vector<8x144xf32>
    %1235 = arith.truncf %1234 : vector<8x144xf32> to vector<8x144xbf16>
    %c0_972 = arith.constant 0 : index
    %c0_973 = arith.constant 0 : index
    %1236 = vector.load %arg34[%c0_972, %c0_973] : memref<144x32xbf16, #tpu.memory_space<vmem>>, vector<144x32xbf16>
    %cst_974 = arith.constant dense<0.000000e+00> : vector<8x32xf32>
    %1237 = tpu.matmul %1235, %1236, %cst_974 {dimension_numbers = #tpu.dot_dimension_numbers<[1], [0], [0], [1], [0, 0, 1, 1], [], []>} : vector<8x144xbf16>, vector<144x32xbf16>, vector<8x32xf32> -> vector<8x32xf32>
    %c0_975 = arith.constant 0 : index
    %c0_976 = arith.constant 0 : index
    %1238 = vector.load %arg35[%c0_975, %c0_976] : memref<1x32xf32, #tpu.memory_space<vmem>>, vector<1x32xf32>
    %1239 = vector.broadcast %1238 : vector<1x32xf32> to vector<8x32xf32>
    %1240 = arith.mulf %1237, %1239 : vector<8x32xf32>
    %c0_977 = arith.constant 0 : index
    %c0_978 = arith.constant 0 : index
    %1241 = vector.load %arg36[%c0_977, %c0_978] : memref<1x32xf32, #tpu.memory_space<vmem>>, vector<1x32xf32>
    %1242 = vector.broadcast %1241 : vector<1x32xf32> to vector<8x32xf32>
    %1243 = arith.addf %1240, %1242 : vector<8x32xf32>
    %1244 = arith.truncf %1243 : vector<8x32xf32> to vector<8x32xbf16>
    %c0_979 = arith.constant 0 : index
    %c0_980 = arith.constant 0 : index
    %1245 = vector.load %arg37[%c0_979, %c0_980] : memref<32x192xbf16, #tpu.memory_space<vmem>>, vector<32x192xbf16>
    %cst_981 = arith.constant dense<0.000000e+00> : vector<8x192xf32>
    %1246 = tpu.matmul %1244, %1245, %cst_981 {dimension_numbers = #tpu.dot_dimension_numbers<[1], [0], [0], [1], [0, 0, 1, 1], [], []>} : vector<8x32xbf16>, vector<32x192xbf16>, vector<8x192xf32> -> vector<8x192xf32>
    %c0_982 = arith.constant 0 : index
    %c0_983 = arith.constant 0 : index
    %1247 = vector.load %arg38[%c0_982, %c0_983] : memref<1x192xf32, #tpu.memory_space<vmem>>, vector<1x192xf32>
    %1248 = vector.broadcast %1247 : vector<1x192xf32> to vector<8x192xf32>
    %1249 = arith.mulf %1246, %1248 : vector<8x192xf32>
    %c0_984 = arith.constant 0 : index
    %c0_985 = arith.constant 0 : index
    %1250 = vector.load %arg39[%c0_984, %c0_985] : memref<1x192xf32, #tpu.memory_space<vmem>>, vector<1x192xf32>
    %1251 = vector.broadcast %1250 : vector<1x192xf32> to vector<8x192xf32>
    %1252 = arith.addf %1249, %1251 : vector<8x192xf32>
    %cst_986 = arith.constant 0.000000e+00 : f32
    %cst_987 = arith.constant 6.000000e+00 : f32
    %1253 = vector.broadcast %cst_986 : f32 to vector<8x192xf32>
    %1254 = arith.maximumf %1253, %1252 : vector<8x192xf32>
    %1255 = vector.broadcast %cst_987 : f32 to vector<8x192xf32>
    %1256 = arith.minimumf %1255, %1254 : vector<8x192xf32>
    %cst_988 = arith.constant 0.000000e+00 : f32
    %1257 = vector.broadcast %cst_988 : f32 to vector<2x4x4x192xf32>
    %c0_989 = arith.constant 0 : index
    %c0_990 = arith.constant 0 : index
    %c0_991 = arith.constant 0 : index
    %c0_992 = arith.constant 0 : index
    %1258 = vector.load %arg68[%c0_989, %c0_990, %c0_991, %c0_992] : memref<2x4x4x192xf32, #tpu.memory_space<vmem>>, vector<2x4x4x192xf32>
    tpu.vector_store %arg68[%c0_989, %c0_990, %c0_991, %c0_992], %1257 {strides = array<i32>} : memref<2x4x4x192xf32, #tpu.memory_space<vmem>>, vector<2x4x4x192xf32>,
    %1259 = vector.extract_strided_slice %1256 {offsets = [0, 0], sizes = [2, 192], strides = [1, 1]} : vector<8x192xf32> to vector<2x192xf32>
    %c0_993 = arith.constant 0 : index
    %c1_994 = arith.constant 1 : index
    %c1_995 = arith.constant 1 : index
    %c0_996 = arith.constant 0 : index
    %1260 = vector.load %arg68[%c0_993, %c1_994, %c1_995, %c0_996] : memref<2x4x4x192xf32, #tpu.memory_space<vmem>>, vector<1x1x2x192xf32>
    %1261 = vector.shape_cast %1260 : vector<1x1x2x192xf32> to vector<2x192xf32>
    %1262 = vector.shape_cast %1259 : vector<2x192xf32> to vector<1x1x2x192xf32>
    tpu.vector_store %arg68[%c0_993, %c1_994, %c1_995, %c0_996], %1262 {strides = array<i32>} : memref<2x4x4x192xf32, #tpu.memory_space<vmem>>, vector<1x1x2x192xf32>,
    %1263 = vector.extract_strided_slice %1256 {offsets = [2, 0], sizes = [2, 192], strides = [1, 1]} : vector<8x192xf32> to vector<2x192xf32>
    %c0_997 = arith.constant 0 : index
    %c2_998 = arith.constant 2 : index
    %c1_999 = arith.constant 1 : index
    %c0_1000 = arith.constant 0 : index
    %1264 = vector.load %arg68[%c0_997, %c2_998, %c1_999, %c0_1000] : memref<2x4x4x192xf32, #tpu.memory_space<vmem>>, vector<1x1x2x192xf32>
    %1265 = vector.shape_cast %1264 : vector<1x1x2x192xf32> to vector<2x192xf32>
    %1266 = vector.shape_cast %1263 : vector<2x192xf32> to vector<1x1x2x192xf32>
    tpu.vector_store %arg68[%c0_997, %c2_998, %c1_999, %c0_1000], %1266 {strides = array<i32>} : memref<2x4x4x192xf32, #tpu.memory_space<vmem>>, vector<1x1x2x192xf32>,
    %1267 = vector.extract_strided_slice %1256 {offsets = [4, 0], sizes = [2, 192], strides = [1, 1]} : vector<8x192xf32> to vector<2x192xf32>
    %c1_1001 = arith.constant 1 : index
    %c1_1002 = arith.constant 1 : index
    %c1_1003 = arith.constant 1 : index
    %c0_1004 = arith.constant 0 : index
    %1268 = vector.load %arg68[%c1_1001, %c1_1002, %c1_1003, %c0_1004] : memref<2x4x4x192xf32, #tpu.memory_space<vmem>>, vector<1x1x2x192xf32>
    %1269 = vector.shape_cast %1268 : vector<1x1x2x192xf32> to vector<2x192xf32>
    %1270 = vector.shape_cast %1267 : vector<2x192xf32> to vector<1x1x2x192xf32>
    tpu.vector_store %arg68[%c1_1001, %c1_1002, %c1_1003, %c0_1004], %1270 {strides = array<i32>} : memref<2x4x4x192xf32, #tpu.memory_space<vmem>>, vector<1x1x2x192xf32>,
    %1271 = vector.extract_strided_slice %1256 {offsets = [6, 0], sizes = [2, 192], strides = [1, 1]} : vector<8x192xf32> to vector<2x192xf32>
    %c1_1005 = arith.constant 1 : index
    %c2_1006 = arith.constant 2 : index
    %c1_1007 = arith.constant 1 : index
    %c0_1008 = arith.constant 0 : index
    %1272 = vector.load %arg68[%c1_1005, %c2_1006, %c1_1007, %c0_1008] : memref<2x4x4x192xf32, #tpu.memory_space<vmem>>, vector<1x1x2x192xf32>
    %1273 = vector.shape_cast %1272 : vector<1x1x2x192xf32> to vector<2x192xf32>
    %1274 = vector.shape_cast %1271 : vector<2x192xf32> to vector<1x1x2x192xf32>
    tpu.vector_store %arg68[%c1_1005, %c2_1006, %c1_1007, %c0_1008], %1274 {strides = array<i32>} : memref<2x4x4x192xf32, #tpu.memory_space<vmem>>, vector<1x1x2x192xf32>,
    %cst_1009 = arith.constant 0.000000e+00 : f32
    %1275 = vector.broadcast %cst_1009 : f32 to vector<2x2x2x192xf32>
    %c0_1010 = arith.constant 0 : index
    %c0_1011 = arith.constant 0 : index
    %c0_1012 = arith.constant 0 : index
    %c0_1013 = arith.constant 0 : index
    %1276 = vector.load %arg68[%c0_1010, %c0_1011, %c0_1012, %c0_1013] : memref<2x4x4x192xf32, #tpu.memory_space<vmem>>, vector<2x2x2x192xf32>
    %c0_1014 = arith.constant 0 : index
    %c0_1015 = arith.constant 0 : index
    %1277 = vector.load %arg40[%c0_1014, %c0_1015] : memref<9x192xf32, #tpu.memory_space<vmem>>, vector<1x192xf32>
    %1278 = vector.shape_cast %1277 : vector<1x192xf32> to vector<1x1x1x192xf32>
    %1279 = vector.broadcast %1278 : vector<1x1x1x192xf32> to vector<2x2x2x192xf32>
    %1280 = arith.mulf %1276, %1279 : vector<2x2x2x192xf32>
    %1281 = arith.addf %1275, %1280 : vector<2x2x2x192xf32>
    %c0_1016 = arith.constant 0 : index
    %c0_1017 = arith.constant 0 : index
    %c1_1018 = arith.constant 1 : index
    %c0_1019 = arith.constant 0 : index
    %1282 = vector.load %arg68[%c0_1016, %c0_1017, %c1_1018, %c0_1019] : memref<2x4x4x192xf32, #tpu.memory_space<vmem>>, vector<2x2x2x192xf32>
    %c1_1020 = arith.constant 1 : index
    %c0_1021 = arith.constant 0 : index
    %1283 = vector.load %arg40[%c1_1020, %c0_1021] : memref<9x192xf32, #tpu.memory_space<vmem>>, vector<1x192xf32>
    %1284 = vector.shape_cast %1283 : vector<1x192xf32> to vector<1x1x1x192xf32>
    %1285 = vector.broadcast %1284 : vector<1x1x1x192xf32> to vector<2x2x2x192xf32>
    %1286 = arith.mulf %1282, %1285 : vector<2x2x2x192xf32>
    %1287 = arith.addf %1281, %1286 : vector<2x2x2x192xf32>
    %c0_1022 = arith.constant 0 : index
    %c0_1023 = arith.constant 0 : index
    %c2_1024 = arith.constant 2 : index
    %c0_1025 = arith.constant 0 : index
    %1288 = vector.load %arg68[%c0_1022, %c0_1023, %c2_1024, %c0_1025] : memref<2x4x4x192xf32, #tpu.memory_space<vmem>>, vector<2x2x2x192xf32>
    %c2_1026 = arith.constant 2 : index
    %c0_1027 = arith.constant 0 : index
    %1289 = vector.load %arg40[%c2_1026, %c0_1027] : memref<9x192xf32, #tpu.memory_space<vmem>>, vector<1x192xf32>
    %1290 = vector.shape_cast %1289 : vector<1x192xf32> to vector<1x1x1x192xf32>
    %1291 = vector.broadcast %1290 : vector<1x1x1x192xf32> to vector<2x2x2x192xf32>
    %1292 = arith.mulf %1288, %1291 : vector<2x2x2x192xf32>
    %1293 = arith.addf %1287, %1292 : vector<2x2x2x192xf32>
    %c0_1028 = arith.constant 0 : index
    %c1_1029 = arith.constant 1 : index
    %c0_1030 = arith.constant 0 : index
    %c0_1031 = arith.constant 0 : index
    %1294 = vector.load %arg68[%c0_1028, %c1_1029, %c0_1030, %c0_1031] : memref<2x4x4x192xf32, #tpu.memory_space<vmem>>, vector<2x2x2x192xf32>
    %c3_1032 = arith.constant 3 : index
    %c0_1033 = arith.constant 0 : index
    %1295 = vector.load %arg40[%c3_1032, %c0_1033] : memref<9x192xf32, #tpu.memory_space<vmem>>, vector<1x192xf32>
    %1296 = vector.shape_cast %1295 : vector<1x192xf32> to vector<1x1x1x192xf32>
    %1297 = vector.broadcast %1296 : vector<1x1x1x192xf32> to vector<2x2x2x192xf32>
    %1298 = arith.mulf %1294, %1297 : vector<2x2x2x192xf32>
    %1299 = arith.addf %1293, %1298 : vector<2x2x2x192xf32>
    %c0_1034 = arith.constant 0 : index
    %c1_1035 = arith.constant 1 : index
    %c1_1036 = arith.constant 1 : index
    %c0_1037 = arith.constant 0 : index
    %1300 = vector.load %arg68[%c0_1034, %c1_1035, %c1_1036, %c0_1037] : memref<2x4x4x192xf32, #tpu.memory_space<vmem>>, vector<2x2x2x192xf32>
    %c4_1038 = arith.constant 4 : index
    %c0_1039 = arith.constant 0 : index
    %1301 = vector.load %arg40[%c4_1038, %c0_1039] : memref<9x192xf32, #tpu.memory_space<vmem>>, vector<1x192xf32>
    %1302 = vector.shape_cast %1301 : vector<1x192xf32> to vector<1x1x1x192xf32>
    %1303 = vector.broadcast %1302 : vector<1x1x1x192xf32> to vector<2x2x2x192xf32>
    %1304 = arith.mulf %1300, %1303 : vector<2x2x2x192xf32>
    %1305 = arith.addf %1299, %1304 : vector<2x2x2x192xf32>
    %c0_1040 = arith.constant 0 : index
    %c1_1041 = arith.constant 1 : index
    %c2_1042 = arith.constant 2 : index
    %c0_1043 = arith.constant 0 : index
    %1306 = vector.load %arg68[%c0_1040, %c1_1041, %c2_1042, %c0_1043] : memref<2x4x4x192xf32, #tpu.memory_space<vmem>>, vector<2x2x2x192xf32>
    %c5_1044 = arith.constant 5 : index
    %c0_1045 = arith.constant 0 : index
    %1307 = vector.load %arg40[%c5_1044, %c0_1045] : memref<9x192xf32, #tpu.memory_space<vmem>>, vector<1x192xf32>
    %1308 = vector.shape_cast %1307 : vector<1x192xf32> to vector<1x1x1x192xf32>
    %1309 = vector.broadcast %1308 : vector<1x1x1x192xf32> to vector<2x2x2x192xf32>
    %1310 = arith.mulf %1306, %1309 : vector<2x2x2x192xf32>
    %1311 = arith.addf %1305, %1310 : vector<2x2x2x192xf32>
    %c0_1046 = arith.constant 0 : index
    %c2_1047 = arith.constant 2 : index
    %c0_1048 = arith.constant 0 : index
    %c0_1049 = arith.constant 0 : index
    %1312 = vector.load %arg68[%c0_1046, %c2_1047, %c0_1048, %c0_1049] : memref<2x4x4x192xf32, #tpu.memory_space<vmem>>, vector<2x2x2x192xf32>
    %c6_1050 = arith.constant 6 : index
    %c0_1051 = arith.constant 0 : index
    %1313 = vector.load %arg40[%c6_1050, %c0_1051] : memref<9x192xf32, #tpu.memory_space<vmem>>, vector<1x192xf32>
    %1314 = vector.shape_cast %1313 : vector<1x192xf32> to vector<1x1x1x192xf32>
    %1315 = vector.broadcast %1314 : vector<1x1x1x192xf32> to vector<2x2x2x192xf32>
    %1316 = arith.mulf %1312, %1315 : vector<2x2x2x192xf32>
    %1317 = arith.addf %1311, %1316 : vector<2x2x2x192xf32>
    %c0_1052 = arith.constant 0 : index
    %c2_1053 = arith.constant 2 : index
    %c1_1054 = arith.constant 1 : index
    %c0_1055 = arith.constant 0 : index
    %1318 = vector.load %arg68[%c0_1052, %c2_1053, %c1_1054, %c0_1055] : memref<2x4x4x192xf32, #tpu.memory_space<vmem>>, vector<2x2x2x192xf32>
    %c7_1056 = arith.constant 7 : index
    %c0_1057 = arith.constant 0 : index
    %1319 = vector.load %arg40[%c7_1056, %c0_1057] : memref<9x192xf32, #tpu.memory_space<vmem>>, vector<1x192xf32>
    %1320 = vector.shape_cast %1319 : vector<1x192xf32> to vector<1x1x1x192xf32>
    %1321 = vector.broadcast %1320 : vector<1x1x1x192xf32> to vector<2x2x2x192xf32>
    %1322 = arith.mulf %1318, %1321 : vector<2x2x2x192xf32>
    %1323 = arith.addf %1317, %1322 : vector<2x2x2x192xf32>
    %c0_1058 = arith.constant 0 : index
    %c2_1059 = arith.constant 2 : index
    %c2_1060 = arith.constant 2 : index
    %c0_1061 = arith.constant 0 : index
    %1324 = vector.load %arg68[%c0_1058, %c2_1059, %c2_1060, %c0_1061] : memref<2x4x4x192xf32, #tpu.memory_space<vmem>>, vector<2x2x2x192xf32>
    %c8_1062 = arith.constant 8 : index
    %c0_1063 = arith.constant 0 : index
    %1325 = vector.load %arg40[%c8_1062, %c0_1063] : memref<9x192xf32, #tpu.memory_space<vmem>>, vector<1x192xf32>
    %1326 = vector.shape_cast %1325 : vector<1x192xf32> to vector<1x1x1x192xf32>
    %1327 = vector.broadcast %1326 : vector<1x1x1x192xf32> to vector<2x2x2x192xf32>
    %1328 = arith.mulf %1324, %1327 : vector<2x2x2x192xf32>
    %1329 = arith.addf %1323, %1328 : vector<2x2x2x192xf32>
    %c0_1064 = arith.constant 0 : index
    %c0_1065 = arith.constant 0 : index
    %1330 = vector.load %arg41[%c0_1064, %c0_1065] : memref<1x192xf32, #tpu.memory_space<vmem>>, vector<1x192xf32>
    %1331 = vector.shape_cast %1330 : vector<1x192xf32> to vector<1x1x1x192xf32>
    %1332 = vector.broadcast %1331 : vector<1x1x1x192xf32> to vector<2x2x2x192xf32>
    %1333 = arith.mulf %1329, %1332 : vector<2x2x2x192xf32>
    %c0_1066 = arith.constant 0 : index
    %c0_1067 = arith.constant 0 : index
    %1334 = vector.load %arg42[%c0_1066, %c0_1067] : memref<1x192xf32, #tpu.memory_space<vmem>>, vector<1x192xf32>
    %1335 = vector.shape_cast %1334 : vector<1x192xf32> to vector<1x1x1x192xf32>
    %1336 = vector.broadcast %1335 : vector<1x1x1x192xf32> to vector<2x2x2x192xf32>
    %1337 = arith.addf %1333, %1336 : vector<2x2x2x192xf32>
    %cst_1068 = arith.constant 0.000000e+00 : f32
    %cst_1069 = arith.constant 6.000000e+00 : f32
    %1338 = vector.broadcast %cst_1068 : f32 to vector<2x2x2x192xf32>
    %1339 = arith.maximumf %1338, %1337 : vector<2x2x2x192xf32>
    %1340 = vector.broadcast %cst_1069 : f32 to vector<2x2x2x192xf32>
    %1341 = arith.minimumf %1340, %1339 : vector<2x2x2x192xf32>
    %1342 = vector.extract_strided_slice %1341 {offsets = [0, 0, 0, 0], sizes = [1, 1, 2, 192], strides = [1, 1, 1, 1]} : vector<2x2x2x192xf32> to vector<1x1x2x192xf32>
    %1343 = vector.shape_cast %1342 : vector<1x1x2x192xf32> to vector<2x192xf32>
    %c0_1070 = arith.constant 0 : index
    %c0_1071 = arith.constant 0 : index
    %1344 = vector.load %arg69[%c0_1070, %c0_1071] : memref<8x192xf32, #tpu.memory_space<vmem>>, vector<2x192xf32>
    tpu.vector_store %arg69[%c0_1070, %c0_1071], %1343 {strides = array<i32>} : memref<8x192xf32, #tpu.memory_space<vmem>>, vector<2x192xf32>,
    %1345 = vector.extract_strided_slice %1341 {offsets = [0, 1, 0, 0], sizes = [1, 1, 2, 192], strides = [1, 1, 1, 1]} : vector<2x2x2x192xf32> to vector<1x1x2x192xf32>
    %1346 = vector.shape_cast %1345 : vector<1x1x2x192xf32> to vector<2x192xf32>
    %c2_1072 = arith.constant 2 : index
    %c0_1073 = arith.constant 0 : index
    %1347 = vector.load %arg69[%c2_1072, %c0_1073] : memref<8x192xf32, #tpu.memory_space<vmem>>, vector<2x192xf32>
    tpu.vector_store %arg69[%c2_1072, %c0_1073], %1346 {strides = array<i32>} : memref<8x192xf32, #tpu.memory_space<vmem>>, vector<2x192xf32>,
    %1348 = vector.extract_strided_slice %1341 {offsets = [1, 0, 0, 0], sizes = [1, 1, 2, 192], strides = [1, 1, 1, 1]} : vector<2x2x2x192xf32> to vector<1x1x2x192xf32>
    %1349 = vector.shape_cast %1348 : vector<1x1x2x192xf32> to vector<2x192xf32>
    %c4_1074 = arith.constant 4 : index
    %c0_1075 = arith.constant 0 : index
    %1350 = vector.load %arg69[%c4_1074, %c0_1075] : memref<8x192xf32, #tpu.memory_space<vmem>>, vector<2x192xf32>
    tpu.vector_store %arg69[%c4_1074, %c0_1075], %1349 {strides = array<i32>} : memref<8x192xf32, #tpu.memory_space<vmem>>, vector<2x192xf32>,
    %1351 = vector.extract_strided_slice %1341 {offsets = [1, 1, 0, 0], sizes = [1, 1, 2, 192], strides = [1, 1, 1, 1]} : vector<2x2x2x192xf32> to vector<1x1x2x192xf32>
    %1352 = vector.shape_cast %1351 : vector<1x1x2x192xf32> to vector<2x192xf32>
    %c6_1076 = arith.constant 6 : index
    %c0_1077 = arith.constant 0 : index
    %1353 = vector.load %arg69[%c6_1076, %c0_1077] : memref<8x192xf32, #tpu.memory_space<vmem>>, vector<2x192xf32>
    tpu.vector_store %arg69[%c6_1076, %c0_1077], %1352 {strides = array<i32>} : memref<8x192xf32, #tpu.memory_space<vmem>>, vector<2x192xf32>,
    %c0_1078 = arith.constant 0 : index
    %c0_1079 = arith.constant 0 : index
    %1354 = vector.load %arg69[%c0_1078, %c0_1079] : memref<8x192xf32, #tpu.memory_space<vmem>>, vector<8x192xf32>
    %1355 = arith.truncf %1354 : vector<8x192xf32> to vector<8x192xbf16>
    %c0_1080 = arith.constant 0 : index
    %c0_1081 = arith.constant 0 : index
    %1356 = vector.load %arg43[%c0_1080, %c0_1081] : memref<192x32xbf16, #tpu.memory_space<vmem>>, vector<192x32xbf16>
    %cst_1082 = arith.constant dense<0.000000e+00> : vector<8x32xf32>
    %1357 = tpu.matmul %1355, %1356, %cst_1082 {dimension_numbers = #tpu.dot_dimension_numbers<[1], [0], [0], [1], [0, 0, 1, 1], [], []>} : vector<8x192xbf16>, vector<192x32xbf16>, vector<8x32xf32> -> vector<8x32xf32>
    %c0_1083 = arith.constant 0 : index
    %c0_1084 = arith.constant 0 : index
    %1358 = vector.load %arg44[%c0_1083, %c0_1084] : memref<1x32xf32, #tpu.memory_space<vmem>>, vector<1x32xf32>
    %1359 = vector.broadcast %1358 : vector<1x32xf32> to vector<8x32xf32>
    %1360 = arith.mulf %1357, %1359 : vector<8x32xf32>
    %c0_1085 = arith.constant 0 : index
    %c0_1086 = arith.constant 0 : index
    %1361 = vector.load %arg45[%c0_1085, %c0_1086] : memref<1x32xf32, #tpu.memory_space<vmem>>, vector<1x32xf32>
    %1362 = vector.broadcast %1361 : vector<1x32xf32> to vector<8x32xf32>
    %1363 = arith.addf %1360, %1362 : vector<8x32xf32>
    %1364 = arith.addf %1363, %1243 : vector<8x32xf32>
    %1365 = arith.truncf %1364 : vector<8x32xf32> to vector<8x32xbf16>
    %c0_1087 = arith.constant 0 : index
    %c0_1088 = arith.constant 0 : index
    %1366 = vector.load %arg46[%c0_1087, %c0_1088] : memref<32x192xbf16, #tpu.memory_space<vmem>>, vector<32x192xbf16>
    %cst_1089 = arith.constant dense<0.000000e+00> : vector<8x192xf32>
    %1367 = tpu.matmul %1365, %1366, %cst_1089 {dimension_numbers = #tpu.dot_dimension_numbers<[1], [0], [0], [1], [0, 0, 1, 1], [], []>} : vector<8x32xbf16>, vector<32x192xbf16>, vector<8x192xf32> -> vector<8x192xf32>
    %c0_1090 = arith.constant 0 : index
    %c0_1091 = arith.constant 0 : index
    %1368 = vector.load %arg47[%c0_1090, %c0_1091] : memref<1x192xf32, #tpu.memory_space<vmem>>, vector<1x192xf32>
    %1369 = vector.broadcast %1368 : vector<1x192xf32> to vector<8x192xf32>
    %1370 = arith.mulf %1367, %1369 : vector<8x192xf32>
    %c0_1092 = arith.constant 0 : index
    %c0_1093 = arith.constant 0 : index
    %1371 = vector.load %arg48[%c0_1092, %c0_1093] : memref<1x192xf32, #tpu.memory_space<vmem>>, vector<1x192xf32>
    %1372 = vector.broadcast %1371 : vector<1x192xf32> to vector<8x192xf32>
    %1373 = arith.addf %1370, %1372 : vector<8x192xf32>
    %cst_1094 = arith.constant 0.000000e+00 : f32
    %cst_1095 = arith.constant 6.000000e+00 : f32
    %1374 = vector.broadcast %cst_1094 : f32 to vector<8x192xf32>
    %1375 = arith.maximumf %1374, %1373 : vector<8x192xf32>
    %1376 = vector.broadcast %cst_1095 : f32 to vector<8x192xf32>
    %1377 = arith.minimumf %1376, %1375 : vector<8x192xf32>
    %cst_1096 = arith.constant 0.000000e+00 : f32
    %1378 = vector.broadcast %cst_1096 : f32 to vector<2x4x4x192xf32>
    %c0_1097 = arith.constant 0 : index
    %c0_1098 = arith.constant 0 : index
    %c0_1099 = arith.constant 0 : index
    %c0_1100 = arith.constant 0 : index
    %1379 = vector.load %arg70[%c0_1097, %c0_1098, %c0_1099, %c0_1100] : memref<2x4x4x192xf32, #tpu.memory_space<vmem>>, vector<2x4x4x192xf32>
    tpu.vector_store %arg70[%c0_1097, %c0_1098, %c0_1099, %c0_1100], %1378 {strides = array<i32>} : memref<2x4x4x192xf32, #tpu.memory_space<vmem>>, vector<2x4x4x192xf32>,
    %1380 = vector.extract_strided_slice %1377 {offsets = [0, 0], sizes = [2, 192], strides = [1, 1]} : vector<8x192xf32> to vector<2x192xf32>
    %c0_1101 = arith.constant 0 : index
    %c1_1102 = arith.constant 1 : index
    %c1_1103 = arith.constant 1 : index
    %c0_1104 = arith.constant 0 : index
    %1381 = vector.load %arg70[%c0_1101, %c1_1102, %c1_1103, %c0_1104] : memref<2x4x4x192xf32, #tpu.memory_space<vmem>>, vector<1x1x2x192xf32>
    %1382 = vector.shape_cast %1381 : vector<1x1x2x192xf32> to vector<2x192xf32>
    %1383 = vector.shape_cast %1380 : vector<2x192xf32> to vector<1x1x2x192xf32>
    tpu.vector_store %arg70[%c0_1101, %c1_1102, %c1_1103, %c0_1104], %1383 {strides = array<i32>} : memref<2x4x4x192xf32, #tpu.memory_space<vmem>>, vector<1x1x2x192xf32>,
    %1384 = vector.extract_strided_slice %1377 {offsets = [2, 0], sizes = [2, 192], strides = [1, 1]} : vector<8x192xf32> to vector<2x192xf32>
    %c0_1105 = arith.constant 0 : index
    %c2_1106 = arith.constant 2 : index
    %c1_1107 = arith.constant 1 : index
    %c0_1108 = arith.constant 0 : index
    %1385 = vector.load %arg70[%c0_1105, %c2_1106, %c1_1107, %c0_1108] : memref<2x4x4x192xf32, #tpu.memory_space<vmem>>, vector<1x1x2x192xf32>
    %1386 = vector.shape_cast %1385 : vector<1x1x2x192xf32> to vector<2x192xf32>
    %1387 = vector.shape_cast %1384 : vector<2x192xf32> to vector<1x1x2x192xf32>
    tpu.vector_store %arg70[%c0_1105, %c2_1106, %c1_1107, %c0_1108], %1387 {strides = array<i32>} : memref<2x4x4x192xf32, #tpu.memory_space<vmem>>, vector<1x1x2x192xf32>,
    %1388 = vector.extract_strided_slice %1377 {offsets = [4, 0], sizes = [2, 192], strides = [1, 1]} : vector<8x192xf32> to vector<2x192xf32>
    %c1_1109 = arith.constant 1 : index
    %c1_1110 = arith.constant 1 : index
    %c1_1111 = arith.constant 1 : index
    %c0_1112 = arith.constant 0 : index
    %1389 = vector.load %arg70[%c1_1109, %c1_1110, %c1_1111, %c0_1112] : memref<2x4x4x192xf32, #tpu.memory_space<vmem>>, vector<1x1x2x192xf32>
    %1390 = vector.shape_cast %1389 : vector<1x1x2x192xf32> to vector<2x192xf32>
    %1391 = vector.shape_cast %1388 : vector<2x192xf32> to vector<1x1x2x192xf32>
    tpu.vector_store %arg70[%c1_1109, %c1_1110, %c1_1111, %c0_1112], %1391 {strides = array<i32>} : memref<2x4x4x192xf32, #tpu.memory_space<vmem>>, vector<1x1x2x192xf32>,
    %1392 = vector.extract_strided_slice %1377 {offsets = [6, 0], sizes = [2, 192], strides = [1, 1]} : vector<8x192xf32> to vector<2x192xf32>
    %c1_1113 = arith.constant 1 : index
    %c2_1114 = arith.constant 2 : index
    %c1_1115 = arith.constant 1 : index
    %c0_1116 = arith.constant 0 : index
    %1393 = vector.load %arg70[%c1_1113, %c2_1114, %c1_1115, %c0_1116] : memref<2x4x4x192xf32, #tpu.memory_space<vmem>>, vector<1x1x2x192xf32>
    %1394 = vector.shape_cast %1393 : vector<1x1x2x192xf32> to vector<2x192xf32>
    %1395 = vector.shape_cast %1392 : vector<2x192xf32> to vector<1x1x2x192xf32>
    tpu.vector_store %arg70[%c1_1113, %c2_1114, %c1_1115, %c0_1116], %1395 {strides = array<i32>} : memref<2x4x4x192xf32, #tpu.memory_space<vmem>>, vector<1x1x2x192xf32>,
    %cst_1117 = arith.constant 0.000000e+00 : f32
    %1396 = vector.broadcast %cst_1117 : f32 to vector<2x2x2x192xf32>
    %c0_1118 = arith.constant 0 : index
    %c0_1119 = arith.constant 0 : index
    %c0_1120 = arith.constant 0 : index
    %c0_1121 = arith.constant 0 : index
    %1397 = vector.load %arg70[%c0_1118, %c0_1119, %c0_1120, %c0_1121] : memref<2x4x4x192xf32, #tpu.memory_space<vmem>>, vector<2x2x2x192xf32>
    %c0_1122 = arith.constant 0 : index
    %c0_1123 = arith.constant 0 : index
    %1398 = vector.load %arg49[%c0_1122, %c0_1123] : memref<9x192xf32, #tpu.memory_space<vmem>>, vector<1x192xf32>
    %1399 = vector.shape_cast %1398 : vector<1x192xf32> to vector<1x1x1x192xf32>
    %1400 = vector.broadcast %1399 : vector<1x1x1x192xf32> to vector<2x2x2x192xf32>
    %1401 = arith.mulf %1397, %1400 : vector<2x2x2x192xf32>
    %1402 = arith.addf %1396, %1401 : vector<2x2x2x192xf32>
    %c0_1124 = arith.constant 0 : index
    %c0_1125 = arith.constant 0 : index
    %c1_1126 = arith.constant 1 : index
    %c0_1127 = arith.constant 0 : index
    %1403 = vector.load %arg70[%c0_1124, %c0_1125, %c1_1126, %c0_1127] : memref<2x4x4x192xf32, #tpu.memory_space<vmem>>, vector<2x2x2x192xf32>
    %c1_1128 = arith.constant 1 : index
    %c0_1129 = arith.constant 0 : index
    %1404 = vector.load %arg49[%c1_1128, %c0_1129] : memref<9x192xf32, #tpu.memory_space<vmem>>, vector<1x192xf32>
    %1405 = vector.shape_cast %1404 : vector<1x192xf32> to vector<1x1x1x192xf32>
    %1406 = vector.broadcast %1405 : vector<1x1x1x192xf32> to vector<2x2x2x192xf32>
    %1407 = arith.mulf %1403, %1406 : vector<2x2x2x192xf32>
    %1408 = arith.addf %1402, %1407 : vector<2x2x2x192xf32>
    %c0_1130 = arith.constant 0 : index
    %c0_1131 = arith.constant 0 : index
    %c2_1132 = arith.constant 2 : index
    %c0_1133 = arith.constant 0 : index
    %1409 = vector.load %arg70[%c0_1130, %c0_1131, %c2_1132, %c0_1133] : memref<2x4x4x192xf32, #tpu.memory_space<vmem>>, vector<2x2x2x192xf32>
    %c2_1134 = arith.constant 2 : index
    %c0_1135 = arith.constant 0 : index
    %1410 = vector.load %arg49[%c2_1134, %c0_1135] : memref<9x192xf32, #tpu.memory_space<vmem>>, vector<1x192xf32>
    %1411 = vector.shape_cast %1410 : vector<1x192xf32> to vector<1x1x1x192xf32>
    %1412 = vector.broadcast %1411 : vector<1x1x1x192xf32> to vector<2x2x2x192xf32>
    %1413 = arith.mulf %1409, %1412 : vector<2x2x2x192xf32>
    %1414 = arith.addf %1408, %1413 : vector<2x2x2x192xf32>
    %c0_1136 = arith.constant 0 : index
    %c1_1137 = arith.constant 1 : index
    %c0_1138 = arith.constant 0 : index
    %c0_1139 = arith.constant 0 : index
    %1415 = vector.load %arg70[%c0_1136, %c1_1137, %c0_1138, %c0_1139] : memref<2x4x4x192xf32, #tpu.memory_space<vmem>>, vector<2x2x2x192xf32>
    %c3_1140 = arith.constant 3 : index
    %c0_1141 = arith.constant 0 : index
    %1416 = vector.load %arg49[%c3_1140, %c0_1141] : memref<9x192xf32, #tpu.memory_space<vmem>>, vector<1x192xf32>
    %1417 = vector.shape_cast %1416 : vector<1x192xf32> to vector<1x1x1x192xf32>
    %1418 = vector.broadcast %1417 : vector<1x1x1x192xf32> to vector<2x2x2x192xf32>
    %1419 = arith.mulf %1415, %1418 : vector<2x2x2x192xf32>
    %1420 = arith.addf %1414, %1419 : vector<2x2x2x192xf32>
    %c0_1142 = arith.constant 0 : index
    %c1_1143 = arith.constant 1 : index
    %c1_1144 = arith.constant 1 : index
    %c0_1145 = arith.constant 0 : index
    %1421 = vector.load %arg70[%c0_1142, %c1_1143, %c1_1144, %c0_1145] : memref<2x4x4x192xf32, #tpu.memory_space<vmem>>, vector<2x2x2x192xf32>
    %c4_1146 = arith.constant 4 : index
    %c0_1147 = arith.constant 0 : index
    %1422 = vector.load %arg49[%c4_1146, %c0_1147] : memref<9x192xf32, #tpu.memory_space<vmem>>, vector<1x192xf32>
    %1423 = vector.shape_cast %1422 : vector<1x192xf32> to vector<1x1x1x192xf32>
    %1424 = vector.broadcast %1423 : vector<1x1x1x192xf32> to vector<2x2x2x192xf32>
    %1425 = arith.mulf %1421, %1424 : vector<2x2x2x192xf32>
    %1426 = arith.addf %1420, %1425 : vector<2x2x2x192xf32>
    %c0_1148 = arith.constant 0 : index
    %c1_1149 = arith.constant 1 : index
    %c2_1150 = arith.constant 2 : index
    %c0_1151 = arith.constant 0 : index
    %1427 = vector.load %arg70[%c0_1148, %c1_1149, %c2_1150, %c0_1151] : memref<2x4x4x192xf32, #tpu.memory_space<vmem>>, vector<2x2x2x192xf32>
    %c5_1152 = arith.constant 5 : index
    %c0_1153 = arith.constant 0 : index
    %1428 = vector.load %arg49[%c5_1152, %c0_1153] : memref<9x192xf32, #tpu.memory_space<vmem>>, vector<1x192xf32>
    %1429 = vector.shape_cast %1428 : vector<1x192xf32> to vector<1x1x1x192xf32>
    %1430 = vector.broadcast %1429 : vector<1x1x1x192xf32> to vector<2x2x2x192xf32>
    %1431 = arith.mulf %1427, %1430 : vector<2x2x2x192xf32>
    %1432 = arith.addf %1426, %1431 : vector<2x2x2x192xf32>
    %c0_1154 = arith.constant 0 : index
    %c2_1155 = arith.constant 2 : index
    %c0_1156 = arith.constant 0 : index
    %c0_1157 = arith.constant 0 : index
    %1433 = vector.load %arg70[%c0_1154, %c2_1155, %c0_1156, %c0_1157] : memref<2x4x4x192xf32, #tpu.memory_space<vmem>>, vector<2x2x2x192xf32>
    %c6_1158 = arith.constant 6 : index
    %c0_1159 = arith.constant 0 : index
    %1434 = vector.load %arg49[%c6_1158, %c0_1159] : memref<9x192xf32, #tpu.memory_space<vmem>>, vector<1x192xf32>
    %1435 = vector.shape_cast %1434 : vector<1x192xf32> to vector<1x1x1x192xf32>
    %1436 = vector.broadcast %1435 : vector<1x1x1x192xf32> to vector<2x2x2x192xf32>
    %1437 = arith.mulf %1433, %1436 : vector<2x2x2x192xf32>
    %1438 = arith.addf %1432, %1437 : vector<2x2x2x192xf32>
    %c0_1160 = arith.constant 0 : index
    %c2_1161 = arith.constant 2 : index
    %c1_1162 = arith.constant 1 : index
    %c0_1163 = arith.constant 0 : index
    %1439 = vector.load %arg70[%c0_1160, %c2_1161, %c1_1162, %c0_1163] : memref<2x4x4x192xf32, #tpu.memory_space<vmem>>, vector<2x2x2x192xf32>
    %c7_1164 = arith.constant 7 : index
    %c0_1165 = arith.constant 0 : index
    %1440 = vector.load %arg49[%c7_1164, %c0_1165] : memref<9x192xf32, #tpu.memory_space<vmem>>, vector<1x192xf32>
    %1441 = vector.shape_cast %1440 : vector<1x192xf32> to vector<1x1x1x192xf32>
    %1442 = vector.broadcast %1441 : vector<1x1x1x192xf32> to vector<2x2x2x192xf32>
    %1443 = arith.mulf %1439, %1442 : vector<2x2x2x192xf32>
    %1444 = arith.addf %1438, %1443 : vector<2x2x2x192xf32>
    %c0_1166 = arith.constant 0 : index
    %c2_1167 = arith.constant 2 : index
    %c2_1168 = arith.constant 2 : index
    %c0_1169 = arith.constant 0 : index
    %1445 = vector.load %arg70[%c0_1166, %c2_1167, %c2_1168, %c0_1169] : memref<2x4x4x192xf32, #tpu.memory_space<vmem>>, vector<2x2x2x192xf32>
    %c8_1170 = arith.constant 8 : index
    %c0_1171 = arith.constant 0 : index
    %1446 = vector.load %arg49[%c8_1170, %c0_1171] : memref<9x192xf32, #tpu.memory_space<vmem>>, vector<1x192xf32>
    %1447 = vector.shape_cast %1446 : vector<1x192xf32> to vector<1x1x1x192xf32>
    %1448 = vector.broadcast %1447 : vector<1x1x1x192xf32> to vector<2x2x2x192xf32>
    %1449 = arith.mulf %1445, %1448 : vector<2x2x2x192xf32>
    %1450 = arith.addf %1444, %1449 : vector<2x2x2x192xf32>
    %c0_1172 = arith.constant 0 : index
    %c0_1173 = arith.constant 0 : index
    %1451 = vector.load %arg50[%c0_1172, %c0_1173] : memref<1x192xf32, #tpu.memory_space<vmem>>, vector<1x192xf32>
    %1452 = vector.shape_cast %1451 : vector<1x192xf32> to vector<1x1x1x192xf32>
    %1453 = vector.broadcast %1452 : vector<1x1x1x192xf32> to vector<2x2x2x192xf32>
    %1454 = arith.mulf %1450, %1453 : vector<2x2x2x192xf32>
    %c0_1174 = arith.constant 0 : index
    %c0_1175 = arith.constant 0 : index
    %1455 = vector.load %arg51[%c0_1174, %c0_1175] : memref<1x192xf32, #tpu.memory_space<vmem>>, vector<1x192xf32>
    %1456 = vector.shape_cast %1455 : vector<1x192xf32> to vector<1x1x1x192xf32>
    %1457 = vector.broadcast %1456 : vector<1x1x1x192xf32> to vector<2x2x2x192xf32>
    %1458 = arith.addf %1454, %1457 : vector<2x2x2x192xf32>
    %cst_1176 = arith.constant 0.000000e+00 : f32
    %cst_1177 = arith.constant 6.000000e+00 : f32
    %1459 = vector.broadcast %cst_1176 : f32 to vector<2x2x2x192xf32>
    %1460 = arith.maximumf %1459, %1458 : vector<2x2x2x192xf32>
    %1461 = vector.broadcast %cst_1177 : f32 to vector<2x2x2x192xf32>
    %1462 = arith.minimumf %1461, %1460 : vector<2x2x2x192xf32>
    %1463 = vector.extract_strided_slice %1462 {offsets = [0, 0, 0, 0], sizes = [1, 1, 2, 192], strides = [1, 1, 1, 1]} : vector<2x2x2x192xf32> to vector<1x1x2x192xf32>
    %1464 = vector.shape_cast %1463 : vector<1x1x2x192xf32> to vector<2x192xf32>
    %c0_1178 = arith.constant 0 : index
    %c0_1179 = arith.constant 0 : index
    %1465 = vector.load %arg71[%c0_1178, %c0_1179] : memref<8x192xf32, #tpu.memory_space<vmem>>, vector<2x192xf32>
    tpu.vector_store %arg71[%c0_1178, %c0_1179], %1464 {strides = array<i32>} : memref<8x192xf32, #tpu.memory_space<vmem>>, vector<2x192xf32>,
    %1466 = vector.extract_strided_slice %1462 {offsets = [0, 1, 0, 0], sizes = [1, 1, 2, 192], strides = [1, 1, 1, 1]} : vector<2x2x2x192xf32> to vector<1x1x2x192xf32>
    %1467 = vector.shape_cast %1466 : vector<1x1x2x192xf32> to vector<2x192xf32>
    %c2_1180 = arith.constant 2 : index
    %c0_1181 = arith.constant 0 : index
    %1468 = vector.load %arg71[%c2_1180, %c0_1181] : memref<8x192xf32, #tpu.memory_space<vmem>>, vector<2x192xf32>
    tpu.vector_store %arg71[%c2_1180, %c0_1181], %1467 {strides = array<i32>} : memref<8x192xf32, #tpu.memory_space<vmem>>, vector<2x192xf32>,
    %1469 = vector.extract_strided_slice %1462 {offsets = [1, 0, 0, 0], sizes = [1, 1, 2, 192], strides = [1, 1, 1, 1]} : vector<2x2x2x192xf32> to vector<1x1x2x192xf32>
    %1470 = vector.shape_cast %1469 : vector<1x1x2x192xf32> to vector<2x192xf32>
    %c4_1182 = arith.constant 4 : index
    %c0_1183 = arith.constant 0 : index
    %1471 = vector.load %arg71[%c4_1182, %c0_1183] : memref<8x192xf32, #tpu.memory_space<vmem>>, vector<2x192xf32>
    tpu.vector_store %arg71[%c4_1182, %c0_1183], %1470 {strides = array<i32>} : memref<8x192xf32, #tpu.memory_space<vmem>>, vector<2x192xf32>,
    %1472 = vector.extract_strided_slice %1462 {offsets = [1, 1, 0, 0], sizes = [1, 1, 2, 192], strides = [1, 1, 1, 1]} : vector<2x2x2x192xf32> to vector<1x1x2x192xf32>
    %1473 = vector.shape_cast %1472 : vector<1x1x2x192xf32> to vector<2x192xf32>
    %c6_1184 = arith.constant 6 : index
    %c0_1185 = arith.constant 0 : index
    %1474 = vector.load %arg71[%c6_1184, %c0_1185] : memref<8x192xf32, #tpu.memory_space<vmem>>, vector<2x192xf32>
    tpu.vector_store %arg71[%c6_1184, %c0_1185], %1473 {strides = array<i32>} : memref<8x192xf32, #tpu.memory_space<vmem>>, vector<2x192xf32>,
    %c0_1186 = arith.constant 0 : index
    %c0_1187 = arith.constant 0 : index
    %1475 = vector.load %arg71[%c0_1186, %c0_1187] : memref<8x192xf32, #tpu.memory_space<vmem>>, vector<8x192xf32>
    %1476 = arith.truncf %1475 : vector<8x192xf32> to vector<8x192xbf16>
    %c0_1188 = arith.constant 0 : index
    %c0_1189 = arith.constant 0 : index
    %1477 = vector.load %arg52[%c0_1188, %c0_1189] : memref<192x32xbf16, #tpu.memory_space<vmem>>, vector<192x32xbf16>
    %cst_1190 = arith.constant dense<0.000000e+00> : vector<8x32xf32>
    %1478 = tpu.matmul %1476, %1477, %cst_1190 {dimension_numbers = #tpu.dot_dimension_numbers<[1], [0], [0], [1], [0, 0, 1, 1], [], []>} : vector<8x192xbf16>, vector<192x32xbf16>, vector<8x32xf32> -> vector<8x32xf32>
    %c0_1191 = arith.constant 0 : index
    %c0_1192 = arith.constant 0 : index
    %1479 = vector.load %arg53[%c0_1191, %c0_1192] : memref<1x32xf32, #tpu.memory_space<vmem>>, vector<1x32xf32>
    %1480 = vector.broadcast %1479 : vector<1x32xf32> to vector<8x32xf32>
    %1481 = arith.mulf %1478, %1480 : vector<8x32xf32>
    %c0_1193 = arith.constant 0 : index
    %c0_1194 = arith.constant 0 : index
    %1482 = vector.load %arg54[%c0_1193, %c0_1194] : memref<1x32xf32, #tpu.memory_space<vmem>>, vector<1x32xf32>
    %1483 = vector.broadcast %1482 : vector<1x32xf32> to vector<8x32xf32>
    %1484 = arith.addf %1481, %1483 : vector<8x32xf32>
    %1485 = arith.addf %1484, %1364 : vector<8x32xf32>
    %1486 = arith.truncf %1485 : vector<8x32xf32> to vector<8x32xbf16>
    %c0_1195 = arith.constant 0 : index
    %c0_1196 = arith.constant 0 : index
    %1487 = vector.load %arg55[%c0_1195, %c0_1196] : memref<32x32xbf16, #tpu.memory_space<vmem>>, vector<32x32xbf16>
    %cst_1197 = arith.constant dense<0.000000e+00> : vector<8x32xf32>
    %1488 = tpu.matmul %1486, %1487, %cst_1197 {dimension_numbers = #tpu.dot_dimension_numbers<[1], [0], [0], [1], [0, 0, 1, 1], [], []>} : vector<8x32xbf16>, vector<32x32xbf16>, vector<8x32xf32> -> vector<8x32xf32>
    %c0_1198 = arith.constant 0 : index
    %c0_1199 = arith.constant 0 : index
    %1489 = vector.load %arg56[%c0_1198, %c0_1199] : memref<1x32xf32, #tpu.memory_space<vmem>>, vector<1x32xf32>
    %1490 = vector.broadcast %1489 : vector<1x32xf32> to vector<8x32xf32>
    %1491 = arith.addf %1488, %1490 : vector<8x32xf32>
    %cst_1200 = arith.constant 0.000000e+00 : f32
    %1492 = vector.broadcast %cst_1200 : f32 to vector<8x32xf32>
    %1493 = arith.maximumf %1491, %1492 : vector<8x32xf32>
    %c0_1201 = arith.constant 0 : index
    %c0_1202 = arith.constant 0 : index
    %1494 = vector.load %arg57[%c0_1201, %c0_1202] : memref<1x32xf32, #tpu.memory_space<vmem>>, vector<1x32xf32>
    %1495 = vector.broadcast %1494 : vector<1x32xf32> to vector<8x32xf32>
    %1496 = arith.mulf %1493, %1495 : vector<8x32xf32>
    %cst_1203 = arith.constant dense<0.000000e+00> : vector<8xf32>
    %1497 = vector.multi_reduction <add>, %1496, %cst_1203 [1] : vector<8x32xf32> to vector<8xf32>
    %1498 = vector.shape_cast %1497 : vector<8xf32> to vector<8x1xf32>
    %c0_1204 = arith.constant 0 : index
    %c0_1205 = arith.constant 0 : index
    %1499 = vector.load %arg58[%c0_1204, %c0_1205] : memref<1x1xf32, #tpu.memory_space<vmem>>, vector<1x1xf32>
    %1500 = vector.broadcast %1499 : vector<1x1xf32> to vector<8x1xf32>
    %1501 = arith.addf %1498, %1500 : vector<8x1xf32>
    %c0_1206 = arith.constant 0 : index
    %c0_1207 = arith.constant 0 : index
    %1502 = vector.load %arg59[%c0_1206, %c0_1207] : memref<8x1xf32, #tpu.memory_space<vmem>>, vector<8x1xf32>
    tpu.vector_store %arg59[%c0_1206, %c0_1207], %1501 {strides = array<i32>} : memref<8x1xf32, #tpu.memory_space<vmem>>, vector<8x1xf32>,
    return
  }
}

</mosaic_0001>

<llo_original>
// kernel: _lambda_.1
$region0: #{_lambda_.1}
  #allocation0 [shape = 'u32[]', space=smem, size = 0x4, offset = 0x4, fixed_abs, tag = 'smem constant byte address 0x4 - core index']
  #allocation1 [shape = 'u32[144,128]{1,0:T(1,128)}', space=vmem, size = 0x12000, scoped, tag = 'internal scratch']
  #allocation2 [shape = 'f32[2,10,10,32]{3,2,1,0:T(8,128)}', space=vmem, size = 0x28000, scoped, tag = 'scratch operand']
  #allocation3 [shape = 'f32[128,32]{1,0:T(8,128)}', space=vmem, size = 0x10000, scoped, tag = 'scratch operand']
  #allocation4 [shape = 'f32[2,10,10,96]{3,2,1,0:T(8,128)}', space=vmem, size = 0x28000, scoped, tag = 'scratch operand']
  #allocation5 [shape = 'f32[32,96]{1,0:T(8,128)}', space=vmem, size = 0x4000, scoped, tag = 'scratch operand']
  #allocation6 [shape = 'f32[2,6,6,144]{3,2,1,0:T(8,128)}', space=vmem, size = 0x18000, scoped, tag = 'scratch operand']
  #allocation7 [shape = 'f32[32,144]{1,0:T(8,128)}', space=vmem, size = 0x8000, scoped, tag = 'scratch operand']
  #allocation8 [shape = 'f32[2,6,6,144]{3,2,1,0:T(8,128)}', space=vmem, size = 0x18000, scoped, tag = 'scratch operand']
  #allocation9 [shape = 'f32[8,144]{1,0:T(8,128)}', space=vmem, size = 0x2000, scoped, tag = 'scratch operand']
  #allocation10 [shape = 'f32[2,4,4,192]{3,2,1,0:T(4,128)}', space=vmem, size = 0x8000, scoped, tag = 'scratch operand']
  #allocation11 [shape = 'f32[8,192]{1,0:T(8,128)}', space=vmem, size = 0x2000, scoped, tag = 'scratch operand']
  #allocation12 [shape = 'f32[2,4,4,192]{3,2,1,0:T(4,128)}', space=vmem, size = 0x8000, scoped, tag = 'scratch operand']
  #allocation13 [shape = 'f32[8,192]{1,0:T(8,128)}', space=vmem, size = 0x2000, scoped, tag = 'scratch operand']
  #allocation14 [shape = 'f32[1,1]{1,0:T(1,128)S(1)}', space=vmem, size = 0x200, scoped, tag = 'scoped memory for _lambda_.1']
  %s0 = inlined_call_operand.smem [shape: u32[60], index: -1, kind: input, shape index: {}]
  %s1 = sld [smem:[%s0]]
  %s2 = scalar_lea.smem %s0, 1
  %s3 = sld [smem:[%s2]]
  %s4 = scalar_lea.smem %s0, 2
  %s5 = sld [smem:[%s4]]
  %s6 = scalar_lea.smem %s0, 3
  %s7 = sld [smem:[%s6]]
  %s8 = scalar_lea.smem %s0, 4
  %s9 = sld [smem:[%s8]]
  %s10 = scalar_lea.smem %s0, 5
  %s11 = sld [smem:[%s10]]
  %s12 = scalar_lea.smem %s0, 6
  %s13 = sld [smem:[%s12]]
  %s14 = scalar_lea.smem %s0, 7
  %s15 = sld [smem:[%s14]]
  %s16 = scalar_lea.smem %s0, 8
  %s17 = sld [smem:[%s16]]
  %s18 = scalar_lea.smem %s0, 9
  %s19 = sld [smem:[%s18]]
  %s20 = scalar_lea.smem %s0, 10
  %s21 = sld [smem:[%s20]]
  %s22 = scalar_lea.smem %s0, 11
  %s23 = sld [smem:[%s22]]
  %s24 = scalar_lea.smem %s0, 12
  %s25 = sld [smem:[%s24]]
  %s26 = scalar_lea.smem %s0, 13
  %s27 = sld [smem:[%s26]]
  %s28 = scalar_lea.smem %s0, 14
  %s29 = sld [smem:[%s28]]
  %s30 = scalar_lea.smem %s0, 15
  %s31 = sld [smem:[%s30]]
  %s32 = scalar_lea.smem %s0, 16
  %s33 = sld [smem:[%s32]]
  %s34 = scalar_lea.smem %s0, 17
  %s35 = sld [smem:[%s34]]
  %s36 = scalar_lea.smem %s0, 18
  %s37 = sld [smem:[%s36]]
  %s38 = scalar_lea.smem %s0, 19
  %s39 = sld [smem:[%s38]]
  %s40 = scalar_lea.smem %s0, 20
  %s41 = sld [smem:[%s40]]
  %s42 = scalar_lea.smem %s0, 21
  %s43 = sld [smem:[%s42]]
  %s44 = scalar_lea.smem %s0, 22
  %s45 = sld [smem:[%s44]]
  %s46 = scalar_lea.smem %s0, 23
  %s47 = sld [smem:[%s46]]
  %s48 = scalar_lea.smem %s0, 24
  %s49 = sld [smem:[%s48]]
  %s50 = scalar_lea.smem %s0, 25
  %s51 = sld [smem:[%s50]]
  %s52 = scalar_lea.smem %s0, 26
  %s53 = sld [smem:[%s52]]
  %s54 = scalar_lea.smem %s0, 27
  %s55 = sld [smem:[%s54]]
  %s56 = scalar_lea.smem %s0, 28
  %s57 = sld [smem:[%s56]]
  %s58 = scalar_lea.smem %s0, 29
  %s59 = sld [smem:[%s58]]
  %s60 = scalar_lea.smem %s0, 30
  %s61 = sld [smem:[%s60]]
  %s62 = scalar_lea.smem %s0, 31
  %s63 = sld [smem:[%s62]]
  %s64 = scalar_lea.smem %s0, 32
  %s65 = sld [smem:[%s64]]
  %s66 = scalar_lea.smem %s0, 33
  %s67 = sld [smem:[%s66]]
  %s68 = scalar_lea.smem %s0, 34
  %s69 = sld [smem:[%s68]]
  %s70 = scalar_lea.smem %s0, 35
  %s71 = sld [smem:[%s70]]
  %s72 = scalar_lea.smem %s0, 36
  %s73 = sld [smem:[%s72]]
  %s74 = scalar_lea.smem %s0, 37
  %s75 = sld [smem:[%s74]]
  %s76 = scalar_lea.smem %s0, 38
  %s77 = sld [smem:[%s76]]
  %s78 = scalar_lea.smem %s0, 39
  %s79 = sld [smem:[%s78]]
  %s80 = scalar_lea.smem %s0, 40
  %s81 = sld [smem:[%s80]]
  %s82 = scalar_lea.smem %s0, 41
  %s83 = sld [smem:[%s82]]
  %s84 = scalar_lea.smem %s0, 42
  %s85 = sld [smem:[%s84]]
  %s86 = scalar_lea.smem %s0, 43
  %s87 = sld [smem:[%s86]]
  %s88 = scalar_lea.smem %s0, 44
  %s89 = sld [smem:[%s88]]
  %s90 = scalar_lea.smem %s0, 45
  %s91 = sld [smem:[%s90]]
  %s92 = scalar_lea.smem %s0, 46
  %s93 = sld [smem:[%s92]]
  %s94 = scalar_lea.smem %s0, 47
  %s95 = sld [smem:[%s94]]
  %s96 = scalar_lea.smem %s0, 48
  %s97 = sld [smem:[%s96]]
  %s98 = scalar_lea.smem %s0, 49
  %s99 = sld [smem:[%s98]]
  %s100 = scalar_lea.smem %s0, 50
  %s101 = sld [smem:[%s100]]
  %s102 = scalar_lea.smem %s0, 51
  %s103 = sld [smem:[%s102]]
  %s104 = scalar_lea.smem %s0, 52
  %s105 = sld [smem:[%s104]]
  %s106 = scalar_lea.smem %s0, 53
  %s107 = sld [smem:[%s106]]
  %s108 = scalar_lea.smem %s0, 54
  %s109 = sld [smem:[%s108]]
  %s110 = scalar_lea.smem %s0, 55
  %s111 = sld [smem:[%s110]]
  %s112 = scalar_lea.smem %s0, 56
  %s113 = sld [smem:[%s112]]
  %s114 = scalar_lea.smem %s0, 57
  %s115 = sld [smem:[%s114]]
  %s116 = scalar_lea.smem %s0, 58
  %s117 = sld [smem:[%s116]]
  %s118 = scalar_lea.smem %s0, 59
  %s119 = sld [smem:[%s118]]
  %s120 = sld [smem:[#allocation0]]
  $region314: #{_lambda_.1} parent=0
    _
  %s122 = ssub.s32 1, %s120
  %s123 = scalar_select 0, %s122, %s120
  %v124 = vstv %s117
  %125 = vst [vmem:[#allocation14] sm:$0x1] %v124
  $region1: #{_lambda_.1} parent=0
    #allocation15 [shape = 'u8[512]{0}', space=vmem, size = 0x400, scoped, tag = 'input window, operand 2, single buffered']
    #allocation16 [shape = 's32[1]{0}', space=sflag, size = 0x4, scoped, tag = 'scoped memory for _lambda_.1']
    #allocation17 [shape = 'u8[512]{0}', space=vmem, size = 0x400, scoped, tag = 'input window, operand 3, single buffered']
    #allocation18 [shape = 's32[1]{0}', space=sflag, size = 0x4, scoped, tag = 'scoped memory for _lambda_.1']
    #allocation19 [shape = 'u8[512]{0}', space=vmem, size = 0x400, scoped, tag = 'input window, operand 5, single buffered']
    #allocation20 [shape = 'u8[512]{0}', space=vmem, size = 0x400, scoped, tag = 'input window, operand 6, single buffered']
    #allocation21 [shape = 's32[1]{0}', space=sflag, size = 0x4, scoped, tag = 'scoped memory for _lambda_.1']
    #allocation22 [shape = 'u8[512]{0}', space=vmem, size = 0x400, scoped, tag = 'input window, operand 8, single buffered']
    #allocation23 [shape = 'u8[512]{0}', space=vmem, size = 0x400, scoped, tag = 'input window, operand 9, single buffered']
    #allocation24 [shape = 's32[1]{0}', space=sflag, size = 0x4, scoped, tag = 'scoped memory for _lambda_.1']
    #allocation25 [shape = 'u8[512]{0}', space=vmem, size = 0x400, scoped, tag = 'input window, operand 11, single buffered']
    #allocation26 [shape = 'u8[512]{0}', space=vmem, size = 0x400, scoped, tag = 'input window, operand 12, single buffered']
    #allocation27 [shape = 's32[1]{0}', space=sflag, size = 0x4, scoped, tag = 'scoped memory for _lambda_.1']
    #allocation28 [shape = 'u8[512]{0}', space=vmem, size = 0x400, scoped, tag = 'input window, operand 14, single buffered']
    #allocation29 [shape = 'u8[512]{0}', space=vmem, size = 0x400, scoped, tag = 'input window, operand 15, single buffered']
    #allocation30 [shape = 's32[1]{0}', space=sflag, size = 0x4, scoped, tag = 'scoped memory for _lambda_.1']
    #allocation31 [shape = 'u8[512]{0}', space=vmem, size = 0x400, scoped, tag = 'input window, operand 17, single buffered']
    #allocation32 [shape = 'u8[512]{0}', space=vmem, size = 0x400, scoped, tag = 'input window, operand 18, single buffered']
    #allocation33 [shape = 's32[1]{0}', space=sflag, size = 0x4, scoped, tag = 'scoped memory for _lambda_.1']
    #allocation34 [shape = 'u8[512]{0}', space=vmem, size = 0x400, scoped, tag = 'input window, operand 26, single buffered']
    #allocation35 [shape = 'u8[512]{0}', space=vmem, size = 0x400, scoped, tag = 'input window, operand 27, single buffered']
    #allocation36 [shape = 's32[1]{0}', space=sflag, size = 0x4, scoped, tag = 'scoped memory for _lambda_.1']
    #allocation37 [shape = 'u8[512]{0}', space=vmem, size = 0x400, scoped, tag = 'input window, operand 35, single buffered']
    #allocation38 [shape = 'u8[512]{0}', space=vmem, size = 0x400, scoped, tag = 'input window, operand 36, single buffered']
    #allocation39 [shape = 's32[1]{0}', space=sflag, size = 0x4, scoped, tag = 'scoped memory for _lambda_.1']
    #allocation40 [shape = 'u8[512]{0}', space=vmem, size = 0x400, scoped, tag = 'input window, operand 44, single buffered']
    %126 = vsyncpa [#allocation16], 0
    %127 = vsyncpa [#allocation18], 0
    %128 = vsyncpa [#allocation21], 0
    %129 = vsyncpa [#allocation24], 0
    %130 = vsyncpa [#allocation27], 0
    %131 = vsyncpa [#allocation30], 0
    %132 = vsyncpa [#allocation33], 0
    %133 = vsyncpa [#allocation36], 0
    %134 = vsyncpa [#allocation39], 0
    // Predicated region
    $region2: #{_lambda_.1} parent=1 // pred_check
      _
    $region3: #{_lambda_.1} parent=1 // pred_check_branch
      %136 = sbr.rel (0) target = $region5
    $region4: #{_lambda_.1} parent=1 // pred_region
      _
    $region5: #{_lambda_.1} parent=1 // pred_fallthru
      _
    // Predicated region
    $region6: #{_lambda_.1} parent=1 // pred_check
      _
    $region7: #{_lambda_.1} parent=1 // pred_check_branch
      %138 = sbr.rel (0) target = $region9
    $region8: #{_lambda_.1} parent=1 // pred_region
      _
    $region9: #{_lambda_.1} parent=1 // pred_fallthru
      _
    // Predicated region
    $region10: #{_lambda_.1} parent=1 // pred_check
      _
    $region11: #{_lambda_.1} parent=1 // pred_check_branch
      %140 = sbr.rel (0) target = $region13
    $region12: #{_lambda_.1} parent=1 // pred_region
      %s142 = ssub.s32 16, 16
      %143 = vsyncadd [#allocation16], %s142
      %s145 = sshll.u32 [#allocation15], 4
      %s146 = int_to_ptr.vmem [resolvable:$true] %s145
      %148 = dma.hbm_to_vmem [thread:$0]  %s5, 16, %s146, [#allocation16]
    $region13: #{_lambda_.1} parent=1 // pred_fallthru
      _
    // Predicated region
    $region14: #{_lambda_.1} parent=1 // pred_check
      _
    $region15: #{_lambda_.1} parent=1 // pred_check_branch
      %150 = sbr.rel (0) target = $region17
    $region16: #{_lambda_.1} parent=1 // pred_region
      %s152 = ssub.s32 16, 16
      %153 = vsyncadd [#allocation18], %s152
      %s155 = sshll.u32 [#allocation17], 4
      %s156 = int_to_ptr.vmem [resolvable:$true] %s155
      %158 = dma.hbm_to_vmem [thread:$0]  %s7, 16, %s156, [#allocation18]
    $region17: #{_lambda_.1} parent=1 // pred_fallthru
      _
    // Predicated region
    $region18: #{_lambda_.1} parent=1 // pred_check
      _
    $region19: #{_lambda_.1} parent=1 // pred_check_branch
      %160 = sbr.rel (0) target = $region21
    $region20: #{_lambda_.1} parent=1 // pred_region
      _
    $region21: #{_lambda_.1} parent=1 // pred_fallthru
      _
    // Predicated region
    $region22: #{_lambda_.1} parent=1 // pred_check
      _
    $region23: #{_lambda_.1} parent=1 // pred_check_branch
      %162 = sbr.rel (0) target = $region25
    $region24: #{_lambda_.1} parent=1 // pred_region
      %s164 = ssub.s32 16, 16
      %165 = vsyncadd [#allocation18], %s164
      %s167 = sshll.u32 [#allocation19], 4
      %s168 = int_to_ptr.vmem [resolvable:$true] %s167
      %170 = dma.hbm_to_vmem [thread:$0]  %s11, 16, %s168, [#allocation18]
    $region25: #{_lambda_.1} parent=1 // pred_fallthru
      _
    // Predicated region
    $region26: #{_lambda_.1} parent=1 // pred_check
      _
    $region27: #{_lambda_.1} parent=1 // pred_check_branch
      %172 = sbr.rel (0) target = $region29
    $region28: #{_lambda_.1} parent=1 // pred_region
      %s174 = ssub.s32 16, 16
      %175 = vsyncadd [#allocation21], %s174
      %s177 = sshll.u32 [#allocation20], 4
      %s178 = int_to_ptr.vmem [resolvable:$true] %s177
      %180 = dma.hbm_to_vmem [thread:$0]  %s13, 16, %s178, [#allocation21]
    $region29: #{_lambda_.1} parent=1 // pred_fallthru
      _
    // Predicated region
    $region30: #{_lambda_.1} parent=1 // pred_check
      _
    $region31: #{_lambda_.1} parent=1 // pred_check_branch
      %182 = sbr.rel (0) target = $region33
    $region32: #{_lambda_.1} parent=1 // pred_region
      _
    $region33: #{_lambda_.1} parent=1 // pred_fallthru
      _
    // Predicated region
    $region34: #{_lambda_.1} parent=1 // pred_check
      _
    $region35: #{_lambda_.1} parent=1 // pred_check_branch
      %184 = sbr.rel (0) target = $region37
    $region36: #{_lambda_.1} parent=1 // pred_region
      %s186 = ssub.s32 16, 16
      %187 = vsyncadd [#allocation21], %s186
      %s189 = sshll.u32 [#allocation22], 4
      %s190 = int_to_ptr.vmem [resolvable:$true] %s189
      %192 = dma.hbm_to_vmem [thread:$0]  %s17, 16, %s190, [#allocation21]
    $region37: #{_lambda_.1} parent=1 // pred_fallthru
      _
    // Predicated region
    $region38: #{_lambda_.1} parent=1 // pred_check
      _
    $region39: #{_lambda_.1} parent=1 // pred_check_branch
      %194 = sbr.rel (0) target = $region41
    $region40: #{_lambda_.1} parent=1 // pred_region
      %s196 = ssub.s32 16, 16
      %197 = vsyncadd [#allocation24], %s196
      %s199 = sshll.u32 [#allocation23], 4
      %s200 = int_to_ptr.vmem [resolvable:$true] %s199
      %202 = dma.hbm_to_vmem [thread:$0]  %s19, 16, %s200, [#allocation24]
    $region41: #{_lambda_.1} parent=1 // pred_fallthru
      _
    // Predicated region
    $region42: #{_lambda_.1} parent=1 // pred_check
      _
    $region43: #{_lambda_.1} parent=1 // pred_check_branch
      %204 = sbr.rel (0) target = $region45
    $region44: #{_lambda_.1} parent=1 // pred_region
      _
    $region45: #{_lambda_.1} parent=1 // pred_fallthru
      _
    // Predicated region
    $region46: #{_lambda_.1} parent=1 // pred_check
      _
    $region47: #{_lambda_.1} parent=1 // pred_check_branch
      %206 = sbr.rel (0) target = $region49
    $region48: #{_lambda_.1} parent=1 // pred_region
      %s208 = ssub.s32 16, 16
      %209 = vsyncadd [#allocation24], %s208
      %s211 = sshll.u32 [#allocation25], 4
      %s212 = int_to_ptr.vmem [resolvable:$true] %s211
      %214 = dma.hbm_to_vmem [thread:$0]  %s23, 16, %s212, [#allocation24]
    $region49: #{_lambda_.1} parent=1 // pred_fallthru
      _
    // Predicated region
    $region50: #{_lambda_.1} parent=1 // pred_check
      _
    $region51: #{_lambda_.1} parent=1 // pred_check_branch
      %216 = sbr.rel (0) target = $region53
    $region52: #{_lambda_.1} parent=1 // pred_region
      %s218 = ssub.s32 16, 16
      %219 = vsyncadd [#allocation27], %s218
      %s221 = sshll.u32 [#allocation26], 4
      %s222 = int_to_ptr.vmem [resolvable:$true] %s221
      %224 = dma.hbm_to_vmem [thread:$0]  %s25, 16, %s222, [#allocation27]
    $region53: #{_lambda_.1} parent=1 // pred_fallthru
      _
    // Predicated region
    $region54: #{_lambda_.1} parent=1 // pred_check
      _
    $region55: #{_lambda_.1} parent=1 // pred_check_branch
      %226 = sbr.rel (0) target = $region57
    $region56: #{_lambda_.1} parent=1 // pred_region
      _
    $region57: #{_lambda_.1} parent=1 // pred_fallthru
      _
    // Predicated region
    $region58: #{_lambda_.1} parent=1 // pred_check
      _
    $region59: #{_lambda_.1} parent=1 // pred_check_branch
      %228 = sbr.rel (0) target = $region61
    $region60: #{_lambda_.1} parent=1 // pred_region
      %s230 = ssub.s32 16, 16
      %231 = vsyncadd [#allocation27], %s230
      %s233 = sshll.u32 [#allocation28], 4
      %s234 = int_to_ptr.vmem [resolvable:$true] %s233
      %236 = dma.hbm_to_vmem [thread:$0]  %s29, 16, %s234, [#allocation27]
    $region61: #{_lambda_.1} parent=1 // pred_fallthru
      _
    // Predicated region
    $region62: #{_lambda_.1} parent=1 // pred_check
      _
    $region63: #{_lambda_.1} parent=1 // pred_check_branch
      %238 = sbr.rel (0) target = $region65
    $region64: #{_lambda_.1} parent=1 // pred_region
      %s240 = ssub.s32 16, 16
      %241 = vsyncadd [#allocation30], %s240
      %s243 = sshll.u32 [#allocation29], 4
      %s244 = int_to_ptr.vmem [resolvable:$true] %s243
      %246 = dma.hbm_to_vmem [thread:$0]  %s31, 16, %s244, [#allocation30]
    $region65: #{_lambda_.1} parent=1 // pred_fallthru
      _
    // Predicated region
    $region66: #{_lambda_.1} parent=1 // pred_check
      _
    $region67: #{_lambda_.1} parent=1 // pred_check_branch
      %248 = sbr.rel (0) target = $region69
    $region68: #{_lambda_.1} parent=1 // pred_region
      _
    $region69: #{_lambda_.1} parent=1 // pred_fallthru
      _
    // Predicated region
    $region70: #{_lambda_.1} parent=1 // pred_check
      _
    $region71: #{_lambda_.1} parent=1 // pred_check_branch
      %250 = sbr.rel (0) target = $region73
    $region72: #{_lambda_.1} parent=1 // pred_region
      %s252 = ssub.s32 16, 16
      %253 = vsyncadd [#allocation30], %s252
      %s255 = sshll.u32 [#allocation31], 4
      %s256 = int_to_ptr.vmem [resolvable:$true] %s255
      %258 = dma.hbm_to_vmem [thread:$0]  %s35, 16, %s256, [#allocation30]
    $region73: #{_lambda_.1} parent=1 // pred_fallthru
      _
    // Predicated region
    $region74: #{_lambda_.1} parent=1 // pred_check
      _
    $region75: #{_lambda_.1} parent=1 // pred_check_branch
      %260 = sbr.rel (0) target = $region77
    $region76: #{_lambda_.1} parent=1 // pred_region
      %s262 = ssub.s32 16, 16
      %263 = vsyncadd [#allocation33], %s262
      %s265 = sshll.u32 [#allocation32], 4
      %s266 = int_to_ptr.vmem [resolvable:$true] %s265
      %268 = dma.hbm_to_vmem [thread:$0]  %s37, 16, %s266, [#allocation33]
    $region77: #{_lambda_.1} parent=1 // pred_fallthru
      _
    // Predicated region
    $region78: #{_lambda_.1} parent=1 // pred_check
      _
    $region79: #{_lambda_.1} parent=1 // pred_check_branch
      %270 = sbr.rel (0) target = $region81
    $region80: #{_lambda_.1} parent=1 // pred_region
      _
    $region81: #{_lambda_.1} parent=1 // pred_fallthru
      _
    // Predicated region
    $region82: #{_lambda_.1} parent=1 // pred_check
      _
    $region83: #{_lambda_.1} parent=1 // pred_check_branch
      %272 = sbr.rel (0) target = $region85
    $region84: #{_lambda_.1} parent=1 // pred_region
      _
    $region85: #{_lambda_.1} parent=1 // pred_fallthru
      _
    // Predicated region
    $region86: #{_lambda_.1} parent=1 // pred_check
      _
    $region87: #{_lambda_.1} parent=1 // pred_check_branch
      %274 = sbr.rel (0) target = $region89
    $region88: #{_lambda_.1} parent=1 // pred_region
      _
    $region89: #{_lambda_.1} parent=1 // pred_fallthru
      _
    // Predicated region
    $region90: #{_lambda_.1} parent=1 // pred_check
      _
    $region91: #{_lambda_.1} parent=1 // pred_check_branch
      %276 = sbr.rel (0) target = $region93
    $region92: #{_lambda_.1} parent=1 // pred_region
      _
    $region93: #{_lambda_.1} parent=1 // pred_fallthru
      _
    // Predicated region
    $region94: #{_lambda_.1} parent=1 // pred_check
      _
    $region95: #{_lambda_.1} parent=1 // pred_check_branch
      %278 = sbr.rel (0) target = $region97
    $region96: #{_lambda_.1} parent=1 // pred_region
      _
    $region97: #{_lambda_.1} parent=1 // pred_fallthru
      _
    // Predicated region
    $region98: #{_lambda_.1} parent=1 // pred_check
      _
    $region99: #{_lambda_.1} parent=1 // pred_check_branch
      %280 = sbr.rel (0) target = $region101
    $region100: #{_lambda_.1} parent=1 // pred_region
      _
    $region101: #{_lambda_.1} parent=1 // pred_fallthru
      _
    // Predicated region
    $region102: #{_lambda_.1} parent=1 // pred_check
      _
    $region103: #{_lambda_.1} parent=1 // pred_check_branch
      %282 = sbr.rel (0) target = $region105
    $region104: #{_lambda_.1} parent=1 // pred_region
      _
    $region105: #{_lambda_.1} parent=1 // pred_fallthru
      _
    // Predicated region
    $region106: #{_lambda_.1} parent=1 // pred_check
      _
    $region107: #{_lambda_.1} parent=1 // pred_check_branch
      %284 = sbr.rel (0) target = $region109
    $region108: #{_lambda_.1} parent=1 // pred_region
      %s286 = ssub.s32 16, 16
      %287 = vsyncadd [#allocation33], %s286
      %s289 = sshll.u32 [#allocation34], 4
      %s290 = int_to_ptr.vmem [resolvable:$true] %s289
      %292 = dma.hbm_to_vmem [thread:$0]  %s53, 16, %s290, [#allocation33]
    $region109: #{_lambda_.1} parent=1 // pred_fallthru
      _
    // Predicated region
    $region110: #{_lambda_.1} parent=1 // pred_check
      _
    $region111: #{_lambda_.1} parent=1 // pred_check_branch
      %294 = sbr.rel (0) target = $region113
    $region112: #{_lambda_.1} parent=1 // pred_region
      %s296 = ssub.s32 16, 16
      %297 = vsyncadd [#allocation36], %s296
      %s299 = sshll.u32 [#allocation35], 4
      %s300 = int_to_ptr.vmem [resolvable:$true] %s299
      %302 = dma.hbm_to_vmem [thread:$0]  %s55, 16, %s300, [#allocation36]
    $region113: #{_lambda_.1} parent=1 // pred_fallthru
      _
    // Predicated region
    $region114: #{_lambda_.1} parent=1 // pred_check
      _
    $region115: #{_lambda_.1} parent=1 // pred_check_branch
      %304 = sbr.rel (0) target = $region117
    $region116: #{_lambda_.1} parent=1 // pred_region
      _
    $region117: #{_lambda_.1} parent=1 // pred_fallthru
      _
    // Predicated region
    $region118: #{_lambda_.1} parent=1 // pred_check
      _
    $region119: #{_lambda_.1} parent=1 // pred_check_branch
      %306 = sbr.rel (0) target = $region121
    $region120: #{_lambda_.1} parent=1 // pred_region
      _
    $region121: #{_lambda_.1} parent=1 // pred_fallthru
      _
    // Predicated region
    $region122: #{_lambda_.1} parent=1 // pred_check
      _
    $region123: #{_lambda_.1} parent=1 // pred_check_branch
      %308 = sbr.rel (0) target = $region125
    $region124: #{_lambda_.1} parent=1 // pred_region
      _
    $region125: #{_lambda_.1} parent=1 // pred_fallthru
      _
    // Predicated region
    $region126: #{_lambda_.1} parent=1 // pred_check
      _
    $region127: #{_lambda_.1} parent=1 // pred_check_branch
      %310 = sbr.rel (0) target = $region129
    $region128: #{_lambda_.1} parent=1 // pred_region
      _
    $region129: #{_lambda_.1} parent=1 // pred_fallthru
      _
    // Predicated region
    $region130: #{_lambda_.1} parent=1 // pred_check
      _
    $region131: #{_lambda_.1} parent=1 // pred_check_branch
      %312 = sbr.rel (0) target = $region133
    $region132: #{_lambda_.1} parent=1 // pred_region
      _
    $region133: #{_lambda_.1} parent=1 // pred_fallthru
      _
    // Predicated region
    $region134: #{_lambda_.1} parent=1 // pred_check
      _
    $region135: #{_lambda_.1} parent=1 // pred_check_branch
      %314 = sbr.rel (0) target = $region137
    $region136: #{_lambda_.1} parent=1 // pred_region
      _
    $region137: #{_lambda_.1} parent=1 // pred_fallthru
      _
    // Predicated region
    $region138: #{_lambda_.1} parent=1 // pred_check
      _
    $region139: #{_lambda_.1} parent=1 // pred_check_branch
      %316 = sbr.rel (0) target = $region141
    $region140: #{_lambda_.1} parent=1 // pred_region
      _
    $region141: #{_lambda_.1} parent=1 // pred_fallthru
      _
    // Predicated region
    $region142: #{_lambda_.1} parent=1 // pred_check
      _
    $region143: #{_lambda_.1} parent=1 // pred_check_branch
      %318 = sbr.rel (0) target = $region145
    $region144: #{_lambda_.1} parent=1 // pred_region
      %s320 = ssub.s32 16, 16
      %321 = vsyncadd [#allocation36], %s320
      %s323 = sshll.u32 [#allocation37], 4
      %s324 = int_to_ptr.vmem [resolvable:$true] %s323
      %326 = dma.hbm_to_vmem [thread:$0]  %s71, 16, %s324, [#allocation36]
    $region145: #{_lambda_.1} parent=1 // pred_fallthru
      _
    // Predicated region
    $region146: #{_lambda_.1} parent=1 // pred_check
      _
    $region147: #{_lambda_.1} parent=1 // pred_check_branch
      %328 = sbr.rel (0) target = $region149
    $region148: #{_lambda_.1} parent=1 // pred_region
      %s330 = ssub.s32 16, 16
      %331 = vsyncadd [#allocation39], %s330
      %s333 = sshll.u32 [#allocation38], 4
      %s334 = int_to_ptr.vmem [resolvable:$true] %s333
      %336 = dma.hbm_to_vmem [thread:$0]  %s73, 16, %s334, [#allocation39]
    $region149: #{_lambda_.1} parent=1 // pred_fallthru
      _
    // Predicated region
    $region150: #{_lambda_.1} parent=1 // pred_check
      _
    $region151: #{_lambda_.1} parent=1 // pred_check_branch
      %338 = sbr.rel (0) target = $region153
    $region152: #{_lambda_.1} parent=1 // pred_region
      _
    $region153: #{_lambda_.1} parent=1 // pred_fallthru
      _
    // Predicated region
    $region154: #{_lambda_.1} parent=1 // pred_check
      _
    $region155: #{_lambda_.1} parent=1 // pred_check_branch
      %340 = sbr.rel (0) target = $region157
    $region156: #{_lambda_.1} parent=1 // pred_region
      _
    $region157: #{_lambda_.1} parent=1 // pred_fallthru
      _
    // Predicated region
    $region158: #{_lambda_.1} parent=1 // pred_check
      _
    $region159: #{_lambda_.1} parent=1 // pred_check_branch
      %342 = sbr.rel (0) target = $region161
    $region160: #{_lambda_.1} parent=1 // pred_region
      _
    $region161: #{_lambda_.1} parent=1 // pred_fallthru
      _
    // Predicated region
    $region162: #{_lambda_.1} parent=1 // pred_check
      _
    $region163: #{_lambda_.1} parent=1 // pred_check_branch
      %344 = sbr.rel (0) target = $region165
    $region164: #{_lambda_.1} parent=1 // pred_region
      _
    $region165: #{_lambda_.1} parent=1 // pred_fallthru
      _
    // Predicated region
    $region166: #{_lambda_.1} parent=1 // pred_check
      _
    $region167: #{_lambda_.1} parent=1 // pred_check_branch
      %346 = sbr.rel (0) target = $region169
    $region168: #{_lambda_.1} parent=1 // pred_region
      _
    $region169: #{_lambda_.1} parent=1 // pred_fallthru
      _
    // Predicated region
    $region170: #{_lambda_.1} parent=1 // pred_check
      _
    $region171: #{_lambda_.1} parent=1 // pred_check_branch
      %348 = sbr.rel (0) target = $region173
    $region172: #{_lambda_.1} parent=1 // pred_region
      _
    $region173: #{_lambda_.1} parent=1 // pred_fallthru
      _
    // Predicated region
    $region174: #{_lambda_.1} parent=1 // pred_check
      _
    $region175: #{_lambda_.1} parent=1 // pred_check_branch
      %350 = sbr.rel (0) target = $region177
    $region176: #{_lambda_.1} parent=1 // pred_region
      _
    $region177: #{_lambda_.1} parent=1 // pred_fallthru
      _
    // Predicated region
    $region178: #{_lambda_.1} parent=1 // pred_check
      _
    $region179: #{_lambda_.1} parent=1 // pred_check_branch
      %352 = sbr.rel (0) target = $region181
    $region180: #{_lambda_.1} parent=1 // pred_region
      %s354 = ssub.s32 16, 16
      %355 = vsyncadd [#allocation39], %s354
      %s357 = sshll.u32 [#allocation40], 4
      %s358 = int_to_ptr.vmem [resolvable:$true] %s357
      %360 = dma.hbm_to_vmem [thread:$0]  %s89, 16, %s358, [#allocation39]
    $region181: #{_lambda_.1} parent=1 // pred_fallthru
      _
    // Predicated region
    $region182: #{_lambda_.1} parent=1 // pred_check
      _
    $region183: #{_lambda_.1} parent=1 // pred_check_branch
      %362 = sbr.rel (0) target = $region185
    $region184: #{_lambda_.1} parent=1 // pred_region
      _
    $region185: #{_lambda_.1} parent=1 // pred_fallthru
      _
    // Predicated region
    $region186: #{_lambda_.1} parent=1 // pred_check
      _
    $region187: #{_lambda_.1} parent=1 // pred_check_branch
      %364 = sbr.rel (0) target = $region189
    $region188: #{_lambda_.1} parent=1 // pred_region
      _
    $region189: #{_lambda_.1} parent=1 // pred_fallthru
      _
    // Predicated region
    $region190: #{_lambda_.1} parent=1 // pred_check
      _
    $region191: #{_lambda_.1} parent=1 // pred_check_branch
      %366 = sbr.rel (0) target = $region193
    $region192: #{_lambda_.1} parent=1 // pred_region
      _
    $region193: #{_lambda_.1} parent=1 // pred_fallthru
      _
    // Predicated region
    $region194: #{_lambda_.1} parent=1 // pred_check
      _
    $region195: #{_lambda_.1} parent=1 // pred_check_branch
      %368 = sbr.rel (0) target = $region197
    $region196: #{_lambda_.1} parent=1 // pred_region
      _
    $region197: #{_lambda_.1} parent=1 // pred_fallthru
      _
    // Predicated region
    $region198: #{_lambda_.1} parent=1 // pred_check
      _
    $region199: #{_lambda_.1} parent=1 // pred_check_branch
      %370 = sbr.rel (0) target = $region201
    $region200: #{_lambda_.1} parent=1 // pred_region
      _
    $region201: #{_lambda_.1} parent=1 // pred_fallthru
      _
    // Predicated region
    $region202: #{_lambda_.1} parent=1 // pred_check
      _
    $region203: #{_lambda_.1} parent=1 // pred_check_branch
      %372 = sbr.rel (0) target = $region205
    $region204: #{_lambda_.1} parent=1 // pred_region
      _
    $region205: #{_lambda_.1} parent=1 // pred_fallthru
      _
    // Predicated region
    $region206: #{_lambda_.1} parent=1 // pred_check
      _
    $region207: #{_lambda_.1} parent=1 // pred_check_branch
      %374 = sbr.rel (0) target = $region209
    $region208: #{_lambda_.1} parent=1 // pred_region
      _
    $region209: #{_lambda_.1} parent=1 // pred_fallthru
      _
    // Predicated region
    $region210: #{_lambda_.1} parent=1 // pred_check
      _
    $region211: #{_lambda_.1} parent=1 // pred_check_branch
      %376 = sbr.rel (0) target = $region213
    $region212: #{_lambda_.1} parent=1 // pred_region
      _
    $region213: #{_lambda_.1} parent=1 // pred_fallthru
      _
    // Predicated region
    $region214: #{_lambda_.1} parent=1 // pred_check
      _
    $region215: #{_lambda_.1} parent=1 // pred_check_branch
      %378 = sbr.rel (0) target = $region217
    $region216: #{_lambda_.1} parent=1 // pred_region
      _
    $region217: #{_lambda_.1} parent=1 // pred_fallthru
      _
    // Predicated region
    $region218: #{_lambda_.1} parent=1 // pred_check
      _
    $region219: #{_lambda_.1} parent=1 // pred_check_branch
      %380 = sbr.rel (0) target = $region221
    $region220: #{_lambda_.1} parent=1 // pred_region
      _
    $region221: #{_lambda_.1} parent=1 // pred_fallthru
      _
    // Predicated region
    $region222: #{_lambda_.1} parent=1 // pred_check
      _
    $region223: #{_lambda_.1} parent=1 // pred_check_branch
      %382 = sbr.rel (0) target = $region225
    $region224: #{_lambda_.1} parent=1 // pred_region
      _
    $region225: #{_lambda_.1} parent=1 // pred_fallthru
      _
    // Predicated region
    $region226: #{_lambda_.1} parent=1 // pred_check
      _
    $region227: #{_lambda_.1} parent=1 // pred_check_branch
      %384 = sbr.rel (0) target = $region229
    $region228: #{_lambda_.1} parent=1 // pred_region
      _
    $region229: #{_lambda_.1} parent=1 // pred_fallthru
      _
    // Predicated region
    $region230: #{_lambda_.1} parent=1 // pred_check
      _
    $region231: #{_lambda_.1} parent=1 // pred_check_branch
      %386 = sbr.rel (0) target = $region233
    $region232: #{_lambda_.1} parent=1 // pred_region
      _
    $region233: #{_lambda_.1} parent=1 // pred_fallthru
      _
    // Predicated region
    $region234: #{_lambda_.1} parent=1 // pred_check
      _
    $region235: #{_lambda_.1} parent=1 // pred_check_branch
      %388 = sbr.rel (0) target = $region237
    $region236: #{_lambda_.1} parent=1 // pred_region
      _
    $region237: #{_lambda_.1} parent=1 // pred_fallthru
      _
    // Predicated region
    $region238: #{_lambda_.1} parent=1 // pred_check
      _
    $region239: #{_lambda_.1} parent=1 // pred_check_branch
      %390 = sbr.rel (0) target = $region241
    $region240: #{_lambda_.1} parent=1 // pred_region
      %391 = dma.done [#allocation16], 16
    $region241: #{_lambda_.1} parent=1 // pred_fallthru
      _
    // Predicated region
    $region242: #{_lambda_.1} parent=1 // pred_check
      _
    $region243: #{_lambda_.1} parent=1 // pred_check_branch
      %393 = sbr.rel (0) target = $region245
    $region244: #{_lambda_.1} parent=1 // pred_region
      %394 = dma.done [#allocation18], 16
    $region245: #{_lambda_.1} parent=1 // pred_fallthru
      _
    // Predicated region
    $region246: #{_lambda_.1} parent=1 // pred_check
      _
    $region247: #{_lambda_.1} parent=1 // pred_check_branch
      %396 = sbr.rel (0) target = $region249
    $region248: #{_lambda_.1} parent=1 // pred_region
      %397 = dma.done [#allocation18], 16
    $region249: #{_lambda_.1} parent=1 // pred_fallthru
      _
    // Predicated region
    $region250: #{_lambda_.1} parent=1 // pred_check
      _
    $region251: #{_lambda_.1} parent=1 // pred_check_branch
      %399 = sbr.rel (0) target = $region253
    $region252: #{_lambda_.1} parent=1 // pred_region
      %400 = dma.done [#allocation21], 16
    $region253: #{_lambda_.1} parent=1 // pred_fallthru
      _
    // Predicated region
    $region254: #{_lambda_.1} parent=1 // pred_check
      _
    $region255: #{_lambda_.1} parent=1 // pred_check_branch
      %402 = sbr.rel (0) target = $region257
    $region256: #{_lambda_.1} parent=1 // pred_region
      %403 = dma.done [#allocation21], 16
    $region257: #{_lambda_.1} parent=1 // pred_fallthru
      _
    // Predicated region
    $region258: #{_lambda_.1} parent=1 // pred_check
      _
    $region259: #{_lambda_.1} parent=1 // pred_check_branch
      %405 = sbr.rel (0) target = $region261
    $region260: #{_lambda_.1} parent=1 // pred_region
      %406 = dma.done [#allocation24], 16
    $region261: #{_lambda_.1} parent=1 // pred_fallthru
      _
    // Predicated region
    $region262: #{_lambda_.1} parent=1 // pred_check
      _
    $region263: #{_lambda_.1} parent=1 // pred_check_branch
      %408 = sbr.rel (0) target = $region265
    $region264: #{_lambda_.1} parent=1 // pred_region
      %409 = dma.done [#allocation24], 16
    $region265: #{_lambda_.1} parent=1 // pred_fallthru
      _
    // Predicated region
    $region266: #{_lambda_.1} parent=1 // pred_check
      _
    $region267: #{_lambda_.1} parent=1 // pred_check_branch
      %411 = sbr.rel (0) target = $region269
    $region268: #{_lambda_.1} parent=1 // pred_region
      %412 = dma.done [#allocation27], 16
    $region269: #{_lambda_.1} parent=1 // pred_fallthru
      _
    // Predicated region
    $region270: #{_lambda_.1} parent=1 // pred_check
      _
    $region271: #{_lambda_.1} parent=1 // pred_check_branch
      %414 = sbr.rel (0) target = $region273
    $region272: #{_lambda_.1} parent=1 // pred_region
      %415 = dma.done [#allocation27], 16
    $region273: #{_lambda_.1} parent=1 // pred_fallthru
      _
    // Predicated region
    $region274: #{_lambda_.1} parent=1 // pred_check
      _
    $region275: #{_lambda_.1} parent=1 // pred_check_branch
      %417 = sbr.rel (0) target = $region277
    $region276: #{_lambda_.1} parent=1 // pred_region
      %418 = dma.done [#allocation30], 16
    $region277: #{_lambda_.1} parent=1 // pred_fallthru
      _
    // Predicated region
    $region278: #{_lambda_.1} parent=1 // pred_check
      _
    $region279: #{_lambda_.1} parent=1 // pred_check_branch
      %420 = sbr.rel (0) target = $region281
    $region280: #{_lambda_.1} parent=1 // pred_region
      %421 = dma.done [#allocation30], 16
    $region281: #{_lambda_.1} parent=1 // pred_fallthru
      _
    // Predicated region
    $region282: #{_lambda_.1} parent=1 // pred_check
      _
    $region283: #{_lambda_.1} parent=1 // pred_check_branch
      %423 = sbr.rel (0) target = $region285
    $region284: #{_lambda_.1} parent=1 // pred_region
      %424 = dma.done [#allocation33], 16
    $region285: #{_lambda_.1} parent=1 // pred_fallthru
      _
    // Predicated region
    $region286: #{_lambda_.1} parent=1 // pred_check
      _
    $region287: #{_lambda_.1} parent=1 // pred_check_branch
      %426 = sbr.rel (0) target = $region289
    $region288: #{_lambda_.1} parent=1 // pred_region
      %427 = dma.done [#allocation33], 16
    $region289: #{_lambda_.1} parent=1 // pred_fallthru
      _
    // Predicated region
    $region290: #{_lambda_.1} parent=1 // pred_check
      _
    $region291: #{_lambda_.1} parent=1 // pred_check_branch
      %429 = sbr.rel (0) target = $region293
    $region292: #{_lambda_.1} parent=1 // pred_region
      %430 = dma.done [#allocation36], 16
    $region293: #{_lambda_.1} parent=1 // pred_fallthru
      _
    // Predicated region
    $region294: #{_lambda_.1} parent=1 // pred_check
      _
    $region295: #{_lambda_.1} parent=1 // pred_check_branch
      %432 = sbr.rel (0) target = $region297
    $region296: #{_lambda_.1} parent=1 // pred_region
      %433 = dma.done [#allocation36], 16
    $region297: #{_lambda_.1} parent=1 // pred_fallthru
      _
    // Predicated region
    $region298: #{_lambda_.1} parent=1 // pred_check
      _
    $region299: #{_lambda_.1} parent=1 // pred_check_branch
      %435 = sbr.rel (0) target = $region301
    $region300: #{_lambda_.1} parent=1 // pred_region
      %436 = dma.done [#allocation39], 16
    $region301: #{_lambda_.1} parent=1 // pred_fallthru
      _
    // Predicated region
    $region302: #{_lambda_.1} parent=1 // pred_check
      _
    $region303: #{_lambda_.1} parent=1 // pred_check_branch
      %438 = sbr.rel (0) target = $region305
    $region304: #{_lambda_.1} parent=1 // pred_region
      %439 = dma.done [#allocation39], 16
    $region305: #{_lambda_.1} parent=1 // pred_fallthru
      _
    %v441 = vld [vmem:[%s1] sm:$0xff]
    %v442 = vld [vmem:[%s1 + $0x8] sm:$0xff]
    %v443 = vld [vmem:[%s1 + $0x10] sm:$0xff]
    %v444 = vld [vmem:[%s1 + $0x18] sm:$0xff]
    %v445 = vld [vmem:[%s1 + $0x20] sm:$0xff]
    %v446 = vld [vmem:[%s1 + $0x28] sm:$0xff]
    %v447 = vld [vmem:[%s1 + $0x30] sm:$0xff]
    %v448 = vld [vmem:[%s1 + $0x38] sm:$0xff]
    %v449 = vld [vmem:[%s1 + $0x40] sm:$0xff]
    %v450 = vld [vmem:[%s1 + $0x48] sm:$0xff]
    %v451 = vld [vmem:[%s1 + $0x50] sm:$0xff]
    %v452 = vld [vmem:[%s1 + $0x58] sm:$0xff]
    %v453 = vld [vmem:[%s1 + $0x60] sm:$0xff]
    %v454 = vld [vmem:[%s1 + $0x68] sm:$0xff]
    %v455 = vld [vmem:[%s1 + $0x70] sm:$0xff]
    %v456 = vld [vmem:[%s1 + $0x78] sm:$0xff]
    %v457 = vpack.c.bf16 %v442, %v441
    %v458 = vpack.c.bf16 %v444, %v443
    %v459 = vpack.c.bf16 %v446, %v445
    %v460 = vpack.c.bf16 %v448, %v447
    %v461 = vpack.c.bf16 %v450, %v449
    %v462 = vpack.c.bf16 %v452, %v451
    %v463 = vpack.c.bf16 %v454, %v453
    %v464 = vpack.c.bf16 %v456, %v455
    %v465 = vld [vmem:[%s3] sm:$0xf]
    %v466 = vld [vmem:[%s3 + $0x4] sm:$0xf]
    %v467 = vld [vmem:[%s3 + $0x8] sm:$0xf]
    %v468 = vld [vmem:[%s3 + $0xc] sm:$0xf]
    %v473 = vunpack.c.l.b16 %v465
    %v474 = vunpack.c.l.b16 %v466
    %v475 = vunpack.c.l.b16 %v467
    %v476 = vunpack.c.l.b16 %v468
    %v477 = vpack.c.b16 %v474, %v473
    %v478 = vpack.c.b16 %v476, %v475
    %vm481 = vcmask 261120
    %v483 = vsel %vm481, %v457, 0
    %v486 = vsel %vm481, %v458, 0
    %v489 = vsel %vm481, %v459, 0
    %v492 = vsel %vm481, %v460, 0
    %v495 = vsel %vm481, %v461, 0
    %v498 = vsel %vm481, %v462, 0
    %v501 = vsel %vm481, %v463, 0
    %v504 = vsel %vm481, %v464, 0
    %506 = vmatprep.subr.bf16.mxu0 0
    %507 = vmatpush1.bf16.msra.mxu0 0
    %508 = vmatprep.subr.bf16.mxu0 0
    %509 = vmatpush1.bf16.msra.mxu0 0
    %510 = vmatprep.subr.bf16.mxu0 0
    %511 = vmatpush1.bf16.msra.mxu0 0
    %512 = vmatprep.subr.bf16.mxu0 0
    %513 = vmatpush1.bf16.msra.mxu0 0
    %514 = vmatprep.subr.bf16.mxu0 0
    %515 = vmatpush1.bf16.msra.mxu0 0
    %516 = vmatprep.subr.bf16.mxu0 0
    %517 = vmatpush1.bf16.msra.mxu0 0
    %518 = vmatprep.subr.bf16.mxu0 0
    %519 = vmatpush1.bf16.msra.mxu0 %v478
    %520 = vmatprep.subr.bf16.mxu0 0
    %521 = vmatpush1.bf16.msra.mxu0 %v477
    %522 = vmatprep.subr.bf16.mxu0 0
    %523 = vmatpush2.bf16.msra.mxu0 0
    %524 = vmatprep.subr.bf16.mxu0 0
    %525 = vmatpush2.bf16.msra.mxu0 0
    %526 = vmatprep.subr.bf16.mxu0 0
    %527 = vmatpush2.bf16.msra.mxu0 0
    %528 = vmatprep.subr.bf16.mxu0 0
    %529 = vmatpush2.bf16.msra.mxu0 0
    %530 = vmatprep.subr.bf16.mxu0 0
    %531 = vmatpush2.bf16.msra.mxu0 0
    %532 = vmatprep.subr.bf16.mxu0 0
    %533 = vmatpush2.bf16.msra.mxu0 0
    %534 = vmatprep.subr.bf16.mxu0 0
    %535 = vmatpush2.bf16.msra.mxu0 0
    %536 = vmatprep.subr.bf16.mxu0 0
    %537 = vmatpush2.bf16.msra.mxu0 0
    %538 = vmatprep.mubr.bf16.mxu0 0
    %539 = vmatmul.mubr.bf16.gmra.mxu0 %v483
    %v540 = vpop.f32.mrf.mxu0
    %v541 = vadd.f32 0.0, %v540
    %v542 = vpop.f32.mrf.mxu0
    %v543 = vpop.f32.mrf.mxu0
    %v544 = vadd.f32 0.0, %v543
    %v545 = vpop.f32.mrf.mxu0
    %546 = vmatprep.mubr.bf16.mxu0 0
    %547 = vmatmul.mubr.bf16.gmra.mxu0 %v486
    %v548 = vpop.f32.mrf.mxu0
    %v549 = vadd.f32 0.0, %v548
    %v550 = vpop.f32.mrf.mxu0
    %v551 = vpop.f32.mrf.mxu0
    %v552 = vadd.f32 0.0, %v551
    %v553 = vpop.f32.mrf.mxu0
    %554 = vmatprep.mubr.bf16.mxu0 0
    %555 = vmatmul.mubr.bf16.gmra.mxu0 %v489
    %v556 = vpop.f32.mrf.mxu0
    %v557 = vadd.f32 0.0, %v556
    %v558 = vpop.f32.mrf.mxu0
    %v559 = vpop.f32.mrf.mxu0
    %v560 = vadd.f32 0.0, %v559
    %v561 = vpop.f32.mrf.mxu0
    %562 = vmatprep.mubr.bf16.mxu0 0
    %563 = vmatmul.mubr.bf16.gmra.mxu0 %v492
    %v564 = vpop.f32.mrf.mxu0
    %v565 = vadd.f32 0.0, %v564
    %v566 = vpop.f32.mrf.mxu0
    %v567 = vpop.f32.mrf.mxu0
    %v568 = vadd.f32 0.0, %v567
    %v569 = vpop.f32.mrf.mxu0
    %570 = vmatprep.mubr.bf16.mxu0 0
    %571 = vmatmul.mubr.bf16.gmra.mxu0 %v495
    %v572 = vpop.f32.mrf.mxu0
    %v573 = vadd.f32 0.0, %v572
    %v574 = vpop.f32.mrf.mxu0
    %v575 = vpop.f32.mrf.mxu0
    %v576 = vadd.f32 0.0, %v575
    %v577 = vpop.f32.mrf.mxu0
    %578 = vmatprep.mubr.bf16.mxu0 0
    %579 = vmatmul.mubr.bf16.gmra.mxu0 %v498
    %v580 = vpop.f32.mrf.mxu0
    %v581 = vadd.f32 0.0, %v580
    %v582 = vpop.f32.mrf.mxu0
    %v583 = vpop.f32.mrf.mxu0
    %v584 = vadd.f32 0.0, %v583
    %v585 = vpop.f32.mrf.mxu0
    %586 = vmatprep.mubr.bf16.mxu0 0
    %587 = vmatmul.mubr.bf16.gmra.mxu0 %v501
    %v588 = vpop.f32.mrf.mxu0
    %v589 = vadd.f32 0.0, %v588
    %v590 = vpop.f32.mrf.mxu0
    %v591 = vpop.f32.mrf.mxu0
    %v592 = vadd.f32 0.0, %v591
    %v593 = vpop.f32.mrf.mxu0
    %594 = vmatprep.mubr.bf16.mxu0 0
    %595 = vmatmul.mubr.bf16.gmra.mxu0 %v504
    %v596 = vpop.f32.mrf.mxu0
    %v597 = vadd.f32 0.0, %v596
    %v598 = vpop.f32.mrf.mxu0
    %v599 = vpop.f32.mrf.mxu0
    %v600 = vadd.f32 0.0, %v599
    %v601 = vpop.f32.mrf.mxu0
    %602 = vdwg.mxu0
    %v603 = vld [vmem:[#allocation15] sm:$0x1]
    %v605 = vlaneseq
    %v606 = vshrl.u32 %v605, 7
    %v607 = vsub.s32 0, %v606
    %v608 = vrot.slane %v603, %v607
    %v610 = vmul.f32 %v541, %v608
    %v611 = vmul.f32 %v544, %v608
    %v612 = vmul.f32 %v549, %v608
    %v613 = vmul.f32 %v552, %v608
    %v614 = vmul.f32 %v557, %v608
    %v615 = vmul.f32 %v560, %v608
    %v616 = vmul.f32 %v565, %v608
    %v617 = vmul.f32 %v568, %v608
    %v618 = vmul.f32 %v573, %v608
    %v619 = vmul.f32 %v576, %v608
    %v620 = vmul.f32 %v581, %v608
    %v621 = vmul.f32 %v584, %v608
    %v622 = vmul.f32 %v589, %v608
    %v623 = vmul.f32 %v592, %v608
    %v624 = vmul.f32 %v597, %v608
    %v625 = vmul.f32 %v600, %v608
    %v626 = vld [vmem:[#allocation17] sm:$0x1]
    %v628 = vlaneseq
    %v629 = vshrl.u32 %v628, 7
    %v630 = vsub.s32 0, %v629
    %v631 = vrot.slane %v626, %v630
    %v633 = vadd.f32 %v610, %v631
    %v634 = vadd.f32 %v611, %v631
    %v635 = vadd.f32 %v612, %v631
    %v636 = vadd.f32 %v613, %v631
    %v637 = vadd.f32 %v614, %v631
    %v638 = vadd.f32 %v615, %v631
    %v639 = vadd.f32 %v616, %v631
    %v640 = vadd.f32 %v617, %v631
    %v641 = vadd.f32 %v618, %v631
    %v642 = vadd.f32 %v619, %v631
    %v643 = vadd.f32 %v620, %v631
    %v644 = vadd.f32 %v621, %v631
    %v645 = vadd.f32 %v622, %v631
    %v646 = vadd.f32 %v623, %v631
    %v647 = vadd.f32 %v624, %v631
    %v648 = vadd.f32 %v625, %v631
    %v649 = vmax.f32 %v633, 0.0
    %v650 = vmax.f32 %v634, 0.0
    %v651 = vmax.f32 %v635, 0.0
    %v652 = vmax.f32 %v636, 0.0
    %v653 = vmax.f32 %v637, 0.0
    %v654 = vmax.f32 %v638, 0.0
    %v655 = vmax.f32 %v639, 0.0
    %v656 = vmax.f32 %v640, 0.0
    %v657 = vmax.f32 %v641, 0.0
    %v658 = vmax.f32 %v642, 0.0
    %v659 = vmax.f32 %v643, 0.0
    %v660 = vmax.f32 %v644, 0.0
    %v661 = vmax.f32 %v645, 0.0
    %v662 = vmax.f32 %v646, 0.0
    %v663 = vmax.f32 %v647, 0.0
    %v664 = vmax.f32 %v648, 0.0
    %v665 = vmin.f32 %v649, 6.0
    %v666 = vmin.f32 %v650, 6.0
    %v667 = vmin.f32 %v651, 6.0
    %v668 = vmin.f32 %v652, 6.0
    %v669 = vmin.f32 %v653, 6.0
    %v670 = vmin.f32 %v654, 6.0
    %v671 = vmin.f32 %v655, 6.0
    %v672 = vmin.f32 %v656, 6.0
    %v673 = vmin.f32 %v657, 6.0
    %v674 = vmin.f32 %v658, 6.0
    %v675 = vmin.f32 %v659, 6.0
    %v676 = vmin.f32 %v660, 6.0
    %v677 = vmin.f32 %v661, 6.0
    %v678 = vmin.f32 %v662, 6.0
    %v679 = vmin.f32 %v663, 6.0
    %v680 = vmin.f32 %v664, 6.0
    %681 = vst.msk [vmem:[#allocation2] sm:$0xff] %vm481, 0.0
    %vm682 = vcmask 254976
    %683 = vst.msk [vmem:[#allocation2 + $0x8] sm:$0x3] %vm682, 0.0
    %684 = vst.msk [vmem:[#allocation2 + $0x10] sm:$0xff] %vm481, 0.0
    %685 = vst.msk [vmem:[#allocation2 + $0x18] sm:$0x3] %vm682, 0.0
    %686 = vst.msk [vmem:[#allocation2 + $0x20] sm:$0xff] %vm481, 0.0
    %687 = vst.msk [vmem:[#allocation2 + $0x28] sm:$0x3] %vm682, 0.0
    %688 = vst.msk [vmem:[#allocation2 + $0x30] sm:$0xff] %vm481, 0.0
    %689 = vst.msk [vmem:[#allocation2 + $0x38] sm:$0x3] %vm682, 0.0
    %690 = vst.msk [vmem:[#allocation2 + $0x40] sm:$0xff] %vm481, 0.0
    %691 = vst.msk [vmem:[#allocation2 + $0x48] sm:$0x3] %vm682, 0.0
    %692 = vst.msk [vmem:[#allocation2 + $0x50] sm:$0xff] %vm481, 0.0
    %693 = vst.msk [vmem:[#allocation2 + $0x58] sm:$0x3] %vm682, 0.0
    %694 = vst.msk [vmem:[#allocation2 + $0x60] sm:$0xff] %vm481, 0.0
    %695 = vst.msk [vmem:[#allocation2 + $0x68] sm:$0x3] %vm682, 0.0
    %696 = vst.msk [vmem:[#allocation2 + $0x70] sm:$0xff] %vm481, 0.0
    %697 = vst.msk [vmem:[#allocation2 + $0x78] sm:$0x3] %vm682, 0.0
    %698 = vst.msk [vmem:[#allocation2 + $0x80] sm:$0xff] %vm481, 0.0
    %699 = vst.msk [vmem:[#allocation2 + $0x88] sm:$0x3] %vm682, 0.0
    %700 = vst.msk [vmem:[#allocation2 + $0x90] sm:$0xff] %vm481, 0.0
    %701 = vst.msk [vmem:[#allocation2 + $0x98] sm:$0x3] %vm682, 0.0
    %702 = vst.msk [vmem:[#allocation2 + $0xa0] sm:$0xff] %vm481, 0.0
    %703 = vst.msk [vmem:[#allocation2 + $0xa8] sm:$0x3] %vm682, 0.0
    %704 = vst.msk [vmem:[#allocation2 + $0xb0] sm:$0xff] %vm481, 0.0
    %705 = vst.msk [vmem:[#allocation2 + $0xb8] sm:$0x3] %vm682, 0.0
    %706 = vst.msk [vmem:[#allocation2 + $0xc0] sm:$0xff] %vm481, 0.0
    %707 = vst.msk [vmem:[#allocation2 + $0xc8] sm:$0x3] %vm682, 0.0
    %708 = vst.msk [vmem:[#allocation2 + $0xd0] sm:$0xff] %vm481, 0.0
    %709 = vst.msk [vmem:[#allocation2 + $0xd8] sm:$0x3] %vm682, 0.0
    %710 = vst.msk [vmem:[#allocation2 + $0xe0] sm:$0xff] %vm481, 0.0
    %711 = vst.msk [vmem:[#allocation2 + $0xe8] sm:$0x3] %vm682, 0.0
    %712 = vst.msk [vmem:[#allocation2 + $0xf0] sm:$0xff] %vm481, 0.0
    %713 = vst.msk [vmem:[#allocation2 + $0xf8] sm:$0x3] %vm682, 0.0
    %714 = vst.msk [vmem:[#allocation2 + $0x100] sm:$0xff] %vm481, 0.0
    %715 = vst.msk [vmem:[#allocation2 + $0x108] sm:$0x3] %vm682, 0.0
    %716 = vst.msk [vmem:[#allocation2 + $0x110] sm:$0xff] %vm481, 0.0
    %717 = vst.msk [vmem:[#allocation2 + $0x118] sm:$0x3] %vm682, 0.0
    %718 = vst.msk [vmem:[#allocation2 + $0x120] sm:$0xff] %vm481, 0.0
    %719 = vst.msk [vmem:[#allocation2 + $0x128] sm:$0x3] %vm682, 0.0
    %720 = vst.msk [vmem:[#allocation2 + $0x130] sm:$0xff] %vm481, 0.0
    %721 = vst.msk [vmem:[#allocation2 + $0x138] sm:$0x3] %vm682, 0.0
    %s722 = scalar_lea.vmem [#allocation2], 16
    %723 = vst.msk [vmem:[%s722 + $0x1] sm:$0xff] %vm481, %v665
    %s724 = scalar_lea.vmem [#allocation2], 32
    %725 = vst.msk [vmem:[%s724 + $0x1] sm:$0xff] %vm481, %v666
    %s726 = scalar_lea.vmem [#allocation2], 48
    %727 = vst.msk [vmem:[%s726 + $0x1] sm:$0xff] %vm481, %v667
    %s728 = scalar_lea.vmem [#allocation2], 64
    %729 = vst.msk [vmem:[%s728 + $0x1] sm:$0xff] %vm481, %v668
    %s730 = scalar_lea.vmem [#allocation2], 80
    %731 = vst.msk [vmem:[%s730 + $0x1] sm:$0xff] %vm481, %v669
    %s732 = scalar_lea.vmem [#allocation2], 96
    %733 = vst.msk [vmem:[%s732 + $0x1] sm:$0xff] %vm481, %v670
    %s734 = scalar_lea.vmem [#allocation2], 112
    %735 = vst.msk [vmem:[%s734 + $0x1] sm:$0xff] %vm481, %v671
    %s736 = scalar_lea.vmem [#allocation2], 128
    %737 = vst.msk [vmem:[%s736 + $0x1] sm:$0xff] %vm481, %v672
    %s738 = scalar_lea.vmem [#allocation2], 176
    %739 = vst.msk [vmem:[%s738 + $0x1] sm:$0xff] %vm481, %v673
    %s740 = scalar_lea.vmem [#allocation2], 192
    %741 = vst.msk [vmem:[%s740 + $0x1] sm:$0xff] %vm481, %v674
    %s742 = scalar_lea.vmem [#allocation2], 208
    %743 = vst.msk [vmem:[%s742 + $0x1] sm:$0xff] %vm481, %v675
    %s744 = scalar_lea.vmem [#allocation2], 224
    %745 = vst.msk [vmem:[%s744 + $0x1] sm:$0xff] %vm481, %v676
    %s746 = scalar_lea.vmem [#allocation2], 240
    %747 = vst.msk [vmem:[%s746 + $0x1] sm:$0xff] %vm481, %v677
    %s748 = scalar_lea.vmem [#allocation2], 256
    %749 = vst.msk [vmem:[%s748 + $0x1] sm:$0xff] %vm481, %v678
    %s750 = scalar_lea.vmem [#allocation2], 272
    %751 = vst.msk [vmem:[%s750 + $0x1] sm:$0xff] %vm481, %v679
    %s752 = scalar_lea.vmem [#allocation2], 288
    %753 = vst.msk [vmem:[%s752 + $0x1] sm:$0xff] %vm481, %v680
    %v754 = vld [vmem:[#allocation2] sm:$0xff]
    %v755 = vld [vmem:[#allocation2 + $0x10] sm:$0xff]
    %v756 = vld [vmem:[#allocation2 + $0x20] sm:$0xff]
    %v757 = vld [vmem:[#allocation2 + $0x30] sm:$0xff]
    %v758 = vld [vmem:[#allocation2 + $0x40] sm:$0xff]
    %v759 = vld [vmem:[#allocation2 + $0x50] sm:$0xff]
    %v760 = vld [vmem:[#allocation2 + $0x60] sm:$0xff]
    %v761 = vld [vmem:[#allocation2 + $0x70] sm:$0xff]
    %v762 = vld [vmem:[#allocation2 + $0xa0] sm:$0xff]
    %v763 = vld [vmem:[#allocation2 + $0xb0] sm:$0xff]
    %v764 = vld [vmem:[#allocation2 + $0xc0] sm:$0xff]
    %v765 = vld [vmem:[#allocation2 + $0xd0] sm:$0xff]
    %v766 = vld [vmem:[#allocation2 + $0xe0] sm:$0xff]
    %v767 = vld [vmem:[#allocation2 + $0xf0] sm:$0xff]
    %v768 = vld [vmem:[#allocation2 + $0x100] sm:$0xff]
    %v769 = vld [vmem:[#allocation2 + $0x110] sm:$0xff]
    %v770 = vld [vmem:[%s9] sm:$0x1]
    %v771 = vlaneseq
    %v772 = vshrl.u32 %v771, 7
    %v773 = vsub.s32 0, %v772
    %v774 = vrot.slane %v770, %v773
    %v775 = vmul.f32 %v754, %v774
    %v776 = vmul.f32 %v755, %v774
    %v777 = vmul.f32 %v756, %v774
    %v778 = vmul.f32 %v757, %v774
    %v779 = vmul.f32 %v758, %v774
    %v780 = vmul.f32 %v759, %v774
    %v781 = vmul.f32 %v760, %v774
    %v782 = vmul.f32 %v761, %v774
    %v783 = vmul.f32 %v762, %v774
    %v784 = vmul.f32 %v763, %v774
    %v785 = vmul.f32 %v764, %v774
    %v786 = vmul.f32 %v765, %v774
    %v787 = vmul.f32 %v766, %v774
    %v788 = vmul.f32 %v767, %v774
    %v789 = vmul.f32 %v768, %v774
    %v790 = vmul.f32 %v769, %v774
    %v791 = vadd.f32 %v775, 0.0
    %v792 = vadd.f32 %v776, 0.0
    %v793 = vadd.f32 %v777, 0.0
    %v794 = vadd.f32 %v778, 0.0
    %v795 = vadd.f32 %v779, 0.0
    %v796 = vadd.f32 %v780, 0.0
    %v797 = vadd.f32 %v781, 0.0
    %v798 = vadd.f32 %v782, 0.0
    %v799 = vadd.f32 %v783, 0.0
    %v800 = vadd.f32 %v784, 0.0
    %v801 = vadd.f32 %v785, 0.0
    %v802 = vadd.f32 %v786, 0.0
    %v803 = vadd.f32 %v787, 0.0
    %v804 = vadd.f32 %v788, 0.0
    %v805 = vadd.f32 %v789, 0.0
    %v806 = vadd.f32 %v790, 0.0
    %v807 = vld [vmem:[#allocation2 + $0x1] sm:$0xff]
    %v808 = vld [vmem:[#allocation2 + $0x11] sm:$0xff]
    %v809 = vld [vmem:[#allocation2 + $0x21] sm:$0xff]
    %v810 = vld [vmem:[#allocation2 + $0x31] sm:$0xff]
    %v811 = vld [vmem:[#allocation2 + $0x41] sm:$0xff]
    %v812 = vld [vmem:[#allocation2 + $0x51] sm:$0xff]
    %v813 = vld [vmem:[#allocation2 + $0x61] sm:$0xff]
    %v814 = vld [vmem:[#allocation2 + $0x71] sm:$0xff]
    %v815 = vld [vmem:[#allocation2 + $0xa1] sm:$0xff]
    %v816 = vld [vmem:[#allocation2 + $0xb1] sm:$0xff]
    %v817 = vld [vmem:[#allocation2 + $0xc1] sm:$0xff]
    %v818 = vld [vmem:[#allocation2 + $0xd1] sm:$0xff]
    %v819 = vld [vmem:[#allocation2 + $0xe1] sm:$0xff]
    %v820 = vld [vmem:[#allocation2 + $0xf1] sm:$0xff]
    %v821 = vld [vmem:[#allocation2 + $0x101] sm:$0xff]
    %v822 = vld [vmem:[#allocation2 + $0x111] sm:$0xff]
    %v823 = vld [vmem:[%s9 + $0x1] sm:$0x1]
    %v824 = vlaneseq
    %v825 = vshrl.u32 %v824, 7
    %v826 = vsub.s32 0, %v825
    %v827 = vrot.slane %v823, %v826
    %v828 = vmul.f32 %v807, %v827
    %v829 = vmul.f32 %v808, %v827
    %v830 = vmul.f32 %v809, %v827
    %v831 = vmul.f32 %v810, %v827
    %v832 = vmul.f32 %v811, %v827
    %v833 = vmul.f32 %v812, %v827
    %v834 = vmul.f32 %v813, %v827
    %v835 = vmul.f32 %v814, %v827
    %v836 = vmul.f32 %v815, %v827
    %v837 = vmul.f32 %v816, %v827
    %v838 = vmul.f32 %v817, %v827
    %v839 = vmul.f32 %v818, %v827
    %v840 = vmul.f32 %v819, %v827
    %v841 = vmul.f32 %v820, %v827
    %v842 = vmul.f32 %v821, %v827
    %v843 = vmul.f32 %v822, %v827
    %v844 = vadd.f32 %v791, %v828
    %v845 = vadd.f32 %v792, %v829
    %v846 = vadd.f32 %v793, %v830
    %v847 = vadd.f32 %v794, %v831
    %v848 = vadd.f32 %v795, %v832
    %v849 = vadd.f32 %v796, %v833
    %v850 = vadd.f32 %v797, %v834
    %v851 = vadd.f32 %v798, %v835
    %v852 = vadd.f32 %v799, %v836
    %v853 = vadd.f32 %v800, %v837
    %v854 = vadd.f32 %v801, %v838
    %v855 = vadd.f32 %v802, %v839
    %v856 = vadd.f32 %v803, %v840
    %v857 = vadd.f32 %v804, %v841
    %v858 = vadd.f32 %v805, %v842
    %v859 = vadd.f32 %v806, %v843
    %v860 = vld [vmem:[#allocation2 + $0x2] sm:$0xff]
    %v861 = vld [vmem:[#allocation2 + $0x12] sm:$0xff]
    %v862 = vld [vmem:[#allocation2 + $0x22] sm:$0xff]
    %v863 = vld [vmem:[#allocation2 + $0x32] sm:$0xff]
    %v864 = vld [vmem:[#allocation2 + $0x42] sm:$0xff]
    %v865 = vld [vmem:[#allocation2 + $0x52] sm:$0xff]
    %v866 = vld [vmem:[#allocation2 + $0x62] sm:$0xff]
    %v867 = vld [vmem:[#allocation2 + $0x72] sm:$0xff]
    %v868 = vld [vmem:[#allocation2 + $0xa2] sm:$0xff]
    %v869 = vld [vmem:[#allocation2 + $0xb2] sm:$0xff]
    %v870 = vld [vmem:[#allocation2 + $0xc2] sm:$0xff]
    %v871 = vld [vmem:[#allocation2 + $0xd2] sm:$0xff]
    %v872 = vld [vmem:[#allocation2 + $0xe2] sm:$0xff]
    %v873 = vld [vmem:[#allocation2 + $0xf2] sm:$0xff]
    %v874 = vld [vmem:[#allocation2 + $0x102] sm:$0xff]
    %v875 = vld [vmem:[#allocation2 + $0x112] sm:$0xff]
    %v876 = vld [vmem:[%s9 + $0x2] sm:$0x1]
    %v877 = vlaneseq
    %v878 = vshrl.u32 %v877, 7
    %v879 = vsub.s32 0, %v878
    %v880 = vrot.slane %v876, %v879
    %v881 = vmul.f32 %v860, %v880
    %v882 = vmul.f32 %v861, %v880
    %v883 = vmul.f32 %v862, %v880
    %v884 = vmul.f32 %v863, %v880
    %v885 = vmul.f32 %v864, %v880
    %v886 = vmul.f32 %v865, %v880
    %v887 = vmul.f32 %v866, %v880
    %v888 = vmul.f32 %v867, %v880
    %v889 = vmul.f32 %v868, %v880
    %v890 = vmul.f32 %v869, %v880
    %v891 = vmul.f32 %v870, %v880
    %v892 = vmul.f32 %v871, %v880
    %v893 = vmul.f32 %v872, %v880
    %v894 = vmul.f32 %v873, %v880
    %v895 = vmul.f32 %v874, %v880
    %v896 = vmul.f32 %v875, %v880
    %v897 = vadd.f32 %v844, %v881
    %v898 = vadd.f32 %v845, %v882
    %v899 = vadd.f32 %v846, %v883
    %v900 = vadd.f32 %v847, %v884
    %v901 = vadd.f32 %v848, %v885
    %v902 = vadd.f32 %v849, %v886
    %v903 = vadd.f32 %v850, %v887
    %v904 = vadd.f32 %v851, %v888
    %v905 = vadd.f32 %v852, %v889
    %v906 = vadd.f32 %v853, %v890
    %v907 = vadd.f32 %v854, %v891
    %v908 = vadd.f32 %v855, %v892
    %v909 = vadd.f32 %v856, %v893
    %v910 = vadd.f32 %v857, %v894
    %v911 = vadd.f32 %v858, %v895
    %v912 = vadd.f32 %v859, %v896
    %v913 = vld [vmem:[%s722] sm:$0xff]
    %v914 = vld [vmem:[%s722 + $0x10] sm:$0xff]
    %v915 = vld [vmem:[%s722 + $0x20] sm:$0xff]
    %v916 = vld [vmem:[%s722 + $0x30] sm:$0xff]
    %v917 = vld [vmem:[%s722 + $0x40] sm:$0xff]
    %v918 = vld [vmem:[%s722 + $0x50] sm:$0xff]
    %v919 = vld [vmem:[%s722 + $0x60] sm:$0xff]
    %v920 = vld [vmem:[%s722 + $0x70] sm:$0xff]
    %v921 = vld [vmem:[%s722 + $0xa0] sm:$0xff]
    %v922 = vld [vmem:[%s722 + $0xb0] sm:$0xff]
    %v923 = vld [vmem:[%s722 + $0xc0] sm:$0xff]
    %v924 = vld [vmem:[%s722 + $0xd0] sm:$0xff]
    %v925 = vld [vmem:[%s722 + $0xe0] sm:$0xff]
    %v926 = vld [vmem:[%s722 + $0xf0] sm:$0xff]
    %v927 = vld [vmem:[%s722 + $0x100] sm:$0xff]
    %v928 = vld [vmem:[%s722 + $0x110] sm:$0xff]
    %v929 = vld [vmem:[%s9 + $0x3] sm:$0x1]
    %v930 = vlaneseq
    %v931 = vshrl.u32 %v930, 7
    %v932 = vsub.s32 0, %v931
    %v933 = vrot.slane %v929, %v932
    %v934 = vmul.f32 %v913, %v933
    %v935 = vmul.f32 %v914, %v933
    %v936 = vmul.f32 %v915, %v933
    %v937 = vmul.f32 %v916, %v933
    %v938 = vmul.f32 %v917, %v933
    %v939 = vmul.f32 %v918, %v933
    %v940 = vmul.f32 %v919, %v933
    %v941 = vmul.f32 %v920, %v933
    %v942 = vmul.f32 %v921, %v933
    %v943 = vmul.f32 %v922, %v933
    %v944 = vmul.f32 %v923, %v933
    %v945 = vmul.f32 %v924, %v933
    %v946 = vmul.f32 %v925, %v933
    %v947 = vmul.f32 %v926, %v933
    %v948 = vmul.f32 %v927, %v933
    %v949 = vmul.f32 %v928, %v933
    %v950 = vadd.f32 %v897, %v934
    %v951 = vadd.f32 %v898, %v935
    %v952 = vadd.f32 %v899, %v936
    %v953 = vadd.f32 %v900, %v937
    %v954 = vadd.f32 %v901, %v938
    %v955 = vadd.f32 %v902, %v939
    %v956 = vadd.f32 %v903, %v940
    %v957 = vadd.f32 %v904, %v941
    %v958 = vadd.f32 %v905, %v942
    %v959 = vadd.f32 %v906, %v943
    %v960 = vadd.f32 %v907, %v944
    %v961 = vadd.f32 %v908, %v945
    %v962 = vadd.f32 %v909, %v946
    %v963 = vadd.f32 %v910, %v947
    %v964 = vadd.f32 %v911, %v948
    %v965 = vadd.f32 %v912, %v949
    %v966 = vld [vmem:[%s722 + $0x1] sm:$0xff]
    %v967 = vld [vmem:[%s722 + $0x11] sm:$0xff]
    %v968 = vld [vmem:[%s722 + $0x21] sm:$0xff]
    %v969 = vld [vmem:[%s722 + $0x31] sm:$0xff]
    %v970 = vld [vmem:[%s722 + $0x41] sm:$0xff]
    %v971 = vld [vmem:[%s722 + $0x51] sm:$0xff]
    %v972 = vld [vmem:[%s722 + $0x61] sm:$0xff]
    %v973 = vld [vmem:[%s722 + $0x71] sm:$0xff]
    %v974 = vld [vmem:[%s722 + $0xa1] sm:$0xff]
    %v975 = vld [vmem:[%s722 + $0xb1] sm:$0xff]
    %v976 = vld [vmem:[%s722 + $0xc1] sm:$0xff]
    %v977 = vld [vmem:[%s722 + $0xd1] sm:$0xff]
    %v978 = vld [vmem:[%s722 + $0xe1] sm:$0xff]
    %v979 = vld [vmem:[%s722 + $0xf1] sm:$0xff]
    %v980 = vld [vmem:[%s722 + $0x101] sm:$0xff]
    %v981 = vld [vmem:[%s722 + $0x111] sm:$0xff]
    %v982 = vld [vmem:[%s9 + $0x4] sm:$0x1]
    %v983 = vlaneseq
    %v984 = vshrl.u32 %v983, 7
    %v985 = vsub.s32 0, %v984
    %v986 = vrot.slane %v982, %v985
    %v987 = vmul.f32 %v966, %v986
    %v988 = vmul.f32 %v967, %v986
    %v989 = vmul.f32 %v968, %v986
    %v990 = vmul.f32 %v969, %v986
    %v991 = vmul.f32 %v970, %v986
    %v992 = vmul.f32 %v971, %v986
    %v993 = vmul.f32 %v972, %v986
    %v994 = vmul.f32 %v973, %v986
    %v995 = vmul.f32 %v974, %v986
    %v996 = vmul.f32 %v975, %v986
    %v997 = vmul.f32 %v976, %v986
    %v998 = vmul.f32 %v977, %v986
    %v999 = vmul.f32 %v978, %v986
    %v1000 = vmul.f32 %v979, %v986
    %v1001 = vmul.f32 %v980, %v986
    %v1002 = vmul.f32 %v981, %v986
    %v1003 = vadd.f32 %v950, %v987
    %v1004 = vadd.f32 %v951, %v988
    %v1005 = vadd.f32 %v952, %v989
    %v1006 = vadd.f32 %v953, %v990
    %v1007 = vadd.f32 %v954, %v991
    %v1008 = vadd.f32 %v955, %v992
    %v1009 = vadd.f32 %v956, %v993
    %v1010 = vadd.f32 %v957, %v994
    %v1011 = vadd.f32 %v958, %v995
    %v1012 = vadd.f32 %v959, %v996
    %v1013 = vadd.f32 %v960, %v997
    %v1014 = vadd.f32 %v961, %v998
    %v1015 = vadd.f32 %v962, %v999
    %v1016 = vadd.f32 %v963, %v1000
    %v1017 = vadd.f32 %v964, %v1001
    %v1018 = vadd.f32 %v965, %v1002
    %v1019 = vld [vmem:[%s722 + $0x2] sm:$0xff]
    %v1020 = vld [vmem:[%s722 + $0x12] sm:$0xff]
    %v1021 = vld [vmem:[%s722 + $0x22] sm:$0xff]
    %v1022 = vld [vmem:[%s722 + $0x32] sm:$0xff]
    %v1023 = vld [vmem:[%s722 + $0x42] sm:$0xff]
    %v1024 = vld [vmem:[%s722 + $0x52] sm:$0xff]
    %v1025 = vld [vmem:[%s722 + $0x62] sm:$0xff]
    %v1026 = vld [vmem:[%s722 + $0x72] sm:$0xff]
    %v1027 = vld [vmem:[%s722 + $0xa2] sm:$0xff]
    %v1028 = vld [vmem:[%s722 + $0xb2] sm:$0xff]
    %v1029 = vld [vmem:[%s722 + $0xc2] sm:$0xff]
    %v1030 = vld [vmem:[%s722 + $0xd2] sm:$0xff]
    %v1031 = vld [vmem:[%s722 + $0xe2] sm:$0xff]
    %v1032 = vld [vmem:[%s722 + $0xf2] sm:$0xff]
    %v1033 = vld [vmem:[%s722 + $0x102] sm:$0xff]
    %v1034 = vld [vmem:[%s722 + $0x112] sm:$0xff]
    %v1035 = vld [vmem:[%s9 + $0x5] sm:$0x1]
    %v1036 = vlaneseq
    %v1037 = vshrl.u32 %v1036, 7
    %v1038 = vsub.s32 0, %v1037
    %v1039 = vrot.slane %v1035, %v1038
    %v1040 = vmul.f32 %v1019, %v1039
    %v1041 = vmul.f32 %v1020, %v1039
    %v1042 = vmul.f32 %v1021, %v1039
    %v1043 = vmul.f32 %v1022, %v1039
    %v1044 = vmul.f32 %v1023, %v1039
    %v1045 = vmul.f32 %v1024, %v1039
    %v1046 = vmul.f32 %v1025, %v1039
    %v1047 = vmul.f32 %v1026, %v1039
    %v1048 = vmul.f32 %v1027, %v1039
    %v1049 = vmul.f32 %v1028, %v1039
    %v1050 = vmul.f32 %v1029, %v1039
    %v1051 = vmul.f32 %v1030, %v1039
    %v1052 = vmul.f32 %v1031, %v1039
    %v1053 = vmul.f32 %v1032, %v1039
    %v1054 = vmul.f32 %v1033, %v1039
    %v1055 = vmul.f32 %v1034, %v1039
    %v1056 = vadd.f32 %v1003, %v1040
    %v1057 = vadd.f32 %v1004, %v1041
    %v1058 = vadd.f32 %v1005, %v1042
    %v1059 = vadd.f32 %v1006, %v1043
    %v1060 = vadd.f32 %v1007, %v1044
    %v1061 = vadd.f32 %v1008, %v1045
    %v1062 = vadd.f32 %v1009, %v1046
    %v1063 = vadd.f32 %v1010, %v1047
    %v1064 = vadd.f32 %v1011, %v1048
    %v1065 = vadd.f32 %v1012, %v1049
    %v1066 = vadd.f32 %v1013, %v1050
    %v1067 = vadd.f32 %v1014, %v1051
    %v1068 = vadd.f32 %v1015, %v1052
    %v1069 = vadd.f32 %v1016, %v1053
    %v1070 = vadd.f32 %v1017, %v1054
    %v1071 = vadd.f32 %v1018, %v1055
    %v1072 = vld [vmem:[%s724] sm:$0xff]
    %v1073 = vld [vmem:[%s724 + $0x10] sm:$0xff]
    %v1074 = vld [vmem:[%s724 + $0x20] sm:$0xff]
    %v1075 = vld [vmem:[%s724 + $0x30] sm:$0xff]
    %v1076 = vld [vmem:[%s724 + $0x40] sm:$0xff]
    %v1077 = vld [vmem:[%s724 + $0x50] sm:$0xff]
    %v1078 = vld [vmem:[%s724 + $0x60] sm:$0xff]
    %v1079 = vld [vmem:[%s724 + $0x70] sm:$0xff]
    %v1080 = vld [vmem:[%s724 + $0xa0] sm:$0xff]
    %v1081 = vld [vmem:[%s724 + $0xb0] sm:$0xff]
    %v1082 = vld [vmem:[%s724 + $0xc0] sm:$0xff]
    %v1083 = vld [vmem:[%s724 + $0xd0] sm:$0xff]
    %v1084 = vld [vmem:[%s724 + $0xe0] sm:$0xff]
    %v1085 = vld [vmem:[%s724 + $0xf0] sm:$0xff]
    %v1086 = vld [vmem:[%s724 + $0x100] sm:$0xff]
    %v1087 = vld [vmem:[%s724 + $0x110] sm:$0xff]
    %v1088 = vld [vmem:[%s9 + $0x6] sm:$0x1]
    %v1089 = vlaneseq
    %v1090 = vshrl.u32 %v1089, 7
    %v1091 = vsub.s32 0, %v1090
    %v1092 = vrot.slane %v1088, %v1091
    %v1093 = vmul.f32 %v1072, %v1092
    %v1094 = vmul.f32 %v1073, %v1092
    %v1095 = vmul.f32 %v1074, %v1092
    %v1096 = vmul.f32 %v1075, %v1092
    %v1097 = vmul.f32 %v1076, %v1092
    %v1098 = vmul.f32 %v1077, %v1092
    %v1099 = vmul.f32 %v1078, %v1092
    %v1100 = vmul.f32 %v1079, %v1092
    %v1101 = vmul.f32 %v1080, %v1092
    %v1102 = vmul.f32 %v1081, %v1092
    %v1103 = vmul.f32 %v1082, %v1092
    %v1104 = vmul.f32 %v1083, %v1092
    %v1105 = vmul.f32 %v1084, %v1092
    %v1106 = vmul.f32 %v1085, %v1092
    %v1107 = vmul.f32 %v1086, %v1092
    %v1108 = vmul.f32 %v1087, %v1092
    %v1109 = vadd.f32 %v1056, %v1093
    %v1110 = vadd.f32 %v1057, %v1094
    %v1111 = vadd.f32 %v1058, %v1095
    %v1112 = vadd.f32 %v1059, %v1096
    %v1113 = vadd.f32 %v1060, %v1097
    %v1114 = vadd.f32 %v1061, %v1098
    %v1115 = vadd.f32 %v1062, %v1099
    %v1116 = vadd.f32 %v1063, %v1100
    %v1117 = vadd.f32 %v1064, %v1101
    %v1118 = vadd.f32 %v1065, %v1102
    %v1119 = vadd.f32 %v1066, %v1103
    %v1120 = vadd.f32 %v1067, %v1104
    %v1121 = vadd.f32 %v1068, %v1105
    %v1122 = vadd.f32 %v1069, %v1106
    %v1123 = vadd.f32 %v1070, %v1107
    %v1124 = vadd.f32 %v1071, %v1108
    %v1125 = vld [vmem:[%s724 + $0x1] sm:$0xff]
    %v1126 = vld [vmem:[%s724 + $0x11] sm:$0xff]
    %v1127 = vld [vmem:[%s724 + $0x21] sm:$0xff]
    %v1128 = vld [vmem:[%s724 + $0x31] sm:$0xff]
    %v1129 = vld [vmem:[%s724 + $0x41] sm:$0xff]
    %v1130 = vld [vmem:[%s724 + $0x51] sm:$0xff]
    %v1131 = vld [vmem:[%s724 + $0x61] sm:$0xff]
    %v1132 = vld [vmem:[%s724 + $0x71] sm:$0xff]
    %v1133 = vld [vmem:[%s724 + $0xa1] sm:$0xff]
    %v1134 = vld [vmem:[%s724 + $0xb1] sm:$0xff]
    %v1135 = vld [vmem:[%s724 + $0xc1] sm:$0xff]
    %v1136 = vld [vmem:[%s724 + $0xd1] sm:$0xff]
    %v1137 = vld [vmem:[%s724 + $0xe1] sm:$0xff]
    %v1138 = vld [vmem:[%s724 + $0xf1] sm:$0xff]
    %v1139 = vld [vmem:[%s724 + $0x101] sm:$0xff]
    %v1140 = vld [vmem:[%s724 + $0x111] sm:$0xff]
    %v1141 = vld [vmem:[%s9 + $0x7] sm:$0x1]
    %v1142 = vlaneseq
    %v1143 = vshrl.u32 %v1142, 7
    %v1144 = vsub.s32 0, %v1143
    %v1145 = vrot.slane %v1141, %v1144
    %v1146 = vmul.f32 %v1125, %v1145
    %v1147 = vmul.f32 %v1126, %v1145
    %v1148 = vmul.f32 %v1127, %v1145
    %v1149 = vmul.f32 %v1128, %v1145
    %v1150 = vmul.f32 %v1129, %v1145
    %v1151 = vmul.f32 %v1130, %v1145
    %v1152 = vmul.f32 %v1131, %v1145
    %v1153 = vmul.f32 %v1132, %v1145
    %v1154 = vmul.f32 %v1133, %v1145
    %v1155 = vmul.f32 %v1134, %v1145
    %v1156 = vmul.f32 %v1135, %v1145
    %v1157 = vmul.f32 %v1136, %v1145
    %v1158 = vmul.f32 %v1137, %v1145
    %v1159 = vmul.f32 %v1138, %v1145
    %v1160 = vmul.f32 %v1139, %v1145
    %v1161 = vmul.f32 %v1140, %v1145
    %v1162 = vadd.f32 %v1109, %v1146
    %v1163 = vadd.f32 %v1110, %v1147
    %v1164 = vadd.f32 %v1111, %v1148
    %v1165 = vadd.f32 %v1112, %v1149
    %v1166 = vadd.f32 %v1113, %v1150
    %v1167 = vadd.f32 %v1114, %v1151
    %v1168 = vadd.f32 %v1115, %v1152
    %v1169 = vadd.f32 %v1116, %v1153
    %v1170 = vadd.f32 %v1117, %v1154
    %v1171 = vadd.f32 %v1118, %v1155
    %v1172 = vadd.f32 %v1119, %v1156
    %v1173 = vadd.f32 %v1120, %v1157
    %v1174 = vadd.f32 %v1121, %v1158
    %v1175 = vadd.f32 %v1122, %v1159
    %v1176 = vadd.f32 %v1123, %v1160
    %v1177 = vadd.f32 %v1124, %v1161
    %v1178 = vld [vmem:[%s724 + $0x2] sm:$0xff]
    %v1179 = vld [vmem:[%s724 + $0x12] sm:$0xff]
    %v1180 = vld [vmem:[%s724 + $0x22] sm:$0xff]
    %v1181 = vld [vmem:[%s724 + $0x32] sm:$0xff]
    %v1182 = vld [vmem:[%s724 + $0x42] sm:$0xff]
    %v1183 = vld [vmem:[%s724 + $0x52] sm:$0xff]
    %v1184 = vld [vmem:[%s724 + $0x62] sm:$0xff]
    %v1185 = vld [vmem:[%s724 + $0x72] sm:$0xff]
    %v1186 = vld [vmem:[%s724 + $0xa2] sm:$0xff]
    %v1187 = vld [vmem:[%s724 + $0xb2] sm:$0xff]
    %v1188 = vld [vmem:[%s724 + $0xc2] sm:$0xff]
    %v1189 = vld [vmem:[%s724 + $0xd2] sm:$0xff]
    %v1190 = vld [vmem:[%s724 + $0xe2] sm:$0xff]
    %v1191 = vld [vmem:[%s724 + $0xf2] sm:$0xff]
    %v1192 = vld [vmem:[%s724 + $0x102] sm:$0xff]
    %v1193 = vld [vmem:[%s724 + $0x112] sm:$0xff]
    %v1194 = vld [vmem:[%s9 + $0x8] sm:$0x1]
    %v1195 = vlaneseq
    %v1196 = vshrl.u32 %v1195, 7
    %v1197 = vsub.s32 0, %v1196
    %v1198 = vrot.slane %v1194, %v1197
    %v1199 = vmul.f32 %v1178, %v1198
    %v1200 = vmul.f32 %v1179, %v1198
    %v1201 = vmul.f32 %v1180, %v1198
    %v1202 = vmul.f32 %v1181, %v1198
    %v1203 = vmul.f32 %v1182, %v1198
    %v1204 = vmul.f32 %v1183, %v1198
    %v1205 = vmul.f32 %v1184, %v1198
    %v1206 = vmul.f32 %v1185, %v1198
    %v1207 = vmul.f32 %v1186, %v1198
    %v1208 = vmul.f32 %v1187, %v1198
    %v1209 = vmul.f32 %v1188, %v1198
    %v1210 = vmul.f32 %v1189, %v1198
    %v1211 = vmul.f32 %v1190, %v1198
    %v1212 = vmul.f32 %v1191, %v1198
    %v1213 = vmul.f32 %v1192, %v1198
    %v1214 = vmul.f32 %v1193, %v1198
    %v1215 = vadd.f32 %v1162, %v1199
    %v1216 = vadd.f32 %v1163, %v1200
    %v1217 = vadd.f32 %v1164, %v1201
    %v1218 = vadd.f32 %v1165, %v1202
    %v1219 = vadd.f32 %v1166, %v1203
    %v1220 = vadd.f32 %v1167, %v1204
    %v1221 = vadd.f32 %v1168, %v1205
    %v1222 = vadd.f32 %v1169, %v1206
    %v1223 = vadd.f32 %v1170, %v1207
    %v1224 = vadd.f32 %v1171, %v1208
    %v1225 = vadd.f32 %v1172, %v1209
    %v1226 = vadd.f32 %v1173, %v1210
    %v1227 = vadd.f32 %v1174, %v1211
    %v1228 = vadd.f32 %v1175, %v1212
    %v1229 = vadd.f32 %v1176, %v1213
    %v1230 = vadd.f32 %v1177, %v1214
    %v1231 = vld [vmem:[#allocation19] sm:$0x1]
    %v1233 = vlaneseq
    %v1234 = vshrl.u32 %v1233, 7
    %v1235 = vsub.s32 0, %v1234
    %v1236 = vrot.slane %v1231, %v1235
    %v1238 = vmul.f32 %v1215, %v1236
    %v1239 = vmul.f32 %v1216, %v1236
    %v1240 = vmul.f32 %v1217, %v1236
    %v1241 = vmul.f32 %v1218, %v1236
    %v1242 = vmul.f32 %v1219, %v1236
    %v1243 = vmul.f32 %v1220, %v1236
    %v1244 = vmul.f32 %v1221, %v1236
    %v1245 = vmul.f32 %v1222, %v1236
    %v1246 = vmul.f32 %v1223, %v1236
    %v1247 = vmul.f32 %v1224, %v1236
    %v1248 = vmul.f32 %v1225, %v1236
    %v1249 = vmul.f32 %v1226, %v1236
    %v1250 = vmul.f32 %v1227, %v1236
    %v1251 = vmul.f32 %v1228, %v1236
    %v1252 = vmul.f32 %v1229, %v1236
    %v1253 = vmul.f32 %v1230, %v1236
    %v1254 = vld [vmem:[#allocation20] sm:$0x1]
    %v1256 = vlaneseq
    %v1257 = vshrl.u32 %v1256, 7
    %v1258 = vsub.s32 0, %v1257
    %v1259 = vrot.slane %v1254, %v1258
    %v1261 = vadd.f32 %v1238, %v1259
    %v1262 = vadd.f32 %v1239, %v1259
    %v1263 = vadd.f32 %v1240, %v1259
    %v1264 = vadd.f32 %v1241, %v1259
    %v1265 = vadd.f32 %v1242, %v1259
    %v1266 = vadd.f32 %v1243, %v1259
    %v1267 = vadd.f32 %v1244, %v1259
    %v1268 = vadd.f32 %v1245, %v1259
    %v1269 = vadd.f32 %v1246, %v1259
    %v1270 = vadd.f32 %v1247, %v1259
    %v1271 = vadd.f32 %v1248, %v1259
    %v1272 = vadd.f32 %v1249, %v1259
    %v1273 = vadd.f32 %v1250, %v1259
    %v1274 = vadd.f32 %v1251, %v1259
    %v1275 = vadd.f32 %v1252, %v1259
    %v1276 = vadd.f32 %v1253, %v1259
    %v1277 = vmax.f32 %v1261, 0.0
    %v1278 = vmax.f32 %v1262, 0.0
    %v1279 = vmax.f32 %v1263, 0.0
    %v1280 = vmax.f32 %v1264, 0.0
    %v1281 = vmax.f32 %v1265, 0.0
    %v1282 = vmax.f32 %v1266, 0.0
    %v1283 = vmax.f32 %v1267, 0.0
    %v1284 = vmax.f32 %v1268, 0.0
    %v1285 = vmax.f32 %v1269, 0.0
    %v1286 = vmax.f32 %v1270, 0.0
    %v1287 = vmax.f32 %v1271, 0.0
    %v1288 = vmax.f32 %v1272, 0.0
    %v1289 = vmax.f32 %v1273, 0.0
    %v1290 = vmax.f32 %v1274, 0.0
    %v1291 = vmax.f32 %v1275, 0.0
    %v1292 = vmax.f32 %v1276, 0.0
    %v1293 = vmin.f32 %v1277, 6.0
    %v1294 = vmin.f32 %v1278, 6.0
    %v1295 = vmin.f32 %v1279, 6.0
    %v1296 = vmin.f32 %v1280, 6.0
    %v1297 = vmin.f32 %v1281, 6.0
    %v1298 = vmin.f32 %v1282, 6.0
    %v1299 = vmin.f32 %v1283, 6.0
    %v1300 = vmin.f32 %v1284, 6.0
    %v1301 = vmin.f32 %v1285, 6.0
    %v1302 = vmin.f32 %v1286, 6.0
    %v1303 = vmin.f32 %v1287, 6.0
    %v1304 = vmin.f32 %v1288, 6.0
    %v1305 = vmin.f32 %v1289, 6.0
    %v1306 = vmin.f32 %v1290, 6.0
    %v1307 = vmin.f32 %v1291, 6.0
    %v1308 = vmin.f32 %v1292, 6.0
    %1309 = vst.msk [vmem:[#allocation3] sm:$0xff] %vm481, %v1293
    %1310 = vst.msk [vmem:[#allocation3 + $0x8] sm:$0xff] %vm481, %v1294
    %1311 = vst.msk [vmem:[#allocation3 + $0x10] sm:$0xff] %vm481, %v1295
    %1312 = vst.msk [vmem:[#allocation3 + $0x18] sm:$0xff] %vm481, %v1296
    %1313 = vst.msk [vmem:[#allocation3 + $0x20] sm:$0xff] %vm481, %v1297
    %1314 = vst.msk [vmem:[#allocation3 + $0x28] sm:$0xff] %vm481, %v1298
    %1315 = vst.msk [vmem:[#allocation3 + $0x30] sm:$0xff] %vm481, %v1299
    %1316 = vst.msk [vmem:[#allocation3 + $0x38] sm:$0xff] %vm481, %v1300
    %1317 = vst.msk [vmem:[#allocation3 + $0x40] sm:$0xff] %vm481, %v1301
    %1318 = vst.msk [vmem:[#allocation3 + $0x48] sm:$0xff] %vm481, %v1302
    %1319 = vst.msk [vmem:[#allocation3 + $0x50] sm:$0xff] %vm481, %v1303
    %1320 = vst.msk [vmem:[#allocation3 + $0x58] sm:$0xff] %vm481, %v1304
    %1321 = vst.msk [vmem:[#allocation3 + $0x60] sm:$0xff] %vm481, %v1305
    %1322 = vst.msk [vmem:[#allocation3 + $0x68] sm:$0xff] %vm481, %v1306
    %1323 = vst.msk [vmem:[#allocation3 + $0x70] sm:$0xff] %vm481, %v1307
    %1324 = vst.msk [vmem:[#allocation3 + $0x78] sm:$0xff] %vm481, %v1308
    %v1325 = vld [vmem:[#allocation3] sm:$0xff]
    %v1326 = vld [vmem:[#allocation3 + $0x8] sm:$0xff]
    %v1327 = vld [vmem:[#allocation3 + $0x10] sm:$0xff]
    %v1328 = vld [vmem:[#allocation3 + $0x18] sm:$0xff]
    %v1329 = vld [vmem:[#allocation3 + $0x20] sm:$0xff]
    %v1330 = vld [vmem:[#allocation3 + $0x28] sm:$0xff]
    %v1331 = vld [vmem:[#allocation3 + $0x30] sm:$0xff]
    %v1332 = vld [vmem:[#allocation3 + $0x38] sm:$0xff]
    %v1333 = vld [vmem:[#allocation3 + $0x40] sm:$0xff]
    %v1334 = vld [vmem:[#allocation3 + $0x48] sm:$0xff]
    %v1335 = vld [vmem:[#allocation3 + $0x50] sm:$0xff]
    %v1336 = vld [vmem:[#allocation3 + $0x58] sm:$0xff]
    %v1337 = vld [vmem:[#allocation3 + $0x60] sm:$0xff]
    %v1338 = vld [vmem:[#allocation3 + $0x68] sm:$0xff]
    %v1339 = vld [vmem:[#allocation3 + $0x70] sm:$0xff]
    %v1340 = vld [vmem:[#allocation3 + $0x78] sm:$0xff]
    %v1341 = vpack.c.bf16 %v1326, %v1325
    %v1342 = vpack.c.bf16 %v1328, %v1327
    %v1343 = vpack.c.bf16 %v1330, %v1329
    %v1344 = vpack.c.bf16 %v1332, %v1331
    %v1345 = vpack.c.bf16 %v1334, %v1333
    %v1346 = vpack.c.bf16 %v1336, %v1335
    %v1347 = vpack.c.bf16 %v1338, %v1337
    %v1348 = vpack.c.bf16 %v1340, %v1339
    %v1349 = vld [vmem:[%s15] sm:$0xf]
    %v1350 = vld [vmem:[%s15 + $0x4] sm:$0xf]
    %v1351 = vld [vmem:[%s15 + $0x8] sm:$0xf]
    %v1352 = vld [vmem:[%s15 + $0xc] sm:$0xf]
    %v1357 = vunpack.c.l.b16 %v1349
    %v1358 = vunpack.c.l.b16 %v1350
    %v1359 = vunpack.c.l.b16 %v1351
    %v1360 = vunpack.c.l.b16 %v1352
    %v1361 = vpack.c.b16 %v1358, %v1357
    %v1362 = vpack.c.b16 %v1360, %v1359
    %v1366 = vsel %vm481, %v1341, 0
    %v1369 = vsel %vm481, %v1342, 0
    %v1372 = vsel %vm481, %v1343, 0
    %v1375 = vsel %vm481, %v1344, 0
    %v1378 = vsel %vm481, %v1345, 0
    %v1381 = vsel %vm481, %v1346, 0
    %v1384 = vsel %vm481, %v1347, 0
    %v1387 = vsel %vm481, %v1348, 0
    %1389 = vmatprep.subr.bf16.mxu0 0
    %1390 = vmatpush1.bf16.msra.mxu0 0
    %1391 = vmatprep.subr.bf16.mxu0 0
    %1392 = vmatpush1.bf16.msra.mxu0 0
    %1393 = vmatprep.subr.bf16.mxu0 0
    %1394 = vmatpush1.bf16.msra.mxu0 0
    %1395 = vmatprep.subr.bf16.mxu0 0
    %1396 = vmatpush1.bf16.msra.mxu0 0
    %1397 = vmatprep.subr.bf16.mxu0 0
    %1398 = vmatpush1.bf16.msra.mxu0 0
    %1399 = vmatprep.subr.bf16.mxu0 0
    %1400 = vmatpush1.bf16.msra.mxu0 0
    %1401 = vmatprep.subr.bf16.mxu0 0
    %1402 = vmatpush1.bf16.msra.mxu0 %v1362
    %1403 = vmatprep.subr.bf16.mxu0 0
    %1404 = vmatpush1.bf16.msra.mxu0 %v1361
    %1405 = vmatprep.subr.bf16.mxu0 0
    %1406 = vmatpush2.bf16.msra.mxu0 0
    %1407 = vmatprep.subr.bf16.mxu0 0
    %1408 = vmatpush2.bf16.msra.mxu0 0
    %1409 = vmatprep.subr.bf16.mxu0 0
    %1410 = vmatpush2.bf16.msra.mxu0 0
    %1411 = vmatprep.subr.bf16.mxu0 0
    %1412 = vmatpush2.bf16.msra.mxu0 0
    %1413 = vmatprep.subr.bf16.mxu0 0
    %1414 = vmatpush2.bf16.msra.mxu0 0
    %1415 = vmatprep.subr.bf16.mxu0 0
    %1416 = vmatpush2.bf16.msra.mxu0 0
    %1417 = vmatprep.subr.bf16.mxu0 0
    %1418 = vmatpush2.bf16.msra.mxu0 0
    %1419 = vmatprep.subr.bf16.mxu0 0
    %1420 = vmatpush2.bf16.msra.mxu0 0
    %1421 = vmatprep.mubr.bf16.mxu0 0
    %1422 = vmatmul.mubr.bf16.gmra.mxu0 %v1366
    %v1423 = vpop.f32.mrf.mxu0
    %v1424 = vadd.f32 0.0, %v1423
    %v1425 = vpop.f32.mrf.mxu0
    %v1426 = vpop.f32.mrf.mxu0
    %v1427 = vadd.f32 0.0, %v1426
    %v1428 = vpop.f32.mrf.mxu0
    %1429 = vmatprep.mubr.bf16.mxu0 0
    %1430 = vmatmul.mubr.bf16.gmra.mxu0 %v1369
    %v1431 = vpop.f32.mrf.mxu0
    %v1432 = vadd.f32 0.0, %v1431
    %v1433 = vpop.f32.mrf.mxu0
    %v1434 = vpop.f32.mrf.mxu0
    %v1435 = vadd.f32 0.0, %v1434
    %v1436 = vpop.f32.mrf.mxu0
    %1437 = vmatprep.mubr.bf16.mxu0 0
    %1438 = vmatmul.mubr.bf16.gmra.mxu0 %v1372
    %v1439 = vpop.f32.mrf.mxu0
    %v1440 = vadd.f32 0.0, %v1439
    %v1441 = vpop.f32.mrf.mxu0
    %v1442 = vpop.f32.mrf.mxu0
    %v1443 = vadd.f32 0.0, %v1442
    %v1444 = vpop.f32.mrf.mxu0
    %1445 = vmatprep.mubr.bf16.mxu0 0
    %1446 = vmatmul.mubr.bf16.gmra.mxu0 %v1375
    %v1447 = vpop.f32.mrf.mxu0
    %v1448 = vadd.f32 0.0, %v1447
    %v1449 = vpop.f32.mrf.mxu0
    %v1450 = vpop.f32.mrf.mxu0
    %v1451 = vadd.f32 0.0, %v1450
    %v1452 = vpop.f32.mrf.mxu0
    %1453 = vmatprep.mubr.bf16.mxu0 0
    %1454 = vmatmul.mubr.bf16.gmra.mxu0 %v1378
    %v1455 = vpop.f32.mrf.mxu0
    %v1456 = vadd.f32 0.0, %v1455
    %v1457 = vpop.f32.mrf.mxu0
    %v1458 = vpop.f32.mrf.mxu0
    %v1459 = vadd.f32 0.0, %v1458
    %v1460 = vpop.f32.mrf.mxu0
    %1461 = vmatprep.mubr.bf16.mxu0 0
    %1462 = vmatmul.mubr.bf16.gmra.mxu0 %v1381
    %v1463 = vpop.f32.mrf.mxu0
    %v1464 = vadd.f32 0.0, %v1463
    %v1465 = vpop.f32.mrf.mxu0
    %v1466 = vpop.f32.mrf.mxu0
    %v1467 = vadd.f32 0.0, %v1466
    %v1468 = vpop.f32.mrf.mxu0
    %1469 = vmatprep.mubr.bf16.mxu0 0
    %1470 = vmatmul.mubr.bf16.gmra.mxu0 %v1384
    %v1471 = vpop.f32.mrf.mxu0
    %v1472 = vadd.f32 0.0, %v1471
    %v1473 = vpop.f32.mrf.mxu0
    %v1474 = vpop.f32.mrf.mxu0
    %v1475 = vadd.f32 0.0, %v1474
    %v1476 = vpop.f32.mrf.mxu0
    %1477 = vmatprep.mubr.bf16.mxu0 0
    %1478 = vmatmul.mubr.bf16.gmra.mxu0 %v1387
    %v1479 = vpop.f32.mrf.mxu0
    %v1480 = vadd.f32 0.0, %v1479
    %v1481 = vpop.f32.mrf.mxu0
    %v1482 = vpop.f32.mrf.mxu0
    %v1483 = vadd.f32 0.0, %v1482
    %v1484 = vpop.f32.mrf.mxu0
    %1485 = vdwg.mxu0
    %v1486 = vld [vmem:[#allocation22] sm:$0x1]
    %v1488 = vlaneseq
    %v1489 = vshrl.u32 %v1488, 7
    %v1490 = vsub.s32 0, %v1489
    %v1491 = vrot.slane %v1486, %v1490
    %v1493 = vmul.f32 %v1424, %v1491
    %v1494 = vmul.f32 %v1427, %v1491
    %v1495 = vmul.f32 %v1432, %v1491
    %v1496 = vmul.f32 %v1435, %v1491
    %v1497 = vmul.f32 %v1440, %v1491
    %v1498 = vmul.f32 %v1443, %v1491
    %v1499 = vmul.f32 %v1448, %v1491
    %v1500 = vmul.f32 %v1451, %v1491
    %v1501 = vmul.f32 %v1456, %v1491
    %v1502 = vmul.f32 %v1459, %v1491
    %v1503 = vmul.f32 %v1464, %v1491
    %v1504 = vmul.f32 %v1467, %v1491
    %v1505 = vmul.f32 %v1472, %v1491
    %v1506 = vmul.f32 %v1475, %v1491
    %v1507 = vmul.f32 %v1480, %v1491
    %v1508 = vmul.f32 %v1483, %v1491
    %v1509 = vld [vmem:[#allocation23] sm:$0x1]
    %v1511 = vlaneseq
    %v1512 = vshrl.u32 %v1511, 7
    %v1513 = vsub.s32 0, %v1512
    %v1514 = vrot.slane %v1509, %v1513
    %v1516 = vadd.f32 %v1493, %v1514
    %v1517 = vadd.f32 %v1494, %v1514
    %v1518 = vadd.f32 %v1495, %v1514
    %v1519 = vadd.f32 %v1496, %v1514
    %v1520 = vadd.f32 %v1497, %v1514
    %v1521 = vadd.f32 %v1498, %v1514
    %v1522 = vadd.f32 %v1499, %v1514
    %v1523 = vadd.f32 %v1500, %v1514
    %v1524 = vadd.f32 %v1501, %v1514
    %v1525 = vadd.f32 %v1502, %v1514
    %v1526 = vadd.f32 %v1503, %v1514
    %v1527 = vadd.f32 %v1504, %v1514
    %v1528 = vadd.f32 %v1505, %v1514
    %v1529 = vadd.f32 %v1506, %v1514
    %v1530 = vadd.f32 %v1507, %v1514
    %v1531 = vadd.f32 %v1508, %v1514
    %v1532 = vpack.c.bf16 %v1517, %v1516
    %v1533 = vpack.c.bf16 %v1519, %v1518
    %v1534 = vpack.c.bf16 %v1521, %v1520
    %v1535 = vpack.c.bf16 %v1523, %v1522
    %v1536 = vpack.c.bf16 %v1525, %v1524
    %v1537 = vpack.c.bf16 %v1527, %v1526
    %v1538 = vpack.c.bf16 %v1529, %v1528
    %v1539 = vpack.c.bf16 %v1531, %v1530
    %v1540 = vld [vmem:[%s21] sm:$0xf]
    %v1541 = vld [vmem:[%s21 + $0x4] sm:$0xf]
    %v1544 = vunpack.c.l.b16 %v1540
    %v1545 = vunpack.c.l.b16 %v1541
    %v1546 = vpack.c.b16 %v1545, %v1544
    %vm1548 = vcmask 130048
    %v1550 = vsel %vm1548, %v1532, 0
    %v1553 = vsel %vm1548, %v1533, 0
    %v1556 = vsel %vm1548, %v1534, 0
    %v1559 = vsel %vm1548, %v1535, 0
    %v1562 = vsel %vm1548, %v1536, 0
    %v1565 = vsel %vm1548, %v1537, 0
    %v1568 = vsel %vm1548, %v1538, 0
    %v1571 = vsel %vm1548, %v1539, 0
    %1573 = vmatprep.subr.bf16.mxu0 0
    %1574 = vmatpush1.bf16.msra.mxu0 0
    %1575 = vmatprep.subr.bf16.mxu0 0
    %1576 = vmatpush1.bf16.msra.mxu0 0
    %1577 = vmatprep.subr.bf16.mxu0 0
    %1578 = vmatpush1.bf16.msra.mxu0 0
    %1579 = vmatprep.subr.bf16.mxu0 0
    %1580 = vmatpush1.bf16.msra.mxu0 0
    %1581 = vmatprep.subr.bf16.mxu0 0
    %1582 = vmatpush1.bf16.msra.mxu0 0
    %1583 = vmatprep.subr.bf16.mxu0 0
    %1584 = vmatpush1.bf16.msra.mxu0 0
    %1585 = vmatprep.subr.bf16.mxu0 0
    %1586 = vmatpush1.bf16.msra.mxu0 0
    %1587 = vmatprep.subr.bf16.mxu0 0
    %1588 = vmatpush1.bf16.msra.mxu0 %v1546
    %1589 = vmatprep.subr.bf16.mxu0 0
    %1590 = vmatpush2.bf16.msra.mxu0 0
    %1591 = vmatprep.subr.bf16.mxu0 0
    %1592 = vmatpush2.bf16.msra.mxu0 0
    %1593 = vmatprep.subr.bf16.mxu0 0
    %1594 = vmatpush2.bf16.msra.mxu0 0
    %1595 = vmatprep.subr.bf16.mxu0 0
    %1596 = vmatpush2.bf16.msra.mxu0 0
    %1597 = vmatprep.subr.bf16.mxu0 0
    %1598 = vmatpush2.bf16.msra.mxu0 0
    %1599 = vmatprep.subr.bf16.mxu0 0
    %1600 = vmatpush2.bf16.msra.mxu0 0
    %1601 = vmatprep.subr.bf16.mxu0 0
    %1602 = vmatpush2.bf16.msra.mxu0 0
    %1603 = vmatprep.subr.bf16.mxu0 0
    %1604 = vmatpush2.bf16.msra.mxu0 0
    %1605 = vmatprep.mubr.bf16.mxu0 0
    %1606 = vmatmul.mubr.bf16.gmra.mxu0 %v1550
    %v1607 = vpop.f32.mrf.mxu0
    %v1608 = vadd.f32 0.0, %v1607
    %v1609 = vpop.f32.mrf.mxu0
    %v1610 = vpop.f32.mrf.mxu0
    %v1611 = vadd.f32 0.0, %v1610
    %v1612 = vpop.f32.mrf.mxu0
    %1613 = vmatprep.mubr.bf16.mxu0 0
    %1614 = vmatmul.mubr.bf16.gmra.mxu0 %v1553
    %v1615 = vpop.f32.mrf.mxu0
    %v1616 = vadd.f32 0.0, %v1615
    %v1617 = vpop.f32.mrf.mxu0
    %v1618 = vpop.f32.mrf.mxu0
    %v1619 = vadd.f32 0.0, %v1618
    %v1620 = vpop.f32.mrf.mxu0
    %1621 = vmatprep.mubr.bf16.mxu0 0
    %1622 = vmatmul.mubr.bf16.gmra.mxu0 %v1556
    %v1623 = vpop.f32.mrf.mxu0
    %v1624 = vadd.f32 0.0, %v1623
    %v1625 = vpop.f32.mrf.mxu0
    %v1626 = vpop.f32.mrf.mxu0
    %v1627 = vadd.f32 0.0, %v1626
    %v1628 = vpop.f32.mrf.mxu0
    %1629 = vmatprep.mubr.bf16.mxu0 0
    %1630 = vmatmul.mubr.bf16.gmra.mxu0 %v1559
    %v1631 = vpop.f32.mrf.mxu0
    %v1632 = vadd.f32 0.0, %v1631
    %v1633 = vpop.f32.mrf.mxu0
    %v1634 = vpop.f32.mrf.mxu0
    %v1635 = vadd.f32 0.0, %v1634
    %v1636 = vpop.f32.mrf.mxu0
    %1637 = vmatprep.mubr.bf16.mxu0 0
    %1638 = vmatmul.mubr.bf16.gmra.mxu0 %v1562
    %v1639 = vpop.f32.mrf.mxu0
    %v1640 = vadd.f32 0.0, %v1639
    %v1641 = vpop.f32.mrf.mxu0
    %v1642 = vpop.f32.mrf.mxu0
    %v1643 = vadd.f32 0.0, %v1642
    %v1644 = vpop.f32.mrf.mxu0
    %1645 = vmatprep.mubr.bf16.mxu0 0
    %1646 = vmatmul.mubr.bf16.gmra.mxu0 %v1565
    %v1647 = vpop.f32.mrf.mxu0
    %v1648 = vadd.f32 0.0, %v1647
    %v1649 = vpop.f32.mrf.mxu0
    %v1650 = vpop.f32.mrf.mxu0
    %v1651 = vadd.f32 0.0, %v1650
    %v1652 = vpop.f32.mrf.mxu0
    %1653 = vmatprep.mubr.bf16.mxu0 0
    %1654 = vmatmul.mubr.bf16.gmra.mxu0 %v1568
    %v1655 = vpop.f32.mrf.mxu0
    %v1656 = vadd.f32 0.0, %v1655
    %v1657 = vpop.f32.mrf.mxu0
    %v1658 = vpop.f32.mrf.mxu0
    %v1659 = vadd.f32 0.0, %v1658
    %v1660 = vpop.f32.mrf.mxu0
    %1661 = vmatprep.mubr.bf16.mxu0 0
    %1662 = vmatmul.mubr.bf16.gmra.mxu0 %v1571
    %v1663 = vpop.f32.mrf.mxu0
    %v1664 = vadd.f32 0.0, %v1663
    %v1665 = vpop.f32.mrf.mxu0
    %v1666 = vpop.f32.mrf.mxu0
    %v1667 = vadd.f32 0.0, %v1666
    %v1668 = vpop.f32.mrf.mxu0
    %1669 = vdwg.mxu0
    %v1670 = vld [vmem:[#allocation25] sm:$0x1]
    %v1672 = vlaneseq
    %v1673 = vshrl.u32 %v1672, 7
    %v1674 = vsub.s32 0, %v1673
    %v1675 = vrot.slane %v1670, %v1674
    %v1677 = vmul.f32 %v1608, %v1675
    %v1678 = vmul.f32 %v1611, %v1675
    %v1679 = vmul.f32 %v1616, %v1675
    %v1680 = vmul.f32 %v1619, %v1675
    %v1681 = vmul.f32 %v1624, %v1675
    %v1682 = vmul.f32 %v1627, %v1675
    %v1683 = vmul.f32 %v1632, %v1675
    %v1684 = vmul.f32 %v1635, %v1675
    %v1685 = vmul.f32 %v1640, %v1675
    %v1686 = vmul.f32 %v1643, %v1675
    %v1687 = vmul.f32 %v1648, %v1675
    %v1688 = vmul.f32 %v1651, %v1675
    %v1689 = vmul.f32 %v1656, %v1675
    %v1690 = vmul.f32 %v1659, %v1675
    %v1691 = vmul.f32 %v1664, %v1675
    %v1692 = vmul.f32 %v1667, %v1675
    %v1693 = vld [vmem:[#allocation26] sm:$0x1]
    %v1695 = vlaneseq
    %v1696 = vshrl.u32 %v1695, 7
    %v1697 = vsub.s32 0, %v1696
    %v1698 = vrot.slane %v1693, %v1697
    %v1700 = vadd.f32 %v1677, %v1698
    %v1701 = vadd.f32 %v1678, %v1698
    %v1702 = vadd.f32 %v1679, %v1698
    %v1703 = vadd.f32 %v1680, %v1698
    %v1704 = vadd.f32 %v1681, %v1698
    %v1705 = vadd.f32 %v1682, %v1698
    %v1706 = vadd.f32 %v1683, %v1698
    %v1707 = vadd.f32 %v1684, %v1698
    %v1708 = vadd.f32 %v1685, %v1698
    %v1709 = vadd.f32 %v1686, %v1698
    %v1710 = vadd.f32 %v1687, %v1698
    %v1711 = vadd.f32 %v1688, %v1698
    %v1712 = vadd.f32 %v1689, %v1698
    %v1713 = vadd.f32 %v1690, %v1698
    %v1714 = vadd.f32 %v1691, %v1698
    %v1715 = vadd.f32 %v1692, %v1698
    %v1716 = vmax.f32 %v1700, 0.0
    %v1717 = vmax.f32 %v1701, 0.0
    %v1718 = vmax.f32 %v1702, 0.0
    %v1719 = vmax.f32 %v1703, 0.0
    %v1720 = vmax.f32 %v1704, 0.0
    %v1721 = vmax.f32 %v1705, 0.0
    %v1722 = vmax.f32 %v1706, 0.0
    %v1723 = vmax.f32 %v1707, 0.0
    %v1724 = vmax.f32 %v1708, 0.0
    %v1725 = vmax.f32 %v1709, 0.0
    %v1726 = vmax.f32 %v1710, 0.0
    %v1727 = vmax.f32 %v1711, 0.0
    %v1728 = vmax.f32 %v1712, 0.0
    %v1729 = vmax.f32 %v1713, 0.0
    %v1730 = vmax.f32 %v1714, 0.0
    %v1731 = vmax.f32 %v1715, 0.0
    %v1732 = vmin.f32 %v1716, 6.0
    %v1733 = vmin.f32 %v1717, 6.0
    %v1734 = vmin.f32 %v1718, 6.0
    %v1735 = vmin.f32 %v1719, 6.0
    %v1736 = vmin.f32 %v1720, 6.0
    %v1737 = vmin.f32 %v1721, 6.0
    %v1738 = vmin.f32 %v1722, 6.0
    %v1739 = vmin.f32 %v1723, 6.0
    %v1740 = vmin.f32 %v1724, 6.0
    %v1741 = vmin.f32 %v1725, 6.0
    %v1742 = vmin.f32 %v1726, 6.0
    %v1743 = vmin.f32 %v1727, 6.0
    %v1744 = vmin.f32 %v1728, 6.0
    %v1745 = vmin.f32 %v1729, 6.0
    %v1746 = vmin.f32 %v1730, 6.0
    %v1747 = vmin.f32 %v1731, 6.0
    %vm1748 = vcmask 785408
    %1749 = vst.msk [vmem:[#allocation4] sm:$0xff] %vm1748, 0.0
    %vm1750 = vcmask 779264
    %1751 = vst.msk [vmem:[#allocation4 + $0x8] sm:$0x3] %vm1750, 0.0
    %1752 = vst.msk [vmem:[#allocation4 + $0x10] sm:$0xff] %vm1748, 0.0
    %1753 = vst.msk [vmem:[#allocation4 + $0x18] sm:$0x3] %vm1750, 0.0
    %1754 = vst.msk [vmem:[#allocation4 + $0x20] sm:$0xff] %vm1748, 0.0
    %1755 = vst.msk [vmem:[#allocation4 + $0x28] sm:$0x3] %vm1750, 0.0
    %1756 = vst.msk [vmem:[#allocation4 + $0x30] sm:$0xff] %vm1748, 0.0
    %1757 = vst.msk [vmem:[#allocation4 + $0x38] sm:$0x3] %vm1750, 0.0
    %1758 = vst.msk [vmem:[#allocation4 + $0x40] sm:$0xff] %vm1748, 0.0
    %1759 = vst.msk [vmem:[#allocation4 + $0x48] sm:$0x3] %vm1750, 0.0
    %1760 = vst.msk [vmem:[#allocation4 + $0x50] sm:$0xff] %vm1748, 0.0
    %1761 = vst.msk [vmem:[#allocation4 + $0x58] sm:$0x3] %vm1750, 0.0
    %1762 = vst.msk [vmem:[#allocation4 + $0x60] sm:$0xff] %vm1748, 0.0
    %1763 = vst.msk [vmem:[#allocation4 + $0x68] sm:$0x3] %vm1750, 0.0
    %1764 = vst.msk [vmem:[#allocation4 + $0x70] sm:$0xff] %vm1748, 0.0
    %1765 = vst.msk [vmem:[#allocation4 + $0x78] sm:$0x3] %vm1750, 0.0
    %1766 = vst.msk [vmem:[#allocation4 + $0x80] sm:$0xff] %vm1748, 0.0
    %1767 = vst.msk [vmem:[#allocation4 + $0x88] sm:$0x3] %vm1750, 0.0
    %1768 = vst.msk [vmem:[#allocation4 + $0x90] sm:$0xff] %vm1748, 0.0
    %1769 = vst.msk [vmem:[#allocation4 + $0x98] sm:$0x3] %vm1750, 0.0
    %1770 = vst.msk [vmem:[#allocation4 + $0xa0] sm:$0xff] %vm1748, 0.0
    %1771 = vst.msk [vmem:[#allocation4 + $0xa8] sm:$0x3] %vm1750, 0.0
    %1772 = vst.msk [vmem:[#allocation4 + $0xb0] sm:$0xff] %vm1748, 0.0
    %1773 = vst.msk [vmem:[#allocation4 + $0xb8] sm:$0x3] %vm1750, 0.0
    %1774 = vst.msk [vmem:[#allocation4 + $0xc0] sm:$0xff] %vm1748, 0.0
    %1775 = vst.msk [vmem:[#allocation4 + $0xc8] sm:$0x3] %vm1750, 0.0
    %1776 = vst.msk [vmem:[#allocation4 + $0xd0] sm:$0xff] %vm1748, 0.0
    %1777 = vst.msk [vmem:[#allocation4 + $0xd8] sm:$0x3] %vm1750, 0.0
    %1778 = vst.msk [vmem:[#allocation4 + $0xe0] sm:$0xff] %vm1748, 0.0
    %1779 = vst.msk [vmem:[#allocation4 + $0xe8] sm:$0x3] %vm1750, 0.0
    %1780 = vst.msk [vmem:[#allocation4 + $0xf0] sm:$0xff] %vm1748, 0.0
    %1781 = vst.msk [vmem:[#allocation4 + $0xf8] sm:$0x3] %vm1750, 0.0
    %1782 = vst.msk [vmem:[#allocation4 + $0x100] sm:$0xff] %vm1748, 0.0
    %1783 = vst.msk [vmem:[#allocation4 + $0x108] sm:$0x3] %vm1750, 0.0
    %1784 = vst.msk [vmem:[#allocation4 + $0x110] sm:$0xff] %vm1748, 0.0
    %1785 = vst.msk [vmem:[#allocation4 + $0x118] sm:$0x3] %vm1750, 0.0
    %1786 = vst.msk [vmem:[#allocation4 + $0x120] sm:$0xff] %vm1748, 0.0
    %1787 = vst.msk [vmem:[#allocation4 + $0x128] sm:$0x3] %vm1750, 0.0
    %1788 = vst.msk [vmem:[#allocation4 + $0x130] sm:$0xff] %vm1748, 0.0
    %1789 = vst.msk [vmem:[#allocation4 + $0x138] sm:$0x3] %vm1750, 0.0
    %s1790 = scalar_lea.vmem [#allocation4], 16
    %1791 = vst.msk [vmem:[%s1790 + $0x1] sm:$0xff] %vm1748, %v1732
    %s1792 = scalar_lea.vmem [#allocation4], 32
    %1793 = vst.msk [vmem:[%s1792 + $0x1] sm:$0xff] %vm1748, %v1733
    %s1794 = scalar_lea.vmem [#allocation4], 48
    %1795 = vst.msk [vmem:[%s1794 + $0x1] sm:$0xff] %vm1748, %v1734
    %s1796 = scalar_lea.vmem [#allocation4], 64
    %1797 = vst.msk [vmem:[%s1796 + $0x1] sm:$0xff] %vm1748, %v1735
    %s1798 = scalar_lea.vmem [#allocation4], 80
    %1799 = vst.msk [vmem:[%s1798 + $0x1] sm:$0xff] %vm1748, %v1736
    %s1800 = scalar_lea.vmem [#allocation4], 96
    %1801 = vst.msk [vmem:[%s1800 + $0x1] sm:$0xff] %vm1748, %v1737
    %s1802 = scalar_lea.vmem [#allocation4], 112
    %1803 = vst.msk [vmem:[%s1802 + $0x1] sm:$0xff] %vm1748, %v1738
    %s1804 = scalar_lea.vmem [#allocation4], 128
    %1805 = vst.msk [vmem:[%s1804 + $0x1] sm:$0xff] %vm1748, %v1739
    %s1806 = scalar_lea.vmem [#allocation4], 176
    %1807 = vst.msk [vmem:[%s1806 + $0x1] sm:$0xff] %vm1748, %v1740
    %s1808 = scalar_lea.vmem [#allocation4], 192
    %1809 = vst.msk [vmem:[%s1808 + $0x1] sm:$0xff] %vm1748, %v1741
    %s1810 = scalar_lea.vmem [#allocation4], 208
    %1811 = vst.msk [vmem:[%s1810 + $0x1] sm:$0xff] %vm1748, %v1742
    %s1812 = scalar_lea.vmem [#allocation4], 224
    %1813 = vst.msk [vmem:[%s1812 + $0x1] sm:$0xff] %vm1748, %v1743
    %s1814 = scalar_lea.vmem [#allocation4], 240
    %1815 = vst.msk [vmem:[%s1814 + $0x1] sm:$0xff] %vm1748, %v1744
    %s1816 = scalar_lea.vmem [#allocation4], 256
    %1817 = vst.msk [vmem:[%s1816 + $0x1] sm:$0xff] %vm1748, %v1745
    %s1818 = scalar_lea.vmem [#allocation4], 272
    %1819 = vst.msk [vmem:[%s1818 + $0x1] sm:$0xff] %vm1748, %v1746
    %s1820 = scalar_lea.vmem [#allocation4], 288
    %1821 = vst.msk [vmem:[%s1820 + $0x1] sm:$0xff] %vm1748, %v1747
    %v1822 = vld [vmem:[#allocation28] sm:$0x1]
    %v1823 = vld [vmem:[#allocation29] sm:$0x1]
    %v1824 = vld [vmem:[#allocation4] sm:$0x7]
    %v1825 = vld [vmem:[#allocation4 + $0xa0] sm:$0x7]
    %v1826 = vld [vmem:[%s27] sm:$0x7]
    %v1827 = vmul.f32 %v1824, %v1826
    %v1828 = vmul.f32 %v1825, %v1826
    %vm1829 = vcmask 780288
    %v1830 = vsel %vm1829, %v1827, 0.0
    %v1831 = vrot.slane %v1830, 4
    %v1832 = vadd.f32 %v1830, %v1831
    %v1833 = vrot.slane %v1832, 2
    %v1834 = vadd.f32 %v1832, %v1833
    %v1835 = vrot.slane %v1834, 1
    %v1836 = vadd.f32 %v1834, %v1835
    %v1837 = vsel %vm1829, %v1828, 0.0
    %v1838 = vrot.slane %v1837, 4
    %v1839 = vadd.f32 %v1837, %v1838
    %v1840 = vrot.slane %v1839, 2
    %v1841 = vadd.f32 %v1839, %v1840
    %v1842 = vrot.slane %v1841, 1
    %v1843 = vadd.f32 %v1841, %v1842
    %v1844 = vadd.f32 %v1836, 0.0
    %v1845 = vadd.f32 %v1843, 0.0
    %v1846 = vld [vmem:[%s1790] sm:$0x7]
    %v1847 = vld [vmem:[%s1790 + $0xa0] sm:$0x7]
    %v1848 = vld [vmem:[%s27 + $0x3] sm:$0x7]
    %v1849 = vmul.f32 %v1846, %v1848
    %v1850 = vmul.f32 %v1847, %v1848
    %v1851 = vsel %vm1829, %v1849, 0.0
    %v1852 = vrot.slane %v1851, 4
    %v1853 = vadd.f32 %v1851, %v1852
    %v1854 = vrot.slane %v1853, 2
    %v1855 = vadd.f32 %v1853, %v1854
    %v1856 = vrot.slane %v1855, 1
    %v1857 = vadd.f32 %v1855, %v1856
    %v1858 = vsel %vm1829, %v1850, 0.0
    %v1859 = vrot.slane %v1858, 4
    %v1860 = vadd.f32 %v1858, %v1859
    %v1861 = vrot.slane %v1860, 2
    %v1862 = vadd.f32 %v1860, %v1861
    %v1863 = vrot.slane %v1862, 1
    %v1864 = vadd.f32 %v1862, %v1863
    %v1865 = vadd.f32 %v1844, %v1857
    %v1866 = vadd.f32 %v1845, %v1864
    %v1867 = vld [vmem:[%s1792] sm:$0x7]
    %v1868 = vld [vmem:[%s1792 + $0xa0] sm:$0x7]
    %v1869 = vld [vmem:[%s27 + $0x6] sm:$0x7]
    %v1870 = vmul.f32 %v1867, %v1869
    %v1871 = vmul.f32 %v1868, %v1869
    %v1872 = vsel %vm1829, %v1870, 0.0
    %v1873 = vrot.slane %v1872, 4
    %v1874 = vadd.f32 %v1872, %v1873
    %v1875 = vrot.slane %v1874, 2
    %v1876 = vadd.f32 %v1874, %v1875
    %v1877 = vrot.slane %v1876, 1
    %v1878 = vadd.f32 %v1876, %v1877
    %v1879 = vsel %vm1829, %v1871, 0.0
    %v1880 = vrot.slane %v1879, 4
    %v1881 = vadd.f32 %v1879, %v1880
    %v1882 = vrot.slane %v1881, 2
    %v1883 = vadd.f32 %v1881, %v1882
    %v1884 = vrot.slane %v1883, 1
    %v1885 = vadd.f32 %v1883, %v1884
    %v1886 = vadd.f32 %v1865, %v1878
    %v1887 = vadd.f32 %v1866, %v1885
    %v1889 = vlaneseq
    %v1890 = vshrl.u32 %v1889, 7
    %v1891 = vsub.s32 0, %v1890
    %v1892 = vrot.slane %v1822, %v1891
    %v1894 = vmul.f32 %v1886, %v1892
    %v1895 = vmul.f32 %v1887, %v1892
    %v1897 = vlaneseq
    %v1898 = vshrl.u32 %v1897, 7
    %v1899 = vsub.s32 0, %v1898
    %v1900 = vrot.slane %v1823, %v1899
    %v1902 = vadd.f32 %v1894, %v1900
    %v1903 = vadd.f32 %v1895, %v1900
    %v1904 = vmax.f32 %v1902, 0.0
    %v1905 = vmax.f32 %v1903, 0.0
    %v1906 = vmin.f32 %v1904, 6.0
    %v1907 = vmin.f32 %v1905, 6.0
    %vm1908 = vcmask 778240
    %1909 = vst.msk [vmem:[#allocation5] sm:$0x1] %vm1908, %v1906
    %1910 = vst.msk [vmem:[#allocation5 + $0x10] sm:$0x1] %vm1908, %v1907
    %v1911 = vld [vmem:[#allocation4 + $0x2] sm:$0x7]
    %v1912 = vld [vmem:[#allocation4 + $0xa2] sm:$0x7]
    %v1913 = vld [vmem:[%s27] sm:$0x7]
    %v1914 = vmul.f32 %v1911, %v1913
    %v1915 = vmul.f32 %v1912, %v1913
    %v1916 = vsel %vm1829, %v1914, 0.0
    %v1917 = vrot.slane %v1916, 4
    %v1918 = vadd.f32 %v1916, %v1917
    %v1919 = vrot.slane %v1918, 2
    %v1920 = vadd.f32 %v1918, %v1919
    %v1921 = vrot.slane %v1920, 1
    %v1922 = vadd.f32 %v1920, %v1921
    %v1923 = vsel %vm1829, %v1915, 0.0
    %v1924 = vrot.slane %v1923, 4
    %v1925 = vadd.f32 %v1923, %v1924
    %v1926 = vrot.slane %v1925, 2
    %v1927 = vadd.f32 %v1925, %v1926
    %v1928 = vrot.slane %v1927, 1
    %v1929 = vadd.f32 %v1927, %v1928
    %v1930 = vadd.f32 %v1922, 0.0
    %v1931 = vadd.f32 %v1929, 0.0
    %v1932 = vld [vmem:[%s1790 + $0x2] sm:$0x7]
    %v1933 = vld [vmem:[%s1790 + $0xa2] sm:$0x7]
    %v1934 = vld [vmem:[%s27 + $0x3] sm:$0x7]
    %v1935 = vmul.f32 %v1932, %v1934
    %v1936 = vmul.f32 %v1933, %v1934
    %v1937 = vsel %vm1829, %v1935, 0.0
    %v1938 = vrot.slane %v1937, 4
    %v1939 = vadd.f32 %v1937, %v1938
    %v1940 = vrot.slane %v1939, 2
    %v1941 = vadd.f32 %v1939, %v1940
    %v1942 = vrot.slane %v1941, 1
    %v1943 = vadd.f32 %v1941, %v1942
    %v1944 = vsel %vm1829, %v1936, 0.0
    %v1945 = vrot.slane %v1944, 4
    %v1946 = vadd.f32 %v1944, %v1945
    %v1947 = vrot.slane %v1946, 2
    %v1948 = vadd.f32 %v1946, %v1947
    %v1949 = vrot.slane %v1948, 1
    %v1950 = vadd.f32 %v1948, %v1949
    %v1951 = vadd.f32 %v1930, %v1943
    %v1952 = vadd.f32 %v1931, %v1950
    %v1953 = vld [vmem:[%s1792 + $0x2] sm:$0x7]
    %v1954 = vld [vmem:[%s1792 + $0xa2] sm:$0x7]
    %v1955 = vld [vmem:[%s27 + $0x6] sm:$0x7]
    %v1956 = vmul.f32 %v1953, %v1955
    %v1957 = vmul.f32 %v1954, %v1955
    %v1958 = vsel %vm1829, %v1956, 0.0
    %v1959 = vrot.slane %v1958, 4
    %v1960 = vadd.f32 %v1958, %v1959
    %v1961 = vrot.slane %v1960, 2
    %v1962 = vadd.f32 %v1960, %v1961
    %v1963 = vrot.slane %v1962, 1
    %v1964 = vadd.f32 %v1962, %v1963
    %v1965 = vsel %vm1829, %v1957, 0.0
    %v1966 = vrot.slane %v1965, 4
    %v1967 = vadd.f32 %v1965, %v1966
    %v1968 = vrot.slane %v1967, 2
    %v1969 = vadd.f32 %v1967, %v1968
    %v1970 = vrot.slane %v1969, 1
    %v1971 = vadd.f32 %v1969, %v1970
    %v1972 = vadd.f32 %v1951, %v1964
    %v1973 = vadd.f32 %v1952, %v1971
    %v1974 = vmul.f32 %v1972, %v1892
    %v1975 = vmul.f32 %v1973, %v1892
    %v1976 = vadd.f32 %v1974, %v1900
    %v1977 = vadd.f32 %v1975, %v1900
    %v1978 = vmax.f32 %v1976, 0.0
    %v1979 = vmax.f32 %v1977, 0.0
    %v1980 = vmin.f32 %v1978, 6.0
    %v1981 = vmin.f32 %v1979, 6.0
    %1982 = vst.msk [vmem:[#allocation5 + $0x1] sm:$0x1] %vm1908, %v1980
    %1983 = vst.msk [vmem:[#allocation5 + $0x11] sm:$0x1] %vm1908, %v1981
    %v1984 = vld [vmem:[#allocation4 + $0x4] sm:$0x7]
    %v1985 = vld [vmem:[#allocation4 + $0xa4] sm:$0x7]
    %v1986 = vld [vmem:[%s27] sm:$0x7]
    %v1987 = vmul.f32 %v1984, %v1986
    %v1988 = vmul.f32 %v1985, %v1986
    %v1989 = vsel %vm1829, %v1987, 0.0
    %v1990 = vrot.slane %v1989, 4
    %v1991 = vadd.f32 %v1989, %v1990
    %v1992 = vrot.slane %v1991, 2
    %v1993 = vadd.f32 %v1991, %v1992
    %v1994 = vrot.slane %v1993, 1
    %v1995 = vadd.f32 %v1993, %v1994
    %v1996 = vsel %vm1829, %v1988, 0.0
    %v1997 = vrot.slane %v1996, 4
    %v1998 = vadd.f32 %v1996, %v1997
    %v1999 = vrot.slane %v1998, 2
    %v2000 = vadd.f32 %v1998, %v1999
    %v2001 = vrot.slane %v2000, 1
    %v2002 = vadd.f32 %v2000, %v2001
    %v2003 = vadd.f32 %v1995, 0.0
    %v2004 = vadd.f32 %v2002, 0.0
    %v2005 = vld [vmem:[%s1790 + $0x4] sm:$0x7]
    %v2006 = vld [vmem:[%s1790 + $0xa4] sm:$0x7]
    %v2007 = vld [vmem:[%s27 + $0x3] sm:$0x7]
    %v2008 = vmul.f32 %v2005, %v2007
    %v2009 = vmul.f32 %v2006, %v2007
    %v2010 = vsel %vm1829, %v2008, 0.0
    %v2011 = vrot.slane %v2010, 4
    %v2012 = vadd.f32 %v2010, %v2011
    %v2013 = vrot.slane %v2012, 2
    %v2014 = vadd.f32 %v2012, %v2013
    %v2015 = vrot.slane %v2014, 1
    %v2016 = vadd.f32 %v2014, %v2015
    %v2017 = vsel %vm1829, %v2009, 0.0
    %v2018 = vrot.slane %v2017, 4
    %v2019 = vadd.f32 %v2017, %v2018
    %v2020 = vrot.slane %v2019, 2
    %v2021 = vadd.f32 %v2019, %v2020
    %v2022 = vrot.slane %v2021, 1
    %v2023 = vadd.f32 %v2021, %v2022
    %v2024 = vadd.f32 %v2003, %v2016
    %v2025 = vadd.f32 %v2004, %v2023
    %v2026 = vld [vmem:[%s1792 + $0x4] sm:$0x7]
    %v2027 = vld [vmem:[%s1792 + $0xa4] sm:$0x7]
    %v2028 = vld [vmem:[%s27 + $0x6] sm:$0x7]
    %v2029 = vmul.f32 %v2026, %v2028
    %v2030 = vmul.f32 %v2027, %v2028
    %v2031 = vsel %vm1829, %v2029, 0.0
    %v2032 = vrot.slane %v2031, 4
    %v2033 = vadd.f32 %v2031, %v2032
    %v2034 = vrot.slane %v2033, 2
    %v2035 = vadd.f32 %v2033, %v2034
    %v2036 = vrot.slane %v2035, 1
    %v2037 = vadd.f32 %v2035, %v2036
    %v2038 = vsel %vm1829, %v2030, 0.0
    %v2039 = vrot.slane %v2038, 4
    %v2040 = vadd.f32 %v2038, %v2039
    %v2041 = vrot.slane %v2040, 2
    %v2042 = vadd.f32 %v2040, %v2041
    %v2043 = vrot.slane %v2042, 1
    %v2044 = vadd.f32 %v2042, %v2043
    %v2045 = vadd.f32 %v2024, %v2037
    %v2046 = vadd.f32 %v2025, %v2044
    %v2047 = vmul.f32 %v2045, %v1892
    %v2048 = vmul.f32 %v2046, %v1892
    %v2049 = vadd.f32 %v2047, %v1900
    %v2050 = vadd.f32 %v2048, %v1900
    %v2051 = vmax.f32 %v2049, 0.0
    %v2052 = vmax.f32 %v2050, 0.0
    %v2053 = vmin.f32 %v2051, 6.0
    %v2054 = vmin.f32 %v2052, 6.0
    %2055 = vst.msk [vmem:[#allocation5 + $0x2] sm:$0x1] %vm1908, %v2053
    %2056 = vst.msk [vmem:[#allocation5 + $0x12] sm:$0x1] %vm1908, %v2054
    %v2057 = vld [vmem:[#allocation4 + $0x6] sm:$0x7]
    %v2058 = vld [vmem:[#allocation4 + $0xa6] sm:$0x7]
    %v2059 = vld [vmem:[%s27] sm:$0x7]
    %v2060 = vmul.f32 %v2057, %v2059
    %v2061 = vmul.f32 %v2058, %v2059
    %v2062 = vsel %vm1829, %v2060, 0.0
    %v2063 = vrot.slane %v2062, 4
    %v2064 = vadd.f32 %v2062, %v2063
    %v2065 = vrot.slane %v2064, 2
    %v2066 = vadd.f32 %v2064, %v2065
    %v2067 = vrot.slane %v2066, 1
    %v2068 = vadd.f32 %v2066, %v2067
    %v2069 = vsel %vm1829, %v2061, 0.0
    %v2070 = vrot.slane %v2069, 4
    %v2071 = vadd.f32 %v2069, %v2070
    %v2072 = vrot.slane %v2071, 2
    %v2073 = vadd.f32 %v2071, %v2072
    %v2074 = vrot.slane %v2073, 1
    %v2075 = vadd.f32 %v2073, %v2074
    %v2076 = vadd.f32 %v2068, 0.0
    %v2077 = vadd.f32 %v2075, 0.0
    %v2078 = vld [vmem:[%s1790 + $0x6] sm:$0x7]
    %v2079 = vld [vmem:[%s1790 + $0xa6] sm:$0x7]
    %v2080 = vld [vmem:[%s27 + $0x3] sm:$0x7]
    %v2081 = vmul.f32 %v2078, %v2080
    %v2082 = vmul.f32 %v2079, %v2080
    %v2083 = vsel %vm1829, %v2081, 0.0
    %v2084 = vrot.slane %v2083, 4
    %v2085 = vadd.f32 %v2083, %v2084
    %v2086 = vrot.slane %v2085, 2
    %v2087 = vadd.f32 %v2085, %v2086
    %v2088 = vrot.slane %v2087, 1
    %v2089 = vadd.f32 %v2087, %v2088
    %v2090 = vsel %vm1829, %v2082, 0.0
    %v2091 = vrot.slane %v2090, 4
    %v2092 = vadd.f32 %v2090, %v2091
    %v2093 = vrot.slane %v2092, 2
    %v2094 = vadd.f32 %v2092, %v2093
    %v2095 = vrot.slane %v2094, 1
    %v2096 = vadd.f32 %v2094, %v2095
    %v2097 = vadd.f32 %v2076, %v2089
    %v2098 = vadd.f32 %v2077, %v2096
    %v2099 = vld [vmem:[%s1792 + $0x6] sm:$0x7]
    %v2100 = vld [vmem:[%s1792 + $0xa6] sm:$0x7]
    %v2101 = vld [vmem:[%s27 + $0x6] sm:$0x7]
    %v2102 = vmul.f32 %v2099, %v2101
    %v2103 = vmul.f32 %v2100, %v2101
    %v2104 = vsel %vm1829, %v2102, 0.0
    %v2105 = vrot.slane %v2104, 4
    %v2106 = vadd.f32 %v2104, %v2105
    %v2107 = vrot.slane %v2106, 2
    %v2108 = vadd.f32 %v2106, %v2107
    %v2109 = vrot.slane %v2108, 1
    %v2110 = vadd.f32 %v2108, %v2109
    %v2111 = vsel %vm1829, %v2103, 0.0
    %v2112 = vrot.slane %v2111, 4
    %v2113 = vadd.f32 %v2111, %v2112
    %v2114 = vrot.slane %v2113, 2
    %v2115 = vadd.f32 %v2113, %v2114
    %v2116 = vrot.slane %v2115, 1
    %v2117 = vadd.f32 %v2115, %v2116
    %v2118 = vadd.f32 %v2097, %v2110
    %v2119 = vadd.f32 %v2098, %v2117
    %v2120 = vmul.f32 %v2118, %v1892
    %v2121 = vmul.f32 %v2119, %v1892
    %v2122 = vadd.f32 %v2120, %v1900
    %v2123 = vadd.f32 %v2121, %v1900
    %v2124 = vmax.f32 %v2122, 0.0
    %v2125 = vmax.f32 %v2123, 0.0
    %v2126 = vmin.f32 %v2124, 6.0
    %v2127 = vmin.f32 %v2125, 6.0
    %2128 = vst.msk [vmem:[#allocation5 + $0x3] sm:$0x1] %vm1908, %v2126
    %2129 = vst.msk [vmem:[#allocation5 + $0x13] sm:$0x1] %vm1908, %v2127
    %v2130 = vld [vmem:[%s1792] sm:$0x7]
    %v2131 = vld [vmem:[%s1792 + $0xa0] sm:$0x7]
    %v2132 = vld [vmem:[%s27] sm:$0x7]
    %v2133 = vmul.f32 %v2130, %v2132
    %v2134 = vmul.f32 %v2131, %v2132
    %v2135 = vsel %vm1829, %v2133, 0.0
    %v2136 = vrot.slane %v2135, 4
    %v2137 = vadd.f32 %v2135, %v2136
    %v2138 = vrot.slane %v2137, 2
    %v2139 = vadd.f32 %v2137, %v2138
    %v2140 = vrot.slane %v2139, 1
    %v2141 = vadd.f32 %v2139, %v2140
    %v2142 = vsel %vm1829, %v2134, 0.0
    %v2143 = vrot.slane %v2142, 4
    %v2144 = vadd.f32 %v2142, %v2143
    %v2145 = vrot.slane %v2144, 2
    %v2146 = vadd.f32 %v2144, %v2145
    %v2147 = vrot.slane %v2146, 1
    %v2148 = vadd.f32 %v2146, %v2147
    %v2149 = vadd.f32 %v2141, 0.0
    %v2150 = vadd.f32 %v2148, 0.0
    %v2151 = vld [vmem:[%s1794] sm:$0x7]
    %v2152 = vld [vmem:[%s1794 + $0xa0] sm:$0x7]
    %v2153 = vld [vmem:[%s27 + $0x3] sm:$0x7]
    %v2154 = vmul.f32 %v2151, %v2153
    %v2155 = vmul.f32 %v2152, %v2153
    %v2156 = vsel %vm1829, %v2154, 0.0
    %v2157 = vrot.slane %v2156, 4
    %v2158 = vadd.f32 %v2156, %v2157
    %v2159 = vrot.slane %v2158, 2
    %v2160 = vadd.f32 %v2158, %v2159
    %v2161 = vrot.slane %v2160, 1
    %v2162 = vadd.f32 %v2160, %v2161
    %v2163 = vsel %vm1829, %v2155, 0.0
    %v2164 = vrot.slane %v2163, 4
    %v2165 = vadd.f32 %v2163, %v2164
    %v2166 = vrot.slane %v2165, 2
    %v2167 = vadd.f32 %v2165, %v2166
    %v2168 = vrot.slane %v2167, 1
    %v2169 = vadd.f32 %v2167, %v2168
    %v2170 = vadd.f32 %v2149, %v2162
    %v2171 = vadd.f32 %v2150, %v2169
    %v2172 = vld [vmem:[%s1796] sm:$0x7]
    %v2173 = vld [vmem:[%s1796 + $0xa0] sm:$0x7]
    %v2174 = vld [vmem:[%s27 + $0x6] sm:$0x7]
    %v2175 = vmul.f32 %v2172, %v2174
    %v2176 = vmul.f32 %v2173, %v2174
    %v2177 = vsel %vm1829, %v2175, 0.0
    %v2178 = vrot.slane %v2177, 4
    %v2179 = vadd.f32 %v2177, %v2178
    %v2180 = vrot.slane %v2179, 2
    %v2181 = vadd.f32 %v2179, %v2180
    %v2182 = vrot.slane %v2181, 1
    %v2183 = vadd.f32 %v2181, %v2182
    %v2184 = vsel %vm1829, %v2176, 0.0
    %v2185 = vrot.slane %v2184, 4
    %v2186 = vadd.f32 %v2184, %v2185
    %v2187 = vrot.slane %v2186, 2
    %v2188 = vadd.f32 %v2186, %v2187
    %v2189 = vrot.slane %v2188, 1
    %v2190 = vadd.f32 %v2188, %v2189
    %v2191 = vadd.f32 %v2170, %v2183
    %v2192 = vadd.f32 %v2171, %v2190
    %v2193 = vmul.f32 %v2191, %v1892
    %v2194 = vmul.f32 %v2192, %v1892
    %v2195 = vadd.f32 %v2193, %v1900
    %v2196 = vadd.f32 %v2194, %v1900
    %v2197 = vmax.f32 %v2195, 0.0
    %v2198 = vmax.f32 %v2196, 0.0
    %v2199 = vmin.f32 %v2197, 6.0
    %v2200 = vmin.f32 %v2198, 6.0
    %2201 = vst.msk [vmem:[#allocation5 + $0x4] sm:$0x1] %vm1908, %v2199
    %2202 = vst.msk [vmem:[#allocation5 + $0x14] sm:$0x1] %vm1908, %v2200
    %v2203 = vld [vmem:[%s1792 + $0x2] sm:$0x7]
    %v2204 = vld [vmem:[%s1792 + $0xa2] sm:$0x7]
    %v2205 = vld [vmem:[%s27] sm:$0x7]
    %v2206 = vmul.f32 %v2203, %v2205
    %v2207 = vmul.f32 %v2204, %v2205
    %v2208 = vsel %vm1829, %v2206, 0.0
    %v2209 = vrot.slane %v2208, 4
    %v2210 = vadd.f32 %v2208, %v2209
    %v2211 = vrot.slane %v2210, 2
    %v2212 = vadd.f32 %v2210, %v2211
    %v2213 = vrot.slane %v2212, 1
    %v2214 = vadd.f32 %v2212, %v2213
    %v2215 = vsel %vm1829, %v2207, 0.0
    %v2216 = vrot.slane %v2215, 4
    %v2217 = vadd.f32 %v2215, %v2216
    %v2218 = vrot.slane %v2217, 2
    %v2219 = vadd.f32 %v2217, %v2218
    %v2220 = vrot.slane %v2219, 1
    %v2221 = vadd.f32 %v2219, %v2220
    %v2222 = vadd.f32 %v2214, 0.0
    %v2223 = vadd.f32 %v2221, 0.0
    %v2224 = vld [vmem:[%s1794 + $0x2] sm:$0x7]
    %v2225 = vld [vmem:[%s1794 + $0xa2] sm:$0x7]
    %v2226 = vld [vmem:[%s27 + $0x3] sm:$0x7]
    %v2227 = vmul.f32 %v2224, %v2226
    %v2228 = vmul.f32 %v2225, %v2226
    %v2229 = vsel %vm1829, %v2227, 0.0
    %v2230 = vrot.slane %v2229, 4
    %v2231 = vadd.f32 %v2229, %v2230
    %v2232 = vrot.slane %v2231, 2
    %v2233 = vadd.f32 %v2231, %v2232
    %v2234 = vrot.slane %v2233, 1
    %v2235 = vadd.f32 %v2233, %v2234
    %v2236 = vsel %vm1829, %v2228, 0.0
    %v2237 = vrot.slane %v2236, 4
    %v2238 = vadd.f32 %v2236, %v2237
    %v2239 = vrot.slane %v2238, 2
    %v2240 = vadd.f32 %v2238, %v2239
    %v2241 = vrot.slane %v2240, 1
    %v2242 = vadd.f32 %v2240, %v2241
    %v2243 = vadd.f32 %v2222, %v2235
    %v2244 = vadd.f32 %v2223, %v2242
    %v2245 = vld [vmem:[%s1796 + $0x2] sm:$0x7]
    %v2246 = vld [vmem:[%s1796 + $0xa2] sm:$0x7]
    %v2247 = vld [vmem:[%s27 + $0x6] sm:$0x7]
    %v2248 = vmul.f32 %v2245, %v2247
    %v2249 = vmul.f32 %v2246, %v2247
    %v2250 = vsel %vm1829, %v2248, 0.0
    %v2251 = vrot.slane %v2250, 4
    %v2252 = vadd.f32 %v2250, %v2251
    %v2253 = vrot.slane %v2252, 2
    %v2254 = vadd.f32 %v2252, %v2253
    %v2255 = vrot.slane %v2254, 1
    %v2256 = vadd.f32 %v2254, %v2255
    %v2257 = vsel %vm1829, %v2249, 0.0
    %v2258 = vrot.slane %v2257, 4
    %v2259 = vadd.f32 %v2257, %v2258
    %v2260 = vrot.slane %v2259, 2
    %v2261 = vadd.f32 %v2259, %v2260
    %v2262 = vrot.slane %v2261, 1
    %v2263 = vadd.f32 %v2261, %v2262
    %v2264 = vadd.f32 %v2243, %v2256
    %v2265 = vadd.f32 %v2244, %v2263
    %v2266 = vmul.f32 %v2264, %v1892
    %v2267 = vmul.f32 %v2265, %v1892
    %v2268 = vadd.f32 %v2266, %v1900
    %v2269 = vadd.f32 %v2267, %v1900
    %v2270 = vmax.f32 %v2268, 0.0
    %v2271 = vmax.f32 %v2269, 0.0
    %v2272 = vmin.f32 %v2270, 6.0
    %v2273 = vmin.f32 %v2271, 6.0
    %2274 = vst.msk [vmem:[#allocation5 + $0x5] sm:$0x1] %vm1908, %v2272
    %2275 = vst.msk [vmem:[#allocation5 + $0x15] sm:$0x1] %vm1908, %v2273
    %v2276 = vld [vmem:[%s1792 + $0x4] sm:$0x7]
    %v2277 = vld [vmem:[%s1792 + $0xa4] sm:$0x7]
    %v2278 = vld [vmem:[%s27] sm:$0x7]
    %v2279 = vmul.f32 %v2276, %v2278
    %v2280 = vmul.f32 %v2277, %v2278
    %v2281 = vsel %vm1829, %v2279, 0.0
    %v2282 = vrot.slane %v2281, 4
    %v2283 = vadd.f32 %v2281, %v2282
    %v2284 = vrot.slane %v2283, 2
    %v2285 = vadd.f32 %v2283, %v2284
    %v2286 = vrot.slane %v2285, 1
    %v2287 = vadd.f32 %v2285, %v2286
    %v2288 = vsel %vm1829, %v2280, 0.0
    %v2289 = vrot.slane %v2288, 4
    %v2290 = vadd.f32 %v2288, %v2289
    %v2291 = vrot.slane %v2290, 2
    %v2292 = vadd.f32 %v2290, %v2291
    %v2293 = vrot.slane %v2292, 1
    %v2294 = vadd.f32 %v2292, %v2293
    %v2295 = vadd.f32 %v2287, 0.0
    %v2296 = vadd.f32 %v2294, 0.0
    %v2297 = vld [vmem:[%s1794 + $0x4] sm:$0x7]
    %v2298 = vld [vmem:[%s1794 + $0xa4] sm:$0x7]
    %v2299 = vld [vmem:[%s27 + $0x3] sm:$0x7]
    %v2300 = vmul.f32 %v2297, %v2299
    %v2301 = vmul.f32 %v2298, %v2299
    %v2302 = vsel %vm1829, %v2300, 0.0
    %v2303 = vrot.slane %v2302, 4
    %v2304 = vadd.f32 %v2302, %v2303
    %v2305 = vrot.slane %v2304, 2
    %v2306 = vadd.f32 %v2304, %v2305
    %v2307 = vrot.slane %v2306, 1
    %v2308 = vadd.f32 %v2306, %v2307
    %v2309 = vsel %vm1829, %v2301, 0.0
    %v2310 = vrot.slane %v2309, 4
    %v2311 = vadd.f32 %v2309, %v2310
    %v2312 = vrot.slane %v2311, 2
    %v2313 = vadd.f32 %v2311, %v2312
    %v2314 = vrot.slane %v2313, 1
    %v2315 = vadd.f32 %v2313, %v2314
    %v2316 = vadd.f32 %v2295, %v2308
    %v2317 = vadd.f32 %v2296, %v2315
    %v2318 = vld [vmem:[%s1796 + $0x4] sm:$0x7]
    %v2319 = vld [vmem:[%s1796 + $0xa4] sm:$0x7]
    %v2320 = vld [vmem:[%s27 + $0x6] sm:$0x7]
    %v2321 = vmul.f32 %v2318, %v2320
    %v2322 = vmul.f32 %v2319, %v2320
    %v2323 = vsel %vm1829, %v2321, 0.0
    %v2324 = vrot.slane %v2323, 4
    %v2325 = vadd.f32 %v2323, %v2324
    %v2326 = vrot.slane %v2325, 2
    %v2327 = vadd.f32 %v2325, %v2326
    %v2328 = vrot.slane %v2327, 1
    %v2329 = vadd.f32 %v2327, %v2328
    %v2330 = vsel %vm1829, %v2322, 0.0
    %v2331 = vrot.slane %v2330, 4
    %v2332 = vadd.f32 %v2330, %v2331
    %v2333 = vrot.slane %v2332, 2
    %v2334 = vadd.f32 %v2332, %v2333
    %v2335 = vrot.slane %v2334, 1
    %v2336 = vadd.f32 %v2334, %v2335
    %v2337 = vadd.f32 %v2316, %v2329
    %v2338 = vadd.f32 %v2317, %v2336
    %v2339 = vmul.f32 %v2337, %v1892
    %v2340 = vmul.f32 %v2338, %v1892
    %v2341 = vadd.f32 %v2339, %v1900
    %v2342 = vadd.f32 %v2340, %v1900
    %v2343 = vmax.f32 %v2341, 0.0
    %v2344 = vmax.f32 %v2342, 0.0
    %v2345 = vmin.f32 %v2343, 6.0
    %v2346 = vmin.f32 %v2344, 6.0
    %2347 = vst.msk [vmem:[#allocation5 + $0x6] sm:$0x1] %vm1908, %v2345
    %2348 = vst.msk [vmem:[#allocation5 + $0x16] sm:$0x1] %vm1908, %v2346
    %v2349 = vld [vmem:[%s1792 + $0x6] sm:$0x7]
    %v2350 = vld [vmem:[%s1792 + $0xa6] sm:$0x7]
    %v2351 = vld [vmem:[%s27] sm:$0x7]
    %v2352 = vmul.f32 %v2349, %v2351
    %v2353 = vmul.f32 %v2350, %v2351
    %v2354 = vsel %vm1829, %v2352, 0.0
    %v2355 = vrot.slane %v2354, 4
    %v2356 = vadd.f32 %v2354, %v2355
    %v2357 = vrot.slane %v2356, 2
    %v2358 = vadd.f32 %v2356, %v2357
    %v2359 = vrot.slane %v2358, 1
    %v2360 = vadd.f32 %v2358, %v2359
    %v2361 = vsel %vm1829, %v2353, 0.0
    %v2362 = vrot.slane %v2361, 4
    %v2363 = vadd.f32 %v2361, %v2362
    %v2364 = vrot.slane %v2363, 2
    %v2365 = vadd.f32 %v2363, %v2364
    %v2366 = vrot.slane %v2365, 1
    %v2367 = vadd.f32 %v2365, %v2366
    %v2368 = vadd.f32 %v2360, 0.0
    %v2369 = vadd.f32 %v2367, 0.0
    %v2370 = vld [vmem:[%s1794 + $0x6] sm:$0x7]
    %v2371 = vld [vmem:[%s1794 + $0xa6] sm:$0x7]
    %v2372 = vld [vmem:[%s27 + $0x3] sm:$0x7]
    %v2373 = vmul.f32 %v2370, %v2372
    %v2374 = vmul.f32 %v2371, %v2372
    %v2375 = vsel %vm1829, %v2373, 0.0
    %v2376 = vrot.slane %v2375, 4
    %v2377 = vadd.f32 %v2375, %v2376
    %v2378 = vrot.slane %v2377, 2
    %v2379 = vadd.f32 %v2377, %v2378
    %v2380 = vrot.slane %v2379, 1
    %v2381 = vadd.f32 %v2379, %v2380
    %v2382 = vsel %vm1829, %v2374, 0.0
    %v2383 = vrot.slane %v2382, 4
    %v2384 = vadd.f32 %v2382, %v2383
    %v2385 = vrot.slane %v2384, 2
    %v2386 = vadd.f32 %v2384, %v2385
    %v2387 = vrot.slane %v2386, 1
    %v2388 = vadd.f32 %v2386, %v2387
    %v2389 = vadd.f32 %v2368, %v2381
    %v2390 = vadd.f32 %v2369, %v2388
    %v2391 = vld [vmem:[%s1796 + $0x6] sm:$0x7]
    %v2392 = vld [vmem:[%s1796 + $0xa6] sm:$0x7]
    %v2393 = vld [vmem:[%s27 + $0x6] sm:$0x7]
    %v2394 = vmul.f32 %v2391, %v2393
    %v2395 = vmul.f32 %v2392, %v2393
    %v2396 = vsel %vm1829, %v2394, 0.0
    %v2397 = vrot.slane %v2396, 4
    %v2398 = vadd.f32 %v2396, %v2397
    %v2399 = vrot.slane %v2398, 2
    %v2400 = vadd.f32 %v2398, %v2399
    %v2401 = vrot.slane %v2400, 1
    %v2402 = vadd.f32 %v2400, %v2401
    %v2403 = vsel %vm1829, %v2395, 0.0
    %v2404 = vrot.slane %v2403, 4
    %v2405 = vadd.f32 %v2403, %v2404
    %v2406 = vrot.slane %v2405, 2
    %v2407 = vadd.f32 %v2405, %v2406
    %v2408 = vrot.slane %v2407, 1
    %v2409 = vadd.f32 %v2407, %v2408
    %v2410 = vadd.f32 %v2389, %v2402
    %v2411 = vadd.f32 %v2390, %v2409
    %v2412 = vmul.f32 %v2410, %v1892
    %v2413 = vmul.f32 %v2411, %v1892
    %v2414 = vadd.f32 %v2412, %v1900
    %v2415 = vadd.f32 %v2413, %v1900
    %v2416 = vmax.f32 %v2414, 0.0
    %v2417 = vmax.f32 %v2415, 0.0
    %v2418 = vmin.f32 %v2416, 6.0
    %v2419 = vmin.f32 %v2417, 6.0
    %2420 = vst.msk [vmem:[#allocation5 + $0x7] sm:$0x1] %vm1908, %v2418
    %2421 = vst.msk [vmem:[#allocation5 + $0x17] sm:$0x1] %vm1908, %v2419
    %v2422 = vld [vmem:[%s1796] sm:$0x7]
    %v2423 = vld [vmem:[%s1796 + $0xa0] sm:$0x7]
    %v2424 = vld [vmem:[%s27] sm:$0x7]
    %v2425 = vmul.f32 %v2422, %v2424
    %v2426 = vmul.f32 %v2423, %v2424
    %v2427 = vsel %vm1829, %v2425, 0.0
    %v2428 = vrot.slane %v2427, 4
    %v2429 = vadd.f32 %v2427, %v2428
    %v2430 = vrot.slane %v2429, 2
    %v2431 = vadd.f32 %v2429, %v2430
    %v2432 = vrot.slane %v2431, 1
    %v2433 = vadd.f32 %v2431, %v2432
    %v2434 = vsel %vm1829, %v2426, 0.0
    %v2435 = vrot.slane %v2434, 4
    %v2436 = vadd.f32 %v2434, %v2435
    %v2437 = vrot.slane %v2436, 2
    %v2438 = vadd.f32 %v2436, %v2437
    %v2439 = vrot.slane %v2438, 1
    %v2440 = vadd.f32 %v2438, %v2439
    %v2441 = vadd.f32 %v2433, 0.0
    %v2442 = vadd.f32 %v2440, 0.0
    %v2443 = vld [vmem:[%s1798] sm:$0x7]
    %v2444 = vld [vmem:[%s1798 + $0xa0] sm:$0x7]
    %v2445 = vld [vmem:[%s27 + $0x3] sm:$0x7]
    %v2446 = vmul.f32 %v2443, %v2445
    %v2447 = vmul.f32 %v2444, %v2445
    %v2448 = vsel %vm1829, %v2446, 0.0
    %v2449 = vrot.slane %v2448, 4
    %v2450 = vadd.f32 %v2448, %v2449
    %v2451 = vrot.slane %v2450, 2
    %v2452 = vadd.f32 %v2450, %v2451
    %v2453 = vrot.slane %v2452, 1
    %v2454 = vadd.f32 %v2452, %v2453
    %v2455 = vsel %vm1829, %v2447, 0.0
    %v2456 = vrot.slane %v2455, 4
    %v2457 = vadd.f32 %v2455, %v2456
    %v2458 = vrot.slane %v2457, 2
    %v2459 = vadd.f32 %v2457, %v2458
    %v2460 = vrot.slane %v2459, 1
    %v2461 = vadd.f32 %v2459, %v2460
    %v2462 = vadd.f32 %v2441, %v2454
    %v2463 = vadd.f32 %v2442, %v2461
    %v2464 = vld [vmem:[%s1800] sm:$0x7]
    %v2465 = vld [vmem:[%s1800 + $0xa0] sm:$0x7]
    %v2466 = vld [vmem:[%s27 + $0x6] sm:$0x7]
    %v2467 = vmul.f32 %v2464, %v2466
    %v2468 = vmul.f32 %v2465, %v2466
    %v2469 = vsel %vm1829, %v2467, 0.0
    %v2470 = vrot.slane %v2469, 4
    %v2471 = vadd.f32 %v2469, %v2470
    %v2472 = vrot.slane %v2471, 2
    %v2473 = vadd.f32 %v2471, %v2472
    %v2474 = vrot.slane %v2473, 1
    %v2475 = vadd.f32 %v2473, %v2474
    %v2476 = vsel %vm1829, %v2468, 0.0
    %v2477 = vrot.slane %v2476, 4
    %v2478 = vadd.f32 %v2476, %v2477
    %v2479 = vrot.slane %v2478, 2
    %v2480 = vadd.f32 %v2478, %v2479
    %v2481 = vrot.slane %v2480, 1
    %v2482 = vadd.f32 %v2480, %v2481
    %v2483 = vadd.f32 %v2462, %v2475
    %v2484 = vadd.f32 %v2463, %v2482
    %v2485 = vmul.f32 %v2483, %v1892
    %v2486 = vmul.f32 %v2484, %v1892
    %v2487 = vadd.f32 %v2485, %v1900
    %v2488 = vadd.f32 %v2486, %v1900
    %v2489 = vmax.f32 %v2487, 0.0
    %v2490 = vmax.f32 %v2488, 0.0
    %v2491 = vmin.f32 %v2489, 6.0
    %v2492 = vmin.f32 %v2490, 6.0
    %2493 = vst.msk [vmem:[#allocation5 + $0x8] sm:$0x1] %vm1908, %v2491
    %2494 = vst.msk [vmem:[#allocation5 + $0x18] sm:$0x1] %vm1908, %v2492
    %v2495 = vld [vmem:[%s1796 + $0x2] sm:$0x7]
    %v2496 = vld [vmem:[%s1796 + $0xa2] sm:$0x7]
    %v2497 = vld [vmem:[%s27] sm:$0x7]
    %v2498 = vmul.f32 %v2495, %v2497
    %v2499 = vmul.f32 %v2496, %v2497
    %v2500 = vsel %vm1829, %v2498, 0.0
    %v2501 = vrot.slane %v2500, 4
    %v2502 = vadd.f32 %v2500, %v2501
    %v2503 = vrot.slane %v2502, 2
    %v2504 = vadd.f32 %v2502, %v2503
    %v2505 = vrot.slane %v2504, 1
    %v2506 = vadd.f32 %v2504, %v2505
    %v2507 = vsel %vm1829, %v2499, 0.0
    %v2508 = vrot.slane %v2507, 4
    %v2509 = vadd.f32 %v2507, %v2508
    %v2510 = vrot.slane %v2509, 2
    %v2511 = vadd.f32 %v2509, %v2510
    %v2512 = vrot.slane %v2511, 1
    %v2513 = vadd.f32 %v2511, %v2512
    %v2514 = vadd.f32 %v2506, 0.0
    %v2515 = vadd.f32 %v2513, 0.0
    %v2516 = vld [vmem:[%s1798 + $0x2] sm:$0x7]
    %v2517 = vld [vmem:[%s1798 + $0xa2] sm:$0x7]
    %v2518 = vld [vmem:[%s27 + $0x3] sm:$0x7]
    %v2519 = vmul.f32 %v2516, %v2518
    %v2520 = vmul.f32 %v2517, %v2518
    %v2521 = vsel %vm1829, %v2519, 0.0
    %v2522 = vrot.slane %v2521, 4
    %v2523 = vadd.f32 %v2521, %v2522
    %v2524 = vrot.slane %v2523, 2
    %v2525 = vadd.f32 %v2523, %v2524
    %v2526 = vrot.slane %v2525, 1
    %v2527 = vadd.f32 %v2525, %v2526
    %v2528 = vsel %vm1829, %v2520, 0.0
    %v2529 = vrot.slane %v2528, 4
    %v2530 = vadd.f32 %v2528, %v2529
    %v2531 = vrot.slane %v2530, 2
    %v2532 = vadd.f32 %v2530, %v2531
    %v2533 = vrot.slane %v2532, 1
    %v2534 = vadd.f32 %v2532, %v2533
    %v2535 = vadd.f32 %v2514, %v2527
    %v2536 = vadd.f32 %v2515, %v2534
    %v2537 = vld [vmem:[%s1800 + $0x2] sm:$0x7]
    %v2538 = vld [vmem:[%s1800 + $0xa2] sm:$0x7]
    %v2539 = vld [vmem:[%s27 + $0x6] sm:$0x7]
    %v2540 = vmul.f32 %v2537, %v2539
    %v2541 = vmul.f32 %v2538, %v2539
    %v2542 = vsel %vm1829, %v2540, 0.0
    %v2543 = vrot.slane %v2542, 4
    %v2544 = vadd.f32 %v2542, %v2543
    %v2545 = vrot.slane %v2544, 2
    %v2546 = vadd.f32 %v2544, %v2545
    %v2547 = vrot.slane %v2546, 1
    %v2548 = vadd.f32 %v2546, %v2547
    %v2549 = vsel %vm1829, %v2541, 0.0
    %v2550 = vrot.slane %v2549, 4
    %v2551 = vadd.f32 %v2549, %v2550
    %v2552 = vrot.slane %v2551, 2
    %v2553 = vadd.f32 %v2551, %v2552
    %v2554 = vrot.slane %v2553, 1
    %v2555 = vadd.f32 %v2553, %v2554
    %v2556 = vadd.f32 %v2535, %v2548
    %v2557 = vadd.f32 %v2536, %v2555
    %v2558 = vmul.f32 %v2556, %v1892
    %v2559 = vmul.f32 %v2557, %v1892
    %v2560 = vadd.f32 %v2558, %v1900
    %v2561 = vadd.f32 %v2559, %v1900
    %v2562 = vmax.f32 %v2560, 0.0
    %v2563 = vmax.f32 %v2561, 0.0
    %v2564 = vmin.f32 %v2562, 6.0
    %v2565 = vmin.f32 %v2563, 6.0
    %2566 = vst.msk [vmem:[#allocation5 + $0x9] sm:$0x1] %vm1908, %v2564
    %2567 = vst.msk [vmem:[#allocation5 + $0x19] sm:$0x1] %vm1908, %v2565
    %v2568 = vld [vmem:[%s1796 + $0x4] sm:$0x7]
    %v2569 = vld [vmem:[%s1796 + $0xa4] sm:$0x7]
    %v2570 = vld [vmem:[%s27] sm:$0x7]
    %v2571 = vmul.f32 %v2568, %v2570
    %v2572 = vmul.f32 %v2569, %v2570
    %v2573 = vsel %vm1829, %v2571, 0.0
    %v2574 = vrot.slane %v2573, 4
    %v2575 = vadd.f32 %v2573, %v2574
    %v2576 = vrot.slane %v2575, 2
    %v2577 = vadd.f32 %v2575, %v2576
    %v2578 = vrot.slane %v2577, 1
    %v2579 = vadd.f32 %v2577, %v2578
    %v2580 = vsel %vm1829, %v2572, 0.0
    %v2581 = vrot.slane %v2580, 4
    %v2582 = vadd.f32 %v2580, %v2581
    %v2583 = vrot.slane %v2582, 2
    %v2584 = vadd.f32 %v2582, %v2583
    %v2585 = vrot.slane %v2584, 1
    %v2586 = vadd.f32 %v2584, %v2585
    %v2587 = vadd.f32 %v2579, 0.0
    %v2588 = vadd.f32 %v2586, 0.0
    %v2589 = vld [vmem:[%s1798 + $0x4] sm:$0x7]
    %v2590 = vld [vmem:[%s1798 + $0xa4] sm:$0x7]
    %v2591 = vld [vmem:[%s27 + $0x3] sm:$0x7]
    %v2592 = vmul.f32 %v2589, %v2591
    %v2593 = vmul.f32 %v2590, %v2591
    %v2594 = vsel %vm1829, %v2592, 0.0
    %v2595 = vrot.slane %v2594, 4
    %v2596 = vadd.f32 %v2594, %v2595
    %v2597 = vrot.slane %v2596, 2
    %v2598 = vadd.f32 %v2596, %v2597
    %v2599 = vrot.slane %v2598, 1
    %v2600 = vadd.f32 %v2598, %v2599
    %v2601 = vsel %vm1829, %v2593, 0.0
    %v2602 = vrot.slane %v2601, 4
    %v2603 = vadd.f32 %v2601, %v2602
    %v2604 = vrot.slane %v2603, 2
    %v2605 = vadd.f32 %v2603, %v2604
    %v2606 = vrot.slane %v2605, 1
    %v2607 = vadd.f32 %v2605, %v2606
    %v2608 = vadd.f32 %v2587, %v2600
    %v2609 = vadd.f32 %v2588, %v2607
    %v2610 = vld [vmem:[%s1800 + $0x4] sm:$0x7]
    %v2611 = vld [vmem:[%s1800 + $0xa4] sm:$0x7]
    %v2612 = vld [vmem:[%s27 + $0x6] sm:$0x7]
    %v2613 = vmul.f32 %v2610, %v2612
    %v2614 = vmul.f32 %v2611, %v2612
    %v2615 = vsel %vm1829, %v2613, 0.0
    %v2616 = vrot.slane %v2615, 4
    %v2617 = vadd.f32 %v2615, %v2616
    %v2618 = vrot.slane %v2617, 2
    %v2619 = vadd.f32 %v2617, %v2618
    %v2620 = vrot.slane %v2619, 1
    %v2621 = vadd.f32 %v2619, %v2620
    %v2622 = vsel %vm1829, %v2614, 0.0
    %v2623 = vrot.slane %v2622, 4
    %v2624 = vadd.f32 %v2622, %v2623
    %v2625 = vrot.slane %v2624, 2
    %v2626 = vadd.f32 %v2624, %v2625
    %v2627 = vrot.slane %v2626, 1
    %v2628 = vadd.f32 %v2626, %v2627
    %v2629 = vadd.f32 %v2608, %v2621
    %v2630 = vadd.f32 %v2609, %v2628
    %v2631 = vmul.f32 %v2629, %v1892
    %v2632 = vmul.f32 %v2630, %v1892
    %v2633 = vadd.f32 %v2631, %v1900
    %v2634 = vadd.f32 %v2632, %v1900
    %v2635 = vmax.f32 %v2633, 0.0
    %v2636 = vmax.f32 %v2634, 0.0
    %v2637 = vmin.f32 %v2635, 6.0
    %v2638 = vmin.f32 %v2636, 6.0
    %2639 = vst.msk [vmem:[#allocation5 + $0xa] sm:$0x1] %vm1908, %v2637
    %2640 = vst.msk [vmem:[#allocation5 + $0x1a] sm:$0x1] %vm1908, %v2638
    %v2641 = vld [vmem:[%s1796 + $0x6] sm:$0x7]
    %v2642 = vld [vmem:[%s1796 + $0xa6] sm:$0x7]
    %v2643 = vld [vmem:[%s27] sm:$0x7]
    %v2644 = vmul.f32 %v2641, %v2643
    %v2645 = vmul.f32 %v2642, %v2643
    %v2646 = vsel %vm1829, %v2644, 0.0
    %v2647 = vrot.slane %v2646, 4
    %v2648 = vadd.f32 %v2646, %v2647
    %v2649 = vrot.slane %v2648, 2
    %v2650 = vadd.f32 %v2648, %v2649
    %v2651 = vrot.slane %v2650, 1
    %v2652 = vadd.f32 %v2650, %v2651
    %v2653 = vsel %vm1829, %v2645, 0.0
    %v2654 = vrot.slane %v2653, 4
    %v2655 = vadd.f32 %v2653, %v2654
    %v2656 = vrot.slane %v2655, 2
    %v2657 = vadd.f32 %v2655, %v2656
    %v2658 = vrot.slane %v2657, 1
    %v2659 = vadd.f32 %v2657, %v2658
    %v2660 = vadd.f32 %v2652, 0.0
    %v2661 = vadd.f32 %v2659, 0.0
    %v2662 = vld [vmem:[%s1798 + $0x6] sm:$0x7]
    %v2663 = vld [vmem:[%s1798 + $0xa6] sm:$0x7]
    %v2664 = vld [vmem:[%s27 + $0x3] sm:$0x7]
    %v2665 = vmul.f32 %v2662, %v2664
    %v2666 = vmul.f32 %v2663, %v2664
    %v2667 = vsel %vm1829, %v2665, 0.0
    %v2668 = vrot.slane %v2667, 4
    %v2669 = vadd.f32 %v2667, %v2668
    %v2670 = vrot.slane %v2669, 2
    %v2671 = vadd.f32 %v2669, %v2670
    %v2672 = vrot.slane %v2671, 1
    %v2673 = vadd.f32 %v2671, %v2672
    %v2674 = vsel %vm1829, %v2666, 0.0
    %v2675 = vrot.slane %v2674, 4
    %v2676 = vadd.f32 %v2674, %v2675
    %v2677 = vrot.slane %v2676, 2
    %v2678 = vadd.f32 %v2676, %v2677
    %v2679 = vrot.slane %v2678, 1
    %v2680 = vadd.f32 %v2678, %v2679
    %v2681 = vadd.f32 %v2660, %v2673
    %v2682 = vadd.f32 %v2661, %v2680
    %v2683 = vld [vmem:[%s1800 + $0x6] sm:$0x7]
    %v2684 = vld [vmem:[%s1800 + $0xa6] sm:$0x7]
    %v2685 = vld [vmem:[%s27 + $0x6] sm:$0x7]
    %v2686 = vmul.f32 %v2683, %v2685
    %v2687 = vmul.f32 %v2684, %v2685
    %v2688 = vsel %vm1829, %v2686, 0.0
    %v2689 = vrot.slane %v2688, 4
    %v2690 = vadd.f32 %v2688, %v2689
    %v2691 = vrot.slane %v2690, 2
    %v2692 = vadd.f32 %v2690, %v2691
    %v2693 = vrot.slane %v2692, 1
    %v2694 = vadd.f32 %v2692, %v2693
    %v2695 = vsel %vm1829, %v2687, 0.0
    %v2696 = vrot.slane %v2695, 4
    %v2697 = vadd.f32 %v2695, %v2696
    %v2698 = vrot.slane %v2697, 2
    %v2699 = vadd.f32 %v2697, %v2698
    %v2700 = vrot.slane %v2699, 1
    %v2701 = vadd.f32 %v2699, %v2700
    %v2702 = vadd.f32 %v2681, %v2694
    %v2703 = vadd.f32 %v2682, %v2701
    %v2704 = vmul.f32 %v2702, %v1892
    %v2705 = vmul.f32 %v2703, %v1892
    %v2706 = vadd.f32 %v2704, %v1900
    %v2707 = vadd.f32 %v2705, %v1900
    %v2708 = vmax.f32 %v2706, 0.0
    %v2709 = vmax.f32 %v2707, 0.0
    %v2710 = vmin.f32 %v2708, 6.0
    %v2711 = vmin.f32 %v2709, 6.0
    %2712 = vst.msk [vmem:[#allocation5 + $0xb] sm:$0x1] %vm1908, %v2710
    %2713 = vst.msk [vmem:[#allocation5 + $0x1b] sm:$0x1] %vm1908, %v2711
    %v2714 = vld [vmem:[%s1800] sm:$0x7]
    %v2715 = vld [vmem:[%s1800 + $0xa0] sm:$0x7]
    %v2716 = vld [vmem:[%s27] sm:$0x7]
    %v2717 = vmul.f32 %v2714, %v2716
    %v2718 = vmul.f32 %v2715, %v2716
    %v2719 = vsel %vm1829, %v2717, 0.0
    %v2720 = vrot.slane %v2719, 4
    %v2721 = vadd.f32 %v2719, %v2720
    %v2722 = vrot.slane %v2721, 2
    %v2723 = vadd.f32 %v2721, %v2722
    %v2724 = vrot.slane %v2723, 1
    %v2725 = vadd.f32 %v2723, %v2724
    %v2726 = vsel %vm1829, %v2718, 0.0
    %v2727 = vrot.slane %v2726, 4
    %v2728 = vadd.f32 %v2726, %v2727
    %v2729 = vrot.slane %v2728, 2
    %v2730 = vadd.f32 %v2728, %v2729
    %v2731 = vrot.slane %v2730, 1
    %v2732 = vadd.f32 %v2730, %v2731
    %v2733 = vadd.f32 %v2725, 0.0
    %v2734 = vadd.f32 %v2732, 0.0
    %v2735 = vld [vmem:[%s1802] sm:$0x7]
    %v2736 = vld [vmem:[%s1802 + $0xa0] sm:$0x7]
    %v2737 = vld [vmem:[%s27 + $0x3] sm:$0x7]
    %v2738 = vmul.f32 %v2735, %v2737
    %v2739 = vmul.f32 %v2736, %v2737
    %v2740 = vsel %vm1829, %v2738, 0.0
    %v2741 = vrot.slane %v2740, 4
    %v2742 = vadd.f32 %v2740, %v2741
    %v2743 = vrot.slane %v2742, 2
    %v2744 = vadd.f32 %v2742, %v2743
    %v2745 = vrot.slane %v2744, 1
    %v2746 = vadd.f32 %v2744, %v2745
    %v2747 = vsel %vm1829, %v2739, 0.0
    %v2748 = vrot.slane %v2747, 4
    %v2749 = vadd.f32 %v2747, %v2748
    %v2750 = vrot.slane %v2749, 2
    %v2751 = vadd.f32 %v2749, %v2750
    %v2752 = vrot.slane %v2751, 1
    %v2753 = vadd.f32 %v2751, %v2752
    %v2754 = vadd.f32 %v2733, %v2746
    %v2755 = vadd.f32 %v2734, %v2753
    %v2756 = vld [vmem:[%s1804] sm:$0x7]
    %v2757 = vld [vmem:[%s1804 + $0xa0] sm:$0x7]
    %v2758 = vld [vmem:[%s27 + $0x6] sm:$0x7]
    %v2759 = vmul.f32 %v2756, %v2758
    %v2760 = vmul.f32 %v2757, %v2758
    %v2761 = vsel %vm1829, %v2759, 0.0
    %v2762 = vrot.slane %v2761, 4
    %v2763 = vadd.f32 %v2761, %v2762
    %v2764 = vrot.slane %v2763, 2
    %v2765 = vadd.f32 %v2763, %v2764
    %v2766 = vrot.slane %v2765, 1
    %v2767 = vadd.f32 %v2765, %v2766
    %v2768 = vsel %vm1829, %v2760, 0.0
    %v2769 = vrot.slane %v2768, 4
    %v2770 = vadd.f32 %v2768, %v2769
    %v2771 = vrot.slane %v2770, 2
    %v2772 = vadd.f32 %v2770, %v2771
    %v2773 = vrot.slane %v2772, 1
    %v2774 = vadd.f32 %v2772, %v2773
    %v2775 = vadd.f32 %v2754, %v2767
    %v2776 = vadd.f32 %v2755, %v2774
    %v2777 = vmul.f32 %v2775, %v1892
    %v2778 = vmul.f32 %v2776, %v1892
    %v2779 = vadd.f32 %v2777, %v1900
    %v2780 = vadd.f32 %v2778, %v1900
    %v2781 = vmax.f32 %v2779, 0.0
    %v2782 = vmax.f32 %v2780, 0.0
    %v2783 = vmin.f32 %v2781, 6.0
    %v2784 = vmin.f32 %v2782, 6.0
    %2785 = vst.msk [vmem:[#allocation5 + $0xc] sm:$0x1] %vm1908, %v2783
    %2786 = vst.msk [vmem:[#allocation5 + $0x1c] sm:$0x1] %vm1908, %v2784
    %v2787 = vld [vmem:[%s1800 + $0x2] sm:$0x7]
    %v2788 = vld [vmem:[%s1800 + $0xa2] sm:$0x7]
    %v2789 = vld [vmem:[%s27] sm:$0x7]
    %v2790 = vmul.f32 %v2787, %v2789
    %v2791 = vmul.f32 %v2788, %v2789
    %v2792 = vsel %vm1829, %v2790, 0.0
    %v2793 = vrot.slane %v2792, 4
    %v2794 = vadd.f32 %v2792, %v2793
    %v2795 = vrot.slane %v2794, 2
    %v2796 = vadd.f32 %v2794, %v2795
    %v2797 = vrot.slane %v2796, 1
    %v2798 = vadd.f32 %v2796, %v2797
    %v2799 = vsel %vm1829, %v2791, 0.0
    %v2800 = vrot.slane %v2799, 4
    %v2801 = vadd.f32 %v2799, %v2800
    %v2802 = vrot.slane %v2801, 2
    %v2803 = vadd.f32 %v2801, %v2802
    %v2804 = vrot.slane %v2803, 1
    %v2805 = vadd.f32 %v2803, %v2804
    %v2806 = vadd.f32 %v2798, 0.0
    %v2807 = vadd.f32 %v2805, 0.0
    %v2808 = vld [vmem:[%s1802 + $0x2] sm:$0x7]
    %v2809 = vld [vmem:[%s1802 + $0xa2] sm:$0x7]
    %v2810 = vld [vmem:[%s27 + $0x3] sm:$0x7]
    %v2811 = vmul.f32 %v2808, %v2810
    %v2812 = vmul.f32 %v2809, %v2810
    %v2813 = vsel %vm1829, %v2811, 0.0
    %v2814 = vrot.slane %v2813, 4
    %v2815 = vadd.f32 %v2813, %v2814
    %v2816 = vrot.slane %v2815, 2
    %v2817 = vadd.f32 %v2815, %v2816
    %v2818 = vrot.slane %v2817, 1
    %v2819 = vadd.f32 %v2817, %v2818
    %v2820 = vsel %vm1829, %v2812, 0.0
    %v2821 = vrot.slane %v2820, 4
    %v2822 = vadd.f32 %v2820, %v2821
    %v2823 = vrot.slane %v2822, 2
    %v2824 = vadd.f32 %v2822, %v2823
    %v2825 = vrot.slane %v2824, 1
    %v2826 = vadd.f32 %v2824, %v2825
    %v2827 = vadd.f32 %v2806, %v2819
    %v2828 = vadd.f32 %v2807, %v2826
    %v2829 = vld [vmem:[%s1804 + $0x2] sm:$0x7]
    %v2830 = vld [vmem:[%s1804 + $0xa2] sm:$0x7]
    %v2831 = vld [vmem:[%s27 + $0x6] sm:$0x7]
    %v2832 = vmul.f32 %v2829, %v2831
    %v2833 = vmul.f32 %v2830, %v2831
    %v2834 = vsel %vm1829, %v2832, 0.0
    %v2835 = vrot.slane %v2834, 4
    %v2836 = vadd.f32 %v2834, %v2835
    %v2837 = vrot.slane %v2836, 2
    %v2838 = vadd.f32 %v2836, %v2837
    %v2839 = vrot.slane %v2838, 1
    %v2840 = vadd.f32 %v2838, %v2839
    %v2841 = vsel %vm1829, %v2833, 0.0
    %v2842 = vrot.slane %v2841, 4
    %v2843 = vadd.f32 %v2841, %v2842
    %v2844 = vrot.slane %v2843, 2
    %v2845 = vadd.f32 %v2843, %v2844
    %v2846 = vrot.slane %v2845, 1
    %v2847 = vadd.f32 %v2845, %v2846
    %v2848 = vadd.f32 %v2827, %v2840
    %v2849 = vadd.f32 %v2828, %v2847
    %v2850 = vmul.f32 %v2848, %v1892
    %v2851 = vmul.f32 %v2849, %v1892
    %v2852 = vadd.f32 %v2850, %v1900
    %v2853 = vadd.f32 %v2851, %v1900
    %v2854 = vmax.f32 %v2852, 0.0
    %v2855 = vmax.f32 %v2853, 0.0
    %v2856 = vmin.f32 %v2854, 6.0
    %v2857 = vmin.f32 %v2855, 6.0
    %2858 = vst.msk [vmem:[#allocation5 + $0xd] sm:$0x1] %vm1908, %v2856
    %2859 = vst.msk [vmem:[#allocation5 + $0x1d] sm:$0x1] %vm1908, %v2857
    %v2860 = vld [vmem:[%s1800 + $0x4] sm:$0x7]
    %v2861 = vld [vmem:[%s1800 + $0xa4] sm:$0x7]
    %v2862 = vld [vmem:[%s27] sm:$0x7]
    %v2863 = vmul.f32 %v2860, %v2862
    %v2864 = vmul.f32 %v2861, %v2862
    %v2865 = vsel %vm1829, %v2863, 0.0
    %v2866 = vrot.slane %v2865, 4
    %v2867 = vadd.f32 %v2865, %v2866
    %v2868 = vrot.slane %v2867, 2
    %v2869 = vadd.f32 %v2867, %v2868
    %v2870 = vrot.slane %v2869, 1
    %v2871 = vadd.f32 %v2869, %v2870
    %v2872 = vsel %vm1829, %v2864, 0.0
    %v2873 = vrot.slane %v2872, 4
    %v2874 = vadd.f32 %v2872, %v2873
    %v2875 = vrot.slane %v2874, 2
    %v2876 = vadd.f32 %v2874, %v2875
    %v2877 = vrot.slane %v2876, 1
    %v2878 = vadd.f32 %v2876, %v2877
    %v2879 = vadd.f32 %v2871, 0.0
    %v2880 = vadd.f32 %v2878, 0.0
    %v2881 = vld [vmem:[%s1802 + $0x4] sm:$0x7]
    %v2882 = vld [vmem:[%s1802 + $0xa4] sm:$0x7]
    %v2883 = vld [vmem:[%s27 + $0x3] sm:$0x7]
    %v2884 = vmul.f32 %v2881, %v2883
    %v2885 = vmul.f32 %v2882, %v2883
    %v2886 = vsel %vm1829, %v2884, 0.0
    %v2887 = vrot.slane %v2886, 4
    %v2888 = vadd.f32 %v2886, %v2887
    %v2889 = vrot.slane %v2888, 2
    %v2890 = vadd.f32 %v2888, %v2889
    %v2891 = vrot.slane %v2890, 1
    %v2892 = vadd.f32 %v2890, %v2891
    %v2893 = vsel %vm1829, %v2885, 0.0
    %v2894 = vrot.slane %v2893, 4
    %v2895 = vadd.f32 %v2893, %v2894
    %v2896 = vrot.slane %v2895, 2
    %v2897 = vadd.f32 %v2895, %v2896
    %v2898 = vrot.slane %v2897, 1
    %v2899 = vadd.f32 %v2897, %v2898
    %v2900 = vadd.f32 %v2879, %v2892
    %v2901 = vadd.f32 %v2880, %v2899
    %v2902 = vld [vmem:[%s1804 + $0x4] sm:$0x7]
    %v2903 = vld [vmem:[%s1804 + $0xa4] sm:$0x7]
    %v2904 = vld [vmem:[%s27 + $0x6] sm:$0x7]
    %v2905 = vmul.f32 %v2902, %v2904
    %v2906 = vmul.f32 %v2903, %v2904
    %v2907 = vsel %vm1829, %v2905, 0.0
    %v2908 = vrot.slane %v2907, 4
    %v2909 = vadd.f32 %v2907, %v2908
    %v2910 = vrot.slane %v2909, 2
    %v2911 = vadd.f32 %v2909, %v2910
    %v2912 = vrot.slane %v2911, 1
    %v2913 = vadd.f32 %v2911, %v2912
    %v2914 = vsel %vm1829, %v2906, 0.0
    %v2915 = vrot.slane %v2914, 4
    %v2916 = vadd.f32 %v2914, %v2915
    %v2917 = vrot.slane %v2916, 2
    %v2918 = vadd.f32 %v2916, %v2917
    %v2919 = vrot.slane %v2918, 1
    %v2920 = vadd.f32 %v2918, %v2919
    %v2921 = vadd.f32 %v2900, %v2913
    %v2922 = vadd.f32 %v2901, %v2920
    %v2923 = vmul.f32 %v2921, %v1892
    %v2924 = vmul.f32 %v2922, %v1892
    %v2925 = vadd.f32 %v2923, %v1900
    %v2926 = vadd.f32 %v2924, %v1900
    %v2927 = vmax.f32 %v2925, 0.0
    %v2928 = vmax.f32 %v2926, 0.0
    %v2929 = vmin.f32 %v2927, 6.0
    %v2930 = vmin.f32 %v2928, 6.0
    %2931 = vst.msk [vmem:[#allocation5 + $0xe] sm:$0x1] %vm1908, %v2929
    %2932 = vst.msk [vmem:[#allocation5 + $0x1e] sm:$0x1] %vm1908, %v2930
    %v2933 = vld [vmem:[%s1800 + $0x6] sm:$0x7]
    %v2934 = vld [vmem:[%s1800 + $0xa6] sm:$0x7]
    %v2935 = vld [vmem:[%s27] sm:$0x7]
    %v2936 = vmul.f32 %v2933, %v2935
    %v2937 = vmul.f32 %v2934, %v2935
    %v2938 = vsel %vm1829, %v2936, 0.0
    %v2939 = vrot.slane %v2938, 4
    %v2940 = vadd.f32 %v2938, %v2939
    %v2941 = vrot.slane %v2940, 2
    %v2942 = vadd.f32 %v2940, %v2941
    %v2943 = vrot.slane %v2942, 1
    %v2944 = vadd.f32 %v2942, %v2943
    %v2945 = vsel %vm1829, %v2937, 0.0
    %v2946 = vrot.slane %v2945, 4
    %v2947 = vadd.f32 %v2945, %v2946
    %v2948 = vrot.slane %v2947, 2
    %v2949 = vadd.f32 %v2947, %v2948
    %v2950 = vrot.slane %v2949, 1
    %v2951 = vadd.f32 %v2949, %v2950
    %v2952 = vadd.f32 %v2944, 0.0
    %v2953 = vadd.f32 %v2951, 0.0
    %v2954 = vld [vmem:[%s1802 + $0x6] sm:$0x7]
    %v2955 = vld [vmem:[%s1802 + $0xa6] sm:$0x7]
    %v2956 = vld [vmem:[%s27 + $0x3] sm:$0x7]
    %v2957 = vmul.f32 %v2954, %v2956
    %v2958 = vmul.f32 %v2955, %v2956
    %v2959 = vsel %vm1829, %v2957, 0.0
    %v2960 = vrot.slane %v2959, 4
    %v2961 = vadd.f32 %v2959, %v2960
    %v2962 = vrot.slane %v2961, 2
    %v2963 = vadd.f32 %v2961, %v2962
    %v2964 = vrot.slane %v2963, 1
    %v2965 = vadd.f32 %v2963, %v2964
    %v2966 = vsel %vm1829, %v2958, 0.0
    %v2967 = vrot.slane %v2966, 4
    %v2968 = vadd.f32 %v2966, %v2967
    %v2969 = vrot.slane %v2968, 2
    %v2970 = vadd.f32 %v2968, %v2969
    %v2971 = vrot.slane %v2970, 1
    %v2972 = vadd.f32 %v2970, %v2971
    %v2973 = vadd.f32 %v2952, %v2965
    %v2974 = vadd.f32 %v2953, %v2972
    %v2975 = vld [vmem:[%s1804 + $0x6] sm:$0x7]
    %v2976 = vld [vmem:[%s1804 + $0xa6] sm:$0x7]
    %v2977 = vld [vmem:[%s27 + $0x6] sm:$0x7]
    %v2978 = vmul.f32 %v2975, %v2977
    %v2979 = vmul.f32 %v2976, %v2977
    %v2980 = vsel %vm1829, %v2978, 0.0
    %v2981 = vrot.slane %v2980, 4
    %v2982 = vadd.f32 %v2980, %v2981
    %v2983 = vrot.slane %v2982, 2
    %v2984 = vadd.f32 %v2982, %v2983
    %v2985 = vrot.slane %v2984, 1
    %v2986 = vadd.f32 %v2984, %v2985
    %v2987 = vsel %vm1829, %v2979, 0.0
    %v2988 = vrot.slane %v2987, 4
    %v2989 = vadd.f32 %v2987, %v2988
    %v2990 = vrot.slane %v2989, 2
    %v2991 = vadd.f32 %v2989, %v2990
    %v2992 = vrot.slane %v2991, 1
    %v2993 = vadd.f32 %v2991, %v2992
    %v2994 = vadd.f32 %v2973, %v2986
    %v2995 = vadd.f32 %v2974, %v2993
    %v2996 = vmul.f32 %v2994, %v1892
    %v2997 = vmul.f32 %v2995, %v1892
    %v2998 = vadd.f32 %v2996, %v1900
    %v2999 = vadd.f32 %v2997, %v1900
    %v3000 = vmax.f32 %v2998, 0.0
    %v3001 = vmax.f32 %v2999, 0.0
    %v3002 = vmin.f32 %v3000, 6.0
    %v3003 = vmin.f32 %v3001, 6.0
    %3004 = vst.msk [vmem:[#allocation5 + $0xf] sm:$0x1] %vm1908, %v3002
    %3005 = vst.msk [vmem:[#allocation5 + $0x1f] sm:$0x1] %vm1908, %v3003
    %v3006 = vld [vmem:[#allocation5] sm:$0xff]
    %v3007 = vld [vmem:[#allocation5 + $0x8] sm:$0xff]
    %v3008 = vld [vmem:[#allocation5 + $0x10] sm:$0xff]
    %v3009 = vld [vmem:[#allocation5 + $0x18] sm:$0xff]
    %v3010 = vpack.c.bf16 %v3007, %v3006
    %v3011 = vpack.c.bf16 %v3009, %v3008
    %v3012 = vld [vmem:[%s33] sm:$0xf]
    %v3013 = vld [vmem:[%s33 + $0x4] sm:$0xf]
    %v3014 = vld [vmem:[%s33 + $0x8] sm:$0xf]
    %v3015 = vld [vmem:[%s33 + $0xc] sm:$0xf]
    %v3016 = vld [vmem:[%s33 + $0x10] sm:$0xf]
    %v3017 = vld [vmem:[%s33 + $0x14] sm:$0xf]
    %v3018 = vld [vmem:[%s33 + $0x18] sm:$0xf]
    %v3019 = vld [vmem:[%s33 + $0x1c] sm:$0xf]
    %v3020 = vld [vmem:[%s33 + $0x20] sm:$0xf]
    %v3021 = vld [vmem:[%s33 + $0x24] sm:$0xf]
    %v3022 = vld [vmem:[%s33 + $0x28] sm:$0xf]
    %v3023 = vld [vmem:[%s33 + $0x2c] sm:$0xf]
    %v3036 = vunpack.c.l.b16 %v3012
    %v3037 = vunpack.c.l.b16 %v3013
    %v3038 = vunpack.c.l.b16 %v3014
    %v3039 = vunpack.c.l.b16 %v3015
    %v3040 = vunpack.c.l.b16 %v3016
    %v3041 = vunpack.c.l.b16 %v3017
    %v3042 = vunpack.c.l.b16 %v3018
    %v3043 = vunpack.c.l.b16 %v3019
    %v3044 = vunpack.c.l.b16 %v3020
    %v3045 = vunpack.c.l.b16 %v3021
    %v3046 = vunpack.c.l.b16 %v3022
    %v3047 = vunpack.c.l.b16 %v3023
    %v3048 = vpack.c.b16 %v3037, %v3036
    %v3049 = vpack.c.b16 %v3039, %v3038
    %v3050 = vpack.c.b16 %v3041, %v3040
    %v3051 = vpack.c.b16 %v3043, %v3042
    %v3052 = vpack.c.b16 %v3045, %v3044
    %v3053 = vpack.c.b16 %v3047, %v3046
    %v3061 = vsel %vm1748, %v3010, 0
    %v3064 = vsel %vm1748, %v3011, 0
    %3066 = vmatprep.subr.bf16.mxu0 0
    %3067 = vmatpush1.bf16.msra.mxu0 0
    %3068 = vmatprep.subr.bf16.mxu0 0
    %3069 = vmatpush1.bf16.msra.mxu0 0
    %3070 = vmatprep.subr.bf16.mxu0 0
    %3071 = vmatpush1.bf16.msra.mxu0 %v3053
    %3072 = vmatprep.subr.bf16.mxu0 0
    %3073 = vmatpush1.bf16.msra.mxu0 %v3052
    %3074 = vmatprep.subr.bf16.mxu0 0
    %3075 = vmatpush1.bf16.msra.mxu0 %v3051
    %3076 = vmatprep.subr.bf16.mxu0 0
    %3077 = vmatpush1.bf16.msra.mxu0 %v3050
    %3078 = vmatprep.subr.bf16.mxu0 0
    %3079 = vmatpush1.bf16.msra.mxu0 %v3049
    %3080 = vmatprep.subr.bf16.mxu0 0
    %3081 = vmatpush1.bf16.msra.mxu0 %v3048
    %3082 = vmatprep.subr.bf16.mxu0 0
    %3083 = vmatpush2.bf16.msra.mxu0 0
    %3084 = vmatprep.subr.bf16.mxu0 0
    %3085 = vmatpush2.bf16.msra.mxu0 0
    %3086 = vmatprep.subr.bf16.mxu0 0
    %3087 = vmatpush2.bf16.msra.mxu0 0
    %3088 = vmatprep.subr.bf16.mxu0 0
    %3089 = vmatpush2.bf16.msra.mxu0 0
    %3090 = vmatprep.subr.bf16.mxu0 0
    %3091 = vmatpush2.bf16.msra.mxu0 0
    %3092 = vmatprep.subr.bf16.mxu0 0
    %3093 = vmatpush2.bf16.msra.mxu0 0
    %3094 = vmatprep.subr.bf16.mxu0 0
    %3095 = vmatpush2.bf16.msra.mxu0 0
    %3096 = vmatprep.subr.bf16.mxu0 0
    %3097 = vmatpush2.bf16.msra.mxu0 0
    %3098 = vmatprep.mubr.bf16.mxu0 0
    %3099 = vmatmul.mubr.bf16.gmra.mxu0 %v3061
    %v3100 = vpop.f32.mrf.mxu0
    %v3101 = vadd.f32 0.0, %v3100
    %v3102 = vpop.f32.mrf.mxu0
    %v3103 = vpop.f32.mrf.mxu0
    %v3104 = vadd.f32 0.0, %v3103
    %v3105 = vpop.f32.mrf.mxu0
    %3106 = vmatprep.mubr.bf16.mxu0 0
    %3107 = vmatmul.mubr.bf16.gmra.mxu0 %v3064
    %v3108 = vpop.f32.mrf.mxu0
    %v3109 = vadd.f32 0.0, %v3108
    %v3110 = vpop.f32.mrf.mxu0
    %v3111 = vpop.f32.mrf.mxu0
    %v3112 = vadd.f32 0.0, %v3111
    %v3113 = vpop.f32.mrf.mxu0
    %3114 = vdwg.mxu0
    %v3115 = vld [vmem:[#allocation31] sm:$0x1]
    %v3117 = vlaneseq
    %v3118 = vshrl.u32 %v3117, 7
    %v3119 = vsub.s32 0, %v3118
    %v3120 = vrot.slane %v3115, %v3119
    %v3122 = vmul.f32 %v3101, %v3120
    %v3123 = vmul.f32 %v3104, %v3120
    %v3124 = vmul.f32 %v3109, %v3120
    %v3125 = vmul.f32 %v3112, %v3120
    %v3126 = vld [vmem:[#allocation32] sm:$0x1]
    %v3128 = vlaneseq
    %v3129 = vshrl.u32 %v3128, 7
    %v3130 = vsub.s32 0, %v3129
    %v3131 = vrot.slane %v3126, %v3130
    %v3133 = vadd.f32 %v3122, %v3131
    %v3134 = vadd.f32 %v3123, %v3131
    %v3135 = vadd.f32 %v3124, %v3131
    %v3136 = vadd.f32 %v3125, %v3131
    %v3137 = vpack.c.bf16 %v3134, %v3133
    %v3138 = vpack.c.bf16 %v3136, %v3135
    %v3139 = vld [vmem:[%s39] sm:$0xff]
    %v3140 = vld [vmem:[%s39 + $0x8] sm:$0xff]
    %v3141 = vld [vmem:[%s39 + $0x10] sm:$0xff]
    %v3145 = vunpack.c.l.b16 %v3139
    %v3146 = vunpack.c.h.b16 %v3139
    %v3147 = vunpack.c.l.b16 %v3140
    %v3148 = vunpack.c.h.b16 %v3140
    %v3149 = vunpack.c.l.b16 %v3141
    %v3150 = vunpack.c.h.b16 %v3141
    %v3151 = vpack.c.b16 %v3147, %v3145
    %v3152 = vpack.c.b16 %v3148, %v3146
    %v3153 = vpack.c.b16 %v3149, %v3149
    %v3154 = vpack.c.b16 %v3150, %v3150
    %vm3157 = vcmask 195584
    %v3159 = vsel %vm3157, %v3137, 0
    %v3162 = vsel %vm3157, %v3138, 0
    %vm3164 = vcmask 1043456
    %v3166 = vsel %vm3164, %v3153, 0
    %v3169 = vsel %vm3164, %v3154, 0
    %3171 = vmatprep.subr.bf16.mxu0 0
    %3172 = vmatpush1.bf16.msra.mxu0 0
    %3173 = vmatprep.subr.bf16.mxu0 0
    %3174 = vmatpush1.bf16.msra.mxu0 0
    %3175 = vmatprep.subr.bf16.mxu0 0
    %3176 = vmatpush1.bf16.msra.mxu0 0
    %3177 = vmatprep.subr.bf16.mxu0 0
    %3178 = vmatpush1.bf16.msra.mxu0 0
    %3179 = vmatprep.subr.bf16.mxu0 0
    %3180 = vmatpush1.bf16.msra.mxu0 0
    %3181 = vmatprep.subr.bf16.mxu0 0
    %3182 = vmatpush1.bf16.msra.mxu0 0
    %3183 = vmatprep.subr.bf16.mxu0 %v3169
    %3184 = vmatpush1.bf16.msra.mxu0 %v3166
    %3185 = vmatprep.subr.bf16.mxu0 %v3152
    %3186 = vmatpush1.bf16.msra.mxu0 %v3151
    %3187 = vmatprep.subr.bf16.mxu0 0
    %3188 = vmatpush2.bf16.msra.mxu0 0
    %3189 = vmatprep.subr.bf16.mxu0 0
    %3190 = vmatpush2.bf16.msra.mxu0 0
    %3191 = vmatprep.subr.bf16.mxu0 0
    %3192 = vmatpush2.bf16.msra.mxu0 0
    %3193 = vmatprep.subr.bf16.mxu0 0
    %3194 = vmatpush2.bf16.msra.mxu0 0
    %3195 = vmatprep.subr.bf16.mxu0 0
    %3196 = vmatpush2.bf16.msra.mxu0 0
    %3197 = vmatprep.subr.bf16.mxu0 0
    %3198 = vmatpush2.bf16.msra.mxu0 0
    %3199 = vmatprep.subr.bf16.mxu0 0
    %3200 = vmatpush2.bf16.msra.mxu0 0
    %3201 = vmatprep.subr.bf16.mxu0 0
    %3202 = vmatpush2.bf16.msra.mxu0 0
    %3203 = vmatprep.mubr.bf16.mxu0 0
    %3204 = vmatmul.mubr.bf16.gmra.mxu0 %v3159
    %v3205 = vpop.f32.mrf.mxu0
    %v3206 = vadd.f32 0.0, %v3205
    %v3207 = vpop.f32.mrf.mxu0
    %v3208 = vadd.f32 0.0, %v3207
    %v3209 = vpop.f32.mrf.mxu0
    %v3210 = vadd.f32 0.0, %v3209
    %v3211 = vpop.f32.mrf.mxu0
    %v3212 = vadd.f32 0.0, %v3211
    %3213 = vmatprep.mubr.bf16.mxu0 0
    %3214 = vmatmul.mubr.bf16.gmra.mxu0 %v3162
    %v3215 = vpop.f32.mrf.mxu0
    %v3216 = vadd.f32 0.0, %v3215
    %v3217 = vpop.f32.mrf.mxu0
    %v3218 = vadd.f32 0.0, %v3217
    %v3219 = vpop.f32.mrf.mxu0
    %v3220 = vadd.f32 0.0, %v3219
    %v3221 = vpop.f32.mrf.mxu0
    %v3222 = vadd.f32 0.0, %v3221
    %3223 = vdwg.mxu0
    %v3224 = vld [vmem:[%s41] sm:$0x3]
    %v3226 = vlaneseq
    %v3227 = vshrl.u32 %v3226, 7
    %v3228 = vsub.s32 0, %v3227
    %v3229 = vrot.slane %v3224, %v3228
    %v3230 = vlaneseq
    %v3231 = vshrl.u32 %v3230, 7
    %v3232 = vsub.s32 1, %v3231
    %v3233 = vrot.slane %v3224, %v3232
    %v3236 = vmul.f32 %v3206, %v3229
    %v3237 = vmul.f32 %v3208, %v3233
    %v3238 = vmul.f32 %v3210, %v3229
    %v3239 = vmul.f32 %v3212, %v3233
    %v3240 = vmul.f32 %v3216, %v3229
    %v3241 = vmul.f32 %v3218, %v3233
    %v3242 = vmul.f32 %v3220, %v3229
    %v3243 = vmul.f32 %v3222, %v3233
    %v3244 = vld [vmem:[%s43] sm:$0x3]
    %v3246 = vlaneseq
    %v3247 = vshrl.u32 %v3246, 7
    %v3248 = vsub.s32 0, %v3247
    %v3249 = vrot.slane %v3244, %v3248
    %v3250 = vlaneseq
    %v3251 = vshrl.u32 %v3250, 7
    %v3252 = vsub.s32 1, %v3251
    %v3253 = vrot.slane %v3244, %v3252
    %v3256 = vadd.f32 %v3236, %v3249
    %v3257 = vadd.f32 %v3237, %v3253
    %v3258 = vadd.f32 %v3238, %v3249
    %v3259 = vadd.f32 %v3239, %v3253
    %v3260 = vadd.f32 %v3240, %v3249
    %v3261 = vadd.f32 %v3241, %v3253
    %v3262 = vadd.f32 %v3242, %v3249
    %v3263 = vadd.f32 %v3243, %v3253
    %v3264 = vmax.f32 %v3256, 0.0
    %v3265 = vmax.f32 %v3257, 0.0
    %v3266 = vmax.f32 %v3258, 0.0
    %v3267 = vmax.f32 %v3259, 0.0
    %v3268 = vmax.f32 %v3260, 0.0
    %v3269 = vmax.f32 %v3261, 0.0
    %v3270 = vmax.f32 %v3262, 0.0
    %v3271 = vmax.f32 %v3263, 0.0
    %v3272 = vmin.f32 %v3264, 6.0
    %v3273 = vmin.f32 %v3265, 6.0
    %v3274 = vmin.f32 %v3266, 6.0
    %v3275 = vmin.f32 %v3267, 6.0
    %v3276 = vmin.f32 %v3268, 6.0
    %v3277 = vmin.f32 %v3269, 6.0
    %v3278 = vmin.f32 %v3270, 6.0
    %v3279 = vmin.f32 %v3271, 6.0
    %3280 = vst [vmem:[#allocation6] sm:$0x3f] 0.0
    %vm3281 = vcmask 128000
    %3282 = vst.msk [vmem:[#allocation6 + $0x8] sm:$0x3f] %vm3281, 0.0
    %3283 = vst [vmem:[#allocation6 + $0x10] sm:$0x3f] 0.0
    %3284 = vst.msk [vmem:[#allocation6 + $0x18] sm:$0x3f] %vm3281, 0.0
    %3285 = vst [vmem:[#allocation6 + $0x20] sm:$0x3f] 0.0
    %3286 = vst.msk [vmem:[#allocation6 + $0x28] sm:$0x3f] %vm3281, 0.0
    %3287 = vst [vmem:[#allocation6 + $0x30] sm:$0x3f] 0.0
    %3288 = vst.msk [vmem:[#allocation6 + $0x38] sm:$0x3f] %vm3281, 0.0
    %3289 = vst [vmem:[#allocation6 + $0x40] sm:$0x3f] 0.0
    %3290 = vst.msk [vmem:[#allocation6 + $0x48] sm:$0x3f] %vm3281, 0.0
    %3291 = vst [vmem:[#allocation6 + $0x50] sm:$0x3f] 0.0
    %3292 = vst.msk [vmem:[#allocation6 + $0x58] sm:$0x3f] %vm3281, 0.0
    %3293 = vst [vmem:[#allocation6 + $0x60] sm:$0x3f] 0.0
    %3294 = vst.msk [vmem:[#allocation6 + $0x68] sm:$0x3f] %vm3281, 0.0
    %3295 = vst [vmem:[#allocation6 + $0x70] sm:$0x3f] 0.0
    %3296 = vst.msk [vmem:[#allocation6 + $0x78] sm:$0x3f] %vm3281, 0.0
    %3297 = vst [vmem:[#allocation6 + $0x80] sm:$0x3f] 0.0
    %3298 = vst.msk [vmem:[#allocation6 + $0x88] sm:$0x3f] %vm3281, 0.0
    %3299 = vst [vmem:[#allocation6 + $0x90] sm:$0x3f] 0.0
    %3300 = vst.msk [vmem:[#allocation6 + $0x98] sm:$0x3f] %vm3281, 0.0
    %3301 = vst [vmem:[#allocation6 + $0xa0] sm:$0x3f] 0.0
    %3302 = vst.msk [vmem:[#allocation6 + $0xa8] sm:$0x3f] %vm3281, 0.0
    %3303 = vst [vmem:[#allocation6 + $0xb0] sm:$0x3f] 0.0
    %3304 = vst.msk [vmem:[#allocation6 + $0xb8] sm:$0x3f] %vm3281, 0.0
    %v3307 = vrot.slane %v3272, 7
    %v3308 = vrot.slane %v3273, 7
    %s3311 = scalar_lea.vmem [#allocation6], 16
    %3312 = vst [vmem:[%s3311] sm:$0x1e] %v3307
    %vm3313 = vcmask 126977
    %3314 = vst.msk [vmem:[%s3311 + $0x8] sm:$0x1e] %vm3313, %v3308
    %v3315 = vrot.slane %v3272, 3
    %v3316 = vrot.slane %v3273, 3
    %s3319 = scalar_lea.vmem [#allocation6], 32
    %3320 = vst [vmem:[%s3319] sm:$0x1e] %v3315
    %3321 = vst.msk [vmem:[%s3319 + $0x8] sm:$0x1e] %vm3313, %v3316
    %v3324 = vrot.slane %v3274, 7
    %v3325 = vrot.slane %v3275, 7
    %s3328 = scalar_lea.vmem [#allocation6], 48
    %3329 = vst [vmem:[%s3328] sm:$0x1e] %v3324
    %3330 = vst.msk [vmem:[%s3328 + $0x8] sm:$0x1e] %vm3313, %v3325
    %v3331 = vrot.slane %v3274, 3
    %v3332 = vrot.slane %v3275, 3
    %s3335 = scalar_lea.vmem [#allocation6], 64
    %3336 = vst [vmem:[%s3335] sm:$0x1e] %v3331
    %3337 = vst.msk [vmem:[%s3335 + $0x8] sm:$0x1e] %vm3313, %v3332
    %v3340 = vrot.slane %v3276, 7
    %v3341 = vrot.slane %v3277, 7
    %s3344 = scalar_lea.vmem [#allocation6], 112
    %3345 = vst [vmem:[%s3344] sm:$0x1e] %v3340
    %3346 = vst.msk [vmem:[%s3344 + $0x8] sm:$0x1e] %vm3313, %v3341
    %v3347 = vrot.slane %v3276, 3
    %v3348 = vrot.slane %v3277, 3
    %s3351 = scalar_lea.vmem [#allocation6], 128
    %3352 = vst [vmem:[%s3351] sm:$0x1e] %v3347
    %3353 = vst.msk [vmem:[%s3351 + $0x8] sm:$0x1e] %vm3313, %v3348
    %v3356 = vrot.slane %v3278, 7
    %v3357 = vrot.slane %v3279, 7
    %s3360 = scalar_lea.vmem [#allocation6], 144
    %3361 = vst [vmem:[%s3360] sm:$0x1e] %v3356
    %3362 = vst.msk [vmem:[%s3360 + $0x8] sm:$0x1e] %vm3313, %v3357
    %v3363 = vrot.slane %v3278, 3
    %v3364 = vrot.slane %v3279, 3
    %s3367 = scalar_lea.vmem [#allocation6], 160
    %3368 = vst [vmem:[%s3367] sm:$0x1e] %v3363
    %3369 = vst.msk [vmem:[%s3367 + $0x8] sm:$0x1e] %vm3313, %v3364
    %v3370 = vld [vmem:[#allocation6] sm:$0xf]
    %v3371 = vld [vmem:[#allocation6 + $0x8] sm:$0xf]
    %v3372 = vld [vmem:[#allocation6 + $0x10] sm:$0xf]
    %v3373 = vld [vmem:[#allocation6 + $0x18] sm:$0xf]
    %v3374 = vld [vmem:[#allocation6 + $0x20] sm:$0xf]
    %v3375 = vld [vmem:[#allocation6 + $0x28] sm:$0xf]
    %v3376 = vld [vmem:[#allocation6 + $0x30] sm:$0xf]
    %v3377 = vld [vmem:[#allocation6 + $0x38] sm:$0xf]
    %v3378 = vld [vmem:[#allocation6 + $0x60] sm:$0xf]
    %v3379 = vld [vmem:[#allocation6 + $0x68] sm:$0xf]
    %v3380 = vld [vmem:[#allocation6 + $0x70] sm:$0xf]
    %v3381 = vld [vmem:[#allocation6 + $0x78] sm:$0xf]
    %v3382 = vld [vmem:[#allocation6 + $0x80] sm:$0xf]
    %v3383 = vld [vmem:[#allocation6 + $0x88] sm:$0xf]
    %v3384 = vld [vmem:[#allocation6 + $0x90] sm:$0xf]
    %v3385 = vld [vmem:[#allocation6 + $0x98] sm:$0xf]
    %v3386 = vld [vmem:[%s45] ss:$8 sm:$0x3]
    %v3388 = vlaneseq
    %v3389 = vshrl.u32 %v3388, 7
    %v3390 = vsub.s32 0, %v3389
    %v3391 = vrot.slane %v3386, %v3390
    %v3392 = vlaneseq
    %v3393 = vshrl.u32 %v3392, 7
    %v3394 = vsub.s32 1, %v3393
    %v3395 = vrot.slane %v3386, %v3394
    %v3398 = vmul.f32 %v3370, %v3391
    %v3399 = vmul.f32 %v3371, %v3395
    %v3400 = vmul.f32 %v3372, %v3391
    %v3401 = vmul.f32 %v3373, %v3395
    %v3402 = vmul.f32 %v3374, %v3391
    %v3403 = vmul.f32 %v3375, %v3395
    %v3404 = vmul.f32 %v3376, %v3391
    %v3405 = vmul.f32 %v3377, %v3395
    %v3406 = vmul.f32 %v3378, %v3391
    %v3407 = vmul.f32 %v3379, %v3395
    %v3408 = vmul.f32 %v3380, %v3391
    %v3409 = vmul.f32 %v3381, %v3395
    %v3410 = vmul.f32 %v3382, %v3391
    %v3411 = vmul.f32 %v3383, %v3395
    %v3412 = vmul.f32 %v3384, %v3391
    %v3413 = vmul.f32 %v3385, %v3395
    %v3414 = vadd.f32 %v3398, 0.0
    %v3415 = vadd.f32 %v3399, 0.0
    %v3416 = vadd.f32 %v3400, 0.0
    %v3417 = vadd.f32 %v3401, 0.0
    %v3418 = vadd.f32 %v3402, 0.0
    %v3419 = vadd.f32 %v3403, 0.0
    %v3420 = vadd.f32 %v3404, 0.0
    %v3421 = vadd.f32 %v3405, 0.0
    %v3422 = vadd.f32 %v3406, 0.0
    %v3423 = vadd.f32 %v3407, 0.0
    %v3424 = vadd.f32 %v3408, 0.0
    %v3425 = vadd.f32 %v3409, 0.0
    %v3426 = vadd.f32 %v3410, 0.0
    %v3427 = vadd.f32 %v3411, 0.0
    %v3428 = vadd.f32 %v3412, 0.0
    %v3429 = vadd.f32 %v3413, 0.0
    %v3430 = vld [vmem:[#allocation6] sm:$0x1e]
    %v3431 = vld [vmem:[#allocation6 + $0x8] sm:$0x1e]
    %v3432 = vld [vmem:[#allocation6 + $0x10] sm:$0x1e]
    %v3433 = vld [vmem:[#allocation6 + $0x18] sm:$0x1e]
    %v3434 = vld [vmem:[#allocation6 + $0x20] sm:$0x1e]
    %v3435 = vld [vmem:[#allocation6 + $0x28] sm:$0x1e]
    %v3436 = vld [vmem:[#allocation6 + $0x30] sm:$0x1e]
    %v3437 = vld [vmem:[#allocation6 + $0x38] sm:$0x1e]
    %v3438 = vld [vmem:[#allocation6 + $0x60] sm:$0x1e]
    %v3439 = vld [vmem:[#allocation6 + $0x68] sm:$0x1e]
    %v3440 = vld [vmem:[#allocation6 + $0x70] sm:$0x1e]
    %v3441 = vld [vmem:[#allocation6 + $0x78] sm:$0x1e]
    %v3442 = vld [vmem:[#allocation6 + $0x80] sm:$0x1e]
    %v3443 = vld [vmem:[#allocation6 + $0x88] sm:$0x1e]
    %v3444 = vld [vmem:[#allocation6 + $0x90] sm:$0x1e]
    %v3445 = vld [vmem:[#allocation6 + $0x98] sm:$0x1e]
    %s3446 = scalar_lea.vmem %s45, 1
    %v3447 = vld [vmem:[%s3446] ss:$8 sm:$0x3]
    %v3449 = vlaneseq
    %v3450 = vshrl.u32 %v3449, 7
    %v3451 = vsub.s32 0, %v3450
    %v3452 = vrot.slane %v3447, %v3451
    %v3453 = vlaneseq
    %v3454 = vshrl.u32 %v3453, 7
    %v3455 = vsub.s32 1, %v3454
    %v3456 = vrot.slane %v3447, %v3455
    %v3459 = vmul.f32 %v3430, %v3452
    %v3460 = vmul.f32 %v3431, %v3456
    %v3461 = vmul.f32 %v3432, %v3452
    %v3462 = vmul.f32 %v3433, %v3456
    %v3463 = vmul.f32 %v3434, %v3452
    %v3464 = vmul.f32 %v3435, %v3456
    %v3465 = vmul.f32 %v3436, %v3452
    %v3466 = vmul.f32 %v3437, %v3456
    %v3467 = vmul.f32 %v3438, %v3452
    %v3468 = vmul.f32 %v3439, %v3456
    %v3469 = vmul.f32 %v3440, %v3452
    %v3470 = vmul.f32 %v3441, %v3456
    %v3471 = vmul.f32 %v3442, %v3452
    %v3472 = vmul.f32 %v3443, %v3456
    %v3473 = vmul.f32 %v3444, %v3452
    %v3474 = vmul.f32 %v3445, %v3456
    %v3491 = vrot.slane %v3459, 1
    %v3492 = vrot.slane %v3460, 1
    %v3493 = vrot.slane %v3461, 1
    %v3494 = vrot.slane %v3462, 1
    %v3495 = vrot.slane %v3463, 1
    %v3496 = vrot.slane %v3464, 1
    %v3497 = vrot.slane %v3465, 1
    %v3498 = vrot.slane %v3466, 1
    %v3499 = vrot.slane %v3467, 1
    %v3500 = vrot.slane %v3468, 1
    %v3501 = vrot.slane %v3469, 1
    %v3502 = vrot.slane %v3470, 1
    %v3503 = vrot.slane %v3471, 1
    %v3504 = vrot.slane %v3472, 1
    %v3505 = vrot.slane %v3473, 1
    %v3506 = vrot.slane %v3474, 1
    %v3523 = vadd.f32 %v3414, %v3491
    %v3524 = vadd.f32 %v3415, %v3492
    %v3525 = vadd.f32 %v3416, %v3493
    %v3526 = vadd.f32 %v3417, %v3494
    %v3527 = vadd.f32 %v3418, %v3495
    %v3528 = vadd.f32 %v3419, %v3496
    %v3529 = vadd.f32 %v3420, %v3497
    %v3530 = vadd.f32 %v3421, %v3498
    %v3531 = vadd.f32 %v3422, %v3499
    %v3532 = vadd.f32 %v3423, %v3500
    %v3533 = vadd.f32 %v3424, %v3501
    %v3534 = vadd.f32 %v3425, %v3502
    %v3535 = vadd.f32 %v3426, %v3503
    %v3536 = vadd.f32 %v3427, %v3504
    %v3537 = vadd.f32 %v3428, %v3505
    %v3538 = vadd.f32 %v3429, %v3506
    %v3539 = vld [vmem:[#allocation6] sm:$0x3c]
    %v3540 = vld [vmem:[#allocation6 + $0x8] sm:$0x3c]
    %v3541 = vld [vmem:[#allocation6 + $0x10] sm:$0x3c]
    %v3542 = vld [vmem:[#allocation6 + $0x18] sm:$0x3c]
    %v3543 = vld [vmem:[#allocation6 + $0x20] sm:$0x3c]
    %v3544 = vld [vmem:[#allocation6 + $0x28] sm:$0x3c]
    %v3545 = vld [vmem:[#allocation6 + $0x30] sm:$0x3c]
    %v3546 = vld [vmem:[#allocation6 + $0x38] sm:$0x3c]
    %v3547 = vld [vmem:[#allocation6 + $0x60] sm:$0x3c]
    %v3548 = vld [vmem:[#allocation6 + $0x68] sm:$0x3c]
    %v3549 = vld [vmem:[#allocation6 + $0x70] sm:$0x3c]
    %v3550 = vld [vmem:[#allocation6 + $0x78] sm:$0x3c]
    %v3551 = vld [vmem:[#allocation6 + $0x80] sm:$0x3c]
    %v3552 = vld [vmem:[#allocation6 + $0x88] sm:$0x3c]
    %v3553 = vld [vmem:[#allocation6 + $0x90] sm:$0x3c]
    %v3554 = vld [vmem:[#allocation6 + $0x98] sm:$0x3c]
    %s3555 = scalar_lea.vmem %s45, 2
    %v3556 = vld [vmem:[%s3555] ss:$8 sm:$0x3]
    %v3558 = vlaneseq
    %v3559 = vshrl.u32 %v3558, 7
    %v3560 = vsub.s32 0, %v3559
    %v3561 = vrot.slane %v3556, %v3560
    %v3562 = vlaneseq
    %v3563 = vshrl.u32 %v3562, 7
    %v3564 = vsub.s32 1, %v3563
    %v3565 = vrot.slane %v3556, %v3564
    %v3568 = vmul.f32 %v3539, %v3561
    %v3569 = vmul.f32 %v3540, %v3565
    %v3570 = vmul.f32 %v3541, %v3561
    %v3571 = vmul.f32 %v3542, %v3565
    %v3572 = vmul.f32 %v3543, %v3561
    %v3573 = vmul.f32 %v3544, %v3565
    %v3574 = vmul.f32 %v3545, %v3561
    %v3575 = vmul.f32 %v3546, %v3565
    %v3576 = vmul.f32 %v3547, %v3561
    %v3577 = vmul.f32 %v3548, %v3565
    %v3578 = vmul.f32 %v3549, %v3561
    %v3579 = vmul.f32 %v3550, %v3565
    %v3580 = vmul.f32 %v3551, %v3561
    %v3581 = vmul.f32 %v3552, %v3565
    %v3582 = vmul.f32 %v3553, %v3561
    %v3583 = vmul.f32 %v3554, %v3565
    %v3600 = vrot.slane %v3568, 2
    %v3601 = vrot.slane %v3569, 2
    %v3602 = vrot.slane %v3570, 2
    %v3603 = vrot.slane %v3571, 2
    %v3604 = vrot.slane %v3572, 2
    %v3605 = vrot.slane %v3573, 2
    %v3606 = vrot.slane %v3574, 2
    %v3607 = vrot.slane %v3575, 2
    %v3608 = vrot.slane %v3576, 2
    %v3609 = vrot.slane %v3577, 2
    %v3610 = vrot.slane %v3578, 2
    %v3611 = vrot.slane %v3579, 2
    %v3612 = vrot.slane %v3580, 2
    %v3613 = vrot.slane %v3581, 2
    %v3614 = vrot.slane %v3582, 2
    %v3615 = vrot.slane %v3583, 2
    %v3632 = vadd.f32 %v3523, %v3600
    %v3633 = vadd.f32 %v3524, %v3601
    %v3634 = vadd.f32 %v3525, %v3602
    %v3635 = vadd.f32 %v3526, %v3603
    %v3636 = vadd.f32 %v3527, %v3604
    %v3637 = vadd.f32 %v3528, %v3605
    %v3638 = vadd.f32 %v3529, %v3606
    %v3639 = vadd.f32 %v3530, %v3607
    %v3640 = vadd.f32 %v3531, %v3608
    %v3641 = vadd.f32 %v3532, %v3609
    %v3642 = vadd.f32 %v3533, %v3610
    %v3643 = vadd.f32 %v3534, %v3611
    %v3644 = vadd.f32 %v3535, %v3612
    %v3645 = vadd.f32 %v3536, %v3613
    %v3646 = vadd.f32 %v3537, %v3614
    %v3647 = vadd.f32 %v3538, %v3615
    %v3648 = vld [vmem:[%s3311] sm:$0xf]
    %v3649 = vld [vmem:[%s3311 + $0x8] sm:$0xf]
    %v3650 = vld [vmem:[%s3311 + $0x10] sm:$0xf]
    %v3651 = vld [vmem:[%s3311 + $0x18] sm:$0xf]
    %v3652 = vld [vmem:[%s3311 + $0x20] sm:$0xf]
    %v3653 = vld [vmem:[%s3311 + $0x28] sm:$0xf]
    %v3654 = vld [vmem:[%s3311 + $0x30] sm:$0xf]
    %v3655 = vld [vmem:[%s3311 + $0x38] sm:$0xf]
    %v3656 = vld [vmem:[%s3311 + $0x60] sm:$0xf]
    %v3657 = vld [vmem:[%s3311 + $0x68] sm:$0xf]
    %v3658 = vld [vmem:[%s3311 + $0x70] sm:$0xf]
    %v3659 = vld [vmem:[%s3311 + $0x78] sm:$0xf]
    %v3660 = vld [vmem:[%s3311 + $0x80] sm:$0xf]
    %v3661 = vld [vmem:[%s3311 + $0x88] sm:$0xf]
    %v3662 = vld [vmem:[%s3311 + $0x90] sm:$0xf]
    %v3663 = vld [vmem:[%s3311 + $0x98] sm:$0xf]
    %s3664 = scalar_lea.vmem %s45, 3
    %v3665 = vld [vmem:[%s3664] ss:$8 sm:$0x3]
    %v3667 = vlaneseq
    %v3668 = vshrl.u32 %v3667, 7
    %v3669 = vsub.s32 0, %v3668
    %v3670 = vrot.slane %v3665, %v3669
    %v3671 = vlaneseq
    %v3672 = vshrl.u32 %v3671, 7
    %v3673 = vsub.s32 1, %v3672
    %v3674 = vrot.slane %v3665, %v3673
    %v3677 = vmul.f32 %v3648, %v3670
    %v3678 = vmul.f32 %v3649, %v3674
    %v3679 = vmul.f32 %v3650, %v3670
    %v3680 = vmul.f32 %v3651, %v3674
    %v3681 = vmul.f32 %v3652, %v3670
    %v3682 = vmul.f32 %v3653, %v3674
    %v3683 = vmul.f32 %v3654, %v3670
    %v3684 = vmul.f32 %v3655, %v3674
    %v3685 = vmul.f32 %v3656, %v3670
    %v3686 = vmul.f32 %v3657, %v3674
    %v3687 = vmul.f32 %v3658, %v3670
    %v3688 = vmul.f32 %v3659, %v3674
    %v3689 = vmul.f32 %v3660, %v3670
    %v3690 = vmul.f32 %v3661, %v3674
    %v3691 = vmul.f32 %v3662, %v3670
    %v3692 = vmul.f32 %v3663, %v3674
    %v3693 = vadd.f32 %v3632, %v3677
    %v3694 = vadd.f32 %v3633, %v3678
    %v3695 = vadd.f32 %v3634, %v3679
    %v3696 = vadd.f32 %v3635, %v3680
    %v3697 = vadd.f32 %v3636, %v3681
    %v3698 = vadd.f32 %v3637, %v3682
    %v3699 = vadd.f32 %v3638, %v3683
    %v3700 = vadd.f32 %v3639, %v3684
    %v3701 = vadd.f32 %v3640, %v3685
    %v3702 = vadd.f32 %v3641, %v3686
    %v3703 = vadd.f32 %v3642, %v3687
    %v3704 = vadd.f32 %v3643, %v3688
    %v3705 = vadd.f32 %v3644, %v3689
    %v3706 = vadd.f32 %v3645, %v3690
    %v3707 = vadd.f32 %v3646, %v3691
    %v3708 = vadd.f32 %v3647, %v3692
    %v3709 = vld [vmem:[%s3311] sm:$0x1e]
    %v3710 = vld [vmem:[%s3311 + $0x8] sm:$0x1e]
    %v3711 = vld [vmem:[%s3311 + $0x10] sm:$0x1e]
    %v3712 = vld [vmem:[%s3311 + $0x18] sm:$0x1e]
    %v3713 = vld [vmem:[%s3311 + $0x20] sm:$0x1e]
    %v3714 = vld [vmem:[%s3311 + $0x28] sm:$0x1e]
    %v3715 = vld [vmem:[%s3311 + $0x30] sm:$0x1e]
    %v3716 = vld [vmem:[%s3311 + $0x38] sm:$0x1e]
    %v3717 = vld [vmem:[%s3311 + $0x60] sm:$0x1e]
    %v3718 = vld [vmem:[%s3311 + $0x68] sm:$0x1e]
    %v3719 = vld [vmem:[%s3311 + $0x70] sm:$0x1e]
    %v3720 = vld [vmem:[%s3311 + $0x78] sm:$0x1e]
    %v3721 = vld [vmem:[%s3311 + $0x80] sm:$0x1e]
    %v3722 = vld [vmem:[%s3311 + $0x88] sm:$0x1e]
    %v3723 = vld [vmem:[%s3311 + $0x90] sm:$0x1e]
    %v3724 = vld [vmem:[%s3311 + $0x98] sm:$0x1e]
    %s3725 = scalar_lea.vmem %s45, 4
    %v3726 = vld [vmem:[%s3725] ss:$8 sm:$0x3]
    %v3728 = vlaneseq
    %v3729 = vshrl.u32 %v3728, 7
    %v3730 = vsub.s32 0, %v3729
    %v3731 = vrot.slane %v3726, %v3730
    %v3732 = vlaneseq
    %v3733 = vshrl.u32 %v3732, 7
    %v3734 = vsub.s32 1, %v3733
    %v3735 = vrot.slane %v3726, %v3734
    %v3738 = vmul.f32 %v3709, %v3731
    %v3739 = vmul.f32 %v3710, %v3735
    %v3740 = vmul.f32 %v3711, %v3731
    %v3741 = vmul.f32 %v3712, %v3735
    %v3742 = vmul.f32 %v3713, %v3731
    %v3743 = vmul.f32 %v3714, %v3735
    %v3744 = vmul.f32 %v3715, %v3731
    %v3745 = vmul.f32 %v3716, %v3735
    %v3746 = vmul.f32 %v3717, %v3731
    %v3747 = vmul.f32 %v3718, %v3735
    %v3748 = vmul.f32 %v3719, %v3731
    %v3749 = vmul.f32 %v3720, %v3735
    %v3750 = vmul.f32 %v3721, %v3731
    %v3751 = vmul.f32 %v3722, %v3735
    %v3752 = vmul.f32 %v3723, %v3731
    %v3753 = vmul.f32 %v3724, %v3735
    %v3770 = vrot.slane %v3738, 1
    %v3771 = vrot.slane %v3739, 1
    %v3772 = vrot.slane %v3740, 1
    %v3773 = vrot.slane %v3741, 1
    %v3774 = vrot.slane %v3742, 1
    %v3775 = vrot.slane %v3743, 1
    %v3776 = vrot.slane %v3744, 1
    %v3777 = vrot.slane %v3745, 1
    %v3778 = vrot.slane %v3746, 1
    %v3779 = vrot.slane %v3747, 1
    %v3780 = vrot.slane %v3748, 1
    %v3781 = vrot.slane %v3749, 1
    %v3782 = vrot.slane %v3750, 1
    %v3783 = vrot.slane %v3751, 1
    %v3784 = vrot.slane %v3752, 1
    %v3785 = vrot.slane %v3753, 1
    %v3802 = vadd.f32 %v3693, %v3770
    %v3803 = vadd.f32 %v3694, %v3771
    %v3804 = vadd.f32 %v3695, %v3772
    %v3805 = vadd.f32 %v3696, %v3773
    %v3806 = vadd.f32 %v3697, %v3774
    %v3807 = vadd.f32 %v3698, %v3775
    %v3808 = vadd.f32 %v3699, %v3776
    %v3809 = vadd.f32 %v3700, %v3777
    %v3810 = vadd.f32 %v3701, %v3778
    %v3811 = vadd.f32 %v3702, %v3779
    %v3812 = vadd.f32 %v3703, %v3780
    %v3813 = vadd.f32 %v3704, %v3781
    %v3814 = vadd.f32 %v3705, %v3782
    %v3815 = vadd.f32 %v3706, %v3783
    %v3816 = vadd.f32 %v3707, %v3784
    %v3817 = vadd.f32 %v3708, %v3785
    %v3818 = vld [vmem:[%s3311] sm:$0x3c]
    %v3819 = vld [vmem:[%s3311 + $0x8] sm:$0x3c]
    %v3820 = vld [vmem:[%s3311 + $0x10] sm:$0x3c]
    %v3821 = vld [vmem:[%s3311 + $0x18] sm:$0x3c]
    %v3822 = vld [vmem:[%s3311 + $0x20] sm:$0x3c]
    %v3823 = vld [vmem:[%s3311 + $0x28] sm:$0x3c]
    %v3824 = vld [vmem:[%s3311 + $0x30] sm:$0x3c]
    %v3825 = vld [vmem:[%s3311 + $0x38] sm:$0x3c]
    %v3826 = vld [vmem:[%s3311 + $0x60] sm:$0x3c]
    %v3827 = vld [vmem:[%s3311 + $0x68] sm:$0x3c]
    %v3828 = vld [vmem:[%s3311 + $0x70] sm:$0x3c]
    %v3829 = vld [vmem:[%s3311 + $0x78] sm:$0x3c]
    %v3830 = vld [vmem:[%s3311 + $0x80] sm:$0x3c]
    %v3831 = vld [vmem:[%s3311 + $0x88] sm:$0x3c]
    %v3832 = vld [vmem:[%s3311 + $0x90] sm:$0x3c]
    %v3833 = vld [vmem:[%s3311 + $0x98] sm:$0x3c]
    %s3834 = scalar_lea.vmem %s45, 5
    %v3835 = vld [vmem:[%s3834] ss:$8 sm:$0x3]
    %v3837 = vlaneseq
    %v3838 = vshrl.u32 %v3837, 7
    %v3839 = vsub.s32 0, %v3838
    %v3840 = vrot.slane %v3835, %v3839
    %v3841 = vlaneseq
    %v3842 = vshrl.u32 %v3841, 7
    %v3843 = vsub.s32 1, %v3842
    %v3844 = vrot.slane %v3835, %v3843
    %v3847 = vmul.f32 %v3818, %v3840
    %v3848 = vmul.f32 %v3819, %v3844
    %v3849 = vmul.f32 %v3820, %v3840
    %v3850 = vmul.f32 %v3821, %v3844
    %v3851 = vmul.f32 %v3822, %v3840
    %v3852 = vmul.f32 %v3823, %v3844
    %v3853 = vmul.f32 %v3824, %v3840
    %v3854 = vmul.f32 %v3825, %v3844
    %v3855 = vmul.f32 %v3826, %v3840
    %v3856 = vmul.f32 %v3827, %v3844
    %v3857 = vmul.f32 %v3828, %v3840
    %v3858 = vmul.f32 %v3829, %v3844
    %v3859 = vmul.f32 %v3830, %v3840
    %v3860 = vmul.f32 %v3831, %v3844
    %v3861 = vmul.f32 %v3832, %v3840
    %v3862 = vmul.f32 %v3833, %v3844
    %v3879 = vrot.slane %v3847, 2
    %v3880 = vrot.slane %v3848, 2
    %v3881 = vrot.slane %v3849, 2
    %v3882 = vrot.slane %v3850, 2
    %v3883 = vrot.slane %v3851, 2
    %v3884 = vrot.slane %v3852, 2
    %v3885 = vrot.slane %v3853, 2
    %v3886 = vrot.slane %v3854, 2
    %v3887 = vrot.slane %v3855, 2
    %v3888 = vrot.slane %v3856, 2
    %v3889 = vrot.slane %v3857, 2
    %v3890 = vrot.slane %v3858, 2
    %v3891 = vrot.slane %v3859, 2
    %v3892 = vrot.slane %v3860, 2
    %v3893 = vrot.slane %v3861, 2
    %v3894 = vrot.slane %v3862, 2
    %v3911 = vadd.f32 %v3802, %v3879
    %v3912 = vadd.f32 %v3803, %v3880
    %v3913 = vadd.f32 %v3804, %v3881
    %v3914 = vadd.f32 %v3805, %v3882
    %v3915 = vadd.f32 %v3806, %v3883
    %v3916 = vadd.f32 %v3807, %v3884
    %v3917 = vadd.f32 %v3808, %v3885
    %v3918 = vadd.f32 %v3809, %v3886
    %v3919 = vadd.f32 %v3810, %v3887
    %v3920 = vadd.f32 %v3811, %v3888
    %v3921 = vadd.f32 %v3812, %v3889
    %v3922 = vadd.f32 %v3813, %v3890
    %v3923 = vadd.f32 %v3814, %v3891
    %v3924 = vadd.f32 %v3815, %v3892
    %v3925 = vadd.f32 %v3816, %v3893
    %v3926 = vadd.f32 %v3817, %v3894
    %v3927 = vld [vmem:[%s3319] sm:$0xf]
    %v3928 = vld [vmem:[%s3319 + $0x8] sm:$0xf]
    %v3929 = vld [vmem:[%s3319 + $0x10] sm:$0xf]
    %v3930 = vld [vmem:[%s3319 + $0x18] sm:$0xf]
    %v3931 = vld [vmem:[%s3319 + $0x20] sm:$0xf]
    %v3932 = vld [vmem:[%s3319 + $0x28] sm:$0xf]
    %v3933 = vld [vmem:[%s3319 + $0x30] sm:$0xf]
    %v3934 = vld [vmem:[%s3319 + $0x38] sm:$0xf]
    %v3935 = vld [vmem:[%s3319 + $0x60] sm:$0xf]
    %v3936 = vld [vmem:[%s3319 + $0x68] sm:$0xf]
    %v3937 = vld [vmem:[%s3319 + $0x70] sm:$0xf]
    %v3938 = vld [vmem:[%s3319 + $0x78] sm:$0xf]
    %v3939 = vld [vmem:[%s3319 + $0x80] sm:$0xf]
    %v3940 = vld [vmem:[%s3319 + $0x88] sm:$0xf]
    %v3941 = vld [vmem:[%s3319 + $0x90] sm:$0xf]
    %v3942 = vld [vmem:[%s3319 + $0x98] sm:$0xf]
    %s3943 = scalar_lea.vmem %s45, 6
    %v3944 = vld [vmem:[%s3943] ss:$8 sm:$0x3]
    %v3946 = vlaneseq
    %v3947 = vshrl.u32 %v3946, 7
    %v3948 = vsub.s32 0, %v3947
    %v3949 = vrot.slane %v3944, %v3948
    %v3950 = vlaneseq
    %v3951 = vshrl.u32 %v3950, 7
    %v3952 = vsub.s32 1, %v3951
    %v3953 = vrot.slane %v3944, %v3952
    %v3956 = vmul.f32 %v3927, %v3949
    %v3957 = vmul.f32 %v3928, %v3953
    %v3958 = vmul.f32 %v3929, %v3949
    %v3959 = vmul.f32 %v3930, %v3953
    %v3960 = vmul.f32 %v3931, %v3949
    %v3961 = vmul.f32 %v3932, %v3953
    %v3962 = vmul.f32 %v3933, %v3949
    %v3963 = vmul.f32 %v3934, %v3953
    %v3964 = vmul.f32 %v3935, %v3949
    %v3965 = vmul.f32 %v3936, %v3953
    %v3966 = vmul.f32 %v3937, %v3949
    %v3967 = vmul.f32 %v3938, %v3953
    %v3968 = vmul.f32 %v3939, %v3949
    %v3969 = vmul.f32 %v3940, %v3953
    %v3970 = vmul.f32 %v3941, %v3949
    %v3971 = vmul.f32 %v3942, %v3953
    %v3972 = vadd.f32 %v3911, %v3956
    %v3973 = vadd.f32 %v3912, %v3957
    %v3974 = vadd.f32 %v3913, %v3958
    %v3975 = vadd.f32 %v3914, %v3959
    %v3976 = vadd.f32 %v3915, %v3960
    %v3977 = vadd.f32 %v3916, %v3961
    %v3978 = vadd.f32 %v3917, %v3962
    %v3979 = vadd.f32 %v3918, %v3963
    %v3980 = vadd.f32 %v3919, %v3964
    %v3981 = vadd.f32 %v3920, %v3965
    %v3982 = vadd.f32 %v3921, %v3966
    %v3983 = vadd.f32 %v3922, %v3967
    %v3984 = vadd.f32 %v3923, %v3968
    %v3985 = vadd.f32 %v3924, %v3969
    %v3986 = vadd.f32 %v3925, %v3970
    %v3987 = vadd.f32 %v3926, %v3971
    %v3988 = vld [vmem:[%s3319] sm:$0x1e]
    %v3989 = vld [vmem:[%s3319 + $0x8] sm:$0x1e]
    %v3990 = vld [vmem:[%s3319 + $0x10] sm:$0x1e]
    %v3991 = vld [vmem:[%s3319 + $0x18] sm:$0x1e]
    %v3992 = vld [vmem:[%s3319 + $0x20] sm:$0x1e]
    %v3993 = vld [vmem:[%s3319 + $0x28] sm:$0x1e]
    %v3994 = vld [vmem:[%s3319 + $0x30] sm:$0x1e]
    %v3995 = vld [vmem:[%s3319 + $0x38] sm:$0x1e]
    %v3996 = vld [vmem:[%s3319 + $0x60] sm:$0x1e]
    %v3997 = vld [vmem:[%s3319 + $0x68] sm:$0x1e]
    %v3998 = vld [vmem:[%s3319 + $0x70] sm:$0x1e]
    %v3999 = vld [vmem:[%s3319 + $0x78] sm:$0x1e]
    %v4000 = vld [vmem:[%s3319 + $0x80] sm:$0x1e]
    %v4001 = vld [vmem:[%s3319 + $0x88] sm:$0x1e]
    %v4002 = vld [vmem:[%s3319 + $0x90] sm:$0x1e]
    %v4003 = vld [vmem:[%s3319 + $0x98] sm:$0x1e]
    %s4004 = scalar_lea.vmem %s45, 7
    %v4005 = vld [vmem:[%s4004] ss:$8 sm:$0x3]
    %v4007 = vlaneseq
    %v4008 = vshrl.u32 %v4007, 7
    %v4009 = vsub.s32 0, %v4008
    %v4010 = vrot.slane %v4005, %v4009
    %v4011 = vlaneseq
    %v4012 = vshrl.u32 %v4011, 7
    %v4013 = vsub.s32 1, %v4012
    %v4014 = vrot.slane %v4005, %v4013
    %v4017 = vmul.f32 %v3988, %v4010
    %v4018 = vmul.f32 %v3989, %v4014
    %v4019 = vmul.f32 %v3990, %v4010
    %v4020 = vmul.f32 %v3991, %v4014
    %v4021 = vmul.f32 %v3992, %v4010
    %v4022 = vmul.f32 %v3993, %v4014
    %v4023 = vmul.f32 %v3994, %v4010
    %v4024 = vmul.f32 %v3995, %v4014
    %v4025 = vmul.f32 %v3996, %v4010
    %v4026 = vmul.f32 %v3997, %v4014
    %v4027 = vmul.f32 %v3998, %v4010
    %v4028 = vmul.f32 %v3999, %v4014
    %v4029 = vmul.f32 %v4000, %v4010
    %v4030 = vmul.f32 %v4001, %v4014
    %v4031 = vmul.f32 %v4002, %v4010
    %v4032 = vmul.f32 %v4003, %v4014
    %v4049 = vrot.slane %v4017, 1
    %v4050 = vrot.slane %v4018, 1
    %v4051 = vrot.slane %v4019, 1
    %v4052 = vrot.slane %v4020, 1
    %v4053 = vrot.slane %v4021, 1
    %v4054 = vrot.slane %v4022, 1
    %v4055 = vrot.slane %v4023, 1
    %v4056 = vrot.slane %v4024, 1
    %v4057 = vrot.slane %v4025, 1
    %v4058 = vrot.slane %v4026, 1
    %v4059 = vrot.slane %v4027, 1
    %v4060 = vrot.slane %v4028, 1
    %v4061 = vrot.slane %v4029, 1
    %v4062 = vrot.slane %v4030, 1
    %v4063 = vrot.slane %v4031, 1
    %v4064 = vrot.slane %v4032, 1
    %v4081 = vadd.f32 %v3972, %v4049
    %v4082 = vadd.f32 %v3973, %v4050
    %v4083 = vadd.f32 %v3974, %v4051
    %v4084 = vadd.f32 %v3975, %v4052
    %v4085 = vadd.f32 %v3976, %v4053
    %v4086 = vadd.f32 %v3977, %v4054
    %v4087 = vadd.f32 %v3978, %v4055
    %v4088 = vadd.f32 %v3979, %v4056
    %v4089 = vadd.f32 %v3980, %v4057
    %v4090 = vadd.f32 %v3981, %v4058
    %v4091 = vadd.f32 %v3982, %v4059
    %v4092 = vadd.f32 %v3983, %v4060
    %v4093 = vadd.f32 %v3984, %v4061
    %v4094 = vadd.f32 %v3985, %v4062
    %v4095 = vadd.f32 %v3986, %v4063
    %v4096 = vadd.f32 %v3987, %v4064
    %v4097 = vld [vmem:[%s3319] sm:$0x3c]
    %v4098 = vld [vmem:[%s3319 + $0x8] sm:$0x3c]
    %v4099 = vld [vmem:[%s3319 + $0x10] sm:$0x3c]
    %v4100 = vld [vmem:[%s3319 + $0x18] sm:$0x3c]
    %v4101 = vld [vmem:[%s3319 + $0x20] sm:$0x3c]
    %v4102 = vld [vmem:[%s3319 + $0x28] sm:$0x3c]
    %v4103 = vld [vmem:[%s3319 + $0x30] sm:$0x3c]
    %v4104 = vld [vmem:[%s3319 + $0x38] sm:$0x3c]
    %v4105 = vld [vmem:[%s3319 + $0x60] sm:$0x3c]
    %v4106 = vld [vmem:[%s3319 + $0x68] sm:$0x3c]
    %v4107 = vld [vmem:[%s3319 + $0x70] sm:$0x3c]
    %v4108 = vld [vmem:[%s3319 + $0x78] sm:$0x3c]
    %v4109 = vld [vmem:[%s3319 + $0x80] sm:$0x3c]
    %v4110 = vld [vmem:[%s3319 + $0x88] sm:$0x3c]
    %v4111 = vld [vmem:[%s3319 + $0x90] sm:$0x3c]
    %v4112 = vld [vmem:[%s3319 + $0x98] sm:$0x3c]
    %s4113 = scalar_lea.vmem %s45, 16
    %v4114 = vld [vmem:[%s4113] ss:$8 sm:$0x3]
    %v4116 = vlaneseq
    %v4117 = vshrl.u32 %v4116, 7
    %v4118 = vsub.s32 0, %v4117
    %v4119 = vrot.slane %v4114, %v4118
    %v4120 = vlaneseq
    %v4121 = vshrl.u32 %v4120, 7
    %v4122 = vsub.s32 1, %v4121
    %v4123 = vrot.slane %v4114, %v4122
    %v4126 = vmul.f32 %v4097, %v4119
    %v4127 = vmul.f32 %v4098, %v4123
    %v4128 = vmul.f32 %v4099, %v4119
    %v4129 = vmul.f32 %v4100, %v4123
    %v4130 = vmul.f32 %v4101, %v4119
    %v4131 = vmul.f32 %v4102, %v4123
    %v4132 = vmul.f32 %v4103, %v4119
    %v4133 = vmul.f32 %v4104, %v4123
    %v4134 = vmul.f32 %v4105, %v4119
    %v4135 = vmul.f32 %v4106, %v4123
    %v4136 = vmul.f32 %v4107, %v4119
    %v4137 = vmul.f32 %v4108, %v4123
    %v4138 = vmul.f32 %v4109, %v4119
    %v4139 = vmul.f32 %v4110, %v4123
    %v4140 = vmul.f32 %v4111, %v4119
    %v4141 = vmul.f32 %v4112, %v4123
    %v4158 = vrot.slane %v4126, 2
    %v4159 = vrot.slane %v4127, 2
    %v4160 = vrot.slane %v4128, 2
    %v4161 = vrot.slane %v4129, 2
    %v4162 = vrot.slane %v4130, 2
    %v4163 = vrot.slane %v4131, 2
    %v4164 = vrot.slane %v4132, 2
    %v4165 = vrot.slane %v4133, 2
    %v4166 = vrot.slane %v4134, 2
    %v4167 = vrot.slane %v4135, 2
    %v4168 = vrot.slane %v4136, 2
    %v4169 = vrot.slane %v4137, 2
    %v4170 = vrot.slane %v4138, 2
    %v4171 = vrot.slane %v4139, 2
    %v4172 = vrot.slane %v4140, 2
    %v4173 = vrot.slane %v4141, 2
    %v4190 = vadd.f32 %v4081, %v4158
    %v4191 = vadd.f32 %v4082, %v4159
    %v4192 = vadd.f32 %v4083, %v4160
    %v4193 = vadd.f32 %v4084, %v4161
    %v4194 = vadd.f32 %v4085, %v4162
    %v4195 = vadd.f32 %v4086, %v4163
    %v4196 = vadd.f32 %v4087, %v4164
    %v4197 = vadd.f32 %v4088, %v4165
    %v4198 = vadd.f32 %v4089, %v4166
    %v4199 = vadd.f32 %v4090, %v4167
    %v4200 = vadd.f32 %v4091, %v4168
    %v4201 = vadd.f32 %v4092, %v4169
    %v4202 = vadd.f32 %v4093, %v4170
    %v4203 = vadd.f32 %v4094, %v4171
    %v4204 = vadd.f32 %v4095, %v4172
    %v4205 = vadd.f32 %v4096, %v4173
    %v4206 = vld [vmem:[%s47] sm:$0x3]
    %v4208 = vlaneseq
    %v4209 = vshrl.u32 %v4208, 7
    %v4210 = vsub.s32 0, %v4209
    %v4211 = vrot.slane %v4206, %v4210
    %v4212 = vlaneseq
    %v4213 = vshrl.u32 %v4212, 7
    %v4214 = vsub.s32 1, %v4213
    %v4215 = vrot.slane %v4206, %v4214
    %v4218 = vmul.f32 %v4190, %v4211
    %v4219 = vmul.f32 %v4191, %v4215
    %v4220 = vmul.f32 %v4192, %v4211
    %v4221 = vmul.f32 %v4193, %v4215
    %v4222 = vmul.f32 %v4194, %v4211
    %v4223 = vmul.f32 %v4195, %v4215
    %v4224 = vmul.f32 %v4196, %v4211
    %v4225 = vmul.f32 %v4197, %v4215
    %v4226 = vmul.f32 %v4198, %v4211
    %v4227 = vmul.f32 %v4199, %v4215
    %v4228 = vmul.f32 %v4200, %v4211
    %v4229 = vmul.f32 %v4201, %v4215
    %v4230 = vmul.f32 %v4202, %v4211
    %v4231 = vmul.f32 %v4203, %v4215
    %v4232 = vmul.f32 %v4204, %v4211
    %v4233 = vmul.f32 %v4205, %v4215
    %v4234 = vld [vmem:[%s49] sm:$0x3]
    %v4236 = vlaneseq
    %v4237 = vshrl.u32 %v4236, 7
    %v4238 = vsub.s32 0, %v4237
    %v4239 = vrot.slane %v4234, %v4238
    %v4240 = vlaneseq
    %v4241 = vshrl.u32 %v4240, 7
    %v4242 = vsub.s32 1, %v4241
    %v4243 = vrot.slane %v4234, %v4242
    %v4246 = vadd.f32 %v4218, %v4239
    %v4247 = vadd.f32 %v4219, %v4243
    %v4248 = vadd.f32 %v4220, %v4239
    %v4249 = vadd.f32 %v4221, %v4243
    %v4250 = vadd.f32 %v4222, %v4239
    %v4251 = vadd.f32 %v4223, %v4243
    %v4252 = vadd.f32 %v4224, %v4239
    %v4253 = vadd.f32 %v4225, %v4243
    %v4254 = vadd.f32 %v4226, %v4239
    %v4255 = vadd.f32 %v4227, %v4243
    %v4256 = vadd.f32 %v4228, %v4239
    %v4257 = vadd.f32 %v4229, %v4243
    %v4258 = vadd.f32 %v4230, %v4239
    %v4259 = vadd.f32 %v4231, %v4243
    %v4260 = vadd.f32 %v4232, %v4239
    %v4261 = vadd.f32 %v4233, %v4243
    %v4262 = vmax.f32 %v4246, 0.0
    %v4263 = vmax.f32 %v4247, 0.0
    %v4264 = vmax.f32 %v4248, 0.0
    %v4265 = vmax.f32 %v4249, 0.0
    %v4266 = vmax.f32 %v4250, 0.0
    %v4267 = vmax.f32 %v4251, 0.0
    %v4268 = vmax.f32 %v4252, 0.0
    %v4269 = vmax.f32 %v4253, 0.0
    %v4270 = vmax.f32 %v4254, 0.0
    %v4271 = vmax.f32 %v4255, 0.0
    %v4272 = vmax.f32 %v4256, 0.0
    %v4273 = vmax.f32 %v4257, 0.0
    %v4274 = vmax.f32 %v4258, 0.0
    %v4275 = vmax.f32 %v4259, 0.0
    %v4276 = vmax.f32 %v4260, 0.0
    %v4277 = vmax.f32 %v4261, 0.0
    %v4278 = vmin.f32 %v4262, 6.0
    %v4279 = vmin.f32 %v4263, 6.0
    %v4280 = vmin.f32 %v4264, 6.0
    %v4281 = vmin.f32 %v4265, 6.0
    %v4282 = vmin.f32 %v4266, 6.0
    %v4283 = vmin.f32 %v4267, 6.0
    %v4284 = vmin.f32 %v4268, 6.0
    %v4285 = vmin.f32 %v4269, 6.0
    %v4286 = vmin.f32 %v4270, 6.0
    %v4287 = vmin.f32 %v4271, 6.0
    %v4288 = vmin.f32 %v4272, 6.0
    %v4289 = vmin.f32 %v4273, 6.0
    %v4290 = vmin.f32 %v4274, 6.0
    %v4291 = vmin.f32 %v4275, 6.0
    %v4292 = vmin.f32 %v4276, 6.0
    %v4293 = vmin.f32 %v4277, 6.0
    %4294 = vst [vmem:[#allocation7] sm:$0xf] %v4278
    %vm4295 = vcmask 125952
    %4296 = vst.msk [vmem:[#allocation7 + $0x8] sm:$0xf] %vm4295, %v4279
    %v4299 = vrot.slane %v4280, 4
    %v4300 = vrot.slane %v4281, 4
    %4303 = vst [vmem:[#allocation7] sm:$0xf0] %v4299
    %vm4304 = vcmask 130052
    %4305 = vst.msk [vmem:[#allocation7 + $0x8] sm:$0xf0] %vm4304, %v4300
    %4306 = vst [vmem:[#allocation7 + $0x10] sm:$0xf] %v4282
    %4307 = vst.msk [vmem:[#allocation7 + $0x18] sm:$0xf] %vm4295, %v4283
    %v4310 = vrot.slane %v4284, 4
    %v4311 = vrot.slane %v4285, 4
    %4314 = vst [vmem:[#allocation7 + $0x10] sm:$0xf0] %v4310
    %4315 = vst.msk [vmem:[#allocation7 + $0x18] sm:$0xf0] %vm4304, %v4311
    %4316 = vst [vmem:[#allocation7 + $0x20] sm:$0xf] %v4286
    %4317 = vst.msk [vmem:[#allocation7 + $0x28] sm:$0xf] %vm4295, %v4287
    %v4320 = vrot.slane %v4288, 4
    %v4321 = vrot.slane %v4289, 4
    %4324 = vst [vmem:[#allocation7 + $0x20] sm:$0xf0] %v4320
    %4325 = vst.msk [vmem:[#allocation7 + $0x28] sm:$0xf0] %vm4304, %v4321
    %4326 = vst [vmem:[#allocation7 + $0x30] sm:$0xf] %v4290
    %4327 = vst.msk [vmem:[#allocation7 + $0x38] sm:$0xf] %vm4295, %v4291
    %v4330 = vrot.slane %v4292, 4
    %v4331 = vrot.slane %v4293, 4
    %4334 = vst [vmem:[#allocation7 + $0x30] sm:$0xf0] %v4330
    %4335 = vst.msk [vmem:[#allocation7 + $0x38] sm:$0xf0] %vm4304, %v4331
    %v4336 = vld [vmem:[#allocation7] sm:$0xff]
    %v4337 = vld [vmem:[#allocation7 + $0x8] sm:$0xff]
    %v4338 = vld [vmem:[#allocation7 + $0x10] sm:$0xff]
    %v4339 = vld [vmem:[#allocation7 + $0x18] sm:$0xff]
    %v4340 = vld [vmem:[#allocation7 + $0x20] sm:$0xff]
    %v4341 = vld [vmem:[#allocation7 + $0x28] sm:$0xff]
    %v4342 = vld [vmem:[#allocation7 + $0x30] sm:$0xff]
    %v4343 = vld [vmem:[#allocation7 + $0x38] sm:$0xff]
    %v4344 = vpack.c.bf16 %v4338, %v4336
    %v4345 = vpack.c.bf16 %v4339, %v4337
    %v4346 = vpack.c.bf16 %v4342, %v4340
    %v4347 = vpack.c.bf16 %v4343, %v4341
    %v4348 = vld [vmem:[%s51] sm:$0xf]
    %v4349 = vld [vmem:[%s51 + $0x4] sm:$0xf]
    %v4350 = vld [vmem:[%s51 + $0x8] sm:$0xf]
    %v4351 = vld [vmem:[%s51 + $0xc] sm:$0xf]
    %v4352 = vld [vmem:[%s51 + $0x10] sm:$0xf]
    %v4353 = vld [vmem:[%s51 + $0x14] sm:$0xf]
    %v4354 = vld [vmem:[%s51 + $0x18] sm:$0xf]
    %v4355 = vld [vmem:[%s51 + $0x1c] sm:$0xf]
    %v4356 = vld [vmem:[%s51 + $0x20] sm:$0xf]
    %v4357 = vld [vmem:[%s51 + $0x24] sm:$0xf]
    %v4358 = vld [vmem:[%s51 + $0x28] sm:$0xf]
    %v4359 = vld [vmem:[%s51 + $0x2c] sm:$0xf]
    %v4360 = vld [vmem:[%s51 + $0x30] sm:$0xf]
    %v4361 = vld [vmem:[%s51 + $0x34] sm:$0xf]
    %v4362 = vld [vmem:[%s51 + $0x38] sm:$0xf]
    %v4363 = vld [vmem:[%s51 + $0x3c] sm:$0xf]
    %v4364 = vld [vmem:[%s51 + $0x40] sm:$0xf]
    %v4365 = vld [vmem:[%s51 + $0x44] sm:$0xf]
    %v4384 = vunpack.c.l.b16 %v4348
    %v4385 = vunpack.c.l.b16 %v4349
    %v4386 = vunpack.c.l.b16 %v4350
    %v4387 = vunpack.c.l.b16 %v4351
    %v4388 = vunpack.c.l.b16 %v4352
    %v4389 = vunpack.c.l.b16 %v4353
    %v4390 = vunpack.c.l.b16 %v4354
    %v4391 = vunpack.c.l.b16 %v4355
    %v4392 = vunpack.c.l.b16 %v4356
    %v4393 = vunpack.c.l.b16 %v4357
    %v4394 = vunpack.c.l.b16 %v4358
    %v4395 = vunpack.c.l.b16 %v4359
    %v4396 = vunpack.c.l.b16 %v4360
    %v4397 = vunpack.c.l.b16 %v4361
    %v4398 = vunpack.c.l.b16 %v4362
    %v4399 = vunpack.c.l.b16 %v4363
    %v4400 = vunpack.c.l.b16 %v4364
    %v4401 = vunpack.c.l.b16 %v4365
    %v4402 = vpack.c.b16 %v4385, %v4384
    %v4403 = vpack.c.b16 %v4387, %v4386
    %v4404 = vpack.c.b16 %v4389, %v4388
    %v4405 = vpack.c.b16 %v4391, %v4390
    %v4406 = vpack.c.b16 %v4393, %v4392
    %v4407 = vpack.c.b16 %v4395, %v4394
    %v4408 = vpack.c.b16 %v4397, %v4396
    %v4409 = vpack.c.b16 %v4399, %v4398
    %v4410 = vpack.c.b16 %v4401, %v4400
    %v4421 = vsel %vm1548, %v4345, 0
    %v4424 = vsel %vm1548, %v4347, 0
    %4426 = vmatprep.subr.bf16.mxu0 0
    %4427 = vmatpush1.bf16.msra.mxu0 %v4409
    %4428 = vmatprep.subr.bf16.mxu0 0
    %4429 = vmatpush1.bf16.msra.mxu0 %v4408
    %4430 = vmatprep.subr.bf16.mxu0 0
    %4431 = vmatpush1.bf16.msra.mxu0 %v4407
    %4432 = vmatprep.subr.bf16.mxu0 0
    %4433 = vmatpush1.bf16.msra.mxu0 %v4406
    %4434 = vmatprep.subr.bf16.mxu0 0
    %4435 = vmatpush1.bf16.msra.mxu0 %v4405
    %4436 = vmatprep.subr.bf16.mxu0 0
    %4437 = vmatpush1.bf16.msra.mxu0 %v4404
    %4438 = vmatprep.subr.bf16.mxu0 0
    %4439 = vmatpush1.bf16.msra.mxu0 %v4403
    %4440 = vmatprep.subr.bf16.mxu0 0
    %4441 = vmatpush1.bf16.msra.mxu0 %v4402
    %4442 = vmatprep.subr.bf16.mxu0 0
    %4443 = vmatpush2.bf16.msra.mxu0 0
    %4444 = vmatprep.subr.bf16.mxu0 0
    %4445 = vmatpush2.bf16.msra.mxu0 0
    %4446 = vmatprep.subr.bf16.mxu0 0
    %4447 = vmatpush2.bf16.msra.mxu0 0
    %4448 = vmatprep.subr.bf16.mxu0 0
    %4449 = vmatpush2.bf16.msra.mxu0 0
    %4450 = vmatprep.subr.bf16.mxu0 0
    %4451 = vmatpush2.bf16.msra.mxu0 0
    %4452 = vmatprep.subr.bf16.mxu0 0
    %4453 = vmatpush2.bf16.msra.mxu0 0
    %4454 = vmatprep.subr.bf16.mxu0 0
    %4455 = vmatpush2.bf16.msra.mxu0 0
    %4456 = vmatprep.subr.bf16.mxu0 0
    %4457 = vmatpush2.bf16.msra.mxu0 %v4410
    %4458 = vmatprep.mubr.bf16.mxu0 %v4421
    %4459 = vmatmul.mubr.bf16.gmra.mxu0 %v4344
    %v4460 = vpop.f32.mrf.mxu0
    %v4461 = vadd.f32 0.0, %v4460
    %v4462 = vpop.f32.mrf.mxu0
    %v4463 = vpop.f32.mrf.mxu0
    %v4464 = vadd.f32 0.0, %v4463
    %v4465 = vpop.f32.mrf.mxu0
    %4466 = vmatprep.mubr.bf16.mxu0 %v4424
    %4467 = vmatmul.mubr.bf16.gmra.mxu0 %v4346
    %v4468 = vpop.f32.mrf.mxu0
    %v4469 = vadd.f32 0.0, %v4468
    %v4470 = vpop.f32.mrf.mxu0
    %v4471 = vpop.f32.mrf.mxu0
    %v4472 = vadd.f32 0.0, %v4471
    %v4473 = vpop.f32.mrf.mxu0
    %4474 = vdwg.mxu0
    %v4475 = vld [vmem:[#allocation34] sm:$0x1]
    %v4477 = vlaneseq
    %v4478 = vshrl.u32 %v4477, 7
    %v4479 = vsub.s32 0, %v4478
    %v4480 = vrot.slane %v4475, %v4479
    %v4482 = vmul.f32 %v4461, %v4480
    %v4483 = vmul.f32 %v4464, %v4480
    %v4484 = vmul.f32 %v4469, %v4480
    %v4485 = vmul.f32 %v4472, %v4480
    %v4486 = vld [vmem:[#allocation35] sm:$0x1]
    %v4488 = vlaneseq
    %v4489 = vshrl.u32 %v4488, 7
    %v4490 = vsub.s32 0, %v4489
    %v4491 = vrot.slane %v4486, %v4490
    %v4493 = vadd.f32 %v4482, %v4491
    %v4494 = vadd.f32 %v4483, %v4491
    %v4495 = vadd.f32 %v4484, %v4491
    %v4496 = vadd.f32 %v4485, %v4491
    %v4497 = vadd.f32 %v4493, %v3133
    %v4498 = vadd.f32 %v4494, %v3134
    %v4499 = vadd.f32 %v4495, %v3135
    %v4500 = vadd.f32 %v4496, %v3136
    %v4501 = vpack.c.bf16 %v4498, %v4497
    %v4502 = vpack.c.bf16 %v4500, %v4499
    %v4503 = vld [vmem:[%s57] sm:$0xff]
    %v4504 = vld [vmem:[%s57 + $0x8] sm:$0xff]
    %v4505 = vld [vmem:[%s57 + $0x10] sm:$0xff]
    %v4509 = vunpack.c.l.b16 %v4503
    %v4510 = vunpack.c.h.b16 %v4503
    %v4511 = vunpack.c.l.b16 %v4504
    %v4512 = vunpack.c.h.b16 %v4504
    %v4513 = vunpack.c.l.b16 %v4505
    %v4514 = vunpack.c.h.b16 %v4505
    %v4515 = vpack.c.b16 %v4511, %v4509
    %v4516 = vpack.c.b16 %v4512, %v4510
    %v4517 = vpack.c.b16 %v4513, %v4513
    %v4518 = vpack.c.b16 %v4514, %v4514
    %v4522 = vsel %vm3157, %v4501, 0
    %v4525 = vsel %vm3157, %v4502, 0
    %v4528 = vsel %vm3164, %v4517, 0
    %v4531 = vsel %vm3164, %v4518, 0
    %4533 = vmatprep.subr.bf16.mxu0 0
    %4534 = vmatpush1.bf16.msra.mxu0 0
    %4535 = vmatprep.subr.bf16.mxu0 0
    %4536 = vmatpush1.bf16.msra.mxu0 0
    %4537 = vmatprep.subr.bf16.mxu0 0
    %4538 = vmatpush1.bf16.msra.mxu0 0
    %4539 = vmatprep.subr.bf16.mxu0 0
    %4540 = vmatpush1.bf16.msra.mxu0 0
    %4541 = vmatprep.subr.bf16.mxu0 0
    %4542 = vmatpush1.bf16.msra.mxu0 0
    %4543 = vmatprep.subr.bf16.mxu0 0
    %4544 = vmatpush1.bf16.msra.mxu0 0
    %4545 = vmatprep.subr.bf16.mxu0 %v4531
    %4546 = vmatpush1.bf16.msra.mxu0 %v4528
    %4547 = vmatprep.subr.bf16.mxu0 %v4516
    %4548 = vmatpush1.bf16.msra.mxu0 %v4515
    %4549 = vmatprep.subr.bf16.mxu0 0
    %4550 = vmatpush2.bf16.msra.mxu0 0
    %4551 = vmatprep.subr.bf16.mxu0 0
    %4552 = vmatpush2.bf16.msra.mxu0 0
    %4553 = vmatprep.subr.bf16.mxu0 0
    %4554 = vmatpush2.bf16.msra.mxu0 0
    %4555 = vmatprep.subr.bf16.mxu0 0
    %4556 = vmatpush2.bf16.msra.mxu0 0
    %4557 = vmatprep.subr.bf16.mxu0 0
    %4558 = vmatpush2.bf16.msra.mxu0 0
    %4559 = vmatprep.subr.bf16.mxu0 0
    %4560 = vmatpush2.bf16.msra.mxu0 0
    %4561 = vmatprep.subr.bf16.mxu0 0
    %4562 = vmatpush2.bf16.msra.mxu0 0
    %4563 = vmatprep.subr.bf16.mxu0 0
    %4564 = vmatpush2.bf16.msra.mxu0 0
    %4565 = vmatprep.mubr.bf16.mxu0 0
    %4566 = vmatmul.mubr.bf16.gmra.mxu0 %v4522
    %v4567 = vpop.f32.mrf.mxu0
    %v4568 = vadd.f32 0.0, %v4567
    %v4569 = vpop.f32.mrf.mxu0
    %v4570 = vadd.f32 0.0, %v4569
    %v4571 = vpop.f32.mrf.mxu0
    %v4572 = vadd.f32 0.0, %v4571
    %v4573 = vpop.f32.mrf.mxu0
    %v4574 = vadd.f32 0.0, %v4573
    %4575 = vmatprep.mubr.bf16.mxu0 0
    %4576 = vmatmul.mubr.bf16.gmra.mxu0 %v4525
    %v4577 = vpop.f32.mrf.mxu0
    %v4578 = vadd.f32 0.0, %v4577
    %v4579 = vpop.f32.mrf.mxu0
    %v4580 = vadd.f32 0.0, %v4579
    %v4581 = vpop.f32.mrf.mxu0
    %v4582 = vadd.f32 0.0, %v4581
    %v4583 = vpop.f32.mrf.mxu0
    %v4584 = vadd.f32 0.0, %v4583
    %4585 = vdwg.mxu0
    %v4586 = vld [vmem:[%s59] sm:$0x3]
    %v4588 = vlaneseq
    %v4589 = vshrl.u32 %v4588, 7
    %v4590 = vsub.s32 0, %v4589
    %v4591 = vrot.slane %v4586, %v4590
    %v4592 = vlaneseq
    %v4593 = vshrl.u32 %v4592, 7
    %v4594 = vsub.s32 1, %v4593
    %v4595 = vrot.slane %v4586, %v4594
    %v4598 = vmul.f32 %v4568, %v4591
    %v4599 = vmul.f32 %v4570, %v4595
    %v4600 = vmul.f32 %v4572, %v4591
    %v4601 = vmul.f32 %v4574, %v4595
    %v4602 = vmul.f32 %v4578, %v4591
    %v4603 = vmul.f32 %v4580, %v4595
    %v4604 = vmul.f32 %v4582, %v4591
    %v4605 = vmul.f32 %v4584, %v4595
    %v4606 = vld [vmem:[%s61] sm:$0x3]
    %v4608 = vlaneseq
    %v4609 = vshrl.u32 %v4608, 7
    %v4610 = vsub.s32 0, %v4609
    %v4611 = vrot.slane %v4606, %v4610
    %v4612 = vlaneseq
    %v4613 = vshrl.u32 %v4612, 7
    %v4614 = vsub.s32 1, %v4613
    %v4615 = vrot.slane %v4606, %v4614
    %v4618 = vadd.f32 %v4598, %v4611
    %v4619 = vadd.f32 %v4599, %v4615
    %v4620 = vadd.f32 %v4600, %v4611
    %v4621 = vadd.f32 %v4601, %v4615
    %v4622 = vadd.f32 %v4602, %v4611
    %v4623 = vadd.f32 %v4603, %v4615
    %v4624 = vadd.f32 %v4604, %v4611
    %v4625 = vadd.f32 %v4605, %v4615
    %v4626 = vmax.f32 %v4618, 0.0
    %v4627 = vmax.f32 %v4619, 0.0
    %v4628 = vmax.f32 %v4620, 0.0
    %v4629 = vmax.f32 %v4621, 0.0
    %v4630 = vmax.f32 %v4622, 0.0
    %v4631 = vmax.f32 %v4623, 0.0
    %v4632 = vmax.f32 %v4624, 0.0
    %v4633 = vmax.f32 %v4625, 0.0
    %v4634 = vmin.f32 %v4626, 6.0
    %v4635 = vmin.f32 %v4627, 6.0
    %v4636 = vmin.f32 %v4628, 6.0
    %v4637 = vmin.f32 %v4629, 6.0
    %v4638 = vmin.f32 %v4630, 6.0
    %v4639 = vmin.f32 %v4631, 6.0
    %v4640 = vmin.f32 %v4632, 6.0
    %v4641 = vmin.f32 %v4633, 6.0
    %4642 = vst [vmem:[#allocation8] sm:$0x3f] 0.0
    %4643 = vst.msk [vmem:[#allocation8 + $0x8] sm:$0x3f] %vm3281, 0.0
    %4644 = vst [vmem:[#allocation8 + $0x10] sm:$0x3f] 0.0
    %4645 = vst.msk [vmem:[#allocation8 + $0x18] sm:$0x3f] %vm3281, 0.0
    %4646 = vst [vmem:[#allocation8 + $0x20] sm:$0x3f] 0.0
    %4647 = vst.msk [vmem:[#allocation8 + $0x28] sm:$0x3f] %vm3281, 0.0
    %4648 = vst [vmem:[#allocation8 + $0x30] sm:$0x3f] 0.0
    %4649 = vst.msk [vmem:[#allocation8 + $0x38] sm:$0x3f] %vm3281, 0.0
    %4650 = vst [vmem:[#allocation8 + $0x40] sm:$0x3f] 0.0
    %4651 = vst.msk [vmem:[#allocation8 + $0x48] sm:$0x3f] %vm3281, 0.0
    %4652 = vst [vmem:[#allocation8 + $0x50] sm:$0x3f] 0.0
    %4653 = vst.msk [vmem:[#allocation8 + $0x58] sm:$0x3f] %vm3281, 0.0
    %4654 = vst [vmem:[#allocation8 + $0x60] sm:$0x3f] 0.0
    %4655 = vst.msk [vmem:[#allocation8 + $0x68] sm:$0x3f] %vm3281, 0.0
    %4656 = vst [vmem:[#allocation8 + $0x70] sm:$0x3f] 0.0
    %4657 = vst.msk [vmem:[#allocation8 + $0x78] sm:$0x3f] %vm3281, 0.0
    %4658 = vst [vmem:[#allocation8 + $0x80] sm:$0x3f] 0.0
    %4659 = vst.msk [vmem:[#allocation8 + $0x88] sm:$0x3f] %vm3281, 0.0
    %4660 = vst [vmem:[#allocation8 + $0x90] sm:$0x3f] 0.0
    %4661 = vst.msk [vmem:[#allocation8 + $0x98] sm:$0x3f] %vm3281, 0.0
    %4662 = vst [vmem:[#allocation8 + $0xa0] sm:$0x3f] 0.0
    %4663 = vst.msk [vmem:[#allocation8 + $0xa8] sm:$0x3f] %vm3281, 0.0
    %4664 = vst [vmem:[#allocation8 + $0xb0] sm:$0x3f] 0.0
    %4665 = vst.msk [vmem:[#allocation8 + $0xb8] sm:$0x3f] %vm3281, 0.0
    %v4668 = vrot.slane %v4634, 7
    %v4669 = vrot.slane %v4635, 7
    %s4672 = scalar_lea.vmem [#allocation8], 16
    %4673 = vst [vmem:[%s4672] sm:$0x1e] %v4668
    %4674 = vst.msk [vmem:[%s4672 + $0x8] sm:$0x1e] %vm3313, %v4669
    %v4675 = vrot.slane %v4634, 3
    %v4676 = vrot.slane %v4635, 3
    %s4679 = scalar_lea.vmem [#allocation8], 32
    %4680 = vst [vmem:[%s4679] sm:$0x1e] %v4675
    %4681 = vst.msk [vmem:[%s4679 + $0x8] sm:$0x1e] %vm3313, %v4676
    %v4684 = vrot.slane %v4636, 7
    %v4685 = vrot.slane %v4637, 7
    %s4688 = scalar_lea.vmem [#allocation8], 48
    %4689 = vst [vmem:[%s4688] sm:$0x1e] %v4684
    %4690 = vst.msk [vmem:[%s4688 + $0x8] sm:$0x1e] %vm3313, %v4685
    %v4691 = vrot.slane %v4636, 3
    %v4692 = vrot.slane %v4637, 3
    %s4695 = scalar_lea.vmem [#allocation8], 64
    %4696 = vst [vmem:[%s4695] sm:$0x1e] %v4691
    %4697 = vst.msk [vmem:[%s4695 + $0x8] sm:$0x1e] %vm3313, %v4692
    %v4700 = vrot.slane %v4638, 7
    %v4701 = vrot.slane %v4639, 7
    %s4704 = scalar_lea.vmem [#allocation8], 112
    %4705 = vst [vmem:[%s4704] sm:$0x1e] %v4700
    %4706 = vst.msk [vmem:[%s4704 + $0x8] sm:$0x1e] %vm3313, %v4701
    %v4707 = vrot.slane %v4638, 3
    %v4708 = vrot.slane %v4639, 3
    %s4711 = scalar_lea.vmem [#allocation8], 128
    %4712 = vst [vmem:[%s4711] sm:$0x1e] %v4707
    %4713 = vst.msk [vmem:[%s4711 + $0x8] sm:$0x1e] %vm3313, %v4708
    %v4716 = vrot.slane %v4640, 7
    %v4717 = vrot.slane %v4641, 7
    %s4720 = scalar_lea.vmem [#allocation8], 144
    %4721 = vst [vmem:[%s4720] sm:$0x1e] %v4716
    %4722 = vst.msk [vmem:[%s4720 + $0x8] sm:$0x1e] %vm3313, %v4717
    %v4723 = vrot.slane %v4640, 3
    %v4724 = vrot.slane %v4641, 3
    %s4727 = scalar_lea.vmem [#allocation8], 160
    %4728 = vst [vmem:[%s4727] sm:$0x1e] %v4723
    %4729 = vst.msk [vmem:[%s4727 + $0x8] sm:$0x1e] %vm3313, %v4724
    %v4730 = vld [vmem:[%s65] sm:$0x3]
    %v4731 = vld [vmem:[%s67] sm:$0x3]
    %v4732 = vld [vmem:[#allocation8] sm:$0x7]
    %v4733 = vld [vmem:[#allocation8 + $0x8] sm:$0x7]
    %v4734 = vld [vmem:[#allocation8 + $0x60] sm:$0x7]
    %v4735 = vld [vmem:[#allocation8 + $0x68] sm:$0x7]
    %v4736 = vld [vmem:[%s63] sm:$0x7]
    %v4737 = vld [vmem:[%s63 + $0x8] sm:$0x7]
    %v4738 = vmul.f32 %v4732, %v4736
    %v4739 = vmul.f32 %v4733, %v4737
    %v4740 = vmul.f32 %v4734, %v4736
    %v4741 = vmul.f32 %v4735, %v4737
    %vm4742 = vcmask 1042432
    %v4743 = vsel %vm4742, %v4738, 0.0
    %v4744 = vrot.slane %v4743, 4
    %v4745 = vadd.f32 %v4743, %v4744
    %v4746 = vrot.slane %v4745, 2
    %v4747 = vadd.f32 %v4745, %v4746
    %v4748 = vrot.slane %v4747, 1
    %v4749 = vadd.f32 %v4747, %v4748
    %vm4750 = vcmask 124928
    %v4751 = vsel %vm4750, %v4739, 0.0
    %v4752 = vrot.slane %v4751, 4
    %v4753 = vadd.f32 %v4751, %v4752
    %v4754 = vrot.slane %v4753, 2
    %v4755 = vadd.f32 %v4753, %v4754
    %v4756 = vrot.slane %v4755, 1
    %v4757 = vadd.f32 %v4755, %v4756
    %v4758 = vsel %vm4742, %v4740, 0.0
    %v4759 = vrot.slane %v4758, 4
    %v4760 = vadd.f32 %v4758, %v4759
    %v4761 = vrot.slane %v4760, 2
    %v4762 = vadd.f32 %v4760, %v4761
    %v4763 = vrot.slane %v4762, 1
    %v4764 = vadd.f32 %v4762, %v4763
    %v4765 = vsel %vm4750, %v4741, 0.0
    %v4766 = vrot.slane %v4765, 4
    %v4767 = vadd.f32 %v4765, %v4766
    %v4768 = vrot.slane %v4767, 2
    %v4769 = vadd.f32 %v4767, %v4768
    %v4770 = vrot.slane %v4769, 1
    %v4771 = vadd.f32 %v4769, %v4770
    %v4772 = vadd.f32 %v4749, 0.0
    %v4773 = vadd.f32 %v4757, 0.0
    %v4774 = vadd.f32 %v4764, 0.0
    %v4775 = vadd.f32 %v4771, 0.0
    %v4776 = vld [vmem:[%s4672] sm:$0x7]
    %v4777 = vld [vmem:[%s4672 + $0x8] sm:$0x7]
    %v4778 = vld [vmem:[%s4672 + $0x60] sm:$0x7]
    %v4779 = vld [vmem:[%s4672 + $0x68] sm:$0x7]
    %v4780 = vld [vmem:[%s63] sm:$0x38]
    %v4781 = vld [vmem:[%s63 + $0x8] sm:$0x38]
    %v4784 = vrot.slane %v4780, 3
    %v4785 = vrot.slane %v4781, 3
    %v4788 = vmul.f32 %v4776, %v4784
    %v4789 = vmul.f32 %v4777, %v4785
    %v4790 = vmul.f32 %v4778, %v4784
    %v4791 = vmul.f32 %v4779, %v4785
    %v4792 = vsel %vm4742, %v4788, 0.0
    %v4793 = vrot.slane %v4792, 4
    %v4794 = vadd.f32 %v4792, %v4793
    %v4795 = vrot.slane %v4794, 2
    %v4796 = vadd.f32 %v4794, %v4795
    %v4797 = vrot.slane %v4796, 1
    %v4798 = vadd.f32 %v4796, %v4797
    %v4799 = vsel %vm4750, %v4789, 0.0
    %v4800 = vrot.slane %v4799, 4
    %v4801 = vadd.f32 %v4799, %v4800
    %v4802 = vrot.slane %v4801, 2
    %v4803 = vadd.f32 %v4801, %v4802
    %v4804 = vrot.slane %v4803, 1
    %v4805 = vadd.f32 %v4803, %v4804
    %v4806 = vsel %vm4742, %v4790, 0.0
    %v4807 = vrot.slane %v4806, 4
    %v4808 = vadd.f32 %v4806, %v4807
    %v4809 = vrot.slane %v4808, 2
    %v4810 = vadd.f32 %v4808, %v4809
    %v4811 = vrot.slane %v4810, 1
    %v4812 = vadd.f32 %v4810, %v4811
    %v4813 = vsel %vm4750, %v4791, 0.0
    %v4814 = vrot.slane %v4813, 4
    %v4815 = vadd.f32 %v4813, %v4814
    %v4816 = vrot.slane %v4815, 2
    %v4817 = vadd.f32 %v4815, %v4816
    %v4818 = vrot.slane %v4817, 1
    %v4819 = vadd.f32 %v4817, %v4818
    %v4820 = vadd.f32 %v4772, %v4798
    %v4821 = vadd.f32 %v4773, %v4805
    %v4822 = vadd.f32 %v4774, %v4812
    %v4823 = vadd.f32 %v4775, %v4819
    %v4824 = vld [vmem:[%s4679] sm:$0x7]
    %v4825 = vld [vmem:[%s4679 + $0x8] sm:$0x7]
    %v4826 = vld [vmem:[%s4679 + $0x60] sm:$0x7]
    %v4827 = vld [vmem:[%s4679 + $0x68] sm:$0x7]
    %v4828 = vld [vmem:[%s63] sm:$0xc0]
    %v4829 = vld [vmem:[%s63 + $0x8] sm:$0xc0]
    %v4830 = vld [vmem:[%s63 + $0x10] sm:$0x1]
    %v4831 = vld [vmem:[%s63 + $0x18] sm:$0x1]
    %vm4836 = vcmask 1041408
    %v4837 = vrot.slane %v4828, 6
    %v4838 = vrot.slane %v4830, 6
    %v4839 = vsel %vm4836, %v4837, %v4838
    %v4840 = vrot.slane %v4829, 6
    %v4841 = vrot.slane %v4831, 6
    %v4842 = vsel %vm4836, %v4840, %v4841
    %v4845 = vmul.f32 %v4824, %v4839
    %v4846 = vmul.f32 %v4825, %v4842
    %v4847 = vmul.f32 %v4826, %v4839
    %v4848 = vmul.f32 %v4827, %v4842
    %v4849 = vsel %vm4742, %v4845, 0.0
    %v4850 = vrot.slane %v4849, 4
    %v4851 = vadd.f32 %v4849, %v4850
    %v4852 = vrot.slane %v4851, 2
    %v4853 = vadd.f32 %v4851, %v4852
    %v4854 = vrot.slane %v4853, 1
    %v4855 = vadd.f32 %v4853, %v4854
    %v4856 = vsel %vm4750, %v4846, 0.0
    %v4857 = vrot.slane %v4856, 4
    %v4858 = vadd.f32 %v4856, %v4857
    %v4859 = vrot.slane %v4858, 2
    %v4860 = vadd.f32 %v4858, %v4859
    %v4861 = vrot.slane %v4860, 1
    %v4862 = vadd.f32 %v4860, %v4861
    %v4863 = vsel %vm4742, %v4847, 0.0
    %v4864 = vrot.slane %v4863, 4
    %v4865 = vadd.f32 %v4863, %v4864
    %v4866 = vrot.slane %v4865, 2
    %v4867 = vadd.f32 %v4865, %v4866
    %v4868 = vrot.slane %v4867, 1
    %v4869 = vadd.f32 %v4867, %v4868
    %v4870 = vsel %vm4750, %v4848, 0.0
    %v4871 = vrot.slane %v4870, 4
    %v4872 = vadd.f32 %v4870, %v4871
    %v4873 = vrot.slane %v4872, 2
    %v4874 = vadd.f32 %v4872, %v4873
    %v4875 = vrot.slane %v4874, 1
    %v4876 = vadd.f32 %v4874, %v4875
    %v4877 = vadd.f32 %v4820, %v4855
    %v4878 = vadd.f32 %v4821, %v4862
    %v4879 = vadd.f32 %v4822, %v4869
    %v4880 = vadd.f32 %v4823, %v4876
    %v4882 = vlaneseq
    %v4883 = vshrl.u32 %v4882, 7
    %v4884 = vsub.s32 0, %v4883
    %v4885 = vrot.slane %v4730, %v4884
    %v4886 = vlaneseq
    %v4887 = vshrl.u32 %v4886, 7
    %v4888 = vsub.s32 1, %v4887
    %v4889 = vrot.slane %v4730, %v4888
    %v4892 = vmul.f32 %v4877, %v4885
    %v4893 = vmul.f32 %v4878, %v4889
    %v4894 = vmul.f32 %v4879, %v4885
    %v4895 = vmul.f32 %v4880, %v4889
    %v4897 = vlaneseq
    %v4898 = vshrl.u32 %v4897, 7
    %v4899 = vsub.s32 0, %v4898
    %v4900 = vrot.slane %v4731, %v4899
    %v4901 = vlaneseq
    %v4902 = vshrl.u32 %v4901, 7
    %v4903 = vsub.s32 1, %v4902
    %v4904 = vrot.slane %v4731, %v4903
    %v4907 = vadd.f32 %v4892, %v4900
    %v4908 = vadd.f32 %v4893, %v4904
    %v4909 = vadd.f32 %v4894, %v4900
    %v4910 = vadd.f32 %v4895, %v4904
    %v4911 = vmax.f32 %v4907, 0.0
    %v4912 = vmax.f32 %v4908, 0.0
    %v4913 = vmax.f32 %v4909, 0.0
    %v4914 = vmax.f32 %v4910, 0.0
    %v4915 = vmin.f32 %v4911, 6.0
    %v4916 = vmin.f32 %v4912, 6.0
    %v4917 = vmin.f32 %v4913, 6.0
    %v4918 = vmin.f32 %v4914, 6.0
    %v4921 = vcombine.low %v4915, %v4916
    %v4923 = vunpack.c.l.s4 1966171168
    %v4924 = vunpack.c.0.s8 %v4923
    %v4925 = vlaneseq
    %v4926 = vshrl.u32 %v4925, 7
    %v4927 = vsub.s32 %v4924, %v4926
    %v4928 = vrot.slane %v4921, %v4927
    %v4930 = vunpack.c.l.s4 1966171168
    %v4931 = vunpack.c.0.s8 %v4930
    %v4932 = vlaneseq
    %v4933 = vshrl.u32 %v4932, 7
    %v4934 = vsub.s32 %v4931, %v4933
    %v4935 = vrot.slane %v4928, %v4934
    %v4937 = vlaneseq
    %vm4938 = vcmp.ge.s32.totalorder %v4937, 0
    %vm4939 = vcmp.lt.s32.totalorder %v4937, 144
    %vm4940 = vmand %vm4938, %vm4939
    %4941 = vst.msk [vmem:[#allocation9] ss:$8 sm:$0x3] %vm4940, %v4935
    %4942 = vst.msk [vmem:[#allocation9] ss:$8 sm:$0x0] %vm4940, %v4935
    %v4945 = vcombine.low %v4917, %v4918
    %v4947 = vunpack.c.l.s4 1966171168
    %v4948 = vunpack.c.0.s8 %v4947
    %v4949 = vlaneseq
    %v4950 = vshrl.u32 %v4949, 7
    %v4951 = vsub.s32 %v4948, %v4950
    %v4952 = vrot.slane %v4945, %v4951
    %v4954 = vunpack.c.l.s4 1966171168
    %v4955 = vunpack.c.0.s8 %v4954
    %v4956 = vlaneseq
    %v4957 = vshrl.u32 %v4956, 7
    %v4958 = vsub.s32 %v4955, %v4957
    %v4959 = vrot.slane %v4952, %v4958
    %s4961 = scalar_lea.vmem [#allocation9], 4
    %4962 = vst.msk [vmem:[%s4961] ss:$8 sm:$0x3] %vm4940, %v4959
    %4963 = vst.msk [vmem:[%s4961] ss:$8 sm:$0x0] %vm4940, %v4959
    %v4964 = vld [vmem:[#allocation8] sm:$0x1c]
    %v4965 = vld [vmem:[#allocation8 + $0x8] sm:$0x1c]
    %v4966 = vld [vmem:[#allocation8 + $0x60] sm:$0x1c]
    %v4967 = vld [vmem:[#allocation8 + $0x68] sm:$0x1c]
    %v4968 = vld [vmem:[%s63] sm:$0x7]
    %v4969 = vld [vmem:[%s63 + $0x8] sm:$0x7]
    %v4972 = vrot.slane %v4968, 6
    %v4973 = vrot.slane %v4969, 6
    %v4976 = vmul.f32 %v4964, %v4972
    %v4977 = vmul.f32 %v4965, %v4973
    %v4978 = vmul.f32 %v4966, %v4972
    %v4979 = vmul.f32 %v4967, %v4973
    %v4984 = vrot.slane %v4976, 2
    %v4985 = vrot.slane %v4977, 2
    %v4986 = vrot.slane %v4978, 2
    %v4987 = vrot.slane %v4979, 2
    %v4992 = vsel %vm4742, %v4984, 0.0
    %v4993 = vrot.slane %v4992, 4
    %v4994 = vadd.f32 %v4992, %v4993
    %v4995 = vrot.slane %v4994, 2
    %v4996 = vadd.f32 %v4994, %v4995
    %v4997 = vrot.slane %v4996, 1
    %v4998 = vadd.f32 %v4996, %v4997
    %v4999 = vsel %vm4750, %v4985, 0.0
    %v5000 = vrot.slane %v4999, 4
    %v5001 = vadd.f32 %v4999, %v5000
    %v5002 = vrot.slane %v5001, 2
    %v5003 = vadd.f32 %v5001, %v5002
    %v5004 = vrot.slane %v5003, 1
    %v5005 = vadd.f32 %v5003, %v5004
    %v5006 = vsel %vm4742, %v4986, 0.0
    %v5007 = vrot.slane %v5006, 4
    %v5008 = vadd.f32 %v5006, %v5007
    %v5009 = vrot.slane %v5008, 2
    %v5010 = vadd.f32 %v5008, %v5009
    %v5011 = vrot.slane %v5010, 1
    %v5012 = vadd.f32 %v5010, %v5011
    %v5013 = vsel %vm4750, %v4987, 0.0
    %v5014 = vrot.slane %v5013, 4
    %v5015 = vadd.f32 %v5013, %v5014
    %v5016 = vrot.slane %v5015, 2
    %v5017 = vadd.f32 %v5015, %v5016
    %v5018 = vrot.slane %v5017, 1
    %v5019 = vadd.f32 %v5017, %v5018
    %v5020 = vadd.f32 %v4998, 0.0
    %v5021 = vadd.f32 %v5005, 0.0
    %v5022 = vadd.f32 %v5012, 0.0
    %v5023 = vadd.f32 %v5019, 0.0
    %v5024 = vld [vmem:[%s4672] sm:$0x1c]
    %v5025 = vld [vmem:[%s4672 + $0x8] sm:$0x1c]
    %v5026 = vld [vmem:[%s4672 + $0x60] sm:$0x1c]
    %v5027 = vld [vmem:[%s4672 + $0x68] sm:$0x1c]
    %v5028 = vld [vmem:[%s63] sm:$0x38]
    %v5029 = vld [vmem:[%s63 + $0x8] sm:$0x38]
    %v5032 = vrot.slane %v5028, 1
    %v5033 = vrot.slane %v5029, 1
    %v5036 = vmul.f32 %v5024, %v5032
    %v5037 = vmul.f32 %v5025, %v5033
    %v5038 = vmul.f32 %v5026, %v5032
    %v5039 = vmul.f32 %v5027, %v5033
    %v5044 = vrot.slane %v5036, 2
    %v5045 = vrot.slane %v5037, 2
    %v5046 = vrot.slane %v5038, 2
    %v5047 = vrot.slane %v5039, 2
    %v5052 = vsel %vm4742, %v5044, 0.0
    %v5053 = vrot.slane %v5052, 4
    %v5054 = vadd.f32 %v5052, %v5053
    %v5055 = vrot.slane %v5054, 2
    %v5056 = vadd.f32 %v5054, %v5055
    %v5057 = vrot.slane %v5056, 1
    %v5058 = vadd.f32 %v5056, %v5057
    %v5059 = vsel %vm4750, %v5045, 0.0
    %v5060 = vrot.slane %v5059, 4
    %v5061 = vadd.f32 %v5059, %v5060
    %v5062 = vrot.slane %v5061, 2
    %v5063 = vadd.f32 %v5061, %v5062
    %v5064 = vrot.slane %v5063, 1
    %v5065 = vadd.f32 %v5063, %v5064
    %v5066 = vsel %vm4742, %v5046, 0.0
    %v5067 = vrot.slane %v5066, 4
    %v5068 = vadd.f32 %v5066, %v5067
    %v5069 = vrot.slane %v5068, 2
    %v5070 = vadd.f32 %v5068, %v5069
    %v5071 = vrot.slane %v5070, 1
    %v5072 = vadd.f32 %v5070, %v5071
    %v5073 = vsel %vm4750, %v5047, 0.0
    %v5074 = vrot.slane %v5073, 4
    %v5075 = vadd.f32 %v5073, %v5074
    %v5076 = vrot.slane %v5075, 2
    %v5077 = vadd.f32 %v5075, %v5076
    %v5078 = vrot.slane %v5077, 1
    %v5079 = vadd.f32 %v5077, %v5078
    %v5080 = vadd.f32 %v5020, %v5058
    %v5081 = vadd.f32 %v5021, %v5065
    %v5082 = vadd.f32 %v5022, %v5072
    %v5083 = vadd.f32 %v5023, %v5079
    %v5084 = vld [vmem:[%s4679] sm:$0x1c]
    %v5085 = vld [vmem:[%s4679 + $0x8] sm:$0x1c]
    %v5086 = vld [vmem:[%s4679 + $0x60] sm:$0x1c]
    %v5087 = vld [vmem:[%s4679 + $0x68] sm:$0x1c]
    %v5088 = vld [vmem:[%s63] sm:$0xc0]
    %v5089 = vld [vmem:[%s63 + $0x8] sm:$0xc0]
    %v5090 = vld [vmem:[%s63 + $0x10] sm:$0x1]
    %v5091 = vld [vmem:[%s63 + $0x18] sm:$0x1]
    %v5096 = vrot.slane %v5088, 4
    %v5097 = vrot.slane %v5090, 4
    %v5098 = vsel %vm3164, %v5096, %v5097
    %v5099 = vrot.slane %v5089, 4
    %v5100 = vrot.slane %v5091, 4
    %v5101 = vsel %vm3164, %v5099, %v5100
    %v5104 = vmul.f32 %v5084, %v5098
    %v5105 = vmul.f32 %v5085, %v5101
    %v5106 = vmul.f32 %v5086, %v5098
    %v5107 = vmul.f32 %v5087, %v5101
    %v5112 = vrot.slane %v5104, 2
    %v5113 = vrot.slane %v5105, 2
    %v5114 = vrot.slane %v5106, 2
    %v5115 = vrot.slane %v5107, 2
    %v5120 = vsel %vm4742, %v5112, 0.0
    %v5121 = vrot.slane %v5120, 4
    %v5122 = vadd.f32 %v5120, %v5121
    %v5123 = vrot.slane %v5122, 2
    %v5124 = vadd.f32 %v5122, %v5123
    %v5125 = vrot.slane %v5124, 1
    %v5126 = vadd.f32 %v5124, %v5125
    %v5127 = vsel %vm4750, %v5113, 0.0
    %v5128 = vrot.slane %v5127, 4
    %v5129 = vadd.f32 %v5127, %v5128
    %v5130 = vrot.slane %v5129, 2
    %v5131 = vadd.f32 %v5129, %v5130
    %v5132 = vrot.slane %v5131, 1
    %v5133 = vadd.f32 %v5131, %v5132
    %v5134 = vsel %vm4742, %v5114, 0.0
    %v5135 = vrot.slane %v5134, 4
    %v5136 = vadd.f32 %v5134, %v5135
    %v5137 = vrot.slane %v5136, 2
    %v5138 = vadd.f32 %v5136, %v5137
    %v5139 = vrot.slane %v5138, 1
    %v5140 = vadd.f32 %v5138, %v5139
    %v5141 = vsel %vm4750, %v5115, 0.0
    %v5142 = vrot.slane %v5141, 4
    %v5143 = vadd.f32 %v5141, %v5142
    %v5144 = vrot.slane %v5143, 2
    %v5145 = vadd.f32 %v5143, %v5144
    %v5146 = vrot.slane %v5145, 1
    %v5147 = vadd.f32 %v5145, %v5146
    %v5148 = vadd.f32 %v5080, %v5126
    %v5149 = vadd.f32 %v5081, %v5133
    %v5150 = vadd.f32 %v5082, %v5140
    %v5151 = vadd.f32 %v5083, %v5147
    %v5152 = vmul.f32 %v5148, %v4885
    %v5153 = vmul.f32 %v5149, %v4889
    %v5154 = vmul.f32 %v5150, %v4885
    %v5155 = vmul.f32 %v5151, %v4889
    %v5156 = vadd.f32 %v5152, %v4900
    %v5157 = vadd.f32 %v5153, %v4904
    %v5158 = vadd.f32 %v5154, %v4900
    %v5159 = vadd.f32 %v5155, %v4904
    %v5160 = vmax.f32 %v5156, 0.0
    %v5161 = vmax.f32 %v5157, 0.0
    %v5162 = vmax.f32 %v5158, 0.0
    %v5163 = vmax.f32 %v5159, 0.0
    %v5164 = vmin.f32 %v5160, 6.0
    %v5165 = vmin.f32 %v5161, 6.0
    %v5166 = vmin.f32 %v5162, 6.0
    %v5167 = vmin.f32 %v5163, 6.0
    %v5170 = vcombine.low %v5164, %v5165
    %v5172 = vunpack.c.l.s4 1966171168
    %v5173 = vunpack.c.0.s8 %v5172
    %v5174 = vlaneseq
    %v5175 = vshrl.u32 %v5174, 7
    %v5176 = vsub.s32 %v5173, %v5175
    %v5177 = vrot.slane %v5170, %v5176
    %v5179 = vunpack.c.l.s4 1966171168
    %v5180 = vunpack.c.0.s8 %v5179
    %v5181 = vlaneseq
    %v5182 = vshrl.u32 %v5181, 7
    %v5183 = vsub.s32 %v5180, %v5182
    %v5184 = vrot.slane %v5177, %v5183
    %s5186 = scalar_lea.vmem [#allocation9], 1
    %5187 = vst.msk [vmem:[%s5186] ss:$8 sm:$0x3] %vm4940, %v5184
    %5188 = vst.msk [vmem:[%s5186] ss:$8 sm:$0x0] %vm4940, %v5184
    %v5191 = vcombine.low %v5166, %v5167
    %v5193 = vunpack.c.l.s4 1966171168
    %v5194 = vunpack.c.0.s8 %v5193
    %v5195 = vlaneseq
    %v5196 = vshrl.u32 %v5195, 7
    %v5197 = vsub.s32 %v5194, %v5196
    %v5198 = vrot.slane %v5191, %v5197
    %v5200 = vunpack.c.l.s4 1966171168
    %v5201 = vunpack.c.0.s8 %v5200
    %v5202 = vlaneseq
    %v5203 = vshrl.u32 %v5202, 7
    %v5204 = vsub.s32 %v5201, %v5203
    %v5205 = vrot.slane %v5198, %v5204
    %s5207 = scalar_lea.vmem [#allocation9], 5
    %5208 = vst.msk [vmem:[%s5207] ss:$8 sm:$0x3] %vm4940, %v5205
    %5209 = vst.msk [vmem:[%s5207] ss:$8 sm:$0x0] %vm4940, %v5205
    %v5210 = vld [vmem:[%s4679] sm:$0x7]
    %v5211 = vld [vmem:[%s4679 + $0x8] sm:$0x7]
    %v5212 = vld [vmem:[%s4679 + $0x60] sm:$0x7]
    %v5213 = vld [vmem:[%s4679 + $0x68] sm:$0x7]
    %v5214 = vld [vmem:[%s63] sm:$0x7]
    %v5215 = vld [vmem:[%s63 + $0x8] sm:$0x7]
    %v5216 = vmul.f32 %v5210, %v5214
    %v5217 = vmul.f32 %v5211, %v5215
    %v5218 = vmul.f32 %v5212, %v5214
    %v5219 = vmul.f32 %v5213, %v5215
    %v5220 = vsel %vm4742, %v5216, 0.0
    %v5221 = vrot.slane %v5220, 4
    %v5222 = vadd.f32 %v5220, %v5221
    %v5223 = vrot.slane %v5222, 2
    %v5224 = vadd.f32 %v5222, %v5223
    %v5225 = vrot.slane %v5224, 1
    %v5226 = vadd.f32 %v5224, %v5225
    %v5227 = vsel %vm4750, %v5217, 0.0
    %v5228 = vrot.slane %v5227, 4
    %v5229 = vadd.f32 %v5227, %v5228
    %v5230 = vrot.slane %v5229, 2
    %v5231 = vadd.f32 %v5229, %v5230
    %v5232 = vrot.slane %v5231, 1
    %v5233 = vadd.f32 %v5231, %v5232
    %v5234 = vsel %vm4742, %v5218, 0.0
    %v5235 = vrot.slane %v5234, 4
    %v5236 = vadd.f32 %v5234, %v5235
    %v5237 = vrot.slane %v5236, 2
    %v5238 = vadd.f32 %v5236, %v5237
    %v5239 = vrot.slane %v5238, 1
    %v5240 = vadd.f32 %v5238, %v5239
    %v5241 = vsel %vm4750, %v5219, 0.0
    %v5242 = vrot.slane %v5241, 4
    %v5243 = vadd.f32 %v5241, %v5242
    %v5244 = vrot.slane %v5243, 2
    %v5245 = vadd.f32 %v5243, %v5244
    %v5246 = vrot.slane %v5245, 1
    %v5247 = vadd.f32 %v5245, %v5246
    %v5248 = vadd.f32 %v5226, 0.0
    %v5249 = vadd.f32 %v5233, 0.0
    %v5250 = vadd.f32 %v5240, 0.0
    %v5251 = vadd.f32 %v5247, 0.0
    %v5252 = vld [vmem:[%s4688] sm:$0x7]
    %v5253 = vld [vmem:[%s4688 + $0x8] sm:$0x7]
    %v5254 = vld [vmem:[%s4688 + $0x60] sm:$0x7]
    %v5255 = vld [vmem:[%s4688 + $0x68] sm:$0x7]
    %v5256 = vld [vmem:[%s63] sm:$0x38]
    %v5257 = vld [vmem:[%s63 + $0x8] sm:$0x38]
    %v5260 = vrot.slane %v5256, 3
    %v5261 = vrot.slane %v5257, 3
    %v5264 = vmul.f32 %v5252, %v5260
    %v5265 = vmul.f32 %v5253, %v5261
    %v5266 = vmul.f32 %v5254, %v5260
    %v5267 = vmul.f32 %v5255, %v5261
    %v5268 = vsel %vm4742, %v5264, 0.0
    %v5269 = vrot.slane %v5268, 4
    %v5270 = vadd.f32 %v5268, %v5269
    %v5271 = vrot.slane %v5270, 2
    %v5272 = vadd.f32 %v5270, %v5271
    %v5273 = vrot.slane %v5272, 1
    %v5274 = vadd.f32 %v5272, %v5273
    %v5275 = vsel %vm4750, %v5265, 0.0
    %v5276 = vrot.slane %v5275, 4
    %v5277 = vadd.f32 %v5275, %v5276
    %v5278 = vrot.slane %v5277, 2
    %v5279 = vadd.f32 %v5277, %v5278
    %v5280 = vrot.slane %v5279, 1
    %v5281 = vadd.f32 %v5279, %v5280
    %v5282 = vsel %vm4742, %v5266, 0.0
    %v5283 = vrot.slane %v5282, 4
    %v5284 = vadd.f32 %v5282, %v5283
    %v5285 = vrot.slane %v5284, 2
    %v5286 = vadd.f32 %v5284, %v5285
    %v5287 = vrot.slane %v5286, 1
    %v5288 = vadd.f32 %v5286, %v5287
    %v5289 = vsel %vm4750, %v5267, 0.0
    %v5290 = vrot.slane %v5289, 4
    %v5291 = vadd.f32 %v5289, %v5290
    %v5292 = vrot.slane %v5291, 2
    %v5293 = vadd.f32 %v5291, %v5292
    %v5294 = vrot.slane %v5293, 1
    %v5295 = vadd.f32 %v5293, %v5294
    %v5296 = vadd.f32 %v5248, %v5274
    %v5297 = vadd.f32 %v5249, %v5281
    %v5298 = vadd.f32 %v5250, %v5288
    %v5299 = vadd.f32 %v5251, %v5295
    %v5300 = vld [vmem:[%s4695] sm:$0x7]
    %v5301 = vld [vmem:[%s4695 + $0x8] sm:$0x7]
    %v5302 = vld [vmem:[%s4695 + $0x60] sm:$0x7]
    %v5303 = vld [vmem:[%s4695 + $0x68] sm:$0x7]
    %v5304 = vld [vmem:[%s63] sm:$0xc0]
    %v5305 = vld [vmem:[%s63 + $0x8] sm:$0xc0]
    %v5306 = vld [vmem:[%s63 + $0x10] sm:$0x1]
    %v5307 = vld [vmem:[%s63 + $0x18] sm:$0x1]
    %v5312 = vrot.slane %v5304, 6
    %v5313 = vrot.slane %v5306, 6
    %v5314 = vsel %vm4836, %v5312, %v5313
    %v5315 = vrot.slane %v5305, 6
    %v5316 = vrot.slane %v5307, 6
    %v5317 = vsel %vm4836, %v5315, %v5316
    %v5320 = vmul.f32 %v5300, %v5314
    %v5321 = vmul.f32 %v5301, %v5317
    %v5322 = vmul.f32 %v5302, %v5314
    %v5323 = vmul.f32 %v5303, %v5317
    %v5324 = vsel %vm4742, %v5320, 0.0
    %v5325 = vrot.slane %v5324, 4
    %v5326 = vadd.f32 %v5324, %v5325
    %v5327 = vrot.slane %v5326, 2
    %v5328 = vadd.f32 %v5326, %v5327
    %v5329 = vrot.slane %v5328, 1
    %v5330 = vadd.f32 %v5328, %v5329
    %v5331 = vsel %vm4750, %v5321, 0.0
    %v5332 = vrot.slane %v5331, 4
    %v5333 = vadd.f32 %v5331, %v5332
    %v5334 = vrot.slane %v5333, 2
    %v5335 = vadd.f32 %v5333, %v5334
    %v5336 = vrot.slane %v5335, 1
    %v5337 = vadd.f32 %v5335, %v5336
    %v5338 = vsel %vm4742, %v5322, 0.0
    %v5339 = vrot.slane %v5338, 4
    %v5340 = vadd.f32 %v5338, %v5339
    %v5341 = vrot.slane %v5340, 2
    %v5342 = vadd.f32 %v5340, %v5341
    %v5343 = vrot.slane %v5342, 1
    %v5344 = vadd.f32 %v5342, %v5343
    %v5345 = vsel %vm4750, %v5323, 0.0
    %v5346 = vrot.slane %v5345, 4
    %v5347 = vadd.f32 %v5345, %v5346
    %v5348 = vrot.slane %v5347, 2
    %v5349 = vadd.f32 %v5347, %v5348
    %v5350 = vrot.slane %v5349, 1
    %v5351 = vadd.f32 %v5349, %v5350
    %v5352 = vadd.f32 %v5296, %v5330
    %v5353 = vadd.f32 %v5297, %v5337
    %v5354 = vadd.f32 %v5298, %v5344
    %v5355 = vadd.f32 %v5299, %v5351
    %v5356 = vmul.f32 %v5352, %v4885
    %v5357 = vmul.f32 %v5353, %v4889
    %v5358 = vmul.f32 %v5354, %v4885
    %v5359 = vmul.f32 %v5355, %v4889
    %v5360 = vadd.f32 %v5356, %v4900
    %v5361 = vadd.f32 %v5357, %v4904
    %v5362 = vadd.f32 %v5358, %v4900
    %v5363 = vadd.f32 %v5359, %v4904
    %v5364 = vmax.f32 %v5360, 0.0
    %v5365 = vmax.f32 %v5361, 0.0
    %v5366 = vmax.f32 %v5362, 0.0
    %v5367 = vmax.f32 %v5363, 0.0
    %v5368 = vmin.f32 %v5364, 6.0
    %v5369 = vmin.f32 %v5365, 6.0
    %v5370 = vmin.f32 %v5366, 6.0
    %v5371 = vmin.f32 %v5367, 6.0
    %v5374 = vcombine.low %v5368, %v5369
    %v5376 = vunpack.c.l.s4 1966171168
    %v5377 = vunpack.c.0.s8 %v5376
    %v5378 = vlaneseq
    %v5379 = vshrl.u32 %v5378, 7
    %v5380 = vsub.s32 %v5377, %v5379
    %v5381 = vrot.slane %v5374, %v5380
    %v5383 = vunpack.c.l.s4 1966171168
    %v5384 = vunpack.c.0.s8 %v5383
    %v5385 = vlaneseq
    %v5386 = vshrl.u32 %v5385, 7
    %v5387 = vsub.s32 %v5384, %v5386
    %v5388 = vrot.slane %v5381, %v5387
    %s5390 = scalar_lea.vmem [#allocation9], 2
    %5391 = vst.msk [vmem:[%s5390] ss:$8 sm:$0x3] %vm4940, %v5388
    %5392 = vst.msk [vmem:[%s5390] ss:$8 sm:$0x0] %vm4940, %v5388
    %v5395 = vcombine.low %v5370, %v5371
    %v5397 = vunpack.c.l.s4 1966171168
    %v5398 = vunpack.c.0.s8 %v5397
    %v5399 = vlaneseq
    %v5400 = vshrl.u32 %v5399, 7
    %v5401 = vsub.s32 %v5398, %v5400
    %v5402 = vrot.slane %v5395, %v5401
    %v5404 = vunpack.c.l.s4 1966171168
    %v5405 = vunpack.c.0.s8 %v5404
    %v5406 = vlaneseq
    %v5407 = vshrl.u32 %v5406, 7
    %v5408 = vsub.s32 %v5405, %v5407
    %v5409 = vrot.slane %v5402, %v5408
    %s5411 = scalar_lea.vmem [#allocation9], 6
    %5412 = vst.msk [vmem:[%s5411] ss:$8 sm:$0x3] %vm4940, %v5409
    %5413 = vst.msk [vmem:[%s5411] ss:$8 sm:$0x0] %vm4940, %v5409
    %v5414 = vld [vmem:[%s4679] sm:$0x1c]
    %v5415 = vld [vmem:[%s4679 + $0x8] sm:$0x1c]
    %v5416 = vld [vmem:[%s4679 + $0x60] sm:$0x1c]
    %v5417 = vld [vmem:[%s4679 + $0x68] sm:$0x1c]
    %v5418 = vld [vmem:[%s63] sm:$0x7]
    %v5419 = vld [vmem:[%s63 + $0x8] sm:$0x7]
    %v5422 = vrot.slane %v5418, 6
    %v5423 = vrot.slane %v5419, 6
    %v5426 = vmul.f32 %v5414, %v5422
    %v5427 = vmul.f32 %v5415, %v5423
    %v5428 = vmul.f32 %v5416, %v5422
    %v5429 = vmul.f32 %v5417, %v5423
    %v5434 = vrot.slane %v5426, 2
    %v5435 = vrot.slane %v5427, 2
    %v5436 = vrot.slane %v5428, 2
    %v5437 = vrot.slane %v5429, 2
    %v5442 = vsel %vm4742, %v5434, 0.0
    %v5443 = vrot.slane %v5442, 4
    %v5444 = vadd.f32 %v5442, %v5443
    %v5445 = vrot.slane %v5444, 2
    %v5446 = vadd.f32 %v5444, %v5445
    %v5447 = vrot.slane %v5446, 1
    %v5448 = vadd.f32 %v5446, %v5447
    %v5449 = vsel %vm4750, %v5435, 0.0
    %v5450 = vrot.slane %v5449, 4
    %v5451 = vadd.f32 %v5449, %v5450
    %v5452 = vrot.slane %v5451, 2
    %v5453 = vadd.f32 %v5451, %v5452
    %v5454 = vrot.slane %v5453, 1
    %v5455 = vadd.f32 %v5453, %v5454
    %v5456 = vsel %vm4742, %v5436, 0.0
    %v5457 = vrot.slane %v5456, 4
    %v5458 = vadd.f32 %v5456, %v5457
    %v5459 = vrot.slane %v5458, 2
    %v5460 = vadd.f32 %v5458, %v5459
    %v5461 = vrot.slane %v5460, 1
    %v5462 = vadd.f32 %v5460, %v5461
    %v5463 = vsel %vm4750, %v5437, 0.0
    %v5464 = vrot.slane %v5463, 4
    %v5465 = vadd.f32 %v5463, %v5464
    %v5466 = vrot.slane %v5465, 2
    %v5467 = vadd.f32 %v5465, %v5466
    %v5468 = vrot.slane %v5467, 1
    %v5469 = vadd.f32 %v5467, %v5468
    %v5470 = vadd.f32 %v5448, 0.0
    %v5471 = vadd.f32 %v5455, 0.0
    %v5472 = vadd.f32 %v5462, 0.0
    %v5473 = vadd.f32 %v5469, 0.0
    %v5474 = vld [vmem:[%s4688] sm:$0x1c]
    %v5475 = vld [vmem:[%s4688 + $0x8] sm:$0x1c]
    %v5476 = vld [vmem:[%s4688 + $0x60] sm:$0x1c]
    %v5477 = vld [vmem:[%s4688 + $0x68] sm:$0x1c]
    %v5478 = vld [vmem:[%s63] sm:$0x38]
    %v5479 = vld [vmem:[%s63 + $0x8] sm:$0x38]
    %v5482 = vrot.slane %v5478, 1
    %v5483 = vrot.slane %v5479, 1
    %v5486 = vmul.f32 %v5474, %v5482
    %v5487 = vmul.f32 %v5475, %v5483
    %v5488 = vmul.f32 %v5476, %v5482
    %v5489 = vmul.f32 %v5477, %v5483
    %v5494 = vrot.slane %v5486, 2
    %v5495 = vrot.slane %v5487, 2
    %v5496 = vrot.slane %v5488, 2
    %v5497 = vrot.slane %v5489, 2
    %v5502 = vsel %vm4742, %v5494, 0.0
    %v5503 = vrot.slane %v5502, 4
    %v5504 = vadd.f32 %v5502, %v5503
    %v5505 = vrot.slane %v5504, 2
    %v5506 = vadd.f32 %v5504, %v5505
    %v5507 = vrot.slane %v5506, 1
    %v5508 = vadd.f32 %v5506, %v5507
    %v5509 = vsel %vm4750, %v5495, 0.0
    %v5510 = vrot.slane %v5509, 4
    %v5511 = vadd.f32 %v5509, %v5510
    %v5512 = vrot.slane %v5511, 2
    %v5513 = vadd.f32 %v5511, %v5512
    %v5514 = vrot.slane %v5513, 1
    %v5515 = vadd.f32 %v5513, %v5514
    %v5516 = vsel %vm4742, %v5496, 0.0
    %v5517 = vrot.slane %v5516, 4
    %v5518 = vadd.f32 %v5516, %v5517
    %v5519 = vrot.slane %v5518, 2
    %v5520 = vadd.f32 %v5518, %v5519
    %v5521 = vrot.slane %v5520, 1
    %v5522 = vadd.f32 %v5520, %v5521
    %v5523 = vsel %vm4750, %v5497, 0.0
    %v5524 = vrot.slane %v5523, 4
    %v5525 = vadd.f32 %v5523, %v5524
    %v5526 = vrot.slane %v5525, 2
    %v5527 = vadd.f32 %v5525, %v5526
    %v5528 = vrot.slane %v5527, 1
    %v5529 = vadd.f32 %v5527, %v5528
    %v5530 = vadd.f32 %v5470, %v5508
    %v5531 = vadd.f32 %v5471, %v5515
    %v5532 = vadd.f32 %v5472, %v5522
    %v5533 = vadd.f32 %v5473, %v5529
    %v5534 = vld [vmem:[%s4695] sm:$0x1c]
    %v5535 = vld [vmem:[%s4695 + $0x8] sm:$0x1c]
    %v5536 = vld [vmem:[%s4695 + $0x60] sm:$0x1c]
    %v5537 = vld [vmem:[%s4695 + $0x68] sm:$0x1c]
    %v5538 = vld [vmem:[%s63] sm:$0xc0]
    %v5539 = vld [vmem:[%s63 + $0x8] sm:$0xc0]
    %v5540 = vld [vmem:[%s63 + $0x10] sm:$0x1]
    %v5541 = vld [vmem:[%s63 + $0x18] sm:$0x1]
    %v5546 = vrot.slane %v5538, 4
    %v5547 = vrot.slane %v5540, 4
    %v5548 = vsel %vm3164, %v5546, %v5547
    %v5549 = vrot.slane %v5539, 4
    %v5550 = vrot.slane %v5541, 4
    %v5551 = vsel %vm3164, %v5549, %v5550
    %v5554 = vmul.f32 %v5534, %v5548
    %v5555 = vmul.f32 %v5535, %v5551
    %v5556 = vmul.f32 %v5536, %v5548
    %v5557 = vmul.f32 %v5537, %v5551
    %v5562 = vrot.slane %v5554, 2
    %v5563 = vrot.slane %v5555, 2
    %v5564 = vrot.slane %v5556, 2
    %v5565 = vrot.slane %v5557, 2
    %v5570 = vsel %vm4742, %v5562, 0.0
    %v5571 = vrot.slane %v5570, 4
    %v5572 = vadd.f32 %v5570, %v5571
    %v5573 = vrot.slane %v5572, 2
    %v5574 = vadd.f32 %v5572, %v5573
    %v5575 = vrot.slane %v5574, 1
    %v5576 = vadd.f32 %v5574, %v5575
    %v5577 = vsel %vm4750, %v5563, 0.0
    %v5578 = vrot.slane %v5577, 4
    %v5579 = vadd.f32 %v5577, %v5578
    %v5580 = vrot.slane %v5579, 2
    %v5581 = vadd.f32 %v5579, %v5580
    %v5582 = vrot.slane %v5581, 1
    %v5583 = vadd.f32 %v5581, %v5582
    %v5584 = vsel %vm4742, %v5564, 0.0
    %v5585 = vrot.slane %v5584, 4
    %v5586 = vadd.f32 %v5584, %v5585
    %v5587 = vrot.slane %v5586, 2
    %v5588 = vadd.f32 %v5586, %v5587
    %v5589 = vrot.slane %v5588, 1
    %v5590 = vadd.f32 %v5588, %v5589
    %v5591 = vsel %vm4750, %v5565, 0.0
    %v5592 = vrot.slane %v5591, 4
    %v5593 = vadd.f32 %v5591, %v5592
    %v5594 = vrot.slane %v5593, 2
    %v5595 = vadd.f32 %v5593, %v5594
    %v5596 = vrot.slane %v5595, 1
    %v5597 = vadd.f32 %v5595, %v5596
    %v5598 = vadd.f32 %v5530, %v5576
    %v5599 = vadd.f32 %v5531, %v5583
    %v5600 = vadd.f32 %v5532, %v5590
    %v5601 = vadd.f32 %v5533, %v5597
    %v5602 = vmul.f32 %v5598, %v4885
    %v5603 = vmul.f32 %v5599, %v4889
    %v5604 = vmul.f32 %v5600, %v4885
    %v5605 = vmul.f32 %v5601, %v4889
    %v5606 = vadd.f32 %v5602, %v4900
    %v5607 = vadd.f32 %v5603, %v4904
    %v5608 = vadd.f32 %v5604, %v4900
    %v5609 = vadd.f32 %v5605, %v4904
    %v5610 = vmax.f32 %v5606, 0.0
    %v5611 = vmax.f32 %v5607, 0.0
    %v5612 = vmax.f32 %v5608, 0.0
    %v5613 = vmax.f32 %v5609, 0.0
    %v5614 = vmin.f32 %v5610, 6.0
    %v5615 = vmin.f32 %v5611, 6.0
    %v5616 = vmin.f32 %v5612, 6.0
    %v5617 = vmin.f32 %v5613, 6.0
    %v5620 = vcombine.low %v5614, %v5615
    %v5622 = vunpack.c.l.s4 1966171168
    %v5623 = vunpack.c.0.s8 %v5622
    %v5624 = vlaneseq
    %v5625 = vshrl.u32 %v5624, 7
    %v5626 = vsub.s32 %v5623, %v5625
    %v5627 = vrot.slane %v5620, %v5626
    %v5629 = vunpack.c.l.s4 1966171168
    %v5630 = vunpack.c.0.s8 %v5629
    %v5631 = vlaneseq
    %v5632 = vshrl.u32 %v5631, 7
    %v5633 = vsub.s32 %v5630, %v5632
    %v5634 = vrot.slane %v5627, %v5633
    %s5636 = scalar_lea.vmem [#allocation9], 3
    %5637 = vst.msk [vmem:[%s5636] ss:$8 sm:$0x3] %vm4940, %v5634
    %5638 = vst.msk [vmem:[%s5636] ss:$8 sm:$0x0] %vm4940, %v5634
    %v5641 = vcombine.low %v5616, %v5617
    %v5643 = vunpack.c.l.s4 1966171168
    %v5644 = vunpack.c.0.s8 %v5643
    %v5645 = vlaneseq
    %v5646 = vshrl.u32 %v5645, 7
    %v5647 = vsub.s32 %v5644, %v5646
    %v5648 = vrot.slane %v5641, %v5647
    %v5650 = vunpack.c.l.s4 1966171168
    %v5651 = vunpack.c.0.s8 %v5650
    %v5652 = vlaneseq
    %v5653 = vshrl.u32 %v5652, 7
    %v5654 = vsub.s32 %v5651, %v5653
    %v5655 = vrot.slane %v5648, %v5654
    %s5657 = scalar_lea.vmem [#allocation9], 7
    %5658 = vst.msk [vmem:[%s5657] ss:$8 sm:$0x3] %vm4940, %v5655
    %5659 = vst.msk [vmem:[%s5657] ss:$8 sm:$0x0] %vm4940, %v5655
    %v5660 = vld [vmem:[#allocation9] sm:$0xff]
    %v5661 = vld [vmem:[#allocation9 + $0x8] sm:$0xff]
    %v5662 = vpack.c.bf16 %v5660, %v5660
    %v5663 = vpack.c.bf16 %v5661, %v5661
    %v5664 = vld [vmem:[%s69] sm:$0xf]
    %v5665 = vld [vmem:[%s69 + $0x4] sm:$0xf]
    %v5666 = vld [vmem:[%s69 + $0x8] sm:$0xf]
    %v5667 = vld [vmem:[%s69 + $0xc] sm:$0xf]
    %v5668 = vld [vmem:[%s69 + $0x10] sm:$0xf]
    %v5669 = vld [vmem:[%s69 + $0x14] sm:$0xf]
    %v5670 = vld [vmem:[%s69 + $0x18] sm:$0xf]
    %v5671 = vld [vmem:[%s69 + $0x1c] sm:$0xf]
    %v5672 = vld [vmem:[%s69 + $0x20] sm:$0xf]
    %v5673 = vld [vmem:[%s69 + $0x24] sm:$0xf]
    %v5674 = vld [vmem:[%s69 + $0x28] sm:$0xf]
    %v5675 = vld [vmem:[%s69 + $0x2c] sm:$0xf]
    %v5676 = vld [vmem:[%s69 + $0x30] sm:$0xf]
    %v5677 = vld [vmem:[%s69 + $0x34] sm:$0xf]
    %v5678 = vld [vmem:[%s69 + $0x38] sm:$0xf]
    %v5679 = vld [vmem:[%s69 + $0x3c] sm:$0xf]
    %v5680 = vld [vmem:[%s69 + $0x40] sm:$0xf]
    %v5681 = vld [vmem:[%s69 + $0x44] sm:$0xf]
    %v5700 = vunpack.c.l.b16 %v5664
    %v5701 = vunpack.c.l.b16 %v5665
    %v5702 = vunpack.c.l.b16 %v5666
    %v5703 = vunpack.c.l.b16 %v5667
    %v5704 = vunpack.c.l.b16 %v5668
    %v5705 = vunpack.c.l.b16 %v5669
    %v5706 = vunpack.c.l.b16 %v5670
    %v5707 = vunpack.c.l.b16 %v5671
    %v5708 = vunpack.c.l.b16 %v5672
    %v5709 = vunpack.c.l.b16 %v5673
    %v5710 = vunpack.c.l.b16 %v5674
    %v5711 = vunpack.c.l.b16 %v5675
    %v5712 = vunpack.c.l.b16 %v5676
    %v5713 = vunpack.c.l.b16 %v5677
    %v5714 = vunpack.c.l.b16 %v5678
    %v5715 = vunpack.c.l.b16 %v5679
    %v5716 = vunpack.c.l.b16 %v5680
    %v5717 = vunpack.c.l.b16 %v5681
    %v5718 = vpack.c.b16 %v5701, %v5700
    %v5719 = vpack.c.b16 %v5703, %v5702
    %v5720 = vpack.c.b16 %v5705, %v5704
    %v5721 = vpack.c.b16 %v5707, %v5706
    %v5722 = vpack.c.b16 %v5709, %v5708
    %v5723 = vpack.c.b16 %v5711, %v5710
    %v5724 = vpack.c.b16 %v5713, %v5712
    %v5725 = vpack.c.b16 %v5715, %v5714
    %v5726 = vpack.c.b16 %v5717, %v5716
    %v5737 = vsel %vm1548, %v5663, 0
    %5739 = vmatprep.subr.bf16.mxu0 0
    %5740 = vmatpush1.bf16.msra.mxu0 %v5725
    %5741 = vmatprep.subr.bf16.mxu0 0
    %5742 = vmatpush1.bf16.msra.mxu0 %v5724
    %5743 = vmatprep.subr.bf16.mxu0 0
    %5744 = vmatpush1.bf16.msra.mxu0 %v5723
    %5745 = vmatprep.subr.bf16.mxu0 0
    %5746 = vmatpush1.bf16.msra.mxu0 %v5722
    %5747 = vmatprep.subr.bf16.mxu0 0
    %5748 = vmatpush1.bf16.msra.mxu0 %v5721
    %5749 = vmatprep.subr.bf16.mxu0 0
    %5750 = vmatpush1.bf16.msra.mxu0 %v5720
    %5751 = vmatprep.subr.bf16.mxu0 0
    %5752 = vmatpush1.bf16.msra.mxu0 %v5719
    %5753 = vmatprep.subr.bf16.mxu0 0
    %5754 = vmatpush1.bf16.msra.mxu0 %v5718
    %5755 = vmatprep.subr.bf16.mxu0 0
    %5756 = vmatpush2.bf16.msra.mxu0 0
    %5757 = vmatprep.subr.bf16.mxu0 0
    %5758 = vmatpush2.bf16.msra.mxu0 0
    %5759 = vmatprep.subr.bf16.mxu0 0
    %5760 = vmatpush2.bf16.msra.mxu0 0
    %5761 = vmatprep.subr.bf16.mxu0 0
    %5762 = vmatpush2.bf16.msra.mxu0 0
    %5763 = vmatprep.subr.bf16.mxu0 0
    %5764 = vmatpush2.bf16.msra.mxu0 0
    %5765 = vmatprep.subr.bf16.mxu0 0
    %5766 = vmatpush2.bf16.msra.mxu0 0
    %5767 = vmatprep.subr.bf16.mxu0 0
    %5768 = vmatpush2.bf16.msra.mxu0 0
    %5769 = vmatprep.subr.bf16.mxu0 0
    %5770 = vmatpush2.bf16.msra.mxu0 %v5726
    %5771 = vmatprep.mubr.bf16.mxu0 %v5737
    %5772 = vmatmul.mubr.bf16.gmra.mxu0 %v5662
    %v5773 = vpop.f32.mrf.mxu0
    %v5774 = vadd.f32 0.0, %v5773
    %v5775 = vpop.f32.mrf.mxu0
    %v5776 = vpop.f32.mrf.mxu0
    %v5777 = vpop.f32.mrf.mxu0
    %5778 = vdwg.mxu0
    %v5779 = vld [vmem:[#allocation37] sm:$0x1]
    %v5781 = vlaneseq
    %v5782 = vshrl.u32 %v5781, 7
    %v5783 = vsub.s32 0, %v5782
    %v5784 = vrot.slane %v5779, %v5783
    %v5786 = vmul.f32 %v5774, %v5784
    %v5787 = vld [vmem:[#allocation38] sm:$0x1]
    %v5789 = vlaneseq
    %v5790 = vshrl.u32 %v5789, 7
    %v5791 = vsub.s32 0, %v5790
    %v5792 = vrot.slane %v5787, %v5791
    %v5794 = vadd.f32 %v5786, %v5792
    %v5795 = vpack.c.bf16 %v5794, %v5794
    %v5796 = vld [vmem:[%s75] sm:$0xff]
    %v5797 = vld [vmem:[%s75 + $0x8] sm:$0xff]
    %v5798 = vld [vmem:[%s75 + $0x10] sm:$0xff]
    %v5799 = vld [vmem:[%s75 + $0x18] sm:$0xff]
    %v5804 = vunpack.c.l.b16 %v5796
    %v5805 = vunpack.c.h.b16 %v5796
    %v5806 = vunpack.c.l.b16 %v5797
    %v5807 = vunpack.c.h.b16 %v5797
    %v5808 = vunpack.c.l.b16 %v5798
    %v5809 = vunpack.c.h.b16 %v5798
    %v5810 = vunpack.c.l.b16 %v5799
    %v5811 = vunpack.c.h.b16 %v5799
    %v5812 = vpack.c.b16 %v5806, %v5804
    %v5813 = vpack.c.b16 %v5807, %v5805
    %v5814 = vpack.c.b16 %v5810, %v5808
    %v5815 = vpack.c.b16 %v5811, %v5809
    %v5821 = vsel %vm481, %v5795, 0
    %5823 = vmatprep.subr.bf16.mxu0 0
    %5824 = vmatpush1.bf16.msra.mxu0 0
    %5825 = vmatprep.subr.bf16.mxu0 0
    %5826 = vmatpush1.bf16.msra.mxu0 0
    %5827 = vmatprep.subr.bf16.mxu0 0
    %5828 = vmatpush1.bf16.msra.mxu0 0
    %5829 = vmatprep.subr.bf16.mxu0 0
    %5830 = vmatpush1.bf16.msra.mxu0 0
    %5831 = vmatprep.subr.bf16.mxu0 0
    %5832 = vmatpush1.bf16.msra.mxu0 0
    %5833 = vmatprep.subr.bf16.mxu0 0
    %5834 = vmatpush1.bf16.msra.mxu0 0
    %5835 = vmatprep.subr.bf16.mxu0 %v5815
    %5836 = vmatpush1.bf16.msra.mxu0 %v5814
    %5837 = vmatprep.subr.bf16.mxu0 %v5813
    %5838 = vmatpush1.bf16.msra.mxu0 %v5812
    %5839 = vmatprep.subr.bf16.mxu0 0
    %5840 = vmatpush2.bf16.msra.mxu0 0
    %5841 = vmatprep.subr.bf16.mxu0 0
    %5842 = vmatpush2.bf16.msra.mxu0 0
    %5843 = vmatprep.subr.bf16.mxu0 0
    %5844 = vmatpush2.bf16.msra.mxu0 0
    %5845 = vmatprep.subr.bf16.mxu0 0
    %5846 = vmatpush2.bf16.msra.mxu0 0
    %5847 = vmatprep.subr.bf16.mxu0 0
    %5848 = vmatpush2.bf16.msra.mxu0 0
    %5849 = vmatprep.subr.bf16.mxu0 0
    %5850 = vmatpush2.bf16.msra.mxu0 0
    %5851 = vmatprep.subr.bf16.mxu0 0
    %5852 = vmatpush2.bf16.msra.mxu0 0
    %5853 = vmatprep.subr.bf16.mxu0 0
    %5854 = vmatpush2.bf16.msra.mxu0 0
    %5855 = vmatprep.mubr.bf16.mxu0 0
    %5856 = vmatmul.mubr.bf16.gmra.mxu0 %v5821
    %v5857 = vpop.f32.mrf.mxu0
    %v5858 = vadd.f32 0.0, %v5857
    %v5859 = vpop.f32.mrf.mxu0
    %v5860 = vadd.f32 0.0, %v5859
    %v5861 = vpop.f32.mrf.mxu0
    %v5862 = vpop.f32.mrf.mxu0
    %5863 = vdwg.mxu0
    %v5864 = vld [vmem:[%s77] sm:$0x3]
    %v5866 = vlaneseq
    %v5867 = vshrl.u32 %v5866, 7
    %v5868 = vsub.s32 0, %v5867
    %v5869 = vrot.slane %v5864, %v5868
    %v5870 = vlaneseq
    %v5871 = vshrl.u32 %v5870, 7
    %v5872 = vsub.s32 1, %v5871
    %v5873 = vrot.slane %v5864, %v5872
    %v5876 = vmul.f32 %v5858, %v5869
    %v5877 = vmul.f32 %v5860, %v5873
    %v5878 = vld [vmem:[%s79] sm:$0x3]
    %v5880 = vlaneseq
    %v5881 = vshrl.u32 %v5880, 7
    %v5882 = vsub.s32 0, %v5881
    %v5883 = vrot.slane %v5878, %v5882
    %v5884 = vlaneseq
    %v5885 = vshrl.u32 %v5884, 7
    %v5886 = vsub.s32 1, %v5885
    %v5887 = vrot.slane %v5878, %v5886
    %v5890 = vadd.f32 %v5876, %v5883
    %v5891 = vadd.f32 %v5877, %v5887
    %v5892 = vmax.f32 %v5890, 0.0
    %v5893 = vmax.f32 %v5891, 0.0
    %v5894 = vmin.f32 %v5892, 6.0
    %v5895 = vmin.f32 %v5893, 6.0
    %vm5896 = vcmask 523268
    %vm5897 = vmor %vm5896, %vm3164
    %5898 = vst.msk [vmem:[#allocation10] sm:$0xff] %vm5897, 0.0
    %5899 = vst.msk [vmem:[#allocation10 + $0x8] sm:$0xff] %vm5897, 0.0
    %5900 = vst.msk [vmem:[#allocation10 + $0x10] sm:$0xff] %vm5897, 0.0
    %5901 = vst.msk [vmem:[#allocation10 + $0x18] sm:$0xff] %vm5897, 0.0
    %5902 = vst.msk [vmem:[#allocation10 + $0x20] sm:$0xff] %vm5897, 0.0
    %5903 = vst.msk [vmem:[#allocation10 + $0x28] sm:$0xff] %vm5897, 0.0
    %5904 = vst.msk [vmem:[#allocation10 + $0x30] sm:$0xff] %vm5897, 0.0
    %5905 = vst.msk [vmem:[#allocation10 + $0x38] sm:$0xff] %vm5897, 0.0
    %v5908 = vcombine.low %v5894, %v5895
    %v5909 = vrot.slane %v5908, 7
    %s5911 = scalar_lea.vmem [#allocation10], 8
    %vm5912 = vcmask 1042433
    %vm5913 = vcmask 522245
    %vm5914 = vmor %vm5913, %vm5912
    %5915 = vst.msk [vmem:[%s5911] sm:$0x66] %vm5914, %v5909
    %v5916 = vrot.slane %v5908, 5
    %v5917 = vrot.slane %v5916, 4
    %s5919 = scalar_lea.vmem [#allocation10], 16
    %5920 = vst.msk [vmem:[%s5919] sm:$0x66] %vm5914, %v5917
    %v5921 = vcombine.high %v5894, %v5895
    %v5922 = vrot.slane %v5921, 7
    %s5924 = scalar_lea.vmem [#allocation10], 40
    %5925 = vst.msk [vmem:[%s5924] sm:$0x66] %vm5914, %v5922
    %v5926 = vrot.slane %v5921, 5
    %v5927 = vrot.slane %v5926, 4
    %s5929 = scalar_lea.vmem [#allocation10], 48
    %5930 = vst.msk [vmem:[%s5929] sm:$0x66] %vm5914, %v5927
    %v5931 = vld [vmem:[#allocation10] sm:$0x33]
    %v5932 = vld [vmem:[#allocation10 + $0x8] sm:$0x33]
    %v5933 = vld [vmem:[#allocation10 + $0x20] sm:$0x33]
    %v5934 = vld [vmem:[#allocation10 + $0x28] sm:$0x33]
    %v5935 = vld [vmem:[%s81] ss:$8 sm:$0x3]
    %v5937 = vlaneseq
    %v5938 = vshrl.u32 %v5937, 7
    %v5939 = vsub.s32 0, %v5938
    %v5940 = vrot.slane %v5935, %v5939
    %v5941 = vlaneseq
    %v5942 = vshrl.u32 %v5941, 7
    %v5943 = vsub.s32 1, %v5942
    %v5944 = vrot.slane %v5935, %v5943
    %v5945 = vcombine.low %v5940, %v5944
    %v5947 = vmul.f32 %v5931, %v5945
    %v5948 = vmul.f32 %v5932, %v5945
    %v5949 = vmul.f32 %v5933, %v5945
    %v5950 = vmul.f32 %v5934, %v5945
    %v5951 = vadd.f32 %v5947, 0.0
    %v5952 = vadd.f32 %v5948, 0.0
    %v5953 = vadd.f32 %v5949, 0.0
    %v5954 = vadd.f32 %v5950, 0.0
    %v5955 = vld [vmem:[#allocation10] sm:$0x66]
    %v5956 = vld [vmem:[#allocation10 + $0x8] sm:$0x66]
    %v5957 = vld [vmem:[#allocation10 + $0x20] sm:$0x66]
    %v5958 = vld [vmem:[#allocation10 + $0x28] sm:$0x66]
    %s5959 = scalar_lea.vmem %s81, 1
    %v5960 = vld [vmem:[%s5959] ss:$8 sm:$0x3]
    %v5962 = vlaneseq
    %v5963 = vshrl.u32 %v5962, 7
    %v5964 = vsub.s32 0, %v5963
    %v5965 = vrot.slane %v5960, %v5964
    %v5966 = vlaneseq
    %v5967 = vshrl.u32 %v5966, 7
    %v5968 = vsub.s32 1, %v5967
    %v5969 = vrot.slane %v5960, %v5968
    %v5970 = vcombine.low %v5965, %v5969
    %v5971 = vrot.slane %v5970, 7
    %v5973 = vmul.f32 %v5955, %v5971
    %v5974 = vmul.f32 %v5956, %v5971
    %v5975 = vmul.f32 %v5957, %v5971
    %v5976 = vmul.f32 %v5958, %v5971
    %v5981 = vrot.slane %v5973, 5
    %v5982 = vrot.slane %v5981, 4
    %v5983 = vrot.slane %v5974, 5
    %v5984 = vrot.slane %v5983, 4
    %v5985 = vrot.slane %v5975, 5
    %v5986 = vrot.slane %v5985, 4
    %v5987 = vrot.slane %v5976, 5
    %v5988 = vrot.slane %v5987, 4
    %v5993 = vadd.f32 %v5951, %v5982
    %v5994 = vadd.f32 %v5952, %v5984
    %v5995 = vadd.f32 %v5953, %v5986
    %v5996 = vadd.f32 %v5954, %v5988
    %v5997 = vld [vmem:[#allocation10] sm:$0xcc]
    %v5998 = vld [vmem:[#allocation10 + $0x8] sm:$0xcc]
    %v5999 = vld [vmem:[#allocation10 + $0x20] sm:$0xcc]
    %v6000 = vld [vmem:[#allocation10 + $0x28] sm:$0xcc]
    %s6001 = scalar_lea.vmem %s81, 2
    %v6002 = vld [vmem:[%s6001] ss:$8 sm:$0x3]
    %v6004 = vlaneseq
    %v6005 = vshrl.u32 %v6004, 7
    %v6006 = vsub.s32 0, %v6005
    %v6007 = vrot.slane %v6002, %v6006
    %v6008 = vlaneseq
    %v6009 = vshrl.u32 %v6008, 7
    %v6010 = vsub.s32 1, %v6009
    %v6011 = vrot.slane %v6002, %v6010
    %v6012 = vcombine.low %v6007, %v6011
    %v6013 = vrot.slane %v6012, 6
    %v6015 = vmul.f32 %v5997, %v6013
    %v6016 = vmul.f32 %v5998, %v6013
    %v6017 = vmul.f32 %v5999, %v6013
    %v6018 = vmul.f32 %v6000, %v6013
    %v6023 = vrot.slane %v6015, 6
    %v6024 = vrot.slane %v6023, 4
    %v6025 = vrot.slane %v6016, 6
    %v6026 = vrot.slane %v6025, 4
    %v6027 = vrot.slane %v6017, 6
    %v6028 = vrot.slane %v6027, 4
    %v6029 = vrot.slane %v6018, 6
    %v6030 = vrot.slane %v6029, 4
    %v6035 = vadd.f32 %v5993, %v6024
    %v6036 = vadd.f32 %v5994, %v6026
    %v6037 = vadd.f32 %v5995, %v6028
    %v6038 = vadd.f32 %v5996, %v6030
    %v6039 = vld [vmem:[%s5911] sm:$0x33]
    %v6040 = vld [vmem:[%s5911 + $0x8] sm:$0x33]
    %v6041 = vld [vmem:[%s5911 + $0x20] sm:$0x33]
    %v6042 = vld [vmem:[%s5911 + $0x28] sm:$0x33]
    %s6043 = scalar_lea.vmem %s81, 3
    %v6044 = vld [vmem:[%s6043] ss:$8 sm:$0x3]
    %v6046 = vlaneseq
    %v6047 = vshrl.u32 %v6046, 7
    %v6048 = vsub.s32 0, %v6047
    %v6049 = vrot.slane %v6044, %v6048
    %v6050 = vlaneseq
    %v6051 = vshrl.u32 %v6050, 7
    %v6052 = vsub.s32 1, %v6051
    %v6053 = vrot.slane %v6044, %v6052
    %v6054 = vcombine.low %v6049, %v6053
    %v6056 = vmul.f32 %v6039, %v6054
    %v6057 = vmul.f32 %v6040, %v6054
    %v6058 = vmul.f32 %v6041, %v6054
    %v6059 = vmul.f32 %v6042, %v6054
    %v6060 = vadd.f32 %v6035, %v6056
    %v6061 = vadd.f32 %v6036, %v6057
    %v6062 = vadd.f32 %v6037, %v6058
    %v6063 = vadd.f32 %v6038, %v6059
    %v6064 = vld [vmem:[%s5911] sm:$0x66]
    %v6065 = vld [vmem:[%s5911 + $0x8] sm:$0x66]
    %v6066 = vld [vmem:[%s5911 + $0x20] sm:$0x66]
    %v6067 = vld [vmem:[%s5911 + $0x28] sm:$0x66]
    %s6068 = scalar_lea.vmem %s81, 4
    %v6069 = vld [vmem:[%s6068] ss:$8 sm:$0x3]
    %v6071 = vlaneseq
    %v6072 = vshrl.u32 %v6071, 7
    %v6073 = vsub.s32 0, %v6072
    %v6074 = vrot.slane %v6069, %v6073
    %v6075 = vlaneseq
    %v6076 = vshrl.u32 %v6075, 7
    %v6077 = vsub.s32 1, %v6076
    %v6078 = vrot.slane %v6069, %v6077
    %v6079 = vcombine.low %v6074, %v6078
    %v6080 = vrot.slane %v6079, 7
    %v6082 = vmul.f32 %v6064, %v6080
    %v6083 = vmul.f32 %v6065, %v6080
    %v6084 = vmul.f32 %v6066, %v6080
    %v6085 = vmul.f32 %v6067, %v6080
    %v6090 = vrot.slane %v6082, 5
    %v6091 = vrot.slane %v6090, 4
    %v6092 = vrot.slane %v6083, 5
    %v6093 = vrot.slane %v6092, 4
    %v6094 = vrot.slane %v6084, 5
    %v6095 = vrot.slane %v6094, 4
    %v6096 = vrot.slane %v6085, 5
    %v6097 = vrot.slane %v6096, 4
    %v6102 = vadd.f32 %v6060, %v6091
    %v6103 = vadd.f32 %v6061, %v6093
    %v6104 = vadd.f32 %v6062, %v6095
    %v6105 = vadd.f32 %v6063, %v6097
    %v6106 = vld [vmem:[%s5911] sm:$0xcc]
    %v6107 = vld [vmem:[%s5911 + $0x8] sm:$0xcc]
    %v6108 = vld [vmem:[%s5911 + $0x20] sm:$0xcc]
    %v6109 = vld [vmem:[%s5911 + $0x28] sm:$0xcc]
    %s6110 = scalar_lea.vmem %s81, 5
    %v6111 = vld [vmem:[%s6110] ss:$8 sm:$0x3]
    %v6113 = vlaneseq
    %v6114 = vshrl.u32 %v6113, 7
    %v6115 = vsub.s32 0, %v6114
    %v6116 = vrot.slane %v6111, %v6115
    %v6117 = vlaneseq
    %v6118 = vshrl.u32 %v6117, 7
    %v6119 = vsub.s32 1, %v6118
    %v6120 = vrot.slane %v6111, %v6119
    %v6121 = vcombine.low %v6116, %v6120
    %v6122 = vrot.slane %v6121, 6
    %v6124 = vmul.f32 %v6106, %v6122
    %v6125 = vmul.f32 %v6107, %v6122
    %v6126 = vmul.f32 %v6108, %v6122
    %v6127 = vmul.f32 %v6109, %v6122
    %v6132 = vrot.slane %v6124, 6
    %v6133 = vrot.slane %v6132, 4
    %v6134 = vrot.slane %v6125, 6
    %v6135 = vrot.slane %v6134, 4
    %v6136 = vrot.slane %v6126, 6
    %v6137 = vrot.slane %v6136, 4
    %v6138 = vrot.slane %v6127, 6
    %v6139 = vrot.slane %v6138, 4
    %v6144 = vadd.f32 %v6102, %v6133
    %v6145 = vadd.f32 %v6103, %v6135
    %v6146 = vadd.f32 %v6104, %v6137
    %v6147 = vadd.f32 %v6105, %v6139
    %v6148 = vld [vmem:[%s5919] sm:$0x33]
    %v6149 = vld [vmem:[%s5919 + $0x8] sm:$0x33]
    %v6150 = vld [vmem:[%s5919 + $0x20] sm:$0x33]
    %v6151 = vld [vmem:[%s5919 + $0x28] sm:$0x33]
    %s6152 = scalar_lea.vmem %s81, 6
    %v6153 = vld [vmem:[%s6152] ss:$8 sm:$0x3]
    %v6155 = vlaneseq
    %v6156 = vshrl.u32 %v6155, 7
    %v6157 = vsub.s32 0, %v6156
    %v6158 = vrot.slane %v6153, %v6157
    %v6159 = vlaneseq
    %v6160 = vshrl.u32 %v6159, 7
    %v6161 = vsub.s32 1, %v6160
    %v6162 = vrot.slane %v6153, %v6161
    %v6163 = vcombine.low %v6158, %v6162
    %v6165 = vmul.f32 %v6148, %v6163
    %v6166 = vmul.f32 %v6149, %v6163
    %v6167 = vmul.f32 %v6150, %v6163
    %v6168 = vmul.f32 %v6151, %v6163
    %v6169 = vadd.f32 %v6144, %v6165
    %v6170 = vadd.f32 %v6145, %v6166
    %v6171 = vadd.f32 %v6146, %v6167
    %v6172 = vadd.f32 %v6147, %v6168
    %v6173 = vld [vmem:[%s5919] sm:$0x66]
    %v6174 = vld [vmem:[%s5919 + $0x8] sm:$0x66]
    %v6175 = vld [vmem:[%s5919 + $0x20] sm:$0x66]
    %v6176 = vld [vmem:[%s5919 + $0x28] sm:$0x66]
    %s6177 = scalar_lea.vmem %s81, 7
    %v6178 = vld [vmem:[%s6177] ss:$8 sm:$0x3]
    %v6180 = vlaneseq
    %v6181 = vshrl.u32 %v6180, 7
    %v6182 = vsub.s32 0, %v6181
    %v6183 = vrot.slane %v6178, %v6182
    %v6184 = vlaneseq
    %v6185 = vshrl.u32 %v6184, 7
    %v6186 = vsub.s32 1, %v6185
    %v6187 = vrot.slane %v6178, %v6186
    %v6188 = vcombine.low %v6183, %v6187
    %v6189 = vrot.slane %v6188, 7
    %v6191 = vmul.f32 %v6173, %v6189
    %v6192 = vmul.f32 %v6174, %v6189
    %v6193 = vmul.f32 %v6175, %v6189
    %v6194 = vmul.f32 %v6176, %v6189
    %v6199 = vrot.slane %v6191, 5
    %v6200 = vrot.slane %v6199, 4
    %v6201 = vrot.slane %v6192, 5
    %v6202 = vrot.slane %v6201, 4
    %v6203 = vrot.slane %v6193, 5
    %v6204 = vrot.slane %v6203, 4
    %v6205 = vrot.slane %v6194, 5
    %v6206 = vrot.slane %v6205, 4
    %v6211 = vadd.f32 %v6169, %v6200
    %v6212 = vadd.f32 %v6170, %v6202
    %v6213 = vadd.f32 %v6171, %v6204
    %v6214 = vadd.f32 %v6172, %v6206
    %v6215 = vld [vmem:[%s5919] sm:$0xcc]
    %v6216 = vld [vmem:[%s5919 + $0x8] sm:$0xcc]
    %v6217 = vld [vmem:[%s5919 + $0x20] sm:$0xcc]
    %v6218 = vld [vmem:[%s5919 + $0x28] sm:$0xcc]
    %s6219 = scalar_lea.vmem %s81, 16
    %v6220 = vld [vmem:[%s6219] ss:$8 sm:$0x3]
    %v6222 = vlaneseq
    %v6223 = vshrl.u32 %v6222, 7
    %v6224 = vsub.s32 0, %v6223
    %v6225 = vrot.slane %v6220, %v6224
    %v6226 = vlaneseq
    %v6227 = vshrl.u32 %v6226, 7
    %v6228 = vsub.s32 1, %v6227
    %v6229 = vrot.slane %v6220, %v6228
    %v6230 = vcombine.low %v6225, %v6229
    %v6231 = vrot.slane %v6230, 6
    %v6233 = vmul.f32 %v6215, %v6231
    %v6234 = vmul.f32 %v6216, %v6231
    %v6235 = vmul.f32 %v6217, %v6231
    %v6236 = vmul.f32 %v6218, %v6231
    %v6241 = vrot.slane %v6233, 6
    %v6242 = vrot.slane %v6241, 4
    %v6243 = vrot.slane %v6234, 6
    %v6244 = vrot.slane %v6243, 4
    %v6245 = vrot.slane %v6235, 6
    %v6246 = vrot.slane %v6245, 4
    %v6247 = vrot.slane %v6236, 6
    %v6248 = vrot.slane %v6247, 4
    %v6253 = vadd.f32 %v6211, %v6242
    %v6254 = vadd.f32 %v6212, %v6244
    %v6255 = vadd.f32 %v6213, %v6246
    %v6256 = vadd.f32 %v6214, %v6248
    %v6257 = vld [vmem:[%s83] sm:$0x3]
    %v6259 = vlaneseq
    %v6260 = vshrl.u32 %v6259, 7
    %v6261 = vsub.s32 0, %v6260
    %v6262 = vrot.slane %v6257, %v6261
    %v6263 = vlaneseq
    %v6264 = vshrl.u32 %v6263, 7
    %v6265 = vsub.s32 1, %v6264
    %v6266 = vrot.slane %v6257, %v6265
    %v6267 = vcombine.low %v6262, %v6266
    %v6269 = vmul.f32 %v6253, %v6267
    %v6270 = vmul.f32 %v6254, %v6267
    %v6271 = vmul.f32 %v6255, %v6267
    %v6272 = vmul.f32 %v6256, %v6267
    %v6273 = vld [vmem:[%s85] sm:$0x3]
    %v6275 = vlaneseq
    %v6276 = vshrl.u32 %v6275, 7
    %v6277 = vsub.s32 0, %v6276
    %v6278 = vrot.slane %v6273, %v6277
    %v6279 = vlaneseq
    %v6280 = vshrl.u32 %v6279, 7
    %v6281 = vsub.s32 1, %v6280
    %v6282 = vrot.slane %v6273, %v6281
    %v6283 = vcombine.low %v6278, %v6282
    %v6285 = vadd.f32 %v6269, %v6283
    %v6286 = vadd.f32 %v6270, %v6283
    %v6287 = vadd.f32 %v6271, %v6283
    %v6288 = vadd.f32 %v6272, %v6283
    %v6289 = vmax.f32 %v6285, 0.0
    %v6290 = vmax.f32 %v6286, 0.0
    %v6291 = vmax.f32 %v6287, 0.0
    %v6292 = vmax.f32 %v6288, 0.0
    %v6293 = vmin.f32 %v6289, 6.0
    %v6294 = vmin.f32 %v6290, 6.0
    %v6295 = vmin.f32 %v6291, 6.0
    %v6296 = vmin.f32 %v6292, 6.0
    %v6298 = vcombine.high %v6293, %v6293
    %6300 = vst [vmem:[#allocation11] sm:$0x3] %v6293
    %vm6301 = vcmask 517120
    %6302 = vst.msk [vmem:[#allocation11 + $0x8] sm:$0x3] %vm6301, %v6298
    %v6304 = vcombine.high %v6294, %v6294
    %v6305 = vrot.slane %v6294, 6
    %v6306 = vrot.slane %v6304, 6
    %6309 = vst [vmem:[#allocation11] sm:$0xc] %v6305
    %vm6310 = vcmask 519170
    %6311 = vst.msk [vmem:[#allocation11 + $0x8] sm:$0xc] %vm6310, %v6306
    %v6313 = vcombine.low %v6295, %v6295
    %6315 = vst [vmem:[#allocation11] sm:$0x30] %v6313
    %vm6316 = vcmask 521220
    %6317 = vst.msk [vmem:[#allocation11 + $0x8] sm:$0x30] %vm6316, %v6295
    %v6319 = vcombine.high %v6296, %v6296
    %v6320 = vrot.slane %v6296, 2
    %v6321 = vrot.slane %v6319, 2
    %6324 = vst [vmem:[#allocation11] sm:$0xc0] %v6320
    %vm6325 = vcmask 523270
    %6326 = vst.msk [vmem:[#allocation11 + $0x8] sm:$0xc0] %vm6325, %v6321
    %v6327 = vld [vmem:[#allocation11] sm:$0xff]
    %v6328 = vld [vmem:[#allocation11 + $0x8] sm:$0xff]
    %v6329 = vpack.c.bf16 %v6327, %v6327
    %v6330 = vpack.c.bf16 %v6328, %v6328
    %v6331 = vld [vmem:[%s87] sm:$0xf]
    %v6332 = vld [vmem:[%s87 + $0x4] sm:$0xf]
    %v6333 = vld [vmem:[%s87 + $0x8] sm:$0xf]
    %v6334 = vld [vmem:[%s87 + $0xc] sm:$0xf]
    %v6335 = vld [vmem:[%s87 + $0x10] sm:$0xf]
    %v6336 = vld [vmem:[%s87 + $0x14] sm:$0xf]
    %v6337 = vld [vmem:[%s87 + $0x18] sm:$0xf]
    %v6338 = vld [vmem:[%s87 + $0x1c] sm:$0xf]
    %v6339 = vld [vmem:[%s87 + $0x20] sm:$0xf]
    %v6340 = vld [vmem:[%s87 + $0x24] sm:$0xf]
    %v6341 = vld [vmem:[%s87 + $0x28] sm:$0xf]
    %v6342 = vld [vmem:[%s87 + $0x2c] sm:$0xf]
    %v6343 = vld [vmem:[%s87 + $0x30] sm:$0xf]
    %v6344 = vld [vmem:[%s87 + $0x34] sm:$0xf]
    %v6345 = vld [vmem:[%s87 + $0x38] sm:$0xf]
    %v6346 = vld [vmem:[%s87 + $0x3c] sm:$0xf]
    %v6347 = vld [vmem:[%s87 + $0x40] sm:$0xf]
    %v6348 = vld [vmem:[%s87 + $0x44] sm:$0xf]
    %v6349 = vld [vmem:[%s87 + $0x48] sm:$0xf]
    %v6350 = vld [vmem:[%s87 + $0x4c] sm:$0xf]
    %v6351 = vld [vmem:[%s87 + $0x50] sm:$0xf]
    %v6352 = vld [vmem:[%s87 + $0x54] sm:$0xf]
    %v6353 = vld [vmem:[%s87 + $0x58] sm:$0xf]
    %v6354 = vld [vmem:[%s87 + $0x5c] sm:$0xf]
    %v6379 = vunpack.c.l.b16 %v6331
    %v6380 = vunpack.c.l.b16 %v6332
    %v6381 = vunpack.c.l.b16 %v6333
    %v6382 = vunpack.c.l.b16 %v6334
    %v6383 = vunpack.c.l.b16 %v6335
    %v6384 = vunpack.c.l.b16 %v6336
    %v6385 = vunpack.c.l.b16 %v6337
    %v6386 = vunpack.c.l.b16 %v6338
    %v6387 = vunpack.c.l.b16 %v6339
    %v6388 = vunpack.c.l.b16 %v6340
    %v6389 = vunpack.c.l.b16 %v6341
    %v6390 = vunpack.c.l.b16 %v6342
    %v6391 = vunpack.c.l.b16 %v6343
    %v6392 = vunpack.c.l.b16 %v6344
    %v6393 = vunpack.c.l.b16 %v6345
    %v6394 = vunpack.c.l.b16 %v6346
    %v6395 = vunpack.c.l.b16 %v6347
    %v6396 = vunpack.c.l.b16 %v6348
    %v6397 = vunpack.c.l.b16 %v6349
    %v6398 = vunpack.c.l.b16 %v6350
    %v6399 = vunpack.c.l.b16 %v6351
    %v6400 = vunpack.c.l.b16 %v6352
    %v6401 = vunpack.c.l.b16 %v6353
    %v6402 = vunpack.c.l.b16 %v6354
    %v6403 = vpack.c.b16 %v6380, %v6379
    %v6404 = vpack.c.b16 %v6382, %v6381
    %v6405 = vpack.c.b16 %v6384, %v6383
    %v6406 = vpack.c.b16 %v6386, %v6385
    %v6407 = vpack.c.b16 %v6388, %v6387
    %v6408 = vpack.c.b16 %v6390, %v6389
    %v6409 = vpack.c.b16 %v6392, %v6391
    %v6410 = vpack.c.b16 %v6394, %v6393
    %v6411 = vpack.c.b16 %v6396, %v6395
    %v6412 = vpack.c.b16 %v6398, %v6397
    %v6413 = vpack.c.b16 %v6400, %v6399
    %v6414 = vpack.c.b16 %v6402, %v6401
    %vm6427 = vcmask 523264
    %v6429 = vsel %vm6427, %v6330, 0
    %6431 = vmatprep.subr.bf16.mxu0 0
    %6432 = vmatpush1.bf16.msra.mxu0 %v6410
    %6433 = vmatprep.subr.bf16.mxu0 0
    %6434 = vmatpush1.bf16.msra.mxu0 %v6409
    %6435 = vmatprep.subr.bf16.mxu0 0
    %6436 = vmatpush1.bf16.msra.mxu0 %v6408
    %6437 = vmatprep.subr.bf16.mxu0 0
    %6438 = vmatpush1.bf16.msra.mxu0 %v6407
    %6439 = vmatprep.subr.bf16.mxu0 0
    %6440 = vmatpush1.bf16.msra.mxu0 %v6406
    %6441 = vmatprep.subr.bf16.mxu0 0
    %6442 = vmatpush1.bf16.msra.mxu0 %v6405
    %6443 = vmatprep.subr.bf16.mxu0 0
    %6444 = vmatpush1.bf16.msra.mxu0 %v6404
    %6445 = vmatprep.subr.bf16.mxu0 0
    %6446 = vmatpush1.bf16.msra.mxu0 %v6403
    %6447 = vmatprep.subr.bf16.mxu0 0
    %6448 = vmatpush2.bf16.msra.mxu0 0
    %6449 = vmatprep.subr.bf16.mxu0 0
    %6450 = vmatpush2.bf16.msra.mxu0 0
    %6451 = vmatprep.subr.bf16.mxu0 0
    %6452 = vmatpush2.bf16.msra.mxu0 0
    %6453 = vmatprep.subr.bf16.mxu0 0
    %6454 = vmatpush2.bf16.msra.mxu0 0
    %6455 = vmatprep.subr.bf16.mxu0 0
    %6456 = vmatpush2.bf16.msra.mxu0 %v6414
    %6457 = vmatprep.subr.bf16.mxu0 0
    %6458 = vmatpush2.bf16.msra.mxu0 %v6413
    %6459 = vmatprep.subr.bf16.mxu0 0
    %6460 = vmatpush2.bf16.msra.mxu0 %v6412
    %6461 = vmatprep.subr.bf16.mxu0 0
    %6462 = vmatpush2.bf16.msra.mxu0 %v6411
    %6463 = vmatprep.mubr.bf16.mxu0 %v6429
    %6464 = vmatmul.mubr.bf16.gmra.mxu0 %v6329
    %v6465 = vpop.f32.mrf.mxu0
    %v6466 = vadd.f32 0.0, %v6465
    %v6467 = vpop.f32.mrf.mxu0
    %v6468 = vpop.f32.mrf.mxu0
    %v6469 = vpop.f32.mrf.mxu0
    %6470 = vdwg.mxu0
    %v6471 = vld [vmem:[#allocation40] sm:$0x1]
    %v6473 = vlaneseq
    %v6474 = vshrl.u32 %v6473, 7
    %v6475 = vsub.s32 0, %v6474
    %v6476 = vrot.slane %v6471, %v6475
    %v6478 = vmul.f32 %v6466, %v6476
    %v6479 = vld [vmem:[%s91] sm:$0x1]
    %v6481 = vlaneseq
    %v6482 = vshrl.u32 %v6481, 7
    %v6483 = vsub.s32 0, %v6482
    %v6484 = vrot.slane %v6479, %v6483
    %v6486 = vadd.f32 %v6478, %v6484
    %v6487 = vadd.f32 %v6486, %v5794
    %v6488 = vpack.c.bf16 %v6487, %v6487
    %v6489 = vld [vmem:[%s93] sm:$0xff]
    %v6490 = vld [vmem:[%s93 + $0x8] sm:$0xff]
    %v6491 = vld [vmem:[%s93 + $0x10] sm:$0xff]
    %v6492 = vld [vmem:[%s93 + $0x18] sm:$0xff]
    %v6497 = vunpack.c.l.b16 %v6489
    %v6498 = vunpack.c.h.b16 %v6489
    %v6499 = vunpack.c.l.b16 %v6490
    %v6500 = vunpack.c.h.b16 %v6490
    %v6501 = vunpack.c.l.b16 %v6491
    %v6502 = vunpack.c.h.b16 %v6491
    %v6503 = vunpack.c.l.b16 %v6492
    %v6504 = vunpack.c.h.b16 %v6492
    %v6505 = vpack.c.b16 %v6499, %v6497
    %v6506 = vpack.c.b16 %v6500, %v6498
    %v6507 = vpack.c.b16 %v6503, %v6501
    %v6508 = vpack.c.b16 %v6504, %v6502
    %v6514 = vsel %vm481, %v6488, 0
    %6516 = vmatprep.subr.bf16.mxu0 0
    %6517 = vmatpush1.bf16.msra.mxu0 0
    %6518 = vmatprep.subr.bf16.mxu0 0
    %6519 = vmatpush1.bf16.msra.mxu0 0
    %6520 = vmatprep.subr.bf16.mxu0 0
    %6521 = vmatpush1.bf16.msra.mxu0 0
    %6522 = vmatprep.subr.bf16.mxu0 0
    %6523 = vmatpush1.bf16.msra.mxu0 0
    %6524 = vmatprep.subr.bf16.mxu0 0
    %6525 = vmatpush1.bf16.msra.mxu0 0
    %6526 = vmatprep.subr.bf16.mxu0 0
    %6527 = vmatpush1.bf16.msra.mxu0 0
    %6528 = vmatprep.subr.bf16.mxu0 %v6508
    %6529 = vmatpush1.bf16.msra.mxu0 %v6507
    %6530 = vmatprep.subr.bf16.mxu0 %v6506
    %6531 = vmatpush1.bf16.msra.mxu0 %v6505
    %6532 = vmatprep.subr.bf16.mxu0 0
    %6533 = vmatpush2.bf16.msra.mxu0 0
    %6534 = vmatprep.subr.bf16.mxu0 0
    %6535 = vmatpush2.bf16.msra.mxu0 0
    %6536 = vmatprep.subr.bf16.mxu0 0
    %6537 = vmatpush2.bf16.msra.mxu0 0
    %6538 = vmatprep.subr.bf16.mxu0 0
    %6539 = vmatpush2.bf16.msra.mxu0 0
    %6540 = vmatprep.subr.bf16.mxu0 0
    %6541 = vmatpush2.bf16.msra.mxu0 0
    %6542 = vmatprep.subr.bf16.mxu0 0
    %6543 = vmatpush2.bf16.msra.mxu0 0
    %6544 = vmatprep.subr.bf16.mxu0 0
    %6545 = vmatpush2.bf16.msra.mxu0 0
    %6546 = vmatprep.subr.bf16.mxu0 0
    %6547 = vmatpush2.bf16.msra.mxu0 0
    %6548 = vmatprep.mubr.bf16.mxu0 0
    %6549 = vmatmul.mubr.bf16.gmra.mxu0 %v6514
    %v6550 = vpop.f32.mrf.mxu0
    %v6551 = vadd.f32 0.0, %v6550
    %v6552 = vpop.f32.mrf.mxu0
    %v6553 = vadd.f32 0.0, %v6552
    %v6554 = vpop.f32.mrf.mxu0
    %v6555 = vpop.f32.mrf.mxu0
    %6556 = vdwg.mxu0
    %v6557 = vld [vmem:[%s95] sm:$0x3]
    %v6559 = vlaneseq
    %v6560 = vshrl.u32 %v6559, 7
    %v6561 = vsub.s32 0, %v6560
    %v6562 = vrot.slane %v6557, %v6561
    %v6563 = vlaneseq
    %v6564 = vshrl.u32 %v6563, 7
    %v6565 = vsub.s32 1, %v6564
    %v6566 = vrot.slane %v6557, %v6565
    %v6569 = vmul.f32 %v6551, %v6562
    %v6570 = vmul.f32 %v6553, %v6566
    %v6571 = vld [vmem:[%s97] sm:$0x3]
    %v6573 = vlaneseq
    %v6574 = vshrl.u32 %v6573, 7
    %v6575 = vsub.s32 0, %v6574
    %v6576 = vrot.slane %v6571, %v6575
    %v6577 = vlaneseq
    %v6578 = vshrl.u32 %v6577, 7
    %v6579 = vsub.s32 1, %v6578
    %v6580 = vrot.slane %v6571, %v6579
    %v6583 = vadd.f32 %v6569, %v6576
    %v6584 = vadd.f32 %v6570, %v6580
    %v6585 = vmax.f32 %v6583, 0.0
    %v6586 = vmax.f32 %v6584, 0.0
    %v6587 = vmin.f32 %v6585, 6.0
    %v6588 = vmin.f32 %v6586, 6.0
    %6589 = vst.msk [vmem:[#allocation12] sm:$0xff] %vm5897, 0.0
    %6590 = vst.msk [vmem:[#allocation12 + $0x8] sm:$0xff] %vm5897, 0.0
    %6591 = vst.msk [vmem:[#allocation12 + $0x10] sm:$0xff] %vm5897, 0.0
    %6592 = vst.msk [vmem:[#allocation12 + $0x18] sm:$0xff] %vm5897, 0.0
    %6593 = vst.msk [vmem:[#allocation12 + $0x20] sm:$0xff] %vm5897, 0.0
    %6594 = vst.msk [vmem:[#allocation12 + $0x28] sm:$0xff] %vm5897, 0.0
    %6595 = vst.msk [vmem:[#allocation12 + $0x30] sm:$0xff] %vm5897, 0.0
    %6596 = vst.msk [vmem:[#allocation12 + $0x38] sm:$0xff] %vm5897, 0.0
    %v6599 = vcombine.low %v6587, %v6588
    %v6600 = vrot.slane %v6599, 7
    %s6602 = scalar_lea.vmem [#allocation12], 8
    %6603 = vst.msk [vmem:[%s6602] sm:$0x66] %vm5914, %v6600
    %v6604 = vrot.slane %v6599, 5
    %v6605 = vrot.slane %v6604, 4
    %s6607 = scalar_lea.vmem [#allocation12], 16
    %6608 = vst.msk [vmem:[%s6607] sm:$0x66] %vm5914, %v6605
    %v6609 = vcombine.high %v6587, %v6588
    %v6610 = vrot.slane %v6609, 7
    %s6612 = scalar_lea.vmem [#allocation12], 40
    %6613 = vst.msk [vmem:[%s6612] sm:$0x66] %vm5914, %v6610
    %v6614 = vrot.slane %v6609, 5
    %v6615 = vrot.slane %v6614, 4
    %s6617 = scalar_lea.vmem [#allocation12], 48
    %6618 = vst.msk [vmem:[%s6617] sm:$0x66] %vm5914, %v6615
    %v6619 = vld [vmem:[#allocation12] sm:$0x33]
    %v6620 = vld [vmem:[#allocation12 + $0x8] sm:$0x33]
    %v6621 = vld [vmem:[#allocation12 + $0x20] sm:$0x33]
    %v6622 = vld [vmem:[#allocation12 + $0x28] sm:$0x33]
    %v6623 = vld [vmem:[%s99] ss:$8 sm:$0x3]
    %v6625 = vlaneseq
    %v6626 = vshrl.u32 %v6625, 7
    %v6627 = vsub.s32 0, %v6626
    %v6628 = vrot.slane %v6623, %v6627
    %v6629 = vlaneseq
    %v6630 = vshrl.u32 %v6629, 7
    %v6631 = vsub.s32 1, %v6630
    %v6632 = vrot.slane %v6623, %v6631
    %v6633 = vcombine.low %v6628, %v6632
    %v6635 = vmul.f32 %v6619, %v6633
    %v6636 = vmul.f32 %v6620, %v6633
    %v6637 = vmul.f32 %v6621, %v6633
    %v6638 = vmul.f32 %v6622, %v6633
    %v6639 = vadd.f32 %v6635, 0.0
    %v6640 = vadd.f32 %v6636, 0.0
    %v6641 = vadd.f32 %v6637, 0.0
    %v6642 = vadd.f32 %v6638, 0.0
    %v6643 = vld [vmem:[#allocation12] sm:$0x66]
    %v6644 = vld [vmem:[#allocation12 + $0x8] sm:$0x66]
    %v6645 = vld [vmem:[#allocation12 + $0x20] sm:$0x66]
    %v6646 = vld [vmem:[#allocation12 + $0x28] sm:$0x66]
    %s6647 = scalar_lea.vmem %s99, 1
    %v6648 = vld [vmem:[%s6647] ss:$8 sm:$0x3]
    %v6650 = vlaneseq
    %v6651 = vshrl.u32 %v6650, 7
    %v6652 = vsub.s32 0, %v6651
    %v6653 = vrot.slane %v6648, %v6652
    %v6654 = vlaneseq
    %v6655 = vshrl.u32 %v6654, 7
    %v6656 = vsub.s32 1, %v6655
    %v6657 = vrot.slane %v6648, %v6656
    %v6658 = vcombine.low %v6653, %v6657
    %v6659 = vrot.slane %v6658, 7
    %v6661 = vmul.f32 %v6643, %v6659
    %v6662 = vmul.f32 %v6644, %v6659
    %v6663 = vmul.f32 %v6645, %v6659
    %v6664 = vmul.f32 %v6646, %v6659
    %v6669 = vrot.slane %v6661, 5
    %v6670 = vrot.slane %v6669, 4
    %v6671 = vrot.slane %v6662, 5
    %v6672 = vrot.slane %v6671, 4
    %v6673 = vrot.slane %v6663, 5
    %v6674 = vrot.slane %v6673, 4
    %v6675 = vrot.slane %v6664, 5
    %v6676 = vrot.slane %v6675, 4
    %v6681 = vadd.f32 %v6639, %v6670
    %v6682 = vadd.f32 %v6640, %v6672
    %v6683 = vadd.f32 %v6641, %v6674
    %v6684 = vadd.f32 %v6642, %v6676
    %v6685 = vld [vmem:[#allocation12] sm:$0xcc]
    %v6686 = vld [vmem:[#allocation12 + $0x8] sm:$0xcc]
    %v6687 = vld [vmem:[#allocation12 + $0x20] sm:$0xcc]
    %v6688 = vld [vmem:[#allocation12 + $0x28] sm:$0xcc]
    %s6689 = scalar_lea.vmem %s99, 2
    %v6690 = vld [vmem:[%s6689] ss:$8 sm:$0x3]
    %v6692 = vlaneseq
    %v6693 = vshrl.u32 %v6692, 7
    %v6694 = vsub.s32 0, %v6693
    %v6695 = vrot.slane %v6690, %v6694
    %v6696 = vlaneseq
    %v6697 = vshrl.u32 %v6696, 7
    %v6698 = vsub.s32 1, %v6697
    %v6699 = vrot.slane %v6690, %v6698
    %v6700 = vcombine.low %v6695, %v6699
    %v6701 = vrot.slane %v6700, 6
    %v6703 = vmul.f32 %v6685, %v6701
    %v6704 = vmul.f32 %v6686, %v6701
    %v6705 = vmul.f32 %v6687, %v6701
    %v6706 = vmul.f32 %v6688, %v6701
    %v6711 = vrot.slane %v6703, 6
    %v6712 = vrot.slane %v6711, 4
    %v6713 = vrot.slane %v6704, 6
    %v6714 = vrot.slane %v6713, 4
    %v6715 = vrot.slane %v6705, 6
    %v6716 = vrot.slane %v6715, 4
    %v6717 = vrot.slane %v6706, 6
    %v6718 = vrot.slane %v6717, 4
    %v6723 = vadd.f32 %v6681, %v6712
    %v6724 = vadd.f32 %v6682, %v6714
    %v6725 = vadd.f32 %v6683, %v6716
    %v6726 = vadd.f32 %v6684, %v6718
    %v6727 = vld [vmem:[%s6602] sm:$0x33]
    %v6728 = vld [vmem:[%s6602 + $0x8] sm:$0x33]
    %v6729 = vld [vmem:[%s6602 + $0x20] sm:$0x33]
    %v6730 = vld [vmem:[%s6602 + $0x28] sm:$0x33]
    %s6731 = scalar_lea.vmem %s99, 3
    %v6732 = vld [vmem:[%s6731] ss:$8 sm:$0x3]
    %v6734 = vlaneseq
    %v6735 = vshrl.u32 %v6734, 7
    %v6736 = vsub.s32 0, %v6735
    %v6737 = vrot.slane %v6732, %v6736
    %v6738 = vlaneseq
    %v6739 = vshrl.u32 %v6738, 7
    %v6740 = vsub.s32 1, %v6739
    %v6741 = vrot.slane %v6732, %v6740
    %v6742 = vcombine.low %v6737, %v6741
    %v6744 = vmul.f32 %v6727, %v6742
    %v6745 = vmul.f32 %v6728, %v6742
    %v6746 = vmul.f32 %v6729, %v6742
    %v6747 = vmul.f32 %v6730, %v6742
    %v6748 = vadd.f32 %v6723, %v6744
    %v6749 = vadd.f32 %v6724, %v6745
    %v6750 = vadd.f32 %v6725, %v6746
    %v6751 = vadd.f32 %v6726, %v6747
    %v6752 = vld [vmem:[%s6602] sm:$0x66]
    %v6753 = vld [vmem:[%s6602 + $0x8] sm:$0x66]
    %v6754 = vld [vmem:[%s6602 + $0x20] sm:$0x66]
    %v6755 = vld [vmem:[%s6602 + $0x28] sm:$0x66]
    %s6756 = scalar_lea.vmem %s99, 4
    %v6757 = vld [vmem:[%s6756] ss:$8 sm:$0x3]
    %v6759 = vlaneseq
    %v6760 = vshrl.u32 %v6759, 7
    %v6761 = vsub.s32 0, %v6760
    %v6762 = vrot.slane %v6757, %v6761
    %v6763 = vlaneseq
    %v6764 = vshrl.u32 %v6763, 7
    %v6765 = vsub.s32 1, %v6764
    %v6766 = vrot.slane %v6757, %v6765
    %v6767 = vcombine.low %v6762, %v6766
    %v6768 = vrot.slane %v6767, 7
    %v6770 = vmul.f32 %v6752, %v6768
    %v6771 = vmul.f32 %v6753, %v6768
    %v6772 = vmul.f32 %v6754, %v6768
    %v6773 = vmul.f32 %v6755, %v6768
    %v6778 = vrot.slane %v6770, 5
    %v6779 = vrot.slane %v6778, 4
    %v6780 = vrot.slane %v6771, 5
    %v6781 = vrot.slane %v6780, 4
    %v6782 = vrot.slane %v6772, 5
    %v6783 = vrot.slane %v6782, 4
    %v6784 = vrot.slane %v6773, 5
    %v6785 = vrot.slane %v6784, 4
    %v6790 = vadd.f32 %v6748, %v6779
    %v6791 = vadd.f32 %v6749, %v6781
    %v6792 = vadd.f32 %v6750, %v6783
    %v6793 = vadd.f32 %v6751, %v6785
    %v6794 = vld [vmem:[%s6602] sm:$0xcc]
    %v6795 = vld [vmem:[%s6602 + $0x8] sm:$0xcc]
    %v6796 = vld [vmem:[%s6602 + $0x20] sm:$0xcc]
    %v6797 = vld [vmem:[%s6602 + $0x28] sm:$0xcc]
    %s6798 = scalar_lea.vmem %s99, 5
    %v6799 = vld [vmem:[%s6798] ss:$8 sm:$0x3]
    %v6801 = vlaneseq
    %v6802 = vshrl.u32 %v6801, 7
    %v6803 = vsub.s32 0, %v6802
    %v6804 = vrot.slane %v6799, %v6803
    %v6805 = vlaneseq
    %v6806 = vshrl.u32 %v6805, 7
    %v6807 = vsub.s32 1, %v6806
    %v6808 = vrot.slane %v6799, %v6807
    %v6809 = vcombine.low %v6804, %v6808
    %v6810 = vrot.slane %v6809, 6
    %v6812 = vmul.f32 %v6794, %v6810
    %v6813 = vmul.f32 %v6795, %v6810
    %v6814 = vmul.f32 %v6796, %v6810
    %v6815 = vmul.f32 %v6797, %v6810
    %v6820 = vrot.slane %v6812, 6
    %v6821 = vrot.slane %v6820, 4
    %v6822 = vrot.slane %v6813, 6
    %v6823 = vrot.slane %v6822, 4
    %v6824 = vrot.slane %v6814, 6
    %v6825 = vrot.slane %v6824, 4
    %v6826 = vrot.slane %v6815, 6
    %v6827 = vrot.slane %v6826, 4
    %v6832 = vadd.f32 %v6790, %v6821
    %v6833 = vadd.f32 %v6791, %v6823
    %v6834 = vadd.f32 %v6792, %v6825
    %v6835 = vadd.f32 %v6793, %v6827
    %v6836 = vld [vmem:[%s6607] sm:$0x33]
    %v6837 = vld [vmem:[%s6607 + $0x8] sm:$0x33]
    %v6838 = vld [vmem:[%s6607 + $0x20] sm:$0x33]
    %v6839 = vld [vmem:[%s6607 + $0x28] sm:$0x33]
    %s6840 = scalar_lea.vmem %s99, 6
    %v6841 = vld [vmem:[%s6840] ss:$8 sm:$0x3]
    %v6843 = vlaneseq
    %v6844 = vshrl.u32 %v6843, 7
    %v6845 = vsub.s32 0, %v6844
    %v6846 = vrot.slane %v6841, %v6845
    %v6847 = vlaneseq
    %v6848 = vshrl.u32 %v6847, 7
    %v6849 = vsub.s32 1, %v6848
    %v6850 = vrot.slane %v6841, %v6849
    %v6851 = vcombine.low %v6846, %v6850
    %v6853 = vmul.f32 %v6836, %v6851
    %v6854 = vmul.f32 %v6837, %v6851
    %v6855 = vmul.f32 %v6838, %v6851
    %v6856 = vmul.f32 %v6839, %v6851
    %v6857 = vadd.f32 %v6832, %v6853
    %v6858 = vadd.f32 %v6833, %v6854
    %v6859 = vadd.f32 %v6834, %v6855
    %v6860 = vadd.f32 %v6835, %v6856
    %v6861 = vld [vmem:[%s6607] sm:$0x66]
    %v6862 = vld [vmem:[%s6607 + $0x8] sm:$0x66]
    %v6863 = vld [vmem:[%s6607 + $0x20] sm:$0x66]
    %v6864 = vld [vmem:[%s6607 + $0x28] sm:$0x66]
    %s6865 = scalar_lea.vmem %s99, 7
    %v6866 = vld [vmem:[%s6865] ss:$8 sm:$0x3]
    %v6868 = vlaneseq
    %v6869 = vshrl.u32 %v6868, 7
    %v6870 = vsub.s32 0, %v6869
    %v6871 = vrot.slane %v6866, %v6870
    %v6872 = vlaneseq
    %v6873 = vshrl.u32 %v6872, 7
    %v6874 = vsub.s32 1, %v6873
    %v6875 = vrot.slane %v6866, %v6874
    %v6876 = vcombine.low %v6871, %v6875
    %v6877 = vrot.slane %v6876, 7
    %v6879 = vmul.f32 %v6861, %v6877
    %v6880 = vmul.f32 %v6862, %v6877
    %v6881 = vmul.f32 %v6863, %v6877
    %v6882 = vmul.f32 %v6864, %v6877
    %v6887 = vrot.slane %v6879, 5
    %v6888 = vrot.slane %v6887, 4
    %v6889 = vrot.slane %v6880, 5
    %v6890 = vrot.slane %v6889, 4
    %v6891 = vrot.slane %v6881, 5
    %v6892 = vrot.slane %v6891, 4
    %v6893 = vrot.slane %v6882, 5
    %v6894 = vrot.slane %v6893, 4
    %v6899 = vadd.f32 %v6857, %v6888
    %v6900 = vadd.f32 %v6858, %v6890
    %v6901 = vadd.f32 %v6859, %v6892
    %v6902 = vadd.f32 %v6860, %v6894
    %v6903 = vld [vmem:[%s6607] sm:$0xcc]
    %v6904 = vld [vmem:[%s6607 + $0x8] sm:$0xcc]
    %v6905 = vld [vmem:[%s6607 + $0x20] sm:$0xcc]
    %v6906 = vld [vmem:[%s6607 + $0x28] sm:$0xcc]
    %s6907 = scalar_lea.vmem %s99, 16
    %v6908 = vld [vmem:[%s6907] ss:$8 sm:$0x3]
    %v6910 = vlaneseq
    %v6911 = vshrl.u32 %v6910, 7
    %v6912 = vsub.s32 0, %v6911
    %v6913 = vrot.slane %v6908, %v6912
    %v6914 = vlaneseq
    %v6915 = vshrl.u32 %v6914, 7
    %v6916 = vsub.s32 1, %v6915
    %v6917 = vrot.slane %v6908, %v6916
    %v6918 = vcombine.low %v6913, %v6917
    %v6919 = vrot.slane %v6918, 6
    %v6921 = vmul.f32 %v6903, %v6919
    %v6922 = vmul.f32 %v6904, %v6919
    %v6923 = vmul.f32 %v6905, %v6919
    %v6924 = vmul.f32 %v6906, %v6919
    %v6929 = vrot.slane %v6921, 6
    %v6930 = vrot.slane %v6929, 4
    %v6931 = vrot.slane %v6922, 6
    %v6932 = vrot.slane %v6931, 4
    %v6933 = vrot.slane %v6923, 6
    %v6934 = vrot.slane %v6933, 4
    %v6935 = vrot.slane %v6924, 6
    %v6936 = vrot.slane %v6935, 4
    %v6941 = vadd.f32 %v6899, %v6930
    %v6942 = vadd.f32 %v6900, %v6932
    %v6943 = vadd.f32 %v6901, %v6934
    %v6944 = vadd.f32 %v6902, %v6936
    %v6945 = vld [vmem:[%s101] sm:$0x3]
    %v6947 = vlaneseq
    %v6948 = vshrl.u32 %v6947, 7
    %v6949 = vsub.s32 0, %v6948
    %v6950 = vrot.slane %v6945, %v6949
    %v6951 = vlaneseq
    %v6952 = vshrl.u32 %v6951, 7
    %v6953 = vsub.s32 1, %v6952
    %v6954 = vrot.slane %v6945, %v6953
    %v6955 = vcombine.low %v6950, %v6954
    %v6957 = vmul.f32 %v6941, %v6955
    %v6958 = vmul.f32 %v6942, %v6955
    %v6959 = vmul.f32 %v6943, %v6955
    %v6960 = vmul.f32 %v6944, %v6955
    %v6961 = vld [vmem:[%s103] sm:$0x3]
    %v6963 = vlaneseq
    %v6964 = vshrl.u32 %v6963, 7
    %v6965 = vsub.s32 0, %v6964
    %v6966 = vrot.slane %v6961, %v6965
    %v6967 = vlaneseq
    %v6968 = vshrl.u32 %v6967, 7
    %v6969 = vsub.s32 1, %v6968
    %v6970 = vrot.slane %v6961, %v6969
    %v6971 = vcombine.low %v6966, %v6970
    %v6973 = vadd.f32 %v6957, %v6971
    %v6974 = vadd.f32 %v6958, %v6971
    %v6975 = vadd.f32 %v6959, %v6971
    %v6976 = vadd.f32 %v6960, %v6971
    %v6977 = vmax.f32 %v6973, 0.0
    %v6978 = vmax.f32 %v6974, 0.0
    %v6979 = vmax.f32 %v6975, 0.0
    %v6980 = vmax.f32 %v6976, 0.0
    %v6981 = vmin.f32 %v6977, 6.0
    %v6982 = vmin.f32 %v6978, 6.0
    %v6983 = vmin.f32 %v6979, 6.0
    %v6984 = vmin.f32 %v6980, 6.0
    %v6986 = vcombine.high %v6981, %v6981
    %6988 = vst [vmem:[#allocation13] sm:$0x3] %v6981
    %6989 = vst.msk [vmem:[#allocation13 + $0x8] sm:$0x3] %vm6301, %v6986
    %v6991 = vcombine.high %v6982, %v6982
    %v6992 = vrot.slane %v6982, 6
    %v6993 = vrot.slane %v6991, 6
    %6996 = vst [vmem:[#allocation13] sm:$0xc] %v6992
    %6997 = vst.msk [vmem:[#allocation13 + $0x8] sm:$0xc] %vm6310, %v6993
    %v6999 = vcombine.low %v6983, %v6983
    %7001 = vst [vmem:[#allocation13] sm:$0x30] %v6999
    %7002 = vst.msk [vmem:[#allocation13 + $0x8] sm:$0x30] %vm6316, %v6983
    %v7004 = vcombine.high %v6984, %v6984
    %v7005 = vrot.slane %v6984, 2
    %v7006 = vrot.slane %v7004, 2
    %7009 = vst [vmem:[#allocation13] sm:$0xc0] %v7005
    %7010 = vst.msk [vmem:[#allocation13 + $0x8] sm:$0xc0] %vm6325, %v7006
    %v7011 = vld [vmem:[#allocation13] sm:$0xff]
    %v7012 = vld [vmem:[#allocation13 + $0x8] sm:$0xff]
    %v7013 = vpack.c.bf16 %v7011, %v7011
    %v7014 = vpack.c.bf16 %v7012, %v7012
    %v7015 = vld [vmem:[%s105] sm:$0xf]
    %v7016 = vld [vmem:[%s105 + $0x4] sm:$0xf]
    %v7017 = vld [vmem:[%s105 + $0x8] sm:$0xf]
    %v7018 = vld [vmem:[%s105 + $0xc] sm:$0xf]
    %v7019 = vld [vmem:[%s105 + $0x10] sm:$0xf]
    %v7020 = vld [vmem:[%s105 + $0x14] sm:$0xf]
    %v7021 = vld [vmem:[%s105 + $0x18] sm:$0xf]
    %v7022 = vld [vmem:[%s105 + $0x1c] sm:$0xf]
    %v7023 = vld [vmem:[%s105 + $0x20] sm:$0xf]
    %v7024 = vld [vmem:[%s105 + $0x24] sm:$0xf]
    %v7025 = vld [vmem:[%s105 + $0x28] sm:$0xf]
    %v7026 = vld [vmem:[%s105 + $0x2c] sm:$0xf]
    %v7027 = vld [vmem:[%s105 + $0x30] sm:$0xf]
    %v7028 = vld [vmem:[%s105 + $0x34] sm:$0xf]
    %v7029 = vld [vmem:[%s105 + $0x38] sm:$0xf]
    %v7030 = vld [vmem:[%s105 + $0x3c] sm:$0xf]
    %v7031 = vld [vmem:[%s105 + $0x40] sm:$0xf]
    %v7032 = vld [vmem:[%s105 + $0x44] sm:$0xf]
    %v7033 = vld [vmem:[%s105 + $0x48] sm:$0xf]
    %v7034 = vld [vmem:[%s105 + $0x4c] sm:$0xf]
    %v7035 = vld [vmem:[%s105 + $0x50] sm:$0xf]
    %v7036 = vld [vmem:[%s105 + $0x54] sm:$0xf]
    %v7037 = vld [vmem:[%s105 + $0x58] sm:$0xf]
    %v7038 = vld [vmem:[%s105 + $0x5c] sm:$0xf]
    %v7063 = vunpack.c.l.b16 %v7015
    %v7064 = vunpack.c.l.b16 %v7016
    %v7065 = vunpack.c.l.b16 %v7017
    %v7066 = vunpack.c.l.b16 %v7018
    %v7067 = vunpack.c.l.b16 %v7019
    %v7068 = vunpack.c.l.b16 %v7020
    %v7069 = vunpack.c.l.b16 %v7021
    %v7070 = vunpack.c.l.b16 %v7022
    %v7071 = vunpack.c.l.b16 %v7023
    %v7072 = vunpack.c.l.b16 %v7024
    %v7073 = vunpack.c.l.b16 %v7025
    %v7074 = vunpack.c.l.b16 %v7026
    %v7075 = vunpack.c.l.b16 %v7027
    %v7076 = vunpack.c.l.b16 %v7028
    %v7077 = vunpack.c.l.b16 %v7029
    %v7078 = vunpack.c.l.b16 %v7030
    %v7079 = vunpack.c.l.b16 %v7031
    %v7080 = vunpack.c.l.b16 %v7032
    %v7081 = vunpack.c.l.b16 %v7033
    %v7082 = vunpack.c.l.b16 %v7034
    %v7083 = vunpack.c.l.b16 %v7035
    %v7084 = vunpack.c.l.b16 %v7036
    %v7085 = vunpack.c.l.b16 %v7037
    %v7086 = vunpack.c.l.b16 %v7038
    %v7087 = vpack.c.b16 %v7064, %v7063
    %v7088 = vpack.c.b16 %v7066, %v7065
    %v7089 = vpack.c.b16 %v7068, %v7067
    %v7090 = vpack.c.b16 %v7070, %v7069
    %v7091 = vpack.c.b16 %v7072, %v7071
    %v7092 = vpack.c.b16 %v7074, %v7073
    %v7093 = vpack.c.b16 %v7076, %v7075
    %v7094 = vpack.c.b16 %v7078, %v7077
    %v7095 = vpack.c.b16 %v7080, %v7079
    %v7096 = vpack.c.b16 %v7082, %v7081
    %v7097 = vpack.c.b16 %v7084, %v7083
    %v7098 = vpack.c.b16 %v7086, %v7085
    %v7112 = vsel %vm6427, %v7014, 0
    %7114 = vmatprep.subr.bf16.mxu0 0
    %7115 = vmatpush1.bf16.msra.mxu0 %v7094
    %7116 = vmatprep.subr.bf16.mxu0 0
    %7117 = vmatpush1.bf16.msra.mxu0 %v7093
    %7118 = vmatprep.subr.bf16.mxu0 0
    %7119 = vmatpush1.bf16.msra.mxu0 %v7092
    %7120 = vmatprep.subr.bf16.mxu0 0
    %7121 = vmatpush1.bf16.msra.mxu0 %v7091
    %7122 = vmatprep.subr.bf16.mxu0 0
    %7123 = vmatpush1.bf16.msra.mxu0 %v7090
    %7124 = vmatprep.subr.bf16.mxu0 0
    %7125 = vmatpush1.bf16.msra.mxu0 %v7089
    %7126 = vmatprep.subr.bf16.mxu0 0
    %7127 = vmatpush1.bf16.msra.mxu0 %v7088
    %7128 = vmatprep.subr.bf16.mxu0 0
    %7129 = vmatpush1.bf16.msra.mxu0 %v7087
    %7130 = vmatprep.subr.bf16.mxu0 0
    %7131 = vmatpush2.bf16.msra.mxu0 0
    %7132 = vmatprep.subr.bf16.mxu0 0
    %7133 = vmatpush2.bf16.msra.mxu0 0
    %7134 = vmatprep.subr.bf16.mxu0 0
    %7135 = vmatpush2.bf16.msra.mxu0 0
    %7136 = vmatprep.subr.bf16.mxu0 0
    %7137 = vmatpush2.bf16.msra.mxu0 0
    %7138 = vmatprep.subr.bf16.mxu0 0
    %7139 = vmatpush2.bf16.msra.mxu0 %v7098
    %7140 = vmatprep.subr.bf16.mxu0 0
    %7141 = vmatpush2.bf16.msra.mxu0 %v7097
    %7142 = vmatprep.subr.bf16.mxu0 0
    %7143 = vmatpush2.bf16.msra.mxu0 %v7096
    %7144 = vmatprep.subr.bf16.mxu0 0
    %7145 = vmatpush2.bf16.msra.mxu0 %v7095
    %7146 = vmatprep.mubr.bf16.mxu0 %v7112
    %7147 = vmatmul.mubr.bf16.gmra.mxu0 %v7013
    %v7148 = vpop.f32.mrf.mxu0
    %v7149 = vadd.f32 0.0, %v7148
    %v7150 = vpop.f32.mrf.mxu0
    %v7151 = vpop.f32.mrf.mxu0
    %v7152 = vpop.f32.mrf.mxu0
    %7153 = vdwg.mxu0
    %v7154 = vld [vmem:[%s107] sm:$0x1]
    %v7156 = vlaneseq
    %v7157 = vshrl.u32 %v7156, 7
    %v7158 = vsub.s32 0, %v7157
    %v7159 = vrot.slane %v7154, %v7158
    %v7161 = vmul.f32 %v7149, %v7159
    %v7162 = vld [vmem:[%s109] sm:$0x1]
    %v7164 = vlaneseq
    %v7165 = vshrl.u32 %v7164, 7
    %v7166 = vsub.s32 0, %v7165
    %v7167 = vrot.slane %v7162, %v7166
    %v7169 = vadd.f32 %v7161, %v7167
    %v7170 = vadd.f32 %v7169, %v6487
    %v7171 = vpack.c.bf16 %v7170, %v7170
    %v7172 = vld [vmem:[%s111] sm:$0xf]
    %v7173 = vld [vmem:[%s111 + $0x4] sm:$0xf]
    %v7174 = vld [vmem:[%s111 + $0x8] sm:$0xf]
    %v7175 = vld [vmem:[%s111 + $0xc] sm:$0xf]
    %v7176 = vld [vmem:[%s113] sm:$0x1]
    %v7178 = vlaneseq
    %v7179 = vshrl.u32 %v7178, 7
    %v7180 = vsub.s32 0, %v7179
    %v7181 = vrot.slane %v7176, %v7180
    %v7187 = vunpack.c.l.b16 %v7172
    %v7188 = vunpack.c.l.b16 %v7173
    %v7189 = vunpack.c.l.b16 %v7174
    %v7190 = vunpack.c.l.b16 %v7175
    %v7191 = vpack.c.b16 %v7188, %v7187
    %v7192 = vpack.c.b16 %v7190, %v7189
    %v7196 = vsel %vm481, %v7171, 0
    %7198 = vmatprep.subr.bf16.mxu0 0
    %7199 = vmatpush1.bf16.msra.mxu0 0
    %7200 = vmatprep.subr.bf16.mxu0 0
    %7201 = vmatpush1.bf16.msra.mxu0 0
    %7202 = vmatprep.subr.bf16.mxu0 0
    %7203 = vmatpush1.bf16.msra.mxu0 0
    %7204 = vmatprep.subr.bf16.mxu0 0
    %7205 = vmatpush1.bf16.msra.mxu0 0
    %7206 = vmatprep.subr.bf16.mxu0 0
    %7207 = vmatpush1.bf16.msra.mxu0 0
    %7208 = vmatprep.subr.bf16.mxu0 0
    %7209 = vmatpush1.bf16.msra.mxu0 0
    %7210 = vmatprep.subr.bf16.mxu0 0
    %7211 = vmatpush1.bf16.msra.mxu0 %v7192
    %7212 = vmatprep.subr.bf16.mxu0 0
    %7213 = vmatpush1.bf16.msra.mxu0 %v7191
    %7214 = vmatprep.subr.bf16.mxu0 0
    %7215 = vmatpush2.bf16.msra.mxu0 0
    %7216 = vmatprep.subr.bf16.mxu0 0
    %7217 = vmatpush2.bf16.msra.mxu0 0
    %7218 = vmatprep.subr.bf16.mxu0 0
    %7219 = vmatpush2.bf16.msra.mxu0 0
    %7220 = vmatprep.subr.bf16.mxu0 0
    %7221 = vmatpush2.bf16.msra.mxu0 0
    %7222 = vmatprep.subr.bf16.mxu0 0
    %7223 = vmatpush2.bf16.msra.mxu0 0
    %7224 = vmatprep.subr.bf16.mxu0 0
    %7225 = vmatpush2.bf16.msra.mxu0 0
    %7226 = vmatprep.subr.bf16.mxu0 0
    %7227 = vmatpush2.bf16.msra.mxu0 0
    %7228 = vmatprep.subr.bf16.mxu0 0
    %7229 = vmatpush2.bf16.msra.mxu0 0
    %7230 = vmatprep.mubr.bf16.mxu0 0
    %7231 = vmatmul.mubr.bf16.gmra.mxu0 %v7196
    %v7232 = vpop.f32.mrf.mxu0
    %v7233 = vadd.f32 %v7181, %v7232
    %v7234 = vpop.f32.mrf.mxu0
    %v7235 = vpop.f32.mrf.mxu0
    %v7236 = vpop.f32.mrf.mxu0
    %7237 = vdwg.mxu0
    %v7238 = vmax.f32 %v7233, 0.0
    %v7239 = vld [vmem:[%s115] sm:$0x1]
    %v7241 = vlaneseq
    %v7242 = vshrl.u32 %v7241, 7
    %v7243 = vsub.s32 0, %v7242
    %v7244 = vrot.slane %v7239, %v7243
    %v7246 = vmul.f32 %v7238, %v7244
    %v7247 = vsel %vm481, %v7246, 0.0
    %7248 = vadd.xlane.f32.xlu0 %v7247
    %v7249 = vpop.xlane.xlu0 %7248
    %v7250 = vld [vmem:[#allocation14] sm:$0x1]
    %v7252 = vlaneseq
    %v7253 = vshrl.u32 %v7252, 7
    %v7254 = vsub.s32 0, %v7253
    %v7255 = vrot.slane %v7250, %v7254
    %v7257 = vadd.f32 %v7249, %v7255
    %vm7258 = vcmask 7168
    %7259 = vst.msk [vmem:[%s119] sm:$0xff] %vm7258, %v7257
    // Predicated region
    $region306: #{_lambda_.1} parent=1 // pred_check
      _
    $region307: #{_lambda_.1} parent=1 // pred_check_branch
      %7261 = sbr.rel (0) target = $region309
    $region308: #{_lambda_.1} parent=1 // pred_region
      _
    $region309: #{_lambda_.1} parent=1 // pred_fallthru
      _
    // Predicated region
    $region310: #{_lambda_.1} parent=1 // pred_check
      _
    $region311: #{_lambda_.1} parent=1 // pred_check_branch
      %7263 = sbr.rel (0) target = $region313
    $region312: #{_lambda_.1} parent=1 // pred_region
      _
    $region313: #{_lambda_.1} parent=1 // pred_fallthru
      _
    %7264 = vsyncpa [#allocation16], 1
    %7265 = vsyncpa [#allocation18], 1
    %7266 = vsyncpa [#allocation21], 1
    %7267 = vsyncpa [#allocation24], 1
    %7268 = vsyncpa [#allocation27], 1
    %7269 = vsyncpa [#allocation30], 1
    %7270 = vsyncpa [#allocation33], 1
    %7271 = vsyncpa [#allocation36], 1
    %7272 = vsyncpa [#allocation39], 1

</llo_original>
